<compile_context>
chip_gen: v7x
topology: tpu7x:2x2x1
jax: 0.10.0
libtpu: 0.0.40
codegen_flags: <defaults>
</compile_context>

<pallas_src>
import functools

import jax
import jax.numpy as jnp
from jax import lax
from jax.experimental import pallas as pl
from jax.experimental.pallas import tpu as pltpu

DEPTH = 4      # module default is 16; small value for the example run
UNITS = 32     # hidden size
FEATS = 1      # node feature dim (module default)
EPS = 1e-5     # BatchNorm eps (PyTorch default)
GROUP = 4      # graph instances fused per grid step -> GROUP*UNITS = 128 lanes
               # (8 gives 256-wide tiles for v6e/v7x's 256x256 MXUs; 4 fills v5e)


# ----------------------------- kernel helpers --------------------------------

def _mm(a, b):
    # f32 operands, HIGHEST precision (multi-pass MXU), f32 accumulate.
    return jnp.dot(a, b, precision=lax.Precision.HIGHEST,
                   preferred_element_type=jnp.float32)


def _sigmoid(z):
    # Numerically-stable logistic, exact division (no approx reciprocal).
    e = jnp.exp(-jnp.abs(z))
    inv = 1.0 / (1.0 + e)
    return jnp.where(z >= 0.0, inv, e * inv)


def _silu(z):
    return z * _sigmoid(z)


def _bn(z, gamma, beta, inv_rows):
    # gnn.BatchNorm, training mode (batch stats over rows, biased variance).
    # Both moments come out of ONE reduction pass over [z | z*z].
    c = z.shape[-1]
    s = jnp.sum(jnp.concatenate([z, z * z], axis=-1), axis=0,
                keepdims=True) * inv_rows
    mu = s[:, :c]
    var = jnp.maximum(s[:, c:] - mu * mu, 0.0)
    return (z - mu) * lax.rsqrt(var + EPS) * gamma + beta


# ----------------------------- Pallas kernel ---------------------------------

def embnet_kernel(
    x_ref, w_ref,
    s_src_ref, s_dst_ref, scat_ref, inv_cnt_ref,
    wv0_ref, bv0_ref, we0_ref, be0_ref,
    wvcat_ref, bvcat_ref, we1_ref, be1_ref,
    gv_ref, btv_ref, ge_ref, bte_ref,
    out_ref,
):
    bu = out_ref.shape[-1]          # GROUP * UNITS (lane-dense, 128)
    s_src = s_src_ref[...]          # [E, N] f32 one-hot of edge_index[1] (src)
    s_dst = s_dst_ref[...]          # [E, N] f32 one-hot of edge_index[0] (dst)
    scat = scat_ref[...]            # [N, E] f32 scatter (dst one-hot transposed)
    inv_cnt = inv_cnt_ref[...]      # [N, 1] f32 1 / max(in-degree, 1)
    inv_n = 1.0 / x_ref.shape[0]
    inv_e = 1.0 / w_ref.shape[0]

    # x = act(v_lin0(x)); w = act(e_lin0(edge_attr))  -- per-instance via the
    # block-diagonal input projection (contraction dim zero-padded to 8).
    x = _silu(_mm(x_ref[...], wv0_ref[...]) + bv0_ref[...])   # [N, bu]
    w = _silu(_mm(w_ref[...], we0_ref[...]) + be0_ref[...])   # [E, bu]

    def layer(d, carry):
        x0, w0 = carry
        # Fused node linears: one [N,bu]x[bu,4bu] matmul; slot-major output
        # [x1 | x3 | x2 | x4] so every slice below is a 128-aligned slab.
        xc = _mm(x0, wvcat_ref[d]) + bvcat_ref[d]              # [N, 4bu]
        w1 = _mm(w0, we1_ref[d]) + be1_ref[d]                  # [E, bu]
        w2 = _sigmoid(w0)

        # Fused src-side gather of (x2, x4) and dst-side gather of x3.
        g24 = _mm(s_src, xc[:, 2 * bu:])                       # [E, 2bu] = [x2[src]|x4[src]]
        x3d = _mm(s_dst, xc[:, bu:2 * bu])                     # [E, bu]  = x3[dst]

        # message = sigmoid(w0) * x2[src]; mean-scatter onto dst nodes.
        msg = w2 * g24[:, :bu]                                 # [E, bu]
        agg = _mm(scat, msg) * inv_cnt                         # [N, bu]

        xn = x0 + _silu(_bn(xc[:, :bu] + agg, gv_ref[d], btv_ref[d], inv_n))
        wn = w0 + _silu(_bn(w1 + x3d + g24[:, bu:], ge_ref[d], bte_ref[d], inv_e))
        return xn, wn

    x, w = lax.fori_loop(0, wvcat_ref.shape[0], layer, (x, w))
    out_ref[...] = w


# ------------------------------ wrappers --------------------------------------

def _vmem_cap():
    # v7x: 64 MiB physical VMEM -> keep the resident design <= ~40 MiB.
    # v5e/v6e: 128 MiB -> the cheaper fully-resident design is viable to ~100 MiB.
    try:
        phys = int(pltpu.get_tpu_info().vmem_capacity_bytes)
    except Exception:
        return 40 << 20
    return (100 << 20) if phys >= (96 << 20) else (40 << 20)


def _const_spec(shape):
    zeros = (0,) * len(shape)
    return pl.BlockSpec(shape, lambda g, _z=zeros: _z)


def precompute_graph(edge_index, num_nodes):
    """Topology-dependent gather/scatter matrices.  Build ONCE per graph."""
    n = num_nodes
    iota = jnp.arange(n, dtype=edge_index.dtype)
    s_dst = (edge_index[0][:, None] == iota[None, :]).astype(jnp.float32)  # [E, N]
    s_src = (edge_index[1][:, None] == iota[None, :]).astype(jnp.float32)  # [E, N]
    scat = s_dst.T                                                          # [N, E]
    counts = jnp.sum(s_dst, axis=0)[:, None]                                # [N, 1]
    inv_cnt = 1.0 / jnp.maximum(counts, 1.0)
    return dict(s_src=s_src, s_dst=s_dst, scat=scat, inv_cnt=inv_cnt)


def pack_params(params, group_batch):
    """Pack module params into the batched, block-diagonal kernel layout (ONCE)."""
    gb = group_batch

    def bdiag(w):  # [..., U, V] -> [..., gb*U, gb*V] block-diagonal (kron(I, w))
        eye = jnp.eye(gb, dtype=w.dtype)
        out = jnp.einsum('bc,...ij->...bicj', eye, w)
        return out.reshape(w.shape[:-2] + (gb * w.shape[-2], gb * w.shape[-1]))

    def lane_tile(b):  # [..., 1, U] -> [..., 1, gb*U]
        return jnp.tile(b, (1,) * (b.ndim - 1) + (gb,))

    def pad8(w):  # zero-pad the tiny contraction dim of the input projections
        k = ((w.shape[0] + 7) // 8) * 8
        return jnp.pad(w, ((0, k - w.shape[0]), (0, 0)))

    # slot-major fused node linear: [x1 | x3 | x2 | x4]
    wvcat = jnp.concatenate([bdiag(params["wv1"]), bdiag(params["wv3"]),
                             bdiag(params["wv2"]), bdiag(params["wv4"])], axis=-1)
    bvcat = jnp.concatenate([lane_tile(params["bv1"]), lane_tile(params["bv3"]),
                             lane_tile(params["bv2"]), lane_tile(params["bv4"])], axis=-1)
    return dict(
        wv0=pad8(bdiag(params["wv0"])), bv0=lane_tile(params["bv0"]),
        we0=pad8(bdiag(params["we0"])), be0=lane_tile(params["be0"]),
        wvcat=wvcat, bvcat=bvcat,
        we1=bdiag(params["we1"]), be1=lane_tile(params["be1"]),
        gv=lane_tile(params["gv"]), btv=lane_tile(params["btv"]),
        ge=lane_tile(params["ge"]), bte=lane_tile(params["bte"]),
    )


def embnet_forward(x_all, edge_attr_all, graph, kp, group_batch):
    """Batched Pallas forward for one shared topology.

    x_all: [B, N, FEATS] f32, edge_attr_all: [B, E, 1] f32, B % group_batch == 0.
    Returns [B, E, UNITS].
    """
    btot, n, _ = x_all.shape
    e = edge_attr_all.shape[1]
    gb = group_batch
    assert btot % gb == 0, "batch must be a multiple of group_batch"
    ng = btot // gb
    bu = gb * UNITS

    # Lane-pack instances (instance-major) -> every activation is >=128 lanes.
    x_g = x_all.reshape(ng, gb, n, -1).transpose(0, 2, 1, 3).reshape(ng, n, -1)
    w_g = edge_attr_all.reshape(ng, gb, e, 1).transpose(0, 2, 1, 3).reshape(ng, e, gb)
    x_g = jnp.pad(x_g, ((0, 0), (0, 0), (0, kp["wv0"].shape[0] - x_g.shape[-1])))
    w_g = jnp.pad(w_g, ((0, 0), (0, 0), (0, kp["we0"].shape[0] - w_g.shape[-1])))

    const_args = (graph["s_src"], graph["s_dst"], graph["scat"], graph["inv_cnt"],
                  kp["wv0"], kp["bv0"], kp["we0"], kp["be0"],
                  kp["wvcat"], kp["bvcat"], kp["we1"], kp["be1"],
                  kp["gv"], kp["btv"], kp["ge"], kp["bte"])
    args = (x_g, w_g) + const_args

    in_specs = [
        pl.BlockSpec((None, n, x_g.shape[-1]), lambda g: (g, 0, 0)),
        pl.BlockSpec((None, e, w_g.shape[-1]), lambda g: (g, 0, 0)),
    ] + [_const_spec(a.shape) for a in const_args]
    out_specs = pl.BlockSpec((None, e, bu), lambda g: (g, 0, 0))

    raw = sum(int(a.size) * a.dtype.itemsize for a in args) + e * bu * 4
    vmem_limit = int(min(max(6 * raw, 16 << 20), _vmem_cap()))

    out = pl.pallas_call(
        embnet_kernel,
        out_shape=jax.ShapeDtypeStruct((ng, e, bu), jnp.float32),
        grid=(ng,),
        in_specs=in_specs,
        out_specs=out_specs,
        compiler_params=pltpu.CompilerParams(
            dimension_semantics=("parallel",),   # v7x: groups split across both TCs
            vmem_limit_bytes=vmem_limit),
    )(*args)

    # Un-pack the lane-dense [ng, E, gb*U] slab back to [B, E, U] (XLA-side).
    return out.reshape(ng, e, gb, UNITS).transpose(0, 2, 1, 3).reshape(btot, e, UNITS)


# --------------------------- pure-JAX reference -------------------------------

def embnet_ref(x, edge_index, edge_attr, params, num_nodes):
    """True f32 reference for ONE instance (matmuls at HIGHEST precision)."""
    silu = lambda z: z * jax.nn.sigmoid(z)
    mm = functools.partial(jnp.dot, precision=lax.Precision.HIGHEST)

    def bn(z, g, b):
        mu = z.mean(0, keepdims=True)
        var = ((z - mu) ** 2).mean(0, keepdims=True)
        return (z - mu) / jnp.sqrt(var + EPS) * g + b

    dst, src = edge_index[0], edge_index[1]
    x = silu(mm(x, params["wv0"]) + params["bv0"])
    w = silu(mm(edge_attr, params["we0"]) + params["be0"])
    for i in range(DEPTH):
        x0, w0 = x, w
        x1 = mm(x0, params["wv1"][i]) + params["bv1"][i]
        x2 = mm(x0, params["wv2"][i]) + params["bv2"][i]
        x3 = mm(x0, params["wv3"][i]) + params["bv3"][i]
        x4 = mm(x0, params["wv4"][i]) + params["bv4"][i]
        w1 = mm(w0, params["we1"][i]) + params["be1"][i]
        w2 = jax.nn.sigmoid(w0)
        msg = w2 * x2[src]
        summed = jax.ops.segment_sum(msg, dst, num_segments=num_nodes)
        cnt = jax.ops.segment_sum(jnp.ones((msg.shape[0], 1), jnp.float32),
                                  dst, num_segments=num_nodes)
        aggregated = summed / jnp.maximum(cnt, 1.0)
        x = x0 + silu(bn(x1 + aggregated, params["gv"][i], params["btv"][i]))
        w = w0 + silu(bn(w1 + x3[dst] + x4[src], params["ge"][i], params["bte"][i]))
    return w


# ------------------------------ params init ----------------------------------

def init_params(key):
    def lin(k, fan_in, fan_out, depth=None):
        bound = 1.0 / (fan_in ** 0.5)
        kw, kb = jax.random.split(k)
        wshape = (fan_in, fan_out) if depth is None else (depth, fan_in, fan_out)
        bshape = (1, fan_out) if depth is None else (depth, 1, fan_out)
        w = jax.random.uniform(kw, wshape, jnp.float32, -bound, bound)
        b = jax.random.uniform(kb, bshape, jnp.float32, -bound, bound)
        return w, b

    keys = jax.random.split(key, 7)
    wv0, bv0 = lin(keys[0], FEATS, UNITS)
    we0, be0 = lin(keys[1], 1, UNITS)
    wv1, bv1 = lin(keys[2], UNITS, UNITS, DEPTH)
    wv2, bv2 = lin(keys[3], UNITS, UNITS, DEPTH)
    wv3, bv3 = lin(keys[4], UNITS, UNITS, DEPTH)
    wv4, bv4 = lin(keys[5], UNITS, UNITS, DEPTH)
    we1, be1 = lin(keys[6], UNITS, UNITS, DEPTH)
    return dict(
        wv0=wv0, bv0=bv0, we0=we0, be0=be0,
        wv1=wv1, bv1=bv1, wv2=wv2, bv2=bv2,
        wv3=wv3, bv3=bv3, wv4=wv4, bv4=bv4,
        we1=we1, be1=be1,
        gv=jnp.ones((DEPTH, 1, UNITS), jnp.float32),
        btv=jnp.zeros((DEPTH, 1, UNITS), jnp.float32),
        ge=jnp.ones((DEPTH, 1, UNITS), jnp.float32),
        bte=jnp.zeros((DEPTH, 1, UNITS), jnp.float32),
    )


# --------------------------------- main ---------------------------------------

if __name__ == "__main__":
    key = jax.random.PRNGKey(0)
    k_x, k_w, k_p = jax.random.split(key, 3)

    N = 8                                   # nodes
    pairs = [(a, b) for a in range(N) for b in range(N) if a != b]
    E = len(pairs)                          # 56 directed edges (complete graph)
    edge_index = jnp.array([[a for a, _ in pairs],
                            [b for _, b in pairs]], dtype=jnp.int32)  # [2, E]

    NG = 2                                  # grid steps (parallel across TCs)
    BATCH = GROUP * NG                      # 8 graph instances, shared topology

    x_all = jax.random.normal(k_x, (BATCH, N, FEATS), jnp.float32)      # demands
    ea_all = jax.random.uniform(k_w, (BATCH, E, 1), jnp.float32)        # distances
    params = init_params(k_p)

    graph = precompute_graph(edge_index, N)      # per-topology, built once
    kparams = pack_params(params, GROUP)         # fused block-diag layout, once

    out = embnet_forward(x_all, ea_all, graph, kparams, GROUP)
    out = jax.block_until_ready(out)

    ref = jnp.stack([embnet_ref(x_all[b], edge_index, ea_all[b], params, N)
                     for b in range(BATCH)])
    assert out.shape == (BATCH, E, UNITS)
    err = float(jnp.max(jnp.abs(out - ref)))
    # f32 HIGHEST-precision matmuls + exact sigmoid: measured error is ~1e-4
    # level; tolerance leaves headroom for multi-pass MXU f32 emulation across
    # DEPTH residual/BatchNorm layers.
    assert jnp.allclose(out, ref, rtol=1e-2, atol=1e-2), err

    print("KERNEL_OK")
</pallas_src>

<mosaic_0001>
module attributes {stable_mosaic.version = 11 : i64} {
  func.func @embnet_kernel(%arg0: i32, %arg1: memref<1x8x8xf32, #tpu.memory_space<vmem>>, %arg2: memref<1x56x8xf32, #tpu.memory_space<vmem>>, %arg3: memref<56x8xf32, #tpu.memory_space<vmem>>, %arg4: memref<56x8xf32, #tpu.memory_space<vmem>>, %arg5: memref<8x56xf32, #tpu.memory_space<vmem>>, %arg6: memref<8x1xf32, #tpu.memory_space<vmem>>, %arg7: memref<8x128xf32, #tpu.memory_space<vmem>>, %arg8: memref<1x128xf32, #tpu.memory_space<vmem>>, %arg9: memref<8x128xf32, #tpu.memory_space<vmem>>, %arg10: memref<1x128xf32, #tpu.memory_space<vmem>>, %arg11: memref<4x128x512xf32, #tpu.memory_space<vmem>>, %arg12: memref<4x1x512xf32, #tpu.memory_space<vmem>>, %arg13: memref<4x128x128xf32, #tpu.memory_space<vmem>>, %arg14: memref<4x1x128xf32, #tpu.memory_space<vmem>>, %arg15: memref<4x1x128xf32, #tpu.memory_space<vmem>>, %arg16: memref<4x1x128xf32, #tpu.memory_space<vmem>>, %arg17: memref<4x1x128xf32, #tpu.memory_space<vmem>>, %arg18: memref<4x1x128xf32, #tpu.memory_space<vmem>>, %arg19: memref<1x56x128xf32, #tpu.memory_space<vmem>>) attributes {dimension_semantics = [#tpu.dimension_semantics<parallel>], iteration_bounds = array<i64: 2>, scalar_prefetch = 0 : i64, scratch_operands = 0 : i64, tpu.core_type = #tpu.core_type<tc>, window_params = [{transform_indices = @transform_0, window_bounds = array<i64: 1, 8, 8>}, {transform_indices = @transform_1, window_bounds = array<i64: 1, 56, 8>}, {pipeline_mode = #tpu.pipeline_mode<synchronous>, transform_indices = @transform_2, window_bounds = array<i64: 56, 8>}, {pipeline_mode = #tpu.pipeline_mode<synchronous>, transform_indices = @transform_3, window_bounds = array<i64: 56, 8>}, {pipeline_mode = #tpu.pipeline_mode<synchronous>, transform_indices = @transform_4, window_bounds = array<i64: 8, 56>}, {pipeline_mode = #tpu.pipeline_mode<synchronous>, transform_indices = @transform_5, window_bounds = array<i64: 8, 1>}, {pipeline_mode = #tpu.pipeline_mode<synchronous>, transform_indices = @transform_6, window_bounds = array<i64: 8, 128>}, {pipeline_mode = #tpu.pipeline_mode<synchronous>, transform_indices = @transform_7, window_bounds = array<i64: 1, 128>}, {pipeline_mode = #tpu.pipeline_mode<synchronous>, transform_indices = @transform_8, window_bounds = array<i64: 8, 128>}, {pipeline_mode = #tpu.pipeline_mode<synchronous>, transform_indices = @transform_9, window_bounds = array<i64: 1, 128>}, {pipeline_mode = #tpu.pipeline_mode<synchronous>, transform_indices = @transform_10, window_bounds = array<i64: 4, 128, 512>}, {pipeline_mode = #tpu.pipeline_mode<synchronous>, transform_indices = @transform_11, window_bounds = array<i64: 4, 1, 512>}, {pipeline_mode = #tpu.pipeline_mode<synchronous>, transform_indices = @transform_12, window_bounds = array<i64: 4, 128, 128>}, {pipeline_mode = #tpu.pipeline_mode<synchronous>, transform_indices = @transform_13, window_bounds = array<i64: 4, 1, 128>}, {pipeline_mode = #tpu.pipeline_mode<synchronous>, transform_indices = @transform_14, window_bounds = array<i64: 4, 1, 128>}, {pipeline_mode = #tpu.pipeline_mode<synchronous>, transform_indices = @transform_15, window_bounds = array<i64: 4, 1, 128>}, {pipeline_mode = #tpu.pipeline_mode<synchronous>, transform_indices = @transform_16, window_bounds = array<i64: 4, 1, 128>}, {pipeline_mode = #tpu.pipeline_mode<synchronous>, transform_indices = @transform_17, window_bounds = array<i64: 4, 1, 128>}, {transform_indices = @transform_18, window_bounds = array<i64: 1, 56, 128>}]} {
    %c0 = arith.constant 0 : index
    %c0_0 = arith.constant 0 : index
    %0 = vector.load %arg3[%c0, %c0_0] : memref<56x8xf32, #tpu.memory_space<vmem>>, vector<56x8xf32>
    %c0_1 = arith.constant 0 : index
    %c0_2 = arith.constant 0 : index
    %1 = vector.load %arg4[%c0_1, %c0_2] : memref<56x8xf32, #tpu.memory_space<vmem>>, vector<56x8xf32>
    %c0_3 = arith.constant 0 : index
    %c0_4 = arith.constant 0 : index
    %2 = vector.load %arg5[%c0_3, %c0_4] : memref<8x56xf32, #tpu.memory_space<vmem>>, vector<8x56xf32>
    %c0_5 = arith.constant 0 : index
    %c0_6 = arith.constant 0 : index
    %3 = vector.load %arg6[%c0_5, %c0_6] : memref<8x1xf32, #tpu.memory_space<vmem>>, vector<8x1xf32>
    %c0_7 = arith.constant 0 : index
    %c0_8 = arith.constant 0 : index
    %c0_9 = arith.constant 0 : index
    %4 = vector.load %arg1[%c0_7, %c0_8, %c0_9] : memref<1x8x8xf32, #tpu.memory_space<vmem>>, vector<1x8x8xf32>
    %5 = vector.shape_cast %4 : vector<1x8x8xf32> to vector<8x8xf32>
    %c0_10 = arith.constant 0 : index
    %c0_11 = arith.constant 0 : index
    %6 = vector.load %arg7[%c0_10, %c0_11] : memref<8x128xf32, #tpu.memory_space<vmem>>, vector<8x128xf32>
    %cst = arith.constant dense<0.000000e+00> : vector<8x128xf32>
    %7 = tpu.matmul %5, %6, %cst {dimension_numbers = #tpu.dot_dimension_numbers<[1], [0], [0], [1], [0, 0, 1, 1], [], []>, precision = #tpu.contract_precision<fp32>} : vector<8x8xf32>, vector<8x128xf32>, vector<8x128xf32> -> vector<8x128xf32>
    %c0_12 = arith.constant 0 : index
    %c0_13 = arith.constant 0 : index
    %8 = vector.load %arg8[%c0_12, %c0_13] : memref<1x128xf32, #tpu.memory_space<vmem>>, vector<1x128xf32>
    %9 = vector.broadcast %8 : vector<1x128xf32> to vector<8x128xf32>
    %10 = arith.addf %7, %9 : vector<8x128xf32>
    %11 = math.absf %10 : vector<8x128xf32>
    %cst_14 = arith.constant 0.000000e+00 : f32
    %12 = vector.broadcast %cst_14 : f32 to vector<8x128xf32>
    %13 = arith.subf %12, %11 : vector<8x128xf32>
    %14 = math.exp %13 : vector<8x128xf32>
    %cst_15 = arith.constant 1.000000e+00 : f32
    %15 = vector.broadcast %cst_15 : f32 to vector<8x128xf32>
    %16 = arith.addf %15, %14 : vector<8x128xf32>
    %cst_16 = arith.constant 1.000000e+00 : f32
    %17 = vector.broadcast %cst_16 : f32 to vector<8x128xf32>
    %18 = arith.divf %17, %16 : vector<8x128xf32>
    %cst_17 = arith.constant 0.000000e+00 : f32
    %19 = vector.broadcast %cst_17 : f32 to vector<8x128xf32>
    %20 = arith.cmpf oge, %10, %19 : vector<8x128xf32>
    %21 = arith.mulf %14, %18 : vector<8x128xf32>
    %22 = arith.select %20, %18, %21 : vector<8x128xi1>, vector<8x128xf32>
    %23 = arith.mulf %10, %22 : vector<8x128xf32>
    %c0_18 = arith.constant 0 : index
    %c0_19 = arith.constant 0 : index
    %c0_20 = arith.constant 0 : index
    %24 = vector.load %arg2[%c0_18, %c0_19, %c0_20] : memref<1x56x8xf32, #tpu.memory_space<vmem>>, vector<1x56x8xf32>
    %25 = vector.shape_cast %24 : vector<1x56x8xf32> to vector<56x8xf32>
    %c0_21 = arith.constant 0 : index
    %c0_22 = arith.constant 0 : index
    %26 = vector.load %arg9[%c0_21, %c0_22] : memref<8x128xf32, #tpu.memory_space<vmem>>, vector<8x128xf32>
    %cst_23 = arith.constant dense<0.000000e+00> : vector<56x128xf32>
    %27 = tpu.matmul %25, %26, %cst_23 {dimension_numbers = #tpu.dot_dimension_numbers<[1], [0], [0], [1], [0, 0, 1, 1], [], []>, precision = #tpu.contract_precision<fp32>} : vector<56x8xf32>, vector<8x128xf32>, vector<56x128xf32> -> vector<56x128xf32>
    %c0_24 = arith.constant 0 : index
    %c0_25 = arith.constant 0 : index
    %28 = vector.load %arg10[%c0_24, %c0_25] : memref<1x128xf32, #tpu.memory_space<vmem>>, vector<1x128xf32>
    %29 = vector.broadcast %28 : vector<1x128xf32> to vector<56x128xf32>
    %30 = arith.addf %27, %29 : vector<56x128xf32>
    %31 = math.absf %30 : vector<56x128xf32>
    %cst_26 = arith.constant 0.000000e+00 : f32
    %32 = vector.broadcast %cst_26 : f32 to vector<56x128xf32>
    %33 = arith.subf %32, %31 : vector<56x128xf32>
    %34 = math.exp %33 : vector<56x128xf32>
    %cst_27 = arith.constant 1.000000e+00 : f32
    %35 = vector.broadcast %cst_27 : f32 to vector<56x128xf32>
    %36 = arith.addf %35, %34 : vector<56x128xf32>
    %cst_28 = arith.constant 1.000000e+00 : f32
    %37 = vector.broadcast %cst_28 : f32 to vector<56x128xf32>
    %38 = arith.divf %37, %36 : vector<56x128xf32>
    %cst_29 = arith.constant 0.000000e+00 : f32
    %39 = vector.broadcast %cst_29 : f32 to vector<56x128xf32>
    %40 = arith.cmpf oge, %30, %39 : vector<56x128xf32>
    %41 = arith.mulf %34, %38 : vector<56x128xf32>
    %42 = arith.select %40, %38, %41 : vector<56x128xi1>, vector<56x128xf32>
    %43 = arith.mulf %30, %42 : vector<56x128xf32>
    %c0_i32 = arith.constant 0 : i32
    %c4_i32 = arith.constant 4 : i32
    %44 = arith.addi %c0_i32, %c4_i32 : i32
    %c1_i32 = arith.constant 1 : i32
    %45:2 = scf.for %arg20 = %c0_i32 to %44 step %c1_i32 iter_args(%arg21 = %23, %arg22 = %43) -> (vector<8x128xf32>, vector<56x128xf32>)  : i32 {
      %49 = arith.index_cast %arg20 : i32 to index
      %c0_34 = arith.constant 0 : index
      %c0_35 = arith.constant 0 : index
      %50 = vector.load %arg11[%49, %c0_34, %c0_35] : memref<4x128x512xf32, #tpu.memory_space<vmem>>, vector<1x128x512xf32>
      %51 = vector.shape_cast %50 : vector<1x128x512xf32> to vector<128x512xf32>
      %cst_36 = arith.constant dense<0.000000e+00> : vector<8x512xf32>
      %52 = tpu.matmul %arg21, %51, %cst_36 {dimension_numbers = #tpu.dot_dimension_numbers<[1], [0], [0], [1], [0, 0, 1, 1], [], []>, precision = #tpu.contract_precision<fp32>} : vector<8x128xf32>, vector<128x512xf32>, vector<8x512xf32> -> vector<8x512xf32>
      %53 = arith.index_cast %arg20 : i32 to index
      %c0_37 = arith.constant 0 : index
      %c0_38 = arith.constant 0 : index
      %54 = vector.load %arg12[%53, %c0_37, %c0_38] : memref<4x1x512xf32, #tpu.memory_space<vmem>>, vector<1x1x512xf32>
      %55 = vector.shape_cast %54 : vector<1x1x512xf32> to vector<1x512xf32>
      %56 = vector.broadcast %55 : vector<1x512xf32> to vector<8x512xf32>
      %57 = arith.addf %52, %56 : vector<8x512xf32>
      %58 = arith.index_cast %arg20 : i32 to index
      %c0_39 = arith.constant 0 : index
      %c0_40 = arith.constant 0 : index
      %59 = vector.load %arg13[%58, %c0_39, %c0_40] : memref<4x128x128xf32, #tpu.memory_space<vmem>>, vector<1x128x128xf32>
      %60 = vector.shape_cast %59 : vector<1x128x128xf32> to vector<128x128xf32>
      %cst_41 = arith.constant dense<0.000000e+00> : vector<56x128xf32>
      %61 = tpu.matmul %arg22, %60, %cst_41 {dimension_numbers = #tpu.dot_dimension_numbers<[1], [0], [0], [1], [0, 0, 1, 1], [], []>, precision = #tpu.contract_precision<fp32>} : vector<56x128xf32>, vector<128x128xf32>, vector<56x128xf32> -> vector<56x128xf32>
      %62 = arith.index_cast %arg20 : i32 to index
      %c0_42 = arith.constant 0 : index
      %c0_43 = arith.constant 0 : index
      %63 = vector.load %arg14[%62, %c0_42, %c0_43] : memref<4x1x128xf32, #tpu.memory_space<vmem>>, vector<1x1x128xf32>
      %64 = vector.shape_cast %63 : vector<1x1x128xf32> to vector<1x128xf32>
      %65 = vector.broadcast %64 : vector<1x128xf32> to vector<56x128xf32>
      %66 = arith.addf %61, %65 : vector<56x128xf32>
      %67 = math.absf %arg22 : vector<56x128xf32>
      %cst_44 = arith.constant 0.000000e+00 : f32
      %68 = vector.broadcast %cst_44 : f32 to vector<56x128xf32>
      %69 = arith.subf %68, %67 : vector<56x128xf32>
      %70 = math.exp %69 : vector<56x128xf32>
      %cst_45 = arith.constant 1.000000e+00 : f32
      %71 = vector.broadcast %cst_45 : f32 to vector<56x128xf32>
      %72 = arith.addf %71, %70 : vector<56x128xf32>
      %cst_46 = arith.constant 1.000000e+00 : f32
      %73 = vector.broadcast %cst_46 : f32 to vector<56x128xf32>
      %74 = arith.divf %73, %72 : vector<56x128xf32>
      %cst_47 = arith.constant 0.000000e+00 : f32
      %75 = vector.broadcast %cst_47 : f32 to vector<56x128xf32>
      %76 = arith.cmpf oge, %arg22, %75 : vector<56x128xf32>
      %77 = arith.mulf %70, %74 : vector<56x128xf32>
      %78 = arith.select %76, %74, %77 : vector<56x128xi1>, vector<56x128xf32>
      %79 = vector.extract_strided_slice %57 {offsets = [0, 256], sizes = [8, 256], strides = [1, 1]} : vector<8x512xf32> to vector<8x256xf32>
      %cst_48 = arith.constant dense<0.000000e+00> : vector<56x256xf32>
      %80 = tpu.matmul %0, %79, %cst_48 {dimension_numbers = #tpu.dot_dimension_numbers<[1], [0], [0], [1], [0, 0, 1, 1], [], []>, precision = #tpu.contract_precision<fp32>} : vector<56x8xf32>, vector<8x256xf32>, vector<56x256xf32> -> vector<56x256xf32>
      %81 = vector.extract_strided_slice %57 {offsets = [0, 128], sizes = [8, 128], strides = [1, 1]} : vector<8x512xf32> to vector<8x128xf32>
      %cst_49 = arith.constant dense<0.000000e+00> : vector<56x128xf32>
      %82 = tpu.matmul %1, %81, %cst_49 {dimension_numbers = #tpu.dot_dimension_numbers<[1], [0], [0], [1], [0, 0, 1, 1], [], []>, precision = #tpu.contract_precision<fp32>} : vector<56x8xf32>, vector<8x128xf32>, vector<56x128xf32> -> vector<56x128xf32>
      %83 = vector.extract_strided_slice %80 {offsets = [0, 0], sizes = [56, 128], strides = [1, 1]} : vector<56x256xf32> to vector<56x128xf32>
      %84 = arith.mulf %78, %83 : vector<56x128xf32>
      %cst_50 = arith.constant dense<0.000000e+00> : vector<8x128xf32>
      %85 = tpu.matmul %2, %84, %cst_50 {dimension_numbers = #tpu.dot_dimension_numbers<[1], [0], [0], [1], [0, 0, 1, 1], [], []>, precision = #tpu.contract_precision<fp32>} : vector<8x56xf32>, vector<56x128xf32>, vector<8x128xf32> -> vector<8x128xf32>
      %86 = vector.broadcast %3 : vector<8x1xf32> to vector<8x128xf32>
      %87 = arith.mulf %85, %86 : vector<8x128xf32>
      %88 = vector.extract_strided_slice %57 {offsets = [0, 0], sizes = [8, 128], strides = [1, 1]} : vector<8x512xf32> to vector<8x128xf32>
      %89 = arith.addf %88, %87 : vector<8x128xf32>
      %90 = arith.index_cast %arg20 : i32 to index
      %c0_51 = arith.constant 0 : index
      %c0_52 = arith.constant 0 : index
      %91 = vector.load %arg15[%90, %c0_51, %c0_52] : memref<4x1x128xf32, #tpu.memory_space<vmem>>, vector<1x1x128xf32>
      %92 = vector.shape_cast %91 : vector<1x1x128xf32> to vector<1x128xf32>
      %93 = arith.index_cast %arg20 : i32 to index
      %c0_53 = arith.constant 0 : index
      %c0_54 = arith.constant 0 : index
      %94 = vector.load %arg16[%93, %c0_53, %c0_54] : memref<4x1x128xf32, #tpu.memory_space<vmem>>, vector<1x1x128xf32>
      %95 = vector.shape_cast %94 : vector<1x1x128xf32> to vector<1x128xf32>
      %96 = arith.mulf %89, %89 : vector<8x128xf32>
      %97 = tpu.concatenate %89, %96 in 1 : vector<8x128xf32>, vector<8x128xf32> -> vector<8x256xf32>
      %cst_55 = arith.constant dense<0.000000e+00> : vector<256xf32>
      %98 = vector.multi_reduction <add>, %97, %cst_55 [0] : vector<8x256xf32> to vector<256xf32>
      %99 = vector.shape_cast %98 : vector<256xf32> to vector<1x256xf32>
      %cst_56 = arith.constant 1.250000e-01 : f32
      %100 = vector.broadcast %cst_56 : f32 to vector<1x256xf32>
      %101 = arith.mulf %99, %100 : vector<1x256xf32>
      %102 = vector.extract_strided_slice %101 {offsets = [0, 0], sizes = [1, 128], strides = [1, 1]} : vector<1x256xf32> to vector<1x128xf32>
      %103 = vector.extract_strided_slice %101 {offsets = [0, 128], sizes = [1, 128], strides = [1, 1]} : vector<1x256xf32> to vector<1x128xf32>
      %104 = arith.mulf %102, %102 : vector<1x128xf32>
      %105 = arith.subf %103, %104 : vector<1x128xf32>
      %cst_57 = arith.constant 0.000000e+00 : f32
      %106 = vector.broadcast %cst_57 : f32 to vector<1x128xf32>
      %107 = arith.maximumf %105, %106 : vector<1x128xf32>
      %108 = vector.broadcast %102 : vector<1x128xf32> to vector<8x128xf32>
      %109 = arith.subf %89, %108 : vector<8x128xf32>
      %cst_58 = arith.constant 9.99999974E-6 : f32
      %110 = vector.broadcast %cst_58 : f32 to vector<1x128xf32>
      %111 = arith.addf %107, %110 : vector<1x128xf32>
      %112 = math.rsqrt %111 : vector<1x128xf32>
      %113 = vector.broadcast %112 : vector<1x128xf32> to vector<8x128xf32>
      %114 = arith.mulf %109, %113 : vector<8x128xf32>
      %115 = vector.broadcast %92 : vector<1x128xf32> to vector<8x128xf32>
      %116 = arith.mulf %114, %115 : vector<8x128xf32>
      %117 = vector.broadcast %95 : vector<1x128xf32> to vector<8x128xf32>
      %118 = arith.addf %116, %117 : vector<8x128xf32>
      %119 = math.absf %118 : vector<8x128xf32>
      %cst_59 = arith.constant 0.000000e+00 : f32
      %120 = vector.broadcast %cst_59 : f32 to vector<8x128xf32>
      %121 = arith.subf %120, %119 : vector<8x128xf32>
      %122 = math.exp %121 : vector<8x128xf32>
      %cst_60 = arith.constant 1.000000e+00 : f32
      %123 = vector.broadcast %cst_60 : f32 to vector<8x128xf32>
      %124 = arith.addf %123, %122 : vector<8x128xf32>
      %cst_61 = arith.constant 1.000000e+00 : f32
      %125 = vector.broadcast %cst_61 : f32 to vector<8x128xf32>
      %126 = arith.divf %125, %124 : vector<8x128xf32>
      %cst_62 = arith.constant 0.000000e+00 : f32
      %127 = vector.broadcast %cst_62 : f32 to vector<8x128xf32>
      %128 = arith.cmpf oge, %118, %127 : vector<8x128xf32>
      %129 = arith.mulf %122, %126 : vector<8x128xf32>
      %130 = arith.select %128, %126, %129 : vector<8x128xi1>, vector<8x128xf32>
      %131 = arith.mulf %118, %130 : vector<8x128xf32>
      %132 = arith.addf %arg21, %131 : vector<8x128xf32>
      %133 = arith.addf %66, %82 : vector<56x128xf32>
      %134 = vector.extract_strided_slice %80 {offsets = [0, 128], sizes = [56, 128], strides = [1, 1]} : vector<56x256xf32> to vector<56x128xf32>
      %135 = arith.addf %133, %134 : vector<56x128xf32>
      %136 = arith.index_cast %arg20 : i32 to index
      %c0_63 = arith.constant 0 : index
      %c0_64 = arith.constant 0 : index
      %137 = vector.load %arg17[%136, %c0_63, %c0_64] : memref<4x1x128xf32, #tpu.memory_space<vmem>>, vector<1x1x128xf32>
      %138 = vector.shape_cast %137 : vector<1x1x128xf32> to vector<1x128xf32>
      %139 = arith.index_cast %arg20 : i32 to index
      %c0_65 = arith.constant 0 : index
      %c0_66 = arith.constant 0 : index
      %140 = vector.load %arg18[%139, %c0_65, %c0_66] : memref<4x1x128xf32, #tpu.memory_space<vmem>>, vector<1x1x128xf32>
      %141 = vector.shape_cast %140 : vector<1x1x128xf32> to vector<1x128xf32>
      %142 = arith.mulf %135, %135 : vector<56x128xf32>
      %143 = tpu.concatenate %135, %142 in 1 : vector<56x128xf32>, vector<56x128xf32> -> vector<56x256xf32>
      %cst_67 = arith.constant dense<0.000000e+00> : vector<256xf32>
      %144 = vector.multi_reduction <add>, %143, %cst_67 [0] : vector<56x256xf32> to vector<256xf32>
      %145 = vector.shape_cast %144 : vector<256xf32> to vector<1x256xf32>
      %cst_68 = arith.constant 0.0178571437 : f32
      %146 = vector.broadcast %cst_68 : f32 to vector<1x256xf32>
      %147 = arith.mulf %145, %146 : vector<1x256xf32>
      %148 = vector.extract_strided_slice %147 {offsets = [0, 0], sizes = [1, 128], strides = [1, 1]} : vector<1x256xf32> to vector<1x128xf32>
      %149 = vector.extract_strided_slice %147 {offsets = [0, 128], sizes = [1, 128], strides = [1, 1]} : vector<1x256xf32> to vector<1x128xf32>
      %150 = arith.mulf %148, %148 : vector<1x128xf32>
      %151 = arith.subf %149, %150 : vector<1x128xf32>
      %cst_69 = arith.constant 0.000000e+00 : f32
      %152 = vector.broadcast %cst_69 : f32 to vector<1x128xf32>
      %153 = arith.maximumf %151, %152 : vector<1x128xf32>
      %154 = vector.broadcast %148 : vector<1x128xf32> to vector<56x128xf32>
      %155 = arith.subf %135, %154 : vector<56x128xf32>
      %cst_70 = arith.constant 9.99999974E-6 : f32
      %156 = vector.broadcast %cst_70 : f32 to vector<1x128xf32>
      %157 = arith.addf %153, %156 : vector<1x128xf32>
      %158 = math.rsqrt %157 : vector<1x128xf32>
      %159 = vector.broadcast %158 : vector<1x128xf32> to vector<56x128xf32>
      %160 = arith.mulf %155, %159 : vector<56x128xf32>
      %161 = vector.broadcast %138 : vector<1x128xf32> to vector<56x128xf32>
      %162 = arith.mulf %160, %161 : vector<56x128xf32>
      %163 = vector.broadcast %141 : vector<1x128xf32> to vector<56x128xf32>
      %164 = arith.addf %162, %163 : vector<56x128xf32>
      %165 = math.absf %164 : vector<56x128xf32>
      %cst_71 = arith.constant 0.000000e+00 : f32
      %166 = vector.broadcast %cst_71 : f32 to vector<56x128xf32>
      %167 = arith.subf %166, %165 : vector<56x128xf32>
      %168 = math.exp %167 : vector<56x128xf32>
      %cst_72 = arith.constant 1.000000e+00 : f32
      %169 = vector.broadcast %cst_72 : f32 to vector<56x128xf32>
      %170 = arith.addf %169, %168 : vector<56x128xf32>
      %cst_73 = arith.constant 1.000000e+00 : f32
      %171 = vector.broadcast %cst_73 : f32 to vector<56x128xf32>
      %172 = arith.divf %171, %170 : vector<56x128xf32>
      %cst_74 = arith.constant 0.000000e+00 : f32
      %173 = vector.broadcast %cst_74 : f32 to vector<56x128xf32>
      %174 = arith.cmpf oge, %164, %173 : vector<56x128xf32>
      %175 = arith.mulf %168, %172 : vector<56x128xf32>
      %176 = arith.select %174, %172, %175 : vector<56x128xi1>, vector<56x128xf32>
      %177 = arith.mulf %164, %176 : vector<56x128xf32>
      %178 = arith.addf %arg22, %177 : vector<56x128xf32>
      scf.yield %132, %178 : vector<8x128xf32>, vector<56x128xf32>
    }
    %c4_i32_30 = arith.constant 4 : i32
    %c0_31 = arith.constant 0 : index
    %c0_32 = arith.constant 0 : index
    %c0_33 = arith.constant 0 : index
    %46 = vector.load %arg19[%c0_31, %c0_32, %c0_33] : memref<1x56x128xf32, #tpu.memory_space<vmem>>, vector<1x56x128xf32>
    %47 = vector.shape_cast %46 : vector<1x56x128xf32> to vector<56x128xf32>
    %48 = vector.shape_cast %45#1 : vector<56x128xf32> to vector<1x56x128xf32>
    tpu.vector_store %arg19[%c0_31, %c0_32, %c0_33], %48 {strides = array<i32>} : memref<1x56x128xf32, #tpu.memory_space<vmem>>, vector<1x56x128xf32>,
    return
  }
  func.func @transform_0(%arg0: i32) -> (i32, i32, i32) {
    %c0_i32 = arith.constant 0 : i32
    %c0_i32_0 = arith.constant 0 : i32
    %c0_i32_1 = arith.constant 0 : i32
    return %arg0, %c0_i32, %c0_i32_0 : i32, i32, i32
  }
  func.func @transform_1(%arg0: i32) -> (i32, i32, i32) {
    %c0_i32 = arith.constant 0 : i32
    %c0_i32_0 = arith.constant 0 : i32
    %c0_i32_1 = arith.constant 0 : i32
    return %arg0, %c0_i32, %c0_i32_0 : i32, i32, i32
  }
  func.func @transform_2(%arg0: i32) -> (i32, i32) {
    %c0_i32 = arith.constant 0 : i32
    %c0_i32_0 = arith.constant 0 : i32
    %c0_i32_1 = arith.constant 0 : i32
    return %c0_i32, %c0_i32_0 : i32, i32
  }
  func.func @transform_3(%arg0: i32) -> (i32, i32) {
    %c0_i32 = arith.constant 0 : i32
    %c0_i32_0 = arith.constant 0 : i32
    %c0_i32_1 = arith.constant 0 : i32
    return %c0_i32, %c0_i32_0 : i32, i32
  }
  func.func @transform_4(%arg0: i32) -> (i32, i32) {
    %c0_i32 = arith.constant 0 : i32
    %c0_i32_0 = arith.constant 0 : i32
    %c0_i32_1 = arith.constant 0 : i32
    return %c0_i32, %c0_i32_0 : i32, i32
  }
  func.func @transform_5(%arg0: i32) -> (i32, i32) {
    %c0_i32 = arith.constant 0 : i32
    %c0_i32_0 = arith.constant 0 : i32
    %c0_i32_1 = arith.constant 0 : i32
    return %c0_i32, %c0_i32_0 : i32, i32
  }
  func.func @transform_6(%arg0: i32) -> (i32, i32) {
    %c0_i32 = arith.constant 0 : i32
    %c0_i32_0 = arith.constant 0 : i32
    %c0_i32_1 = arith.constant 0 : i32
    return %c0_i32, %c0_i32_0 : i32, i32
  }
  func.func @transform_7(%arg0: i32) -> (i32, i32) {
    %c0_i32 = arith.constant 0 : i32
    %c0_i32_0 = arith.constant 0 : i32
    %c0_i32_1 = arith.constant 0 : i32
    return %c0_i32, %c0_i32_0 : i32, i32
  }
  func.func @transform_8(%arg0: i32) -> (i32, i32) {
    %c0_i32 = arith.constant 0 : i32
    %c0_i32_0 = arith.constant 0 : i32
    %c0_i32_1 = arith.constant 0 : i32
    return %c0_i32, %c0_i32_0 : i32, i32
  }
  func.func @transform_9(%arg0: i32) -> (i32, i32) {
    %c0_i32 = arith.constant 0 : i32
    %c0_i32_0 = arith.constant 0 : i32
    %c0_i32_1 = arith.constant 0 : i32
    return %c0_i32, %c0_i32_0 : i32, i32
  }
  func.func @transform_10(%arg0: i32) -> (i32, i32, i32) {
    %c0_i32 = arith.constant 0 : i32
    %c0_i32_0 = arith.constant 0 : i32
    %c0_i32_1 = arith.constant 0 : i32
    %c0_i32_2 = arith.constant 0 : i32
    return %c0_i32, %c0_i32_0, %c0_i32_1 : i32, i32, i32
  }
  func.func @transform_11(%arg0: i32) -> (i32, i32, i32) {
    %c0_i32 = arith.constant 0 : i32
    %c0_i32_0 = arith.constant 0 : i32
    %c0_i32_1 = arith.constant 0 : i32
    %c0_i32_2 = arith.constant 0 : i32
    return %c0_i32, %c0_i32_0, %c0_i32_1 : i32, i32, i32
  }
  func.func @transform_12(%arg0: i32) -> (i32, i32, i32) {
    %c0_i32 = arith.constant 0 : i32
    %c0_i32_0 = arith.constant 0 : i32
    %c0_i32_1 = arith.constant 0 : i32
    %c0_i32_2 = arith.constant 0 : i32
    return %c0_i32, %c0_i32_0, %c0_i32_1 : i32, i32, i32
  }
  func.func @transform_13(%arg0: i32) -> (i32, i32, i32) {
    %c0_i32 = arith.constant 0 : i32
    %c0_i32_0 = arith.constant 0 : i32
    %c0_i32_1 = arith.constant 0 : i32
    %c0_i32_2 = arith.constant 0 : i32
    return %c0_i32, %c0_i32_0, %c0_i32_1 : i32, i32, i32
  }
  func.func @transform_14(%arg0: i32) -> (i32, i32, i32) {
    %c0_i32 = arith.constant 0 : i32
    %c0_i32_0 = arith.constant 0 : i32
    %c0_i32_1 = arith.constant 0 : i32
    %c0_i32_2 = arith.constant 0 : i32
    return %c0_i32, %c0_i32_0, %c0_i32_1 : i32, i32, i32
  }
  func.func @transform_15(%arg0: i32) -> (i32, i32, i32) {
    %c0_i32 = arith.constant 0 : i32
    %c0_i32_0 = arith.constant 0 : i32
    %c0_i32_1 = arith.constant 0 : i32
    %c0_i32_2 = arith.constant 0 : i32
    return %c0_i32, %c0_i32_0, %c0_i32_1 : i32, i32, i32
  }
  func.func @transform_16(%arg0: i32) -> (i32, i32, i32) {
    %c0_i32 = arith.constant 0 : i32
    %c0_i32_0 = arith.constant 0 : i32
    %c0_i32_1 = arith.constant 0 : i32
    %c0_i32_2 = arith.constant 0 : i32
    return %c0_i32, %c0_i32_0, %c0_i32_1 : i32, i32, i32
  }
  func.func @transform_17(%arg0: i32) -> (i32, i32, i32) {
    %c0_i32 = arith.constant 0 : i32
    %c0_i32_0 = arith.constant 0 : i32
    %c0_i32_1 = arith.constant 0 : i32
    %c0_i32_2 = arith.constant 0 : i32
    return %c0_i32, %c0_i32_0, %c0_i32_1 : i32, i32, i32
  }
  func.func @transform_18(%arg0: i32) -> (i32, i32, i32) {
    %c0_i32 = arith.constant 0 : i32
    %c0_i32_0 = arith.constant 0 : i32
    %c0_i32_1 = arith.constant 0 : i32
    return %arg0, %c0_i32, %c0_i32_0 : i32, i32, i32
  }
}

</mosaic_0001>

<llo_original>
// kernel: tpu_custom_call.1
$region0: #{tpu_custom_call.1}
  #allocation0 [shape = 'u32[]', space=smem, size = 0x4, offset = 0x4, fixed_abs, tag = 'smem constant byte address 0x4 - core index']
  #allocation1 [shape = 'u32[144,128]{1,0:T(1,128)}', space=vmem, size = 0x12000, scoped, tag = 'internal scratch']
  %s0 = inlined_call_operand.vmem [shape: f32[2,8,8], index: 0, kind: input, shape index: {}]
  %s1 = inlined_call_operand.vmem [shape: f32[2,56,8], index: 1, kind: input, shape index: {}]
  %s2 = inlined_call_operand.vmem [shape: f32[56,8], index: 2, kind: input, shape index: {}]
  %s3 = inlined_call_operand.vmem [shape: f32[56,8], index: 3, kind: input, shape index: {}]
  %s4 = inlined_call_operand.vmem [shape: f32[8,56], index: 4, kind: input, shape index: {}]
  %s5 = inlined_call_operand.vmem [shape: f32[8,1], index: 5, kind: input, shape index: {}]
  %s6 = inlined_call_operand.vmem [shape: f32[8,128], index: 6, kind: input, shape index: {}]
  %s7 = inlined_call_operand.vmem [shape: f32[1,128], index: 7, kind: input, shape index: {}]
  %s8 = inlined_call_operand.vmem [shape: f32[8,128], index: 8, kind: input, shape index: {}]
  %s9 = inlined_call_operand.vmem [shape: f32[1,128], index: 9, kind: input, shape index: {}]
  %s10 = inlined_call_operand.hbm [shape: f32[4,128,512], index: 10, kind: input, shape index: {}]
  %s11 = inlined_call_operand.vmem [shape: f32[4,1,512], index: 11, kind: input, shape index: {}]
  %s12 = inlined_call_operand.hbm [shape: f32[4,128,128], index: 12, kind: input, shape index: {}]
  %s13 = inlined_call_operand.vmem [shape: f32[4,1,128], index: 13, kind: input, shape index: {}]
  %s14 = inlined_call_operand.vmem [shape: f32[4,1,128], index: 14, kind: input, shape index: {}]
  %s15 = inlined_call_operand.vmem [shape: f32[4,1,128], index: 15, kind: input, shape index: {}]
  %s16 = inlined_call_operand.vmem [shape: f32[4,1,128], index: 16, kind: input, shape index: {}]
  %s17 = inlined_call_operand.vmem [shape: f32[4,1,128], index: 17, kind: input, shape index: {}]
  %s18 = inlined_call_operand.hbm [shape: f32[2,56,128], index: 18, kind: output, shape index: {}]
  %s19 = sld [smem:[#allocation0]]
  $region120: #{tpu_custom_call.1} parent=0
    _
  %s21 = ssub.s32 1, %s19
  %s22 = scalar_select 0, %s21, %s19
  $region1: #{tpu_custom_call.1} parent=0
    #allocation2 [shape = 'u8[1048576]{0}', space=vmem, size = 0x100000, scoped, tag = 'input window, operand 10, single buffered']
    #allocation3 [shape = 's32[2]{0}', space=sflag, size = 0x8, scoped, tag = 'scoped memory for tpu_custom_call.1']
    #allocation4 [shape = 's32[2]{0}', space=sflag, size = 0x8, scoped, tag = 'scoped memory for tpu_custom_call.1']
    #allocation5 [shape = 'u8[262144]{0}', space=vmem, size = 0x40000, scoped, tag = 'input window, operand 12, single buffered']
    #allocation6 [shape = 's32[1]{0}', space=sflag, size = 0x4, scoped, tag = 'scoped memory for tpu_custom_call.1']
    #allocation7 [shape = 'u8[57344]{0}', space=vmem, size = 0xe000, scoped, tag = 'output window, operand 0']
    %23 = vsyncpa [#allocation3], 0
    %24 = vsyncpa [#allocation6], 0
    %25 = vsyncpa [#allocation4], 0
    %s26 = scalar_lea.sflag [#allocation4], 1
    %27 = vsyncpa %s26, 0
    loop: start=0, step=1, limit=4
    $region2: #{tpu_custom_call.1} parent=1 // loop_pre_header
      _
    $region3: #{tpu_custom_call.1} parent=1 // loop_header
      %s29 = sphi 0, %s33
      %p30 = scmp.ge.s32.totalorder %s29, 4
      %s39 = sphi 0, %s41
      %s42 = sphi 0, %s39
      %s43 = sphi 0, %s42
      %s59 = sphi 0, %s43
      %s65 = sphi 0, %s67
      %s68 = sphi 0, %s65
      %s69 = sphi 0, %s68
      %s85 = sphi 0, %s69
      %s89 = sphi 0, %s89
      %s91 = sphi 0, %s89
      %s92 = sphi 0, %s91
      %s106 = sphi 0, %s92
      %s110 = sphi 0, %s110
      %s112 = sphi 0, %s110
      %s113 = sphi 0, %s112
      %s127 = sphi 0, %s113
      %s131 = sphi 0, %s131
      %s133 = sphi 0, %s131
      %s134 = sphi 0, %s133
      %s148 = sphi 0, %s134
      %s152 = sphi 0, %s152
      %s154 = sphi 0, %s152
      %s155 = sphi 0, %s154
      %s169 = sphi 0, %s155
      %s173 = sphi 0, %s173
      %s175 = sphi 0, %s173
      %s176 = sphi 0, %s175
      %s190 = sphi 0, %s176
      %s194 = sphi 0, %s194
      %s196 = sphi 0, %s194
      %s197 = sphi 0, %s196
      %s211 = sphi 0, %s197
      %s215 = sphi 0, %s215
      %s217 = sphi 0, %s215
      %s218 = sphi 0, %s217
      %s232 = sphi 0, %s218
      %s236 = sphi 0, %s236
      %s238 = sphi 0, %s236
      %s239 = sphi 0, %s238
      %s253 = sphi 0, %s239
      %s257 = sphi 0, %s257
      %s259 = sphi 0, %s257
      %s260 = sphi 0, %s259
      %s274 = sphi 0, %s260
      %s278 = sphi 0, %s278
      %s280 = sphi 0, %s278
      %s281 = sphi 0, %s280
      %s295 = sphi 0, %s281
      %s299 = sphi 0, %s299
      %s301 = sphi 0, %s299
      %s302 = sphi 0, %s301
      %s316 = sphi 0, %s302
      %s320 = sphi 0, %s320
      %s322 = sphi 0, %s320
      %s323 = sphi 0, %s322
      %s337 = sphi 0, %s323
      %s341 = sphi 0, %s341
      %s343 = sphi 0, %s341
      %s344 = sphi 0, %s343
      %s358 = sphi 0, %s344
      %s362 = sphi 0, %s362
      %s364 = sphi 0, %s362
      %s365 = sphi 0, %s364
      %s379 = sphi 0, %s365
      %s383 = sphi 0, %s383
      %s385 = sphi 0, %s383
      %s386 = sphi 0, %s385
      %s400 = sphi 0, %s386
      %s404 = sphi 0, %s404
      %s406 = sphi 0, %s404
      %s407 = sphi 0, %s406
      %s421 = sphi 0, %s407
      %s427 = sphi 0, %s429
      %s430 = sphi 0, %s427
      %s431 = sphi 0, %s430
      %s447 = sphi 0, %s431
    $region4: #{tpu_custom_call.1} parent=1 // loop_header_branch
      %32 = sbr.rel (%p30) target = $region8
    $region5: #{tpu_custom_call.1} parent=1 // loop_body
      %s34 = ssub.s32 %s29, 1
      %s35 = ssub.s32 %s29, 2
      %s36 = sadd.s32 %s29, 1
      %s37 = ssub.s32 %s29, %s36
      %p38 = scmp.eq.s32.totalorder %s37, 0
      %s40 = sadd.s32 %s39, 1
      %s41 = scalar_select %p38, %s39, %s40
      %p44 = pneg %p38
      %p45 = scmp.eq.s32.totalorder %s29, 1
      %p46 = por %p44, %p45
      %p47 = scmp.ne.s32.totalorder %s39, %s42
      %p48 = scmp.eq.s32.totalorder %s29, 0
      %p49 = por %p47, %p48
      %p50 = scmp.ne.s32.totalorder %s39, %s42
      %p51 = scmp.eq.s32.totalorder %s34, 1
      %p52 = por %p50, %p51
      %p53 = scmp.ne.s32.totalorder %s42, %s43
      %p54 = scmp.eq.s32.totalorder %s34, 0
      %p55 = por %p53, %p54
      %p56 = scmp.ne.s32.totalorder %s42, %s43
      %p57 = scmp.eq.s32.totalorder %s35, 1
      %p58 = por %p56, %p57
      %p60 = scmp.ne.s32.totalorder %s43, %s59
      %p61 = scmp.eq.s32.totalorder %s35, 0
      %p62 = por %p60, %p61
      %s63 = ssub.s32 %s29, %s36
      %p64 = scmp.eq.s32.totalorder %s63, 0
      %s66 = sadd.s32 %s65, 1
      %s67 = scalar_select %p64, %s65, %s66
      %p70 = pneg %p64
      %p71 = scmp.eq.s32.totalorder %s29, 1
      %p72 = por %p70, %p71
      %p73 = scmp.ne.s32.totalorder %s65, %s68
      %p74 = scmp.eq.s32.totalorder %s29, 0
      %p75 = por %p73, %p74
      %p76 = scmp.ne.s32.totalorder %s65, %s68
      %p77 = scmp.eq.s32.totalorder %s34, 1
      %p78 = por %p76, %p77
      %p79 = scmp.ne.s32.totalorder %s68, %s69
      %p80 = scmp.eq.s32.totalorder %s34, 0
      %p81 = por %p79, %p80
      %p82 = scmp.ne.s32.totalorder %s68, %s69
      %p83 = scmp.eq.s32.totalorder %s35, 1
      %p84 = por %p82, %p83
      %p86 = scmp.ne.s32.totalorder %s69, %s85
      %p87 = scmp.eq.s32.totalorder %s35, 0
      %p88 = por %p86, %p87
      %s90 = sadd.s32 %s89, 1
      %p93 = scmp.eq.s32.totalorder %s29, 1
      %p94 = scmp.ne.s32.totalorder %s89, %s91
      %p95 = scmp.eq.s32.totalorder %s29, 0
      %p96 = por %p94, %p95
      %p97 = scmp.ne.s32.totalorder %s89, %s91
      %p98 = scmp.eq.s32.totalorder %s34, 1
      %p99 = por %p97, %p98
      %p100 = scmp.ne.s32.totalorder %s91, %s92
      %p101 = scmp.eq.s32.totalorder %s34, 0
      %p102 = por %p100, %p101
      %p103 = scmp.ne.s32.totalorder %s91, %s92
      %p104 = scmp.eq.s32.totalorder %s35, 1
      %p105 = por %p103, %p104
      %p107 = scmp.ne.s32.totalorder %s92, %s106
      %p108 = scmp.eq.s32.totalorder %s35, 0
      %p109 = por %p107, %p108
      %s111 = sadd.s32 %s110, 1
      %p114 = scmp.eq.s32.totalorder %s29, 1
      %p115 = scmp.ne.s32.totalorder %s110, %s112
      %p116 = scmp.eq.s32.totalorder %s29, 0
      %p117 = por %p115, %p116
      %p118 = scmp.ne.s32.totalorder %s110, %s112
      %p119 = scmp.eq.s32.totalorder %s34, 1
      %p120 = por %p118, %p119
      %p121 = scmp.ne.s32.totalorder %s112, %s113
      %p122 = scmp.eq.s32.totalorder %s34, 0
      %p123 = por %p121, %p122
      %p124 = scmp.ne.s32.totalorder %s112, %s113
      %p125 = scmp.eq.s32.totalorder %s35, 1
      %p126 = por %p124, %p125
      %p128 = scmp.ne.s32.totalorder %s113, %s127
      %p129 = scmp.eq.s32.totalorder %s35, 0
      %p130 = por %p128, %p129
      %s132 = sadd.s32 %s131, 1
      %p135 = scmp.eq.s32.totalorder %s29, 1
      %p136 = scmp.ne.s32.totalorder %s131, %s133
      %p137 = scmp.eq.s32.totalorder %s29, 0
      %p138 = por %p136, %p137
      %p139 = scmp.ne.s32.totalorder %s131, %s133
      %p140 = scmp.eq.s32.totalorder %s34, 1
      %p141 = por %p139, %p140
      %p142 = scmp.ne.s32.totalorder %s133, %s134
      %p143 = scmp.eq.s32.totalorder %s34, 0
      %p144 = por %p142, %p143
      %p145 = scmp.ne.s32.totalorder %s133, %s134
      %p146 = scmp.eq.s32.totalorder %s35, 1
      %p147 = por %p145, %p146
      %p149 = scmp.ne.s32.totalorder %s134, %s148
      %p150 = scmp.eq.s32.totalorder %s35, 0
      %p151 = por %p149, %p150
      %s153 = sadd.s32 %s152, 1
      %p156 = scmp.eq.s32.totalorder %s29, 1
      %p157 = scmp.ne.s32.totalorder %s152, %s154
      %p158 = scmp.eq.s32.totalorder %s29, 0
      %p159 = por %p157, %p158
      %p160 = scmp.ne.s32.totalorder %s152, %s154
      %p161 = scmp.eq.s32.totalorder %s34, 1
      %p162 = por %p160, %p161
      %p163 = scmp.ne.s32.totalorder %s154, %s155
      %p164 = scmp.eq.s32.totalorder %s34, 0
      %p165 = por %p163, %p164
      %p166 = scmp.ne.s32.totalorder %s154, %s155
      %p167 = scmp.eq.s32.totalorder %s35, 1
      %p168 = por %p166, %p167
      %p170 = scmp.ne.s32.totalorder %s155, %s169
      %p171 = scmp.eq.s32.totalorder %s35, 0
      %p172 = por %p170, %p171
      %s174 = sadd.s32 %s173, 1
      %p177 = scmp.eq.s32.totalorder %s29, 1
      %p178 = scmp.ne.s32.totalorder %s173, %s175
      %p179 = scmp.eq.s32.totalorder %s29, 0
      %p180 = por %p178, %p179
      %p181 = scmp.ne.s32.totalorder %s173, %s175
      %p182 = scmp.eq.s32.totalorder %s34, 1
      %p183 = por %p181, %p182
      %p184 = scmp.ne.s32.totalorder %s175, %s176
      %p185 = scmp.eq.s32.totalorder %s34, 0
      %p186 = por %p184, %p185
      %p187 = scmp.ne.s32.totalorder %s175, %s176
      %p188 = scmp.eq.s32.totalorder %s35, 1
      %p189 = por %p187, %p188
      %p191 = scmp.ne.s32.totalorder %s176, %s190
      %p192 = scmp.eq.s32.totalorder %s35, 0
      %p193 = por %p191, %p192
      %s195 = sadd.s32 %s194, 1
      %p198 = scmp.eq.s32.totalorder %s29, 1
      %p199 = scmp.ne.s32.totalorder %s194, %s196
      %p200 = scmp.eq.s32.totalorder %s29, 0
      %p201 = por %p199, %p200
      %p202 = scmp.ne.s32.totalorder %s194, %s196
      %p203 = scmp.eq.s32.totalorder %s34, 1
      %p204 = por %p202, %p203
      %p205 = scmp.ne.s32.totalorder %s196, %s197
      %p206 = scmp.eq.s32.totalorder %s34, 0
      %p207 = por %p205, %p206
      %p208 = scmp.ne.s32.totalorder %s196, %s197
      %p209 = scmp.eq.s32.totalorder %s35, 1
      %p210 = por %p208, %p209
      %p212 = scmp.ne.s32.totalorder %s197, %s211
      %p213 = scmp.eq.s32.totalorder %s35, 0
      %p214 = por %p212, %p213
      %s216 = sadd.s32 %s215, 1
      %p219 = scmp.eq.s32.totalorder %s29, 1
      %p220 = scmp.ne.s32.totalorder %s215, %s217
      %p221 = scmp.eq.s32.totalorder %s29, 0
      %p222 = por %p220, %p221
      %p223 = scmp.ne.s32.totalorder %s215, %s217
      %p224 = scmp.eq.s32.totalorder %s34, 1
      %p225 = por %p223, %p224
      %p226 = scmp.ne.s32.totalorder %s217, %s218
      %p227 = scmp.eq.s32.totalorder %s34, 0
      %p228 = por %p226, %p227
      %p229 = scmp.ne.s32.totalorder %s217, %s218
      %p230 = scmp.eq.s32.totalorder %s35, 1
      %p231 = por %p229, %p230
      %p233 = scmp.ne.s32.totalorder %s218, %s232
      %p234 = scmp.eq.s32.totalorder %s35, 0
      %p235 = por %p233, %p234
      %s237 = sadd.s32 %s236, 1
      %p240 = scmp.eq.s32.totalorder %s29, 1
      %p241 = scmp.ne.s32.totalorder %s236, %s238
      %p242 = scmp.eq.s32.totalorder %s29, 0
      %p243 = por %p241, %p242
      %p244 = scmp.ne.s32.totalorder %s236, %s238
      %p245 = scmp.eq.s32.totalorder %s34, 1
      %p246 = por %p244, %p245
      %p247 = scmp.ne.s32.totalorder %s238, %s239
      %p248 = scmp.eq.s32.totalorder %s34, 0
      %p249 = por %p247, %p248
      %p250 = scmp.ne.s32.totalorder %s238, %s239
      %p251 = scmp.eq.s32.totalorder %s35, 1
      %p252 = por %p250, %p251
      %p254 = scmp.ne.s32.totalorder %s239, %s253
      %p255 = scmp.eq.s32.totalorder %s35, 0
      %p256 = por %p254, %p255
      %s258 = sadd.s32 %s257, 1
      %p261 = scmp.eq.s32.totalorder %s29, 1
      %p262 = scmp.ne.s32.totalorder %s257, %s259
      %p263 = scmp.eq.s32.totalorder %s29, 0
      %p264 = por %p262, %p263
      %p265 = scmp.ne.s32.totalorder %s257, %s259
      %p266 = scmp.eq.s32.totalorder %s34, 1
      %p267 = por %p265, %p266
      %p268 = scmp.ne.s32.totalorder %s259, %s260
      %p269 = scmp.eq.s32.totalorder %s34, 0
      %p270 = por %p268, %p269
      %p271 = scmp.ne.s32.totalorder %s259, %s260
      %p272 = scmp.eq.s32.totalorder %s35, 1
      %p273 = por %p271, %p272
      %p275 = scmp.ne.s32.totalorder %s260, %s274
      %p276 = scmp.eq.s32.totalorder %s35, 0
      %p277 = por %p275, %p276
      %s279 = sadd.s32 %s278, 1
      %p282 = scmp.eq.s32.totalorder %s29, 1
      %p283 = scmp.ne.s32.totalorder %s278, %s280
      %p284 = scmp.eq.s32.totalorder %s29, 0
      %p285 = por %p283, %p284
      %p286 = scmp.ne.s32.totalorder %s278, %s280
      %p287 = scmp.eq.s32.totalorder %s34, 1
      %p288 = por %p286, %p287
      %p289 = scmp.ne.s32.totalorder %s280, %s281
      %p290 = scmp.eq.s32.totalorder %s34, 0
      %p291 = por %p289, %p290
      %p292 = scmp.ne.s32.totalorder %s280, %s281
      %p293 = scmp.eq.s32.totalorder %s35, 1
      %p294 = por %p292, %p293
      %p296 = scmp.ne.s32.totalorder %s281, %s295
      %p297 = scmp.eq.s32.totalorder %s35, 0
      %p298 = por %p296, %p297
      %s300 = sadd.s32 %s299, 1
      %p303 = scmp.eq.s32.totalorder %s29, 1
      %p304 = scmp.ne.s32.totalorder %s299, %s301
      %p305 = scmp.eq.s32.totalorder %s29, 0
      %p306 = por %p304, %p305
      %p307 = scmp.ne.s32.totalorder %s299, %s301
      %p308 = scmp.eq.s32.totalorder %s34, 1
      %p309 = por %p307, %p308
      %p310 = scmp.ne.s32.totalorder %s301, %s302
      %p311 = scmp.eq.s32.totalorder %s34, 0
      %p312 = por %p310, %p311
      %p313 = scmp.ne.s32.totalorder %s301, %s302
      %p314 = scmp.eq.s32.totalorder %s35, 1
      %p315 = por %p313, %p314
      %p317 = scmp.ne.s32.totalorder %s302, %s316
      %p318 = scmp.eq.s32.totalorder %s35, 0
      %p319 = por %p317, %p318
      %s321 = sadd.s32 %s320, 1
      %p324 = scmp.eq.s32.totalorder %s29, 1
      %p325 = scmp.ne.s32.totalorder %s320, %s322
      %p326 = scmp.eq.s32.totalorder %s29, 0
      %p327 = por %p325, %p326
      %p328 = scmp.ne.s32.totalorder %s320, %s322
      %p329 = scmp.eq.s32.totalorder %s34, 1
      %p330 = por %p328, %p329
      %p331 = scmp.ne.s32.totalorder %s322, %s323
      %p332 = scmp.eq.s32.totalorder %s34, 0
      %p333 = por %p331, %p332
      %p334 = scmp.ne.s32.totalorder %s322, %s323
      %p335 = scmp.eq.s32.totalorder %s35, 1
      %p336 = por %p334, %p335
      %p338 = scmp.ne.s32.totalorder %s323, %s337
      %p339 = scmp.eq.s32.totalorder %s35, 0
      %p340 = por %p338, %p339
      %s342 = sadd.s32 %s341, 1
      %p345 = scmp.eq.s32.totalorder %s29, 1
      %p346 = scmp.ne.s32.totalorder %s341, %s343
      %p347 = scmp.eq.s32.totalorder %s29, 0
      %p348 = por %p346, %p347
      %p349 = scmp.ne.s32.totalorder %s341, %s343
      %p350 = scmp.eq.s32.totalorder %s34, 1
      %p351 = por %p349, %p350
      %p352 = scmp.ne.s32.totalorder %s343, %s344
      %p353 = scmp.eq.s32.totalorder %s34, 0
      %p354 = por %p352, %p353
      %p355 = scmp.ne.s32.totalorder %s343, %s344
      %p356 = scmp.eq.s32.totalorder %s35, 1
      %p357 = por %p355, %p356
      %p359 = scmp.ne.s32.totalorder %s344, %s358
      %p360 = scmp.eq.s32.totalorder %s35, 0
      %p361 = por %p359, %p360
      %s363 = sadd.s32 %s362, 1
      %p366 = scmp.eq.s32.totalorder %s29, 1
      %p367 = scmp.ne.s32.totalorder %s362, %s364
      %p368 = scmp.eq.s32.totalorder %s29, 0
      %p369 = por %p367, %p368
      %p370 = scmp.ne.s32.totalorder %s362, %s364
      %p371 = scmp.eq.s32.totalorder %s34, 1
      %p372 = por %p370, %p371
      %p373 = scmp.ne.s32.totalorder %s364, %s365
      %p374 = scmp.eq.s32.totalorder %s34, 0
      %p375 = por %p373, %p374
      %p376 = scmp.ne.s32.totalorder %s364, %s365
      %p377 = scmp.eq.s32.totalorder %s35, 1
      %p378 = por %p376, %p377
      %p380 = scmp.ne.s32.totalorder %s365, %s379
      %p381 = scmp.eq.s32.totalorder %s35, 0
      %p382 = por %p380, %p381
      %s384 = sadd.s32 %s383, 1
      %p387 = scmp.eq.s32.totalorder %s29, 1
      %p388 = scmp.ne.s32.totalorder %s383, %s385
      %p389 = scmp.eq.s32.totalorder %s29, 0
      %p390 = por %p388, %p389
      %p391 = scmp.ne.s32.totalorder %s383, %s385
      %p392 = scmp.eq.s32.totalorder %s34, 1
      %p393 = por %p391, %p392
      %p394 = scmp.ne.s32.totalorder %s385, %s386
      %p395 = scmp.eq.s32.totalorder %s34, 0
      %p396 = por %p394, %p395
      %p397 = scmp.ne.s32.totalorder %s385, %s386
      %p398 = scmp.eq.s32.totalorder %s35, 1
      %p399 = por %p397, %p398
      %p401 = scmp.ne.s32.totalorder %s386, %s400
      %p402 = scmp.eq.s32.totalorder %s35, 0
      %p403 = por %p401, %p402
      %s405 = sadd.s32 %s404, 1
      %p408 = scmp.eq.s32.totalorder %s29, 1
      %p409 = scmp.ne.s32.totalorder %s404, %s406
      %p410 = scmp.eq.s32.totalorder %s29, 0
      %p411 = por %p409, %p410
      %p412 = scmp.ne.s32.totalorder %s404, %s406
      %p413 = scmp.eq.s32.totalorder %s34, 1
      %p414 = por %p412, %p413
      %p415 = scmp.ne.s32.totalorder %s406, %s407
      %p416 = scmp.eq.s32.totalorder %s34, 0
      %p417 = por %p415, %p416
      %p418 = scmp.ne.s32.totalorder %s406, %s407
      %p419 = scmp.eq.s32.totalorder %s35, 1
      %p420 = por %p418, %p419
      %p422 = scmp.ne.s32.totalorder %s407, %s421
      %p423 = scmp.eq.s32.totalorder %s35, 0
      %p424 = por %p422, %p423
      %s425 = ssub.s32 %s29, %s36
      %p426 = scmp.eq.s32.totalorder %s425, 0
      %s428 = sadd.s32 %s427, 1
      %s429 = scalar_select %p426, %s427, %s428
      %p432 = pneg %p426
      %p433 = scmp.eq.s32.totalorder %s29, 1
      %p434 = por %p432, %p433
      %p435 = scmp.ne.s32.totalorder %s427, %s430
      %p436 = scmp.eq.s32.totalorder %s29, 0
      %p437 = por %p435, %p436
      %p438 = scmp.ne.s32.totalorder %s427, %s430
      %p439 = scmp.eq.s32.totalorder %s34, 1
      %p440 = por %p438, %p439
      %p441 = scmp.ne.s32.totalorder %s430, %s431
      %p442 = scmp.eq.s32.totalorder %s34, 0
      %p443 = por %p441, %p442
      %p444 = scmp.ne.s32.totalorder %s430, %s431
      %p445 = scmp.eq.s32.totalorder %s35, 1
      %p446 = por %p444, %p445
      %p448 = scmp.ne.s32.totalorder %s431, %s447
      %p449 = scmp.eq.s32.totalorder %s35, 0
      %p450 = por %p448, %p449
      %p451 = scmp.le.s32.totalorder 1, %s29
      %p452 = scmp.lt.s32.totalorder %s29, 3
      %p453 = pnand %p451, %p452
      %p454 = pneg %p453
      // Predicated region
      $region9: #{tpu_custom_call.1} parent=5 // pred_check
        _
      $region10: #{tpu_custom_call.1} parent=5 // pred_check_branch
        %456 = sbr.rel (%p453) target = $region12
      $region11: #{tpu_custom_call.1} parent=5 // pred_region
        %s457 = ssub.s32 %s29, 1
        // Predicated region
        $region13: #{tpu_custom_call.1} parent=11 // pred_check
          %p458 = pneg %p102
        $region14: #{tpu_custom_call.1} parent=11 // pred_check_branch
          %460 = sbr.rel (%p458) target = $region16
        $region15: #{tpu_custom_call.1} parent=11 // pred_region
          _
        $region16: #{tpu_custom_call.1} parent=11 // pred_fallthru
          _
        // Predicated region
        $region17: #{tpu_custom_call.1} parent=11 // pred_check
          %p461 = pneg %p123
        $region18: #{tpu_custom_call.1} parent=11 // pred_check_branch
          %463 = sbr.rel (%p461) target = $region20
        $region19: #{tpu_custom_call.1} parent=11 // pred_region
          _
        $region20: #{tpu_custom_call.1} parent=11 // pred_fallthru
          _
        // Predicated region
        $region21: #{tpu_custom_call.1} parent=11 // pred_check
          %p464 = pneg %p144
        $region22: #{tpu_custom_call.1} parent=11 // pred_check_branch
          %466 = sbr.rel (%p464) target = $region24
        $region23: #{tpu_custom_call.1} parent=11 // pred_region
          _
        $region24: #{tpu_custom_call.1} parent=11 // pred_fallthru
          _
        // Predicated region
        $region25: #{tpu_custom_call.1} parent=11 // pred_check
          %p467 = pneg %p165
        $region26: #{tpu_custom_call.1} parent=11 // pred_check_branch
          %469 = sbr.rel (%p467) target = $region28
        $region27: #{tpu_custom_call.1} parent=11 // pred_region
          _
        $region28: #{tpu_custom_call.1} parent=11 // pred_fallthru
          _
        // Predicated region
        $region29: #{tpu_custom_call.1} parent=11 // pred_check
          %p470 = pneg %p186
        $region30: #{tpu_custom_call.1} parent=11 // pred_check_branch
          %472 = sbr.rel (%p470) target = $region32
        $region31: #{tpu_custom_call.1} parent=11 // pred_region
          _
        $region32: #{tpu_custom_call.1} parent=11 // pred_fallthru
          _
        // Predicated region
        $region33: #{tpu_custom_call.1} parent=11 // pred_check
          %p473 = pneg %p207
        $region34: #{tpu_custom_call.1} parent=11 // pred_check_branch
          %475 = sbr.rel (%p473) target = $region36
        $region35: #{tpu_custom_call.1} parent=11 // pred_region
          _
        $region36: #{tpu_custom_call.1} parent=11 // pred_fallthru
          _
        // Predicated region
        $region37: #{tpu_custom_call.1} parent=11 // pred_check
          %p476 = pneg %p228
        $region38: #{tpu_custom_call.1} parent=11 // pred_check_branch
          %478 = sbr.rel (%p476) target = $region40
        $region39: #{tpu_custom_call.1} parent=11 // pred_region
          _
        $region40: #{tpu_custom_call.1} parent=11 // pred_fallthru
          _
        // Predicated region
        $region41: #{tpu_custom_call.1} parent=11 // pred_check
          %p479 = pneg %p249
        $region42: #{tpu_custom_call.1} parent=11 // pred_check_branch
          %481 = sbr.rel (%p479) target = $region44
        $region43: #{tpu_custom_call.1} parent=11 // pred_region
          _
        $region44: #{tpu_custom_call.1} parent=11 // pred_fallthru
          _
        // Predicated region
        $region45: #{tpu_custom_call.1} parent=11 // pred_check
          %p482 = pneg %p270
        $region46: #{tpu_custom_call.1} parent=11 // pred_check_branch
          %484 = sbr.rel (%p482) target = $region48
        $region47: #{tpu_custom_call.1} parent=11 // pred_region
          %s486 = ssub.s32 32768, 32768
          %487 = vsyncadd [#allocation3], %s486
          %s488 = sshll.u32 [#allocation2], 4
          %s489 = int_to_ptr.vmem [resolvable:$true] %s488
          %494 = dma.hbm_to_vmem [thread:$0]  %s10, 32768, %s489, [#allocation3], 512, 512, 32
        $region48: #{tpu_custom_call.1} parent=11 // pred_fallthru
          _
        // Predicated region
        $region49: #{tpu_custom_call.1} parent=11 // pred_check
          %p495 = pneg %p291
        $region50: #{tpu_custom_call.1} parent=11 // pred_check_branch
          %497 = sbr.rel (%p495) target = $region52
        $region51: #{tpu_custom_call.1} parent=11 // pred_region
          _
        $region52: #{tpu_custom_call.1} parent=11 // pred_fallthru
          _
        // Predicated region
        $region53: #{tpu_custom_call.1} parent=11 // pred_check
          %p498 = pneg %p312
        $region54: #{tpu_custom_call.1} parent=11 // pred_check_branch
          %500 = sbr.rel (%p498) target = $region56
        $region55: #{tpu_custom_call.1} parent=11 // pred_region
          %s502 = ssub.s32 8192, 8192
          %503 = vsyncadd [#allocation6], %s502
          %s504 = sshll.u32 [#allocation5], 4
          %s505 = int_to_ptr.vmem [resolvable:$true] %s504
          %510 = dma.hbm_to_vmem [thread:$0]  %s12, 8192, %s505, [#allocation6], 128, 128, 8
        $region56: #{tpu_custom_call.1} parent=11 // pred_fallthru
          _
        // Predicated region
        $region57: #{tpu_custom_call.1} parent=11 // pred_check
          %p511 = pneg %p333
        $region58: #{tpu_custom_call.1} parent=11 // pred_check_branch
          %513 = sbr.rel (%p511) target = $region60
        $region59: #{tpu_custom_call.1} parent=11 // pred_region
          _
        $region60: #{tpu_custom_call.1} parent=11 // pred_fallthru
          _
        // Predicated region
        $region61: #{tpu_custom_call.1} parent=11 // pred_check
          %p514 = pneg %p354
        $region62: #{tpu_custom_call.1} parent=11 // pred_check_branch
          %516 = sbr.rel (%p514) target = $region64
        $region63: #{tpu_custom_call.1} parent=11 // pred_region
          _
        $region64: #{tpu_custom_call.1} parent=11 // pred_fallthru
          _
        // Predicated region
        $region65: #{tpu_custom_call.1} parent=11 // pred_check
          %p517 = pneg %p375
        $region66: #{tpu_custom_call.1} parent=11 // pred_check_branch
          %519 = sbr.rel (%p517) target = $region68
        $region67: #{tpu_custom_call.1} parent=11 // pred_region
          _
        $region68: #{tpu_custom_call.1} parent=11 // pred_fallthru
          _
        // Predicated region
        $region69: #{tpu_custom_call.1} parent=11 // pred_check
          %p520 = pneg %p396
        $region70: #{tpu_custom_call.1} parent=11 // pred_check_branch
          %522 = sbr.rel (%p520) target = $region72
        $region71: #{tpu_custom_call.1} parent=11 // pred_region
          _
        $region72: #{tpu_custom_call.1} parent=11 // pred_fallthru
          _
        // Predicated region
        $region73: #{tpu_custom_call.1} parent=11 // pred_check
          %p523 = pneg %p417
        $region74: #{tpu_custom_call.1} parent=11 // pred_check_branch
          %525 = sbr.rel (%p523) target = $region76
        $region75: #{tpu_custom_call.1} parent=11 // pred_region
          _
        $region76: #{tpu_custom_call.1} parent=11 // pred_fallthru
          _
      $region12: #{tpu_custom_call.1} parent=5 // pred_fallthru
        _
      %p526 = scmp.lt.s32.totalorder %s29, 2
      // Predicated region
      $region77: #{tpu_custom_call.1} parent=5 // pred_check
        %p527 = pneg %p526
      $region78: #{tpu_custom_call.1} parent=5 // pred_check_branch
        %529 = sbr.rel (%p527) target = $region80
      $region79: #{tpu_custom_call.1} parent=5 // pred_region
        // Predicated region
        $region81: #{tpu_custom_call.1} parent=79 // pred_check
          %p530 = pneg %p49
        $region82: #{tpu_custom_call.1} parent=79 // pred_check_branch
          %532 = sbr.rel (%p530) target = $region84
        $region83: #{tpu_custom_call.1} parent=79 // pred_region
          %p533 = scmp.lt.s32.totalorder %s29, 1
          %s534 = scalar_select %p533, %s29, 1
          %s535 = smul.addr %s534, 8
          %s536 = scalar_lea.vmem %s0, %s535
        $region84: #{tpu_custom_call.1} parent=79 // pred_fallthru
          _
        // Predicated region
        $region85: #{tpu_custom_call.1} parent=79 // pred_check
          %p537 = pneg %p75
        $region86: #{tpu_custom_call.1} parent=79 // pred_check_branch
          %539 = sbr.rel (%p537) target = $region88
        $region87: #{tpu_custom_call.1} parent=79 // pred_region
          %p540 = scmp.lt.s32.totalorder %s29, 1
          %s541 = scalar_select %p540, %s29, 1
          %s542 = smul.addr %s541, 7
          %s543 = smul.addr %s542, 8
          %s544 = scalar_lea.vmem %s1, %s543
        $region88: #{tpu_custom_call.1} parent=79 // pred_fallthru
          _
      $region80: #{tpu_custom_call.1} parent=5 // pred_fallthru
        _
      %p545 = scmp.le.s32.totalorder 1, %s29
      %p546 = scmp.lt.s32.totalorder %s29, 3
      %p547 = pnand %p545, %p546
      %p548 = pneg %p547
      // Predicated region
      $region89: #{tpu_custom_call.1} parent=5 // pred_check
        _
      $region90: #{tpu_custom_call.1} parent=5 // pred_check_branch
        %550 = sbr.rel (%p547) target = $region92
      $region91: #{tpu_custom_call.1} parent=5 // pred_region
        %s551 = ssub.s32 %s29, 1
        // Predicated region
        $region93: #{tpu_custom_call.1} parent=91 // pred_check
          %p552 = pneg %p270
        $region94: #{tpu_custom_call.1} parent=91 // pred_check_branch
          %554 = sbr.rel (%p552) target = $region96
        $region95: #{tpu_custom_call.1} parent=91 // pred_region
          %555 = dma.done [#allocation3], 32768
        $region96: #{tpu_custom_call.1} parent=91 // pred_fallthru
          _
        // Predicated region
        $region97: #{tpu_custom_call.1} parent=91 // pred_check
          %p556 = pneg %p312
        $region98: #{tpu_custom_call.1} parent=91 // pred_check_branch
          %558 = sbr.rel (%p556) target = $region100
        $region99: #{tpu_custom_call.1} parent=91 // pred_region
          %559 = dma.done [#allocation6], 8192
        $region100: #{tpu_custom_call.1} parent=91 // pred_fallthru
          _
        %p560 = scmp.lt.s32.totalorder %s34, 1
        %s561 = scalar_select %p560, %s34, 1
        %s562 = smul.addr %s561, 8
        %s563 = scalar_lea.vmem %s0, %s562
        %p564 = pneg %p55
        %p565 = pneg %p52
        %p566 = scmp.lt.s32.totalorder %s34, 1
        %s567 = scalar_select %p566, %s34, 1
        %s568 = smul.addr %s567, 7
        %s569 = smul.addr %s568, 8
        %s570 = scalar_lea.vmem %s1, %s569
        %p571 = pneg %p81
        %p572 = pneg %p78
        %p573 = pneg %p102
        %p574 = pneg %p99
        %p575 = pneg %p123
        %p576 = pneg %p120
        %p577 = pneg %p144
        %p578 = pneg %p141
        %p579 = pneg %p165
        %p580 = pneg %p162
        %p581 = pneg %p186
        %p582 = pneg %p183
        %p583 = pneg %p207
        %p584 = pneg %p204
        %p585 = pneg %p228
        %p586 = pneg %p225
        %p587 = pneg %p249
        %p588 = pneg %p246
        %p589 = pneg %p270
        %p590 = pneg %p267
        %p591 = pneg %p291
        %p592 = pneg %p288
        %p593 = pneg %p312
        %p594 = pneg %p309
        %p595 = pneg %p333
        %p596 = pneg %p330
        %p597 = pneg %p354
        %p598 = pneg %p351
        %p599 = pneg %p375
        %p600 = pneg %p372
        %p601 = pneg %p396
        %p602 = pneg %p393
        %p603 = pneg %p417
        %p604 = pneg %p414
        %p605 = pneg %p443
        %p606 = pneg %p440
        %s607 = sand.u32 %s430, 1
        %s608 = scalar_lea.sflag [#allocation4], %s607
        %s609 = sand.u32 %s430, 1
        %s610 = smul.addr %s609, 56
        %s611 = scalar_lea.vmem [#allocation7], %s610
        %p612 = scmp.lt.s32.totalorder %s34, 1
        %s613 = scalar_select %p612, %s34, 1
        %s614 = smul.addr %s613, 8
        %s615 = scalar_lea.vmem %s0, %s614
        %p616 = scmp.lt.s32.totalorder %s34, 1
        %s617 = scalar_select %p616, %s34, 1
        %s618 = smul.addr %s617, 7
        %s619 = smul.addr %s618, 8
        %s620 = scalar_lea.vmem %s1, %s619
        %v621 = vld [vmem:[%s2] sm:$0xff]
        %v622 = vld [vmem:[%s2 + $0x8] sm:$0xff]
        %v623 = vld [vmem:[%s2 + $0x10] sm:$0xff]
        %v624 = vld [vmem:[%s2 + $0x18] sm:$0xff]
        %v625 = vld [vmem:[%s2 + $0x20] sm:$0xff]
        %v626 = vld [vmem:[%s2 + $0x28] sm:$0xff]
        %v627 = vld [vmem:[%s2 + $0x30] sm:$0xff]
        %v628 = vld [vmem:[%s3] sm:$0xff]
        %v629 = vld [vmem:[%s3 + $0x8] sm:$0xff]
        %v630 = vld [vmem:[%s3 + $0x10] sm:$0xff]
        %v631 = vld [vmem:[%s3 + $0x18] sm:$0xff]
        %v632 = vld [vmem:[%s3 + $0x20] sm:$0xff]
        %v633 = vld [vmem:[%s3 + $0x28] sm:$0xff]
        %v634 = vld [vmem:[%s3 + $0x30] sm:$0xff]
        %v635 = vld [vmem:[%s4] sm:$0xff]
        %v636 = vld [vmem:[%s5] sm:$0xff]
        %v637 = vld [vmem:[%s615] sm:$0xff]
        %v638 = vld [vmem:[%s6] sm:$0xff]
        %v639 = vld [vmem:[%s7] sm:$0x1]
        %v641 = vlaneseq
        %v642 = vshrl.u32 %v641, 7
        %v643 = vsub.s32 0, %v642
        %v644 = vrot.slane %v639, %v643
        %vm646 = vcmask 64512
        %v648 = vsel %vm646, %v637, 0
        %650 = vmatprep.subr.mxu0 0.0
        %v651 = vand.u32 %v638, 4294901760
        %652 = vmatpush1.msra.mxu0 %v651
        %653 = vmatprep.subr.mxu0 0.0
        %654 = vmatpush1.msra.mxu0 0.0
        %655 = vmatprep.subr.mxu0 0.0
        %656 = vmatpush1.msra.mxu0 0.0
        %657 = vmatprep.subr.mxu0 0.0
        %658 = vmatpush1.msra.mxu0 0.0
        %659 = vmatprep.subr.mxu0 0.0
        %660 = vmatpush1.msra.mxu0 0.0
        %661 = vmatprep.subr.mxu0 0.0
        %662 = vmatpush1.msra.mxu0 0.0
        %663 = vmatprep.subr.mxu0 0.0
        %664 = vmatpush1.msra.mxu0 0.0
        %665 = vmatprep.subr.mxu0 0.0
        %666 = vmatpush1.msra.mxu0 0.0
        %667 = vmatprep.subr.mxu0 0.0
        %668 = vmatpush1.msra.mxu0 0.0
        %669 = vmatprep.subr.mxu0 0.0
        %670 = vmatpush1.msra.mxu0 0.0
        %671 = vmatprep.subr.mxu0 0.0
        %672 = vmatpush1.msra.mxu0 0.0
        %673 = vmatprep.subr.mxu0 0.0
        %674 = vmatpush1.msra.mxu0 0.0
        %675 = vmatprep.subr.mxu0 0.0
        %676 = vmatpush1.msra.mxu0 0.0
        %677 = vmatprep.subr.mxu0 0.0
        %678 = vmatpush1.msra.mxu0 0.0
        %679 = vmatprep.subr.mxu0 0.0
        %680 = vmatpush1.msra.mxu0 0.0
        %681 = vmatprep.subr.mxu0 0.0
        %682 = vmatpush1.msra.mxu0 0.0
        %683 = vmatprep.subr.mxu0 0.0
        %684 = vmatpush1.msra.mxu0 0.0
        %685 = vmatprep.subr.mxu0 0.0
        %686 = vmatpush1.msra.mxu0 0.0
        %687 = vmatprep.subr.mxu0 0.0
        %688 = vmatpush1.msra.mxu0 0.0
        %689 = vmatprep.subr.mxu0 0.0
        %690 = vmatpush1.msra.mxu0 0.0
        %691 = vmatprep.subr.mxu0 0.0
        %692 = vmatpush1.msra.mxu0 0.0
        %693 = vmatprep.subr.mxu0 0.0
        %694 = vmatpush1.msra.mxu0 0.0
        %695 = vmatprep.subr.mxu0 0.0
        %696 = vmatpush1.msra.mxu0 0.0
        %697 = vmatprep.subr.mxu0 0.0
        %698 = vmatpush1.msra.mxu0 0.0
        %699 = vmatprep.subr.mxu0 0.0
        %700 = vmatpush1.msra.mxu0 0.0
        %701 = vmatprep.subr.mxu0 0.0
        %702 = vmatpush1.msra.mxu0 0.0
        %703 = vmatprep.subr.mxu0 0.0
        %704 = vmatpush1.msra.mxu0 0.0
        %705 = vmatprep.subr.mxu0 0.0
        %706 = vmatpush1.msra.mxu0 0.0
        %707 = vmatprep.subr.mxu0 0.0
        %708 = vmatpush1.msra.mxu0 0.0
        %709 = vmatprep.subr.mxu0 0.0
        %710 = vmatpush1.msra.mxu0 0.0
        %711 = vmatprep.subr.mxu0 0.0
        %712 = vmatpush1.msra.mxu0 0.0
        %713 = vmatprep.subr.mxu0 0.0
        %714 = vmatpush1.msra.mxu0 0.0
        %715 = vmatprep.mubr.f32.mxu0 0.0
        %v716 = vand.u32 %v648, 4294901760
        %v717 = vsub.f32 %v648, %v716
        %v718 = vand.u32 %v717, 4294901760
        %v719 = vsub.f32 %v717, %v718
        %v720 = vand.u32 %v719, 4294901760
        %721 = vmatmul.mubr.f32.gmra.mrb[0].mxu0 %v720
        %v722 = vpop.f32.mrb[0].mxu0
        %v723 = vadd.f32 %v644, %v722
        %v724 = vpop.f32.mrb[0].mxu0
        %725 = vdwg.mxu0
        %726 = vmatprep.subr.mxu0 0.0
        %v727 = vand.u32 %v638, 4294901760
        %v728 = vsub.f32 %v638, %v727
        %v729 = vand.u32 %v728, 4294901760
        %v730 = vsub.f32 %v728, %v729
        %v731 = vand.u32 %v730, 4294901760
        %732 = vmatpush1.msra.mxu0 %v731
        %733 = vmatprep.subr.mxu0 0.0
        %734 = vmatpush1.msra.mxu0 0.0
        %735 = vmatprep.subr.mxu0 0.0
        %736 = vmatpush1.msra.mxu0 0.0
        %737 = vmatprep.subr.mxu0 0.0
        %738 = vmatpush1.msra.mxu0 0.0
        %739 = vmatprep.subr.mxu0 0.0
        %740 = vmatpush1.msra.mxu0 0.0
        %741 = vmatprep.subr.mxu0 0.0
        %742 = vmatpush1.msra.mxu0 0.0
        %743 = vmatprep.subr.mxu0 0.0
        %744 = vmatpush1.msra.mxu0 0.0
        %745 = vmatprep.subr.mxu0 0.0
        %746 = vmatpush1.msra.mxu0 0.0
        %747 = vmatprep.subr.mxu0 0.0
        %748 = vmatpush1.msra.mxu0 0.0
        %749 = vmatprep.subr.mxu0 0.0
        %750 = vmatpush1.msra.mxu0 0.0
        %751 = vmatprep.subr.mxu0 0.0
        %752 = vmatpush1.msra.mxu0 0.0
        %753 = vmatprep.subr.mxu0 0.0
        %754 = vmatpush1.msra.mxu0 0.0
        %755 = vmatprep.subr.mxu0 0.0
        %756 = vmatpush1.msra.mxu0 0.0
        %757 = vmatprep.subr.mxu0 0.0
        %758 = vmatpush1.msra.mxu0 0.0
        %759 = vmatprep.subr.mxu0 0.0
        %760 = vmatpush1.msra.mxu0 0.0
        %761 = vmatprep.subr.mxu0 0.0
        %762 = vmatpush1.msra.mxu0 0.0
        %763 = vmatprep.subr.mxu0 0.0
        %764 = vmatpush1.msra.mxu0 0.0
        %765 = vmatprep.subr.mxu0 0.0
        %766 = vmatpush1.msra.mxu0 0.0
        %767 = vmatprep.subr.mxu0 0.0
        %768 = vmatpush1.msra.mxu0 0.0
        %769 = vmatprep.subr.mxu0 0.0
        %770 = vmatpush1.msra.mxu0 0.0
        %771 = vmatprep.subr.mxu0 0.0
        %772 = vmatpush1.msra.mxu0 0.0
        %773 = vmatprep.subr.mxu0 0.0
        %774 = vmatpush1.msra.mxu0 0.0
        %775 = vmatprep.subr.mxu0 0.0
        %776 = vmatpush1.msra.mxu0 0.0
        %777 = vmatprep.subr.mxu0 0.0
        %778 = vmatpush1.msra.mxu0 0.0
        %779 = vmatprep.subr.mxu0 0.0
        %780 = vmatpush1.msra.mxu0 0.0
        %781 = vmatprep.subr.mxu0 0.0
        %782 = vmatpush1.msra.mxu0 0.0
        %783 = vmatprep.subr.mxu0 0.0
        %784 = vmatpush1.msra.mxu0 0.0
        %785 = vmatprep.subr.mxu0 0.0
        %786 = vmatpush1.msra.mxu0 0.0
        %787 = vmatprep.subr.mxu0 0.0
        %788 = vmatpush1.msra.mxu0 0.0
        %789 = vmatprep.subr.mxu0 0.0
        %790 = vmatpush1.msra.mxu0 0.0
        %791 = vmatprep.subr.mxu0 0.0
        %792 = vmatpush1.msra.mxu0 0.0
        %793 = vmatprep.subr.mxu0 0.0
        %794 = vmatpush1.msra.mxu0 0.0
        %795 = vmatprep.mubr.f32.mxu0 0.0
        %v796 = vand.u32 %v648, 4294901760
        %797 = vmatmul.mubr.f32.gmra.mrb[0].mxu0 %v796
        %v798 = vpop.f32.mrb[0].mxu0
        %v799 = vadd.f32 %v723, %v798
        %v800 = vpop.f32.mrb[0].mxu0
        %801 = vdwg.mxu0
        %802 = vmatprep.subr.mxu0 0.0
        %v803 = vand.u32 %v638, 4294901760
        %v804 = vsub.f32 %v638, %v803
        %805 = vmatpush1.msra.mxu0 %v804
        %806 = vmatprep.subr.mxu0 0.0
        %807 = vmatpush1.msra.mxu0 0.0
        %808 = vmatprep.subr.mxu0 0.0
        %809 = vmatpush1.msra.mxu0 0.0
        %810 = vmatprep.subr.mxu0 0.0
        %811 = vmatpush1.msra.mxu0 0.0
        %812 = vmatprep.subr.mxu0 0.0
        %813 = vmatpush1.msra.mxu0 0.0
        %814 = vmatprep.subr.mxu0 0.0
        %815 = vmatpush1.msra.mxu0 0.0
        %816 = vmatprep.subr.mxu0 0.0
        %817 = vmatpush1.msra.mxu0 0.0
        %818 = vmatprep.subr.mxu0 0.0
        %819 = vmatpush1.msra.mxu0 0.0
        %820 = vmatprep.subr.mxu0 0.0
        %821 = vmatpush1.msra.mxu0 0.0
        %822 = vmatprep.subr.mxu0 0.0
        %823 = vmatpush1.msra.mxu0 0.0
        %824 = vmatprep.subr.mxu0 0.0
        %825 = vmatpush1.msra.mxu0 0.0
        %826 = vmatprep.subr.mxu0 0.0
        %827 = vmatpush1.msra.mxu0 0.0
        %828 = vmatprep.subr.mxu0 0.0
        %829 = vmatpush1.msra.mxu0 0.0
        %830 = vmatprep.subr.mxu0 0.0
        %831 = vmatpush1.msra.mxu0 0.0
        %832 = vmatprep.subr.mxu0 0.0
        %833 = vmatpush1.msra.mxu0 0.0
        %834 = vmatprep.subr.mxu0 0.0
        %835 = vmatpush1.msra.mxu0 0.0
        %836 = vmatprep.subr.mxu0 0.0
        %837 = vmatpush1.msra.mxu0 0.0
        %838 = vmatprep.subr.mxu0 0.0
        %839 = vmatpush1.msra.mxu0 0.0
        %840 = vmatprep.subr.mxu0 0.0
        %841 = vmatpush1.msra.mxu0 0.0
        %842 = vmatprep.subr.mxu0 0.0
        %843 = vmatpush1.msra.mxu0 0.0
        %844 = vmatprep.subr.mxu0 0.0
        %845 = vmatpush1.msra.mxu0 0.0
        %846 = vmatprep.subr.mxu0 0.0
        %847 = vmatpush1.msra.mxu0 0.0
        %848 = vmatprep.subr.mxu0 0.0
        %849 = vmatpush1.msra.mxu0 0.0
        %850 = vmatprep.subr.mxu0 0.0
        %851 = vmatpush1.msra.mxu0 0.0
        %852 = vmatprep.subr.mxu0 0.0
        %853 = vmatpush1.msra.mxu0 0.0
        %854 = vmatprep.subr.mxu0 0.0
        %855 = vmatpush1.msra.mxu0 0.0
        %856 = vmatprep.subr.mxu0 0.0
        %857 = vmatpush1.msra.mxu0 0.0
        %858 = vmatprep.subr.mxu0 0.0
        %859 = vmatpush1.msra.mxu0 0.0
        %860 = vmatprep.subr.mxu0 0.0
        %861 = vmatpush1.msra.mxu0 0.0
        %862 = vmatprep.subr.mxu0 0.0
        %863 = vmatpush1.msra.mxu0 0.0
        %864 = vmatprep.subr.mxu0 0.0
        %865 = vmatpush1.msra.mxu0 0.0
        %866 = vmatprep.subr.mxu0 0.0
        %867 = vmatpush1.msra.mxu0 0.0
        %868 = vmatprep.mubr.f32.mxu0 0.0
        %v869 = vand.u32 %v648, 4294901760
        %v870 = vsub.f32 %v648, %v869
        %871 = vmatmul.mubr.f32.gmra.mrb[0].mxu0 %v870
        %v872 = vpop.f32.mrb[0].mxu0
        %v873 = vadd.f32 %v799, %v872
        %v874 = vpop.f32.mrb[0].mxu0
        %875 = vdwg.mxu0
        %876 = vmatprep.subr.mxu0 0.0
        %v877 = vand.u32 %v638, 4294901760
        %878 = vmatpush1.msra.mxu0 %v877
        %879 = vmatprep.subr.mxu0 0.0
        %880 = vmatpush1.msra.mxu0 0.0
        %881 = vmatprep.subr.mxu0 0.0
        %882 = vmatpush1.msra.mxu0 0.0
        %883 = vmatprep.subr.mxu0 0.0
        %884 = vmatpush1.msra.mxu0 0.0
        %885 = vmatprep.subr.mxu0 0.0
        %886 = vmatpush1.msra.mxu0 0.0
        %887 = vmatprep.subr.mxu0 0.0
        %888 = vmatpush1.msra.mxu0 0.0
        %889 = vmatprep.subr.mxu0 0.0
        %890 = vmatpush1.msra.mxu0 0.0
        %891 = vmatprep.subr.mxu0 0.0
        %892 = vmatpush1.msra.mxu0 0.0
        %893 = vmatprep.subr.mxu0 0.0
        %894 = vmatpush1.msra.mxu0 0.0
        %895 = vmatprep.subr.mxu0 0.0
        %896 = vmatpush1.msra.mxu0 0.0
        %897 = vmatprep.subr.mxu0 0.0
        %898 = vmatpush1.msra.mxu0 0.0
        %899 = vmatprep.subr.mxu0 0.0
        %900 = vmatpush1.msra.mxu0 0.0
        %901 = vmatprep.subr.mxu0 0.0
        %902 = vmatpush1.msra.mxu0 0.0
        %903 = vmatprep.subr.mxu0 0.0
        %904 = vmatpush1.msra.mxu0 0.0
        %905 = vmatprep.subr.mxu0 0.0
        %906 = vmatpush1.msra.mxu0 0.0
        %907 = vmatprep.subr.mxu0 0.0
        %908 = vmatpush1.msra.mxu0 0.0
        %909 = vmatprep.subr.mxu0 0.0
        %910 = vmatpush1.msra.mxu0 0.0
        %911 = vmatprep.subr.mxu0 0.0
        %912 = vmatpush1.msra.mxu0 0.0
        %913 = vmatprep.subr.mxu0 0.0
        %914 = vmatpush1.msra.mxu0 0.0
        %915 = vmatprep.subr.mxu0 0.0
        %916 = vmatpush1.msra.mxu0 0.0
        %917 = vmatprep.subr.mxu0 0.0
        %918 = vmatpush1.msra.mxu0 0.0
        %919 = vmatprep.subr.mxu0 0.0
        %920 = vmatpush1.msra.mxu0 0.0
        %921 = vmatprep.subr.mxu0 0.0
        %922 = vmatpush1.msra.mxu0 0.0
        %923 = vmatprep.subr.mxu0 0.0
        %924 = vmatpush1.msra.mxu0 0.0
        %925 = vmatprep.subr.mxu0 0.0
        %926 = vmatpush1.msra.mxu0 0.0
        %927 = vmatprep.subr.mxu0 0.0
        %928 = vmatpush1.msra.mxu0 0.0
        %929 = vmatprep.subr.mxu0 0.0
        %930 = vmatpush1.msra.mxu0 0.0
        %931 = vmatprep.subr.mxu0 0.0
        %932 = vmatpush1.msra.mxu0 0.0
        %933 = vmatprep.subr.mxu0 0.0
        %934 = vmatpush1.msra.mxu0 0.0
        %935 = vmatprep.subr.mxu0 0.0
        %936 = vmatpush1.msra.mxu0 0.0
        %937 = vmatprep.subr.mxu0 0.0
        %938 = vmatpush1.msra.mxu0 0.0
        %939 = vmatprep.subr.mxu0 0.0
        %940 = vmatpush1.msra.mxu0 0.0
        %941 = vmatprep.mubr.f32.mxu0 0.0
        %v942 = vand.u32 %v648, 4294901760
        %v943 = vsub.f32 %v648, %v942
        %v944 = vand.u32 %v943, 4294901760
        %945 = vmatmul.mubr.f32.gmra.mrb[0].mxu0 %v944
        %v946 = vpop.f32.mrb[0].mxu0
        %v947 = vadd.f32 %v873, %v946
        %v948 = vpop.f32.mrb[0].mxu0
        %949 = vdwg.mxu0
        %950 = vmatprep.subr.mxu0 0.0
        %v951 = vand.u32 %v638, 4294901760
        %v952 = vsub.f32 %v638, %v951
        %v953 = vand.u32 %v952, 4294901760
        %954 = vmatpush1.msra.mxu0 %v953
        %955 = vmatprep.subr.mxu0 0.0
        %956 = vmatpush1.msra.mxu0 0.0
        %957 = vmatprep.subr.mxu0 0.0
        %958 = vmatpush1.msra.mxu0 0.0
        %959 = vmatprep.subr.mxu0 0.0
        %960 = vmatpush1.msra.mxu0 0.0
        %961 = vmatprep.subr.mxu0 0.0
        %962 = vmatpush1.msra.mxu0 0.0
        %963 = vmatprep.subr.mxu0 0.0
        %964 = vmatpush1.msra.mxu0 0.0
        %965 = vmatprep.subr.mxu0 0.0
        %966 = vmatpush1.msra.mxu0 0.0
        %967 = vmatprep.subr.mxu0 0.0
        %968 = vmatpush1.msra.mxu0 0.0
        %969 = vmatprep.subr.mxu0 0.0
        %970 = vmatpush1.msra.mxu0 0.0
        %971 = vmatprep.subr.mxu0 0.0
        %972 = vmatpush1.msra.mxu0 0.0
        %973 = vmatprep.subr.mxu0 0.0
        %974 = vmatpush1.msra.mxu0 0.0
        %975 = vmatprep.subr.mxu0 0.0
        %976 = vmatpush1.msra.mxu0 0.0
        %977 = vmatprep.subr.mxu0 0.0
        %978 = vmatpush1.msra.mxu0 0.0
        %979 = vmatprep.subr.mxu0 0.0
        %980 = vmatpush1.msra.mxu0 0.0
        %981 = vmatprep.subr.mxu0 0.0
        %982 = vmatpush1.msra.mxu0 0.0
        %983 = vmatprep.subr.mxu0 0.0
        %984 = vmatpush1.msra.mxu0 0.0
        %985 = vmatprep.subr.mxu0 0.0
        %986 = vmatpush1.msra.mxu0 0.0
        %987 = vmatprep.subr.mxu0 0.0
        %988 = vmatpush1.msra.mxu0 0.0
        %989 = vmatprep.subr.mxu0 0.0
        %990 = vmatpush1.msra.mxu0 0.0
        %991 = vmatprep.subr.mxu0 0.0
        %992 = vmatpush1.msra.mxu0 0.0
        %993 = vmatprep.subr.mxu0 0.0
        %994 = vmatpush1.msra.mxu0 0.0
        %995 = vmatprep.subr.mxu0 0.0
        %996 = vmatpush1.msra.mxu0 0.0
        %997 = vmatprep.subr.mxu0 0.0
        %998 = vmatpush1.msra.mxu0 0.0
        %999 = vmatprep.subr.mxu0 0.0
        %1000 = vmatpush1.msra.mxu0 0.0
        %1001 = vmatprep.subr.mxu0 0.0
        %1002 = vmatpush1.msra.mxu0 0.0
        %1003 = vmatprep.subr.mxu0 0.0
        %1004 = vmatpush1.msra.mxu0 0.0
        %1005 = vmatprep.subr.mxu0 0.0
        %1006 = vmatpush1.msra.mxu0 0.0
        %1007 = vmatprep.subr.mxu0 0.0
        %1008 = vmatpush1.msra.mxu0 0.0
        %1009 = vmatprep.subr.mxu0 0.0
        %1010 = vmatpush1.msra.mxu0 0.0
        %1011 = vmatprep.subr.mxu0 0.0
        %1012 = vmatpush1.msra.mxu0 0.0
        %1013 = vmatprep.subr.mxu0 0.0
        %1014 = vmatpush1.msra.mxu0 0.0
        %1015 = vmatprep.subr.mxu0 0.0
        %1016 = vmatpush1.msra.mxu0 0.0
        %1017 = vmatprep.mubr.f32.mxu0 0.0
        %v1018 = vand.u32 %v648, 4294901760
        %1019 = vmatmul.mubr.f32.gmra.mrb[0].mxu0 %v1018
        %v1020 = vpop.f32.mrb[0].mxu0
        %v1021 = vadd.f32 %v947, %v1020
        %v1022 = vpop.f32.mrb[0].mxu0
        %1023 = vdwg.mxu0
        %1024 = vmatprep.subr.mxu0 0.0
        %v1025 = vand.u32 %v638, 4294901760
        %1026 = vmatpush1.msra.mxu0 %v1025
        %1027 = vmatprep.subr.mxu0 0.0
        %1028 = vmatpush1.msra.mxu0 0.0
        %1029 = vmatprep.subr.mxu0 0.0
        %1030 = vmatpush1.msra.mxu0 0.0
        %1031 = vmatprep.subr.mxu0 0.0
        %1032 = vmatpush1.msra.mxu0 0.0
        %1033 = vmatprep.subr.mxu0 0.0
        %1034 = vmatpush1.msra.mxu0 0.0
        %1035 = vmatprep.subr.mxu0 0.0
        %1036 = vmatpush1.msra.mxu0 0.0
        %1037 = vmatprep.subr.mxu0 0.0
        %1038 = vmatpush1.msra.mxu0 0.0
        %1039 = vmatprep.subr.mxu0 0.0
        %1040 = vmatpush1.msra.mxu0 0.0
        %1041 = vmatprep.subr.mxu0 0.0
        %1042 = vmatpush1.msra.mxu0 0.0
        %1043 = vmatprep.subr.mxu0 0.0
        %1044 = vmatpush1.msra.mxu0 0.0
        %1045 = vmatprep.subr.mxu0 0.0
        %1046 = vmatpush1.msra.mxu0 0.0
        %1047 = vmatprep.subr.mxu0 0.0
        %1048 = vmatpush1.msra.mxu0 0.0
        %1049 = vmatprep.subr.mxu0 0.0
        %1050 = vmatpush1.msra.mxu0 0.0
        %1051 = vmatprep.subr.mxu0 0.0
        %1052 = vmatpush1.msra.mxu0 0.0
        %1053 = vmatprep.subr.mxu0 0.0
        %1054 = vmatpush1.msra.mxu0 0.0
        %1055 = vmatprep.subr.mxu0 0.0
        %1056 = vmatpush1.msra.mxu0 0.0
        %1057 = vmatprep.subr.mxu0 0.0
        %1058 = vmatpush1.msra.mxu0 0.0
        %1059 = vmatprep.subr.mxu0 0.0
        %1060 = vmatpush1.msra.mxu0 0.0
        %1061 = vmatprep.subr.mxu0 0.0
        %1062 = vmatpush1.msra.mxu0 0.0
        %1063 = vmatprep.subr.mxu0 0.0
        %1064 = vmatpush1.msra.mxu0 0.0
        %1065 = vmatprep.subr.mxu0 0.0
        %1066 = vmatpush1.msra.mxu0 0.0
        %1067 = vmatprep.subr.mxu0 0.0
        %1068 = vmatpush1.msra.mxu0 0.0
        %1069 = vmatprep.subr.mxu0 0.0
        %1070 = vmatpush1.msra.mxu0 0.0
        %1071 = vmatprep.subr.mxu0 0.0
        %1072 = vmatpush1.msra.mxu0 0.0
        %1073 = vmatprep.subr.mxu0 0.0
        %1074 = vmatpush1.msra.mxu0 0.0
        %1075 = vmatprep.subr.mxu0 0.0
        %1076 = vmatpush1.msra.mxu0 0.0
        %1077 = vmatprep.subr.mxu0 0.0
        %1078 = vmatpush1.msra.mxu0 0.0
        %1079 = vmatprep.subr.mxu0 0.0
        %1080 = vmatpush1.msra.mxu0 0.0
        %1081 = vmatprep.subr.mxu0 0.0
        %1082 = vmatpush1.msra.mxu0 0.0
        %1083 = vmatprep.subr.mxu0 0.0
        %1084 = vmatpush1.msra.mxu0 0.0
        %1085 = vmatprep.subr.mxu0 0.0
        %1086 = vmatpush1.msra.mxu0 0.0
        %1087 = vmatprep.subr.mxu0 0.0
        %1088 = vmatpush1.msra.mxu0 0.0
        %1089 = vmatprep.mubr.f32.mxu0 0.0
        %v1090 = vand.u32 %v648, 4294901760
        %1091 = vmatmul.mubr.f32.gmra.mrb[0].mxu0 %v1090
        %v1092 = vpop.f32.mrb[0].mxu0
        %v1093 = vadd.f32 %v1021, %v1092
        %v1094 = vpop.f32.mrb[0].mxu0
        %1095 = vdwg.mxu0
        %v1096 = vand.u32 2147483647, %v1093
        %v1097 = vsub.f32 0.0, %v1096
        %v1098 = vmul.f32 %v1097, 1.442695
        %v1099 = vpow.pop %v1098
        %v1100 = vadd.f32 %v1099, 1.0
        %v1101 = vrcp.pop %v1100
        %v1102 = vmul.f32 1.0, %v1101
        %vm1103 = vcmp.ge.f32.partialorder %v1093, 0.0
        %v1104 = vmul.f32 %v1099, %v1102
        %v1105 = vsel %vm1103, %v1102, %v1104
        %v1106 = vmul.f32 %v1093, %v1105
        %v1107 = vld [vmem:[%s620] sm:$0xff]
        %v1108 = vld [vmem:[%s620 + $0x8] sm:$0xff]
        %v1109 = vld [vmem:[%s620 + $0x10] sm:$0xff]
        %v1110 = vld [vmem:[%s620 + $0x18] sm:$0xff]
        %v1111 = vld [vmem:[%s620 + $0x20] sm:$0xff]
        %v1112 = vld [vmem:[%s620 + $0x28] sm:$0xff]
        %v1113 = vld [vmem:[%s620 + $0x30] sm:$0xff]
        %v1114 = vld [vmem:[%s8] sm:$0xff]
        %v1115 = vld [vmem:[%s9] sm:$0x1]
        %v1117 = vlaneseq
        %v1118 = vshrl.u32 %v1117, 7
        %v1119 = vsub.s32 0, %v1118
        %v1120 = vrot.slane %v1115, %v1119
        %v1123 = vsel %vm646, %v1107, 0
        %v1126 = vsel %vm646, %v1108, 0
        %v1129 = vsel %vm646, %v1109, 0
        %v1132 = vsel %vm646, %v1110, 0
        %v1135 = vsel %vm646, %v1111, 0
        %v1138 = vsel %vm646, %v1112, 0
        %v1141 = vsel %vm646, %v1113, 0
        %1143 = vmatprep.subr.mxu0 0.0
        %v1144 = vand.u32 %v1114, 4294901760
        %1145 = vmatpush1.msra.mxu0 %v1144
        %1146 = vmatprep.subr.mxu0 0.0
        %1147 = vmatpush1.msra.mxu0 0.0
        %1148 = vmatprep.subr.mxu0 0.0
        %1149 = vmatpush1.msra.mxu0 0.0
        %1150 = vmatprep.subr.mxu0 0.0
        %1151 = vmatpush1.msra.mxu0 0.0
        %1152 = vmatprep.subr.mxu0 0.0
        %1153 = vmatpush1.msra.mxu0 0.0
        %1154 = vmatprep.subr.mxu0 0.0
        %1155 = vmatpush1.msra.mxu0 0.0
        %1156 = vmatprep.subr.mxu0 0.0
        %1157 = vmatpush1.msra.mxu0 0.0
        %1158 = vmatprep.subr.mxu0 0.0
        %1159 = vmatpush1.msra.mxu0 0.0
        %1160 = vmatprep.subr.mxu0 0.0
        %1161 = vmatpush1.msra.mxu0 0.0
        %1162 = vmatprep.subr.mxu0 0.0
        %1163 = vmatpush1.msra.mxu0 0.0
        %1164 = vmatprep.subr.mxu0 0.0
        %1165 = vmatpush1.msra.mxu0 0.0
        %1166 = vmatprep.subr.mxu0 0.0
        %1167 = vmatpush1.msra.mxu0 0.0
        %1168 = vmatprep.subr.mxu0 0.0
        %1169 = vmatpush1.msra.mxu0 0.0
        %1170 = vmatprep.subr.mxu0 0.0
        %1171 = vmatpush1.msra.mxu0 0.0
        %1172 = vmatprep.subr.mxu0 0.0
        %1173 = vmatpush1.msra.mxu0 0.0
        %1174 = vmatprep.subr.mxu0 0.0
        %1175 = vmatpush1.msra.mxu0 0.0
        %1176 = vmatprep.subr.mxu0 0.0
        %1177 = vmatpush1.msra.mxu0 0.0
        %1178 = vmatprep.subr.mxu0 0.0
        %1179 = vmatpush1.msra.mxu0 0.0
        %1180 = vmatprep.subr.mxu0 0.0
        %1181 = vmatpush1.msra.mxu0 0.0
        %1182 = vmatprep.subr.mxu0 0.0
        %1183 = vmatpush1.msra.mxu0 0.0
        %1184 = vmatprep.subr.mxu0 0.0
        %1185 = vmatpush1.msra.mxu0 0.0
        %1186 = vmatprep.subr.mxu0 0.0
        %1187 = vmatpush1.msra.mxu0 0.0
        %1188 = vmatprep.subr.mxu0 0.0
        %1189 = vmatpush1.msra.mxu0 0.0
        %1190 = vmatprep.subr.mxu0 0.0
        %1191 = vmatpush1.msra.mxu0 0.0
        %1192 = vmatprep.subr.mxu0 0.0
        %1193 = vmatpush1.msra.mxu0 0.0
        %1194 = vmatprep.subr.mxu0 0.0
        %1195 = vmatpush1.msra.mxu0 0.0
        %1196 = vmatprep.subr.mxu0 0.0
        %1197 = vmatpush1.msra.mxu0 0.0
        %1198 = vmatprep.subr.mxu0 0.0
        %1199 = vmatpush1.msra.mxu0 0.0
        %1200 = vmatprep.subr.mxu0 0.0
        %1201 = vmatpush1.msra.mxu0 0.0
        %1202 = vmatprep.subr.mxu0 0.0
        %1203 = vmatpush1.msra.mxu0 0.0
        %1204 = vmatprep.subr.mxu0 0.0
        %1205 = vmatpush1.msra.mxu0 0.0
        %1206 = vmatprep.subr.mxu0 0.0
        %1207 = vmatpush1.msra.mxu0 0.0
        %1208 = vmatprep.mubr.f32.mxu0 0.0
        %v1209 = vand.u32 %v1123, 4294901760
        %v1210 = vsub.f32 %v1123, %v1209
        %v1211 = vand.u32 %v1210, 4294901760
        %v1212 = vsub.f32 %v1210, %v1211
        %v1213 = vand.u32 %v1212, 4294901760
        %1214 = vmatmul.mubr.f32.gmra.mrb[0].mxu0 %v1213
        %v1215 = vpop.f32.mrb[0].mxu0
        %v1216 = vadd.f32 %v1120, %v1215
        %v1217 = vpop.f32.mrb[0].mxu0
        %1218 = vmatprep.mubr.f32.mxu0 0.0
        %v1219 = vand.u32 %v1126, 4294901760
        %v1220 = vsub.f32 %v1126, %v1219
        %v1221 = vand.u32 %v1220, 4294901760
        %v1222 = vsub.f32 %v1220, %v1221
        %v1223 = vand.u32 %v1222, 4294901760
        %1224 = vmatmul.mubr.f32.gmra.mrb[0].mxu0 %v1223
        %v1225 = vpop.f32.mrb[0].mxu0
        %v1226 = vadd.f32 %v1120, %v1225
        %v1227 = vpop.f32.mrb[0].mxu0
        %1228 = vmatprep.mubr.f32.mxu0 0.0
        %v1229 = vand.u32 %v1129, 4294901760
        %v1230 = vsub.f32 %v1129, %v1229
        %v1231 = vand.u32 %v1230, 4294901760
        %v1232 = vsub.f32 %v1230, %v1231
        %v1233 = vand.u32 %v1232, 4294901760
        %1234 = vmatmul.mubr.f32.gmra.mrb[0].mxu0 %v1233
        %v1235 = vpop.f32.mrb[0].mxu0
        %v1236 = vadd.f32 %v1120, %v1235
        %v1237 = vpop.f32.mrb[0].mxu0
        %1238 = vmatprep.mubr.f32.mxu0 0.0
        %v1239 = vand.u32 %v1132, 4294901760
        %v1240 = vsub.f32 %v1132, %v1239
        %v1241 = vand.u32 %v1240, 4294901760
        %v1242 = vsub.f32 %v1240, %v1241
        %v1243 = vand.u32 %v1242, 4294901760
        %1244 = vmatmul.mubr.f32.gmra.mrb[0].mxu0 %v1243
        %v1245 = vpop.f32.mrb[0].mxu0
        %v1246 = vadd.f32 %v1120, %v1245
        %v1247 = vpop.f32.mrb[0].mxu0
        %1248 = vmatprep.mubr.f32.mxu0 0.0
        %v1249 = vand.u32 %v1135, 4294901760
        %v1250 = vsub.f32 %v1135, %v1249
        %v1251 = vand.u32 %v1250, 4294901760
        %v1252 = vsub.f32 %v1250, %v1251
        %v1253 = vand.u32 %v1252, 4294901760
        %1254 = vmatmul.mubr.f32.gmra.mrb[0].mxu0 %v1253
        %v1255 = vpop.f32.mrb[0].mxu0
        %v1256 = vadd.f32 %v1120, %v1255
        %v1257 = vpop.f32.mrb[0].mxu0
        %1258 = vmatprep.mubr.f32.mxu0 0.0
        %v1259 = vand.u32 %v1138, 4294901760
        %v1260 = vsub.f32 %v1138, %v1259
        %v1261 = vand.u32 %v1260, 4294901760
        %v1262 = vsub.f32 %v1260, %v1261
        %v1263 = vand.u32 %v1262, 4294901760
        %1264 = vmatmul.mubr.f32.gmra.mrb[0].mxu0 %v1263
        %v1265 = vpop.f32.mrb[0].mxu0
        %v1266 = vadd.f32 %v1120, %v1265
        %v1267 = vpop.f32.mrb[0].mxu0
        %1268 = vmatprep.mubr.f32.mxu0 0.0
        %v1269 = vand.u32 %v1141, 4294901760
        %v1270 = vsub.f32 %v1141, %v1269
        %v1271 = vand.u32 %v1270, 4294901760
        %v1272 = vsub.f32 %v1270, %v1271
        %v1273 = vand.u32 %v1272, 4294901760
        %1274 = vmatmul.mubr.f32.gmra.mrb[0].mxu0 %v1273
        %v1275 = vpop.f32.mrb[0].mxu0
        %v1276 = vadd.f32 %v1120, %v1275
        %v1277 = vpop.f32.mrb[0].mxu0
        %1278 = vdwg.mxu0
        %1279 = vmatprep.subr.mxu0 0.0
        %v1280 = vand.u32 %v1114, 4294901760
        %v1281 = vsub.f32 %v1114, %v1280
        %v1282 = vand.u32 %v1281, 4294901760
        %v1283 = vsub.f32 %v1281, %v1282
        %v1284 = vand.u32 %v1283, 4294901760
        %1285 = vmatpush1.msra.mxu0 %v1284
        %1286 = vmatprep.subr.mxu0 0.0
        %1287 = vmatpush1.msra.mxu0 0.0
        %1288 = vmatprep.subr.mxu0 0.0
        %1289 = vmatpush1.msra.mxu0 0.0
        %1290 = vmatprep.subr.mxu0 0.0
        %1291 = vmatpush1.msra.mxu0 0.0
        %1292 = vmatprep.subr.mxu0 0.0
        %1293 = vmatpush1.msra.mxu0 0.0
        %1294 = vmatprep.subr.mxu0 0.0
        %1295 = vmatpush1.msra.mxu0 0.0
        %1296 = vmatprep.subr.mxu0 0.0
        %1297 = vmatpush1.msra.mxu0 0.0
        %1298 = vmatprep.subr.mxu0 0.0
        %1299 = vmatpush1.msra.mxu0 0.0
        %1300 = vmatprep.subr.mxu0 0.0
        %1301 = vmatpush1.msra.mxu0 0.0
        %1302 = vmatprep.subr.mxu0 0.0
        %1303 = vmatpush1.msra.mxu0 0.0
        %1304 = vmatprep.subr.mxu0 0.0
        %1305 = vmatpush1.msra.mxu0 0.0
        %1306 = vmatprep.subr.mxu0 0.0
        %1307 = vmatpush1.msra.mxu0 0.0
        %1308 = vmatprep.subr.mxu0 0.0
        %1309 = vmatpush1.msra.mxu0 0.0
        %1310 = vmatprep.subr.mxu0 0.0
        %1311 = vmatpush1.msra.mxu0 0.0
        %1312 = vmatprep.subr.mxu0 0.0
        %1313 = vmatpush1.msra.mxu0 0.0
        %1314 = vmatprep.subr.mxu0 0.0
        %1315 = vmatpush1.msra.mxu0 0.0
        %1316 = vmatprep.subr.mxu0 0.0
        %1317 = vmatpush1.msra.mxu0 0.0
        %1318 = vmatprep.subr.mxu0 0.0
        %1319 = vmatpush1.msra.mxu0 0.0
        %1320 = vmatprep.subr.mxu0 0.0
        %1321 = vmatpush1.msra.mxu0 0.0
        %1322 = vmatprep.subr.mxu0 0.0
        %1323 = vmatpush1.msra.mxu0 0.0
        %1324 = vmatprep.subr.mxu0 0.0
        %1325 = vmatpush1.msra.mxu0 0.0
        %1326 = vmatprep.subr.mxu0 0.0
        %1327 = vmatpush1.msra.mxu0 0.0
        %1328 = vmatprep.subr.mxu0 0.0
        %1329 = vmatpush1.msra.mxu0 0.0
        %1330 = vmatprep.subr.mxu0 0.0
        %1331 = vmatpush1.msra.mxu0 0.0
        %1332 = vmatprep.subr.mxu0 0.0
        %1333 = vmatpush1.msra.mxu0 0.0
        %1334 = vmatprep.subr.mxu0 0.0
        %1335 = vmatpush1.msra.mxu0 0.0
        %1336 = vmatprep.subr.mxu0 0.0
        %1337 = vmatpush1.msra.mxu0 0.0
        %1338 = vmatprep.subr.mxu0 0.0
        %1339 = vmatpush1.msra.mxu0 0.0
        %1340 = vmatprep.subr.mxu0 0.0
        %1341 = vmatpush1.msra.mxu0 0.0
        %1342 = vmatprep.subr.mxu0 0.0
        %1343 = vmatpush1.msra.mxu0 0.0
        %1344 = vmatprep.subr.mxu0 0.0
        %1345 = vmatpush1.msra.mxu0 0.0
        %1346 = vmatprep.subr.mxu0 0.0
        %1347 = vmatpush1.msra.mxu0 0.0
        %1348 = vmatprep.mubr.f32.mxu0 0.0
        %v1349 = vand.u32 %v1123, 4294901760
        %1350 = vmatmul.mubr.f32.gmra.mrb[0].mxu0 %v1349
        %v1351 = vpop.f32.mrb[0].mxu0
        %v1352 = vadd.f32 %v1216, %v1351
        %v1353 = vpop.f32.mrb[0].mxu0
        %1354 = vmatprep.mubr.f32.mxu0 0.0
        %v1355 = vand.u32 %v1126, 4294901760
        %1356 = vmatmul.mubr.f32.gmra.mrb[0].mxu0 %v1355
        %v1357 = vpop.f32.mrb[0].mxu0
        %v1358 = vadd.f32 %v1226, %v1357
        %v1359 = vpop.f32.mrb[0].mxu0
        %1360 = vmatprep.mubr.f32.mxu0 0.0
        %v1361 = vand.u32 %v1129, 4294901760
        %1362 = vmatmul.mubr.f32.gmra.mrb[0].mxu0 %v1361
        %v1363 = vpop.f32.mrb[0].mxu0
        %v1364 = vadd.f32 %v1236, %v1363
        %v1365 = vpop.f32.mrb[0].mxu0
        %1366 = vmatprep.mubr.f32.mxu0 0.0
        %v1367 = vand.u32 %v1132, 4294901760
        %1368 = vmatmul.mubr.f32.gmra.mrb[0].mxu0 %v1367
        %v1369 = vpop.f32.mrb[0].mxu0
        %v1370 = vadd.f32 %v1246, %v1369
        %v1371 = vpop.f32.mrb[0].mxu0
        %1372 = vmatprep.mubr.f32.mxu0 0.0
        %v1373 = vand.u32 %v1135, 4294901760
        %1374 = vmatmul.mubr.f32.gmra.mrb[0].mxu0 %v1373
        %v1375 = vpop.f32.mrb[0].mxu0
        %v1376 = vadd.f32 %v1256, %v1375
        %v1377 = vpop.f32.mrb[0].mxu0
        %1378 = vmatprep.mubr.f32.mxu0 0.0
        %v1379 = vand.u32 %v1138, 4294901760
        %1380 = vmatmul.mubr.f32.gmra.mrb[0].mxu0 %v1379
        %v1381 = vpop.f32.mrb[0].mxu0
        %v1382 = vadd.f32 %v1266, %v1381
        %v1383 = vpop.f32.mrb[0].mxu0
        %1384 = vmatprep.mubr.f32.mxu0 0.0
        %v1385 = vand.u32 %v1141, 4294901760
        %1386 = vmatmul.mubr.f32.gmra.mrb[0].mxu0 %v1385
        %v1387 = vpop.f32.mrb[0].mxu0
        %v1388 = vadd.f32 %v1276, %v1387
        %v1389 = vpop.f32.mrb[0].mxu0
        %1390 = vdwg.mxu0
        %1391 = vmatprep.subr.mxu0 0.0
        %v1392 = vand.u32 %v1114, 4294901760
        %v1393 = vsub.f32 %v1114, %v1392
        %1394 = vmatpush1.msra.mxu0 %v1393
        %1395 = vmatprep.subr.mxu0 0.0
        %1396 = vmatpush1.msra.mxu0 0.0
        %1397 = vmatprep.subr.mxu0 0.0
        %1398 = vmatpush1.msra.mxu0 0.0
        %1399 = vmatprep.subr.mxu0 0.0
        %1400 = vmatpush1.msra.mxu0 0.0
        %1401 = vmatprep.subr.mxu0 0.0
        %1402 = vmatpush1.msra.mxu0 0.0
        %1403 = vmatprep.subr.mxu0 0.0
        %1404 = vmatpush1.msra.mxu0 0.0
        %1405 = vmatprep.subr.mxu0 0.0
        %1406 = vmatpush1.msra.mxu0 0.0
        %1407 = vmatprep.subr.mxu0 0.0
        %1408 = vmatpush1.msra.mxu0 0.0
        %1409 = vmatprep.subr.mxu0 0.0
        %1410 = vmatpush1.msra.mxu0 0.0
        %1411 = vmatprep.subr.mxu0 0.0
        %1412 = vmatpush1.msra.mxu0 0.0
        %1413 = vmatprep.subr.mxu0 0.0
        %1414 = vmatpush1.msra.mxu0 0.0
        %1415 = vmatprep.subr.mxu0 0.0
        %1416 = vmatpush1.msra.mxu0 0.0
        %1417 = vmatprep.subr.mxu0 0.0
        %1418 = vmatpush1.msra.mxu0 0.0
        %1419 = vmatprep.subr.mxu0 0.0
        %1420 = vmatpush1.msra.mxu0 0.0
        %1421 = vmatprep.subr.mxu0 0.0
        %1422 = vmatpush1.msra.mxu0 0.0
        %1423 = vmatprep.subr.mxu0 0.0
        %1424 = vmatpush1.msra.mxu0 0.0
        %1425 = vmatprep.subr.mxu0 0.0
        %1426 = vmatpush1.msra.mxu0 0.0
        %1427 = vmatprep.subr.mxu0 0.0
        %1428 = vmatpush1.msra.mxu0 0.0
        %1429 = vmatprep.subr.mxu0 0.0
        %1430 = vmatpush1.msra.mxu0 0.0
        %1431 = vmatprep.subr.mxu0 0.0
        %1432 = vmatpush1.msra.mxu0 0.0
        %1433 = vmatprep.subr.mxu0 0.0
        %1434 = vmatpush1.msra.mxu0 0.0
        %1435 = vmatprep.subr.mxu0 0.0
        %1436 = vmatpush1.msra.mxu0 0.0
        %1437 = vmatprep.subr.mxu0 0.0
        %1438 = vmatpush1.msra.mxu0 0.0
        %1439 = vmatprep.subr.mxu0 0.0
        %1440 = vmatpush1.msra.mxu0 0.0
        %1441 = vmatprep.subr.mxu0 0.0
        %1442 = vmatpush1.msra.mxu0 0.0
        %1443 = vmatprep.subr.mxu0 0.0
        %1444 = vmatpush1.msra.mxu0 0.0
        %1445 = vmatprep.subr.mxu0 0.0
        %1446 = vmatpush1.msra.mxu0 0.0
        %1447 = vmatprep.subr.mxu0 0.0
        %1448 = vmatpush1.msra.mxu0 0.0
        %1449 = vmatprep.subr.mxu0 0.0
        %1450 = vmatpush1.msra.mxu0 0.0
        %1451 = vmatprep.subr.mxu0 0.0
        %1452 = vmatpush1.msra.mxu0 0.0
        %1453 = vmatprep.subr.mxu0 0.0
        %1454 = vmatpush1.msra.mxu0 0.0
        %1455 = vmatprep.subr.mxu0 0.0
        %1456 = vmatpush1.msra.mxu0 0.0
        %1457 = vmatprep.mubr.f32.mxu0 0.0
        %v1458 = vand.u32 %v1123, 4294901760
        %v1459 = vsub.f32 %v1123, %v1458
        %1460 = vmatmul.mubr.f32.gmra.mrb[0].mxu0 %v1459
        %v1461 = vpop.f32.mrb[0].mxu0
        %v1462 = vadd.f32 %v1352, %v1461
        %v1463 = vpop.f32.mrb[0].mxu0
        %1464 = vmatprep.mubr.f32.mxu0 0.0
        %v1465 = vand.u32 %v1126, 4294901760
        %v1466 = vsub.f32 %v1126, %v1465
        %1467 = vmatmul.mubr.f32.gmra.mrb[0].mxu0 %v1466
        %v1468 = vpop.f32.mrb[0].mxu0
        %v1469 = vadd.f32 %v1358, %v1468
        %v1470 = vpop.f32.mrb[0].mxu0
        %1471 = vmatprep.mubr.f32.mxu0 0.0
        %v1472 = vand.u32 %v1129, 4294901760
        %v1473 = vsub.f32 %v1129, %v1472
        %1474 = vmatmul.mubr.f32.gmra.mrb[0].mxu0 %v1473
        %v1475 = vpop.f32.mrb[0].mxu0
        %v1476 = vadd.f32 %v1364, %v1475
        %v1477 = vpop.f32.mrb[0].mxu0
        %1478 = vmatprep.mubr.f32.mxu0 0.0
        %v1479 = vand.u32 %v1132, 4294901760
        %v1480 = vsub.f32 %v1132, %v1479
        %1481 = vmatmul.mubr.f32.gmra.mrb[0].mxu0 %v1480
        %v1482 = vpop.f32.mrb[0].mxu0
        %v1483 = vadd.f32 %v1370, %v1482
        %v1484 = vpop.f32.mrb[0].mxu0
        %1485 = vmatprep.mubr.f32.mxu0 0.0
        %v1486 = vand.u32 %v1135, 4294901760
        %v1487 = vsub.f32 %v1135, %v1486
        %1488 = vmatmul.mubr.f32.gmra.mrb[0].mxu0 %v1487
        %v1489 = vpop.f32.mrb[0].mxu0
        %v1490 = vadd.f32 %v1376, %v1489
        %v1491 = vpop.f32.mrb[0].mxu0
        %1492 = vmatprep.mubr.f32.mxu0 0.0
        %v1493 = vand.u32 %v1138, 4294901760
        %v1494 = vsub.f32 %v1138, %v1493
        %1495 = vmatmul.mubr.f32.gmra.mrb[0].mxu0 %v1494
        %v1496 = vpop.f32.mrb[0].mxu0
        %v1497 = vadd.f32 %v1382, %v1496
        %v1498 = vpop.f32.mrb[0].mxu0
        %1499 = vmatprep.mubr.f32.mxu0 0.0
        %v1500 = vand.u32 %v1141, 4294901760
        %v1501 = vsub.f32 %v1141, %v1500
        %1502 = vmatmul.mubr.f32.gmra.mrb[0].mxu0 %v1501
        %v1503 = vpop.f32.mrb[0].mxu0
        %v1504 = vadd.f32 %v1388, %v1503
        %v1505 = vpop.f32.mrb[0].mxu0
        %1506 = vdwg.mxu0
        %1507 = vmatprep.subr.mxu0 0.0
        %v1508 = vand.u32 %v1114, 4294901760
        %1509 = vmatpush1.msra.mxu0 %v1508
        %1510 = vmatprep.subr.mxu0 0.0
        %1511 = vmatpush1.msra.mxu0 0.0
        %1512 = vmatprep.subr.mxu0 0.0
        %1513 = vmatpush1.msra.mxu0 0.0
        %1514 = vmatprep.subr.mxu0 0.0
        %1515 = vmatpush1.msra.mxu0 0.0
        %1516 = vmatprep.subr.mxu0 0.0
        %1517 = vmatpush1.msra.mxu0 0.0
        %1518 = vmatprep.subr.mxu0 0.0
        %1519 = vmatpush1.msra.mxu0 0.0
        %1520 = vmatprep.subr.mxu0 0.0
        %1521 = vmatpush1.msra.mxu0 0.0
        %1522 = vmatprep.subr.mxu0 0.0
        %1523 = vmatpush1.msra.mxu0 0.0
        %1524 = vmatprep.subr.mxu0 0.0
        %1525 = vmatpush1.msra.mxu0 0.0
        %1526 = vmatprep.subr.mxu0 0.0
        %1527 = vmatpush1.msra.mxu0 0.0
        %1528 = vmatprep.subr.mxu0 0.0
        %1529 = vmatpush1.msra.mxu0 0.0
        %1530 = vmatprep.subr.mxu0 0.0
        %1531 = vmatpush1.msra.mxu0 0.0
        %1532 = vmatprep.subr.mxu0 0.0
        %1533 = vmatpush1.msra.mxu0 0.0
        %1534 = vmatprep.subr.mxu0 0.0
        %1535 = vmatpush1.msra.mxu0 0.0
        %1536 = vmatprep.subr.mxu0 0.0
        %1537 = vmatpush1.msra.mxu0 0.0
        %1538 = vmatprep.subr.mxu0 0.0
        %1539 = vmatpush1.msra.mxu0 0.0
        %1540 = vmatprep.subr.mxu0 0.0
        %1541 = vmatpush1.msra.mxu0 0.0
        %1542 = vmatprep.subr.mxu0 0.0
        %1543 = vmatpush1.msra.mxu0 0.0
        %1544 = vmatprep.subr.mxu0 0.0
        %1545 = vmatpush1.msra.mxu0 0.0
        %1546 = vmatprep.subr.mxu0 0.0
        %1547 = vmatpush1.msra.mxu0 0.0
        %1548 = vmatprep.subr.mxu0 0.0
        %1549 = vmatpush1.msra.mxu0 0.0
        %1550 = vmatprep.subr.mxu0 0.0
        %1551 = vmatpush1.msra.mxu0 0.0
        %1552 = vmatprep.subr.mxu0 0.0
        %1553 = vmatpush1.msra.mxu0 0.0
        %1554 = vmatprep.subr.mxu0 0.0
        %1555 = vmatpush1.msra.mxu0 0.0
        %1556 = vmatprep.subr.mxu0 0.0
        %1557 = vmatpush1.msra.mxu0 0.0
        %1558 = vmatprep.subr.mxu0 0.0
        %1559 = vmatpush1.msra.mxu0 0.0
        %1560 = vmatprep.subr.mxu0 0.0
        %1561 = vmatpush1.msra.mxu0 0.0
        %1562 = vmatprep.subr.mxu0 0.0
        %1563 = vmatpush1.msra.mxu0 0.0
        %1564 = vmatprep.subr.mxu0 0.0
        %1565 = vmatpush1.msra.mxu0 0.0
        %1566 = vmatprep.subr.mxu0 0.0
        %1567 = vmatpush1.msra.mxu0 0.0
        %1568 = vmatprep.subr.mxu0 0.0
        %1569 = vmatpush1.msra.mxu0 0.0
        %1570 = vmatprep.subr.mxu0 0.0
        %1571 = vmatpush1.msra.mxu0 0.0
        %1572 = vmatprep.mubr.f32.mxu0 0.0
        %v1573 = vand.u32 %v1123, 4294901760
        %v1574 = vsub.f32 %v1123, %v1573
        %v1575 = vand.u32 %v1574, 4294901760
        %1576 = vmatmul.mubr.f32.gmra.mrb[0].mxu0 %v1575
        %v1577 = vpop.f32.mrb[0].mxu0
        %v1578 = vadd.f32 %v1462, %v1577
        %v1579 = vpop.f32.mrb[0].mxu0
        %1580 = vmatprep.mubr.f32.mxu0 0.0
        %v1581 = vand.u32 %v1126, 4294901760
        %v1582 = vsub.f32 %v1126, %v1581
        %v1583 = vand.u32 %v1582, 4294901760
        %1584 = vmatmul.mubr.f32.gmra.mrb[0].mxu0 %v1583
        %v1585 = vpop.f32.mrb[0].mxu0
        %v1586 = vadd.f32 %v1469, %v1585
        %v1587 = vpop.f32.mrb[0].mxu0
        %1588 = vmatprep.mubr.f32.mxu0 0.0
        %v1589 = vand.u32 %v1129, 4294901760
        %v1590 = vsub.f32 %v1129, %v1589
        %v1591 = vand.u32 %v1590, 4294901760
        %1592 = vmatmul.mubr.f32.gmra.mrb[0].mxu0 %v1591
        %v1593 = vpop.f32.mrb[0].mxu0
        %v1594 = vadd.f32 %v1476, %v1593
        %v1595 = vpop.f32.mrb[0].mxu0
        %1596 = vmatprep.mubr.f32.mxu0 0.0
        %v1597 = vand.u32 %v1132, 4294901760
        %v1598 = vsub.f32 %v1132, %v1597
        %v1599 = vand.u32 %v1598, 4294901760
        %1600 = vmatmul.mubr.f32.gmra.mrb[0].mxu0 %v1599
        %v1601 = vpop.f32.mrb[0].mxu0
        %v1602 = vadd.f32 %v1483, %v1601
        %v1603 = vpop.f32.mrb[0].mxu0
        %1604 = vmatprep.mubr.f32.mxu0 0.0
        %v1605 = vand.u32 %v1135, 4294901760
        %v1606 = vsub.f32 %v1135, %v1605
        %v1607 = vand.u32 %v1606, 4294901760
        %1608 = vmatmul.mubr.f32.gmra.mrb[0].mxu0 %v1607
        %v1609 = vpop.f32.mrb[0].mxu0
        %v1610 = vadd.f32 %v1490, %v1609
        %v1611 = vpop.f32.mrb[0].mxu0
        %1612 = vmatprep.mubr.f32.mxu0 0.0
        %v1613 = vand.u32 %v1138, 4294901760
        %v1614 = vsub.f32 %v1138, %v1613
        %v1615 = vand.u32 %v1614, 4294901760
        %1616 = vmatmul.mubr.f32.gmra.mrb[0].mxu0 %v1615
        %v1617 = vpop.f32.mrb[0].mxu0
        %v1618 = vadd.f32 %v1497, %v1617
        %v1619 = vpop.f32.mrb[0].mxu0
        %1620 = vmatprep.mubr.f32.mxu0 0.0
        %v1621 = vand.u32 %v1141, 4294901760
        %v1622 = vsub.f32 %v1141, %v1621
        %v1623 = vand.u32 %v1622, 4294901760
        %1624 = vmatmul.mubr.f32.gmra.mrb[0].mxu0 %v1623
        %v1625 = vpop.f32.mrb[0].mxu0
        %v1626 = vadd.f32 %v1504, %v1625
        %v1627 = vpop.f32.mrb[0].mxu0
        %1628 = vdwg.mxu0
        %1629 = vmatprep.subr.mxu0 0.0
        %v1630 = vand.u32 %v1114, 4294901760
        %v1631 = vsub.f32 %v1114, %v1630
        %v1632 = vand.u32 %v1631, 4294901760
        %1633 = vmatpush1.msra.mxu0 %v1632
        %1634 = vmatprep.subr.mxu0 0.0
        %1635 = vmatpush1.msra.mxu0 0.0
        %1636 = vmatprep.subr.mxu0 0.0
        %1637 = vmatpush1.msra.mxu0 0.0
        %1638 = vmatprep.subr.mxu0 0.0
        %1639 = vmatpush1.msra.mxu0 0.0
        %1640 = vmatprep.subr.mxu0 0.0
        %1641 = vmatpush1.msra.mxu0 0.0
        %1642 = vmatprep.subr.mxu0 0.0
        %1643 = vmatpush1.msra.mxu0 0.0
        %1644 = vmatprep.subr.mxu0 0.0
        %1645 = vmatpush1.msra.mxu0 0.0
        %1646 = vmatprep.subr.mxu0 0.0
        %1647 = vmatpush1.msra.mxu0 0.0
        %1648 = vmatprep.subr.mxu0 0.0
        %1649 = vmatpush1.msra.mxu0 0.0
        %1650 = vmatprep.subr.mxu0 0.0
        %1651 = vmatpush1.msra.mxu0 0.0
        %1652 = vmatprep.subr.mxu0 0.0
        %1653 = vmatpush1.msra.mxu0 0.0
        %1654 = vmatprep.subr.mxu0 0.0
        %1655 = vmatpush1.msra.mxu0 0.0
        %1656 = vmatprep.subr.mxu0 0.0
        %1657 = vmatpush1.msra.mxu0 0.0
        %1658 = vmatprep.subr.mxu0 0.0
        %1659 = vmatpush1.msra.mxu0 0.0
        %1660 = vmatprep.subr.mxu0 0.0
        %1661 = vmatpush1.msra.mxu0 0.0
        %1662 = vmatprep.subr.mxu0 0.0
        %1663 = vmatpush1.msra.mxu0 0.0
        %1664 = vmatprep.subr.mxu0 0.0
        %1665 = vmatpush1.msra.mxu0 0.0
        %1666 = vmatprep.subr.mxu0 0.0
        %1667 = vmatpush1.msra.mxu0 0.0
        %1668 = vmatprep.subr.mxu0 0.0
        %1669 = vmatpush1.msra.mxu0 0.0
        %1670 = vmatprep.subr.mxu0 0.0
        %1671 = vmatpush1.msra.mxu0 0.0
        %1672 = vmatprep.subr.mxu0 0.0
        %1673 = vmatpush1.msra.mxu0 0.0
        %1674 = vmatprep.subr.mxu0 0.0
        %1675 = vmatpush1.msra.mxu0 0.0
        %1676 = vmatprep.subr.mxu0 0.0
        %1677 = vmatpush1.msra.mxu0 0.0
        %1678 = vmatprep.subr.mxu0 0.0
        %1679 = vmatpush1.msra.mxu0 0.0
        %1680 = vmatprep.subr.mxu0 0.0
        %1681 = vmatpush1.msra.mxu0 0.0
        %1682 = vmatprep.subr.mxu0 0.0
        %1683 = vmatpush1.msra.mxu0 0.0
        %1684 = vmatprep.subr.mxu0 0.0
        %1685 = vmatpush1.msra.mxu0 0.0
        %1686 = vmatprep.subr.mxu0 0.0
        %1687 = vmatpush1.msra.mxu0 0.0
        %1688 = vmatprep.subr.mxu0 0.0
        %1689 = vmatpush1.msra.mxu0 0.0
        %1690 = vmatprep.subr.mxu0 0.0
        %1691 = vmatpush1.msra.mxu0 0.0
        %1692 = vmatprep.subr.mxu0 0.0
        %1693 = vmatpush1.msra.mxu0 0.0
        %1694 = vmatprep.subr.mxu0 0.0
        %1695 = vmatpush1.msra.mxu0 0.0
        %1696 = vmatprep.mubr.f32.mxu0 0.0
        %v1697 = vand.u32 %v1123, 4294901760
        %1698 = vmatmul.mubr.f32.gmra.mrb[0].mxu0 %v1697
        %v1699 = vpop.f32.mrb[0].mxu0
        %v1700 = vadd.f32 %v1578, %v1699
        %v1701 = vpop.f32.mrb[0].mxu0
        %1702 = vmatprep.mubr.f32.mxu0 0.0
        %v1703 = vand.u32 %v1126, 4294901760
        %1704 = vmatmul.mubr.f32.gmra.mrb[0].mxu0 %v1703
        %v1705 = vpop.f32.mrb[0].mxu0
        %v1706 = vadd.f32 %v1586, %v1705
        %v1707 = vpop.f32.mrb[0].mxu0
        %1708 = vmatprep.mubr.f32.mxu0 0.0
        %v1709 = vand.u32 %v1129, 4294901760
        %1710 = vmatmul.mubr.f32.gmra.mrb[0].mxu0 %v1709
        %v1711 = vpop.f32.mrb[0].mxu0
        %v1712 = vadd.f32 %v1594, %v1711
        %v1713 = vpop.f32.mrb[0].mxu0
        %1714 = vmatprep.mubr.f32.mxu0 0.0
        %v1715 = vand.u32 %v1132, 4294901760
        %1716 = vmatmul.mubr.f32.gmra.mrb[0].mxu0 %v1715
        %v1717 = vpop.f32.mrb[0].mxu0
        %v1718 = vadd.f32 %v1602, %v1717
        %v1719 = vpop.f32.mrb[0].mxu0
        %1720 = vmatprep.mubr.f32.mxu0 0.0
        %v1721 = vand.u32 %v1135, 4294901760
        %1722 = vmatmul.mubr.f32.gmra.mrb[0].mxu0 %v1721
        %v1723 = vpop.f32.mrb[0].mxu0
        %v1724 = vadd.f32 %v1610, %v1723
        %v1725 = vpop.f32.mrb[0].mxu0
        %1726 = vmatprep.mubr.f32.mxu0 0.0
        %v1727 = vand.u32 %v1138, 4294901760
        %1728 = vmatmul.mubr.f32.gmra.mrb[0].mxu0 %v1727
        %v1729 = vpop.f32.mrb[0].mxu0
        %v1730 = vadd.f32 %v1618, %v1729
        %v1731 = vpop.f32.mrb[0].mxu0
        %1732 = vmatprep.mubr.f32.mxu0 0.0
        %v1733 = vand.u32 %v1141, 4294901760
        %1734 = vmatmul.mubr.f32.gmra.mrb[0].mxu0 %v1733
        %v1735 = vpop.f32.mrb[0].mxu0
        %v1736 = vadd.f32 %v1626, %v1735
        %v1737 = vpop.f32.mrb[0].mxu0
        %1738 = vdwg.mxu0
        %1739 = vmatprep.subr.mxu0 0.0
        %v1740 = vand.u32 %v1114, 4294901760
        %1741 = vmatpush1.msra.mxu0 %v1740
        %1742 = vmatprep.subr.mxu0 0.0
        %1743 = vmatpush1.msra.mxu0 0.0
        %1744 = vmatprep.subr.mxu0 0.0
        %1745 = vmatpush1.msra.mxu0 0.0
        %1746 = vmatprep.subr.mxu0 0.0
        %1747 = vmatpush1.msra.mxu0 0.0
        %1748 = vmatprep.subr.mxu0 0.0
        %1749 = vmatpush1.msra.mxu0 0.0
        %1750 = vmatprep.subr.mxu0 0.0
        %1751 = vmatpush1.msra.mxu0 0.0
        %1752 = vmatprep.subr.mxu0 0.0
        %1753 = vmatpush1.msra.mxu0 0.0
        %1754 = vmatprep.subr.mxu0 0.0
        %1755 = vmatpush1.msra.mxu0 0.0
        %1756 = vmatprep.subr.mxu0 0.0
        %1757 = vmatpush1.msra.mxu0 0.0
        %1758 = vmatprep.subr.mxu0 0.0
        %1759 = vmatpush1.msra.mxu0 0.0
        %1760 = vmatprep.subr.mxu0 0.0
        %1761 = vmatpush1.msra.mxu0 0.0
        %1762 = vmatprep.subr.mxu0 0.0
        %1763 = vmatpush1.msra.mxu0 0.0
        %1764 = vmatprep.subr.mxu0 0.0
        %1765 = vmatpush1.msra.mxu0 0.0
        %1766 = vmatprep.subr.mxu0 0.0
        %1767 = vmatpush1.msra.mxu0 0.0
        %1768 = vmatprep.subr.mxu0 0.0
        %1769 = vmatpush1.msra.mxu0 0.0
        %1770 = vmatprep.subr.mxu0 0.0
        %1771 = vmatpush1.msra.mxu0 0.0
        %1772 = vmatprep.subr.mxu0 0.0
        %1773 = vmatpush1.msra.mxu0 0.0
        %1774 = vmatprep.subr.mxu0 0.0
        %1775 = vmatpush1.msra.mxu0 0.0
        %1776 = vmatprep.subr.mxu0 0.0
        %1777 = vmatpush1.msra.mxu0 0.0
        %1778 = vmatprep.subr.mxu0 0.0
        %1779 = vmatpush1.msra.mxu0 0.0
        %1780 = vmatprep.subr.mxu0 0.0
        %1781 = vmatpush1.msra.mxu0 0.0
        %1782 = vmatprep.subr.mxu0 0.0
        %1783 = vmatpush1.msra.mxu0 0.0
        %1784 = vmatprep.subr.mxu0 0.0
        %1785 = vmatpush1.msra.mxu0 0.0
        %1786 = vmatprep.subr.mxu0 0.0
        %1787 = vmatpush1.msra.mxu0 0.0
        %1788 = vmatprep.subr.mxu0 0.0
        %1789 = vmatpush1.msra.mxu0 0.0
        %1790 = vmatprep.subr.mxu0 0.0
        %1791 = vmatpush1.msra.mxu0 0.0
        %1792 = vmatprep.subr.mxu0 0.0
        %1793 = vmatpush1.msra.mxu0 0.0
        %1794 = vmatprep.subr.mxu0 0.0
        %1795 = vmatpush1.msra.mxu0 0.0
        %1796 = vmatprep.subr.mxu0 0.0
        %1797 = vmatpush1.msra.mxu0 0.0
        %1798 = vmatprep.subr.mxu0 0.0
        %1799 = vmatpush1.msra.mxu0 0.0
        %1800 = vmatprep.subr.mxu0 0.0
        %1801 = vmatpush1.msra.mxu0 0.0
        %1802 = vmatprep.subr.mxu0 0.0
        %1803 = vmatpush1.msra.mxu0 0.0
        %1804 = vmatprep.mubr.f32.mxu0 0.0
        %v1805 = vand.u32 %v1123, 4294901760
        %1806 = vmatmul.mubr.f32.gmra.mrb[0].mxu0 %v1805
        %v1807 = vpop.f32.mrb[0].mxu0
        %v1808 = vadd.f32 %v1700, %v1807
        %v1809 = vpop.f32.mrb[0].mxu0
        %1810 = vmatprep.mubr.f32.mxu0 0.0
        %v1811 = vand.u32 %v1126, 4294901760
        %1812 = vmatmul.mubr.f32.gmra.mrb[0].mxu0 %v1811
        %v1813 = vpop.f32.mrb[0].mxu0
        %v1814 = vadd.f32 %v1706, %v1813
        %v1815 = vpop.f32.mrb[0].mxu0
        %1816 = vmatprep.mubr.f32.mxu0 0.0
        %v1817 = vand.u32 %v1129, 4294901760
        %1818 = vmatmul.mubr.f32.gmra.mrb[0].mxu0 %v1817
        %v1819 = vpop.f32.mrb[0].mxu0
        %v1820 = vadd.f32 %v1712, %v1819
        %v1821 = vpop.f32.mrb[0].mxu0
        %1822 = vmatprep.mubr.f32.mxu0 0.0
        %v1823 = vand.u32 %v1132, 4294901760
        %1824 = vmatmul.mubr.f32.gmra.mrb[0].mxu0 %v1823
        %v1825 = vpop.f32.mrb[0].mxu0
        %v1826 = vadd.f32 %v1718, %v1825
        %v1827 = vpop.f32.mrb[0].mxu0
        %1828 = vmatprep.mubr.f32.mxu0 0.0
        %v1829 = vand.u32 %v1135, 4294901760
        %1830 = vmatmul.mubr.f32.gmra.mrb[0].mxu0 %v1829
        %v1831 = vpop.f32.mrb[0].mxu0
        %v1832 = vadd.f32 %v1724, %v1831
        %v1833 = vpop.f32.mrb[0].mxu0
        %1834 = vmatprep.mubr.f32.mxu0 0.0
        %v1835 = vand.u32 %v1138, 4294901760
        %1836 = vmatmul.mubr.f32.gmra.mrb[0].mxu0 %v1835
        %v1837 = vpop.f32.mrb[0].mxu0
        %v1838 = vadd.f32 %v1730, %v1837
        %v1839 = vpop.f32.mrb[0].mxu0
        %1840 = vmatprep.mubr.f32.mxu0 0.0
        %v1841 = vand.u32 %v1141, 4294901760
        %1842 = vmatmul.mubr.f32.gmra.mrb[0].mxu0 %v1841
        %v1843 = vpop.f32.mrb[0].mxu0
        %v1844 = vadd.f32 %v1736, %v1843
        %v1845 = vpop.f32.mrb[0].mxu0
        %1846 = vdwg.mxu0
        %v1847 = vand.u32 2147483647, %v1808
        %v1848 = vand.u32 2147483647, %v1814
        %v1849 = vand.u32 2147483647, %v1820
        %v1850 = vand.u32 2147483647, %v1826
        %v1851 = vand.u32 2147483647, %v1832
        %v1852 = vand.u32 2147483647, %v1838
        %v1853 = vand.u32 2147483647, %v1844
        %v1854 = vsub.f32 0.0, %v1847
        %v1855 = vsub.f32 0.0, %v1848
        %v1856 = vsub.f32 0.0, %v1849
        %v1857 = vsub.f32 0.0, %v1850
        %v1858 = vsub.f32 0.0, %v1851
        %v1859 = vsub.f32 0.0, %v1852
        %v1860 = vsub.f32 0.0, %v1853
        %v1861 = vmul.f32 %v1854, 1.442695
        %v1862 = vpow.pop %v1861
        %v1863 = vmul.f32 %v1855, 1.442695
        %v1864 = vpow.pop %v1863
        %v1865 = vmul.f32 %v1856, 1.442695
        %v1866 = vpow.pop %v1865
        %v1867 = vmul.f32 %v1857, 1.442695
        %v1868 = vpow.pop %v1867
        %v1869 = vmul.f32 %v1858, 1.442695
        %v1870 = vpow.pop %v1869
        %v1871 = vmul.f32 %v1859, 1.442695
        %v1872 = vpow.pop %v1871
        %v1873 = vmul.f32 %v1860, 1.442695
        %v1874 = vpow.pop %v1873
        %v1875 = vadd.f32 %v1862, 1.0
        %v1876 = vadd.f32 %v1864, 1.0
        %v1877 = vadd.f32 %v1866, 1.0
        %v1878 = vadd.f32 %v1868, 1.0
        %v1879 = vadd.f32 %v1870, 1.0
        %v1880 = vadd.f32 %v1872, 1.0
        %v1881 = vadd.f32 %v1874, 1.0
        %v1882 = vrcp.pop %v1875
        %v1883 = vmul.f32 1.0, %v1882
        %v1884 = vrcp.pop %v1876
        %v1885 = vmul.f32 1.0, %v1884
        %v1886 = vrcp.pop %v1877
        %v1887 = vmul.f32 1.0, %v1886
        %v1888 = vrcp.pop %v1878
        %v1889 = vmul.f32 1.0, %v1888
        %v1890 = vrcp.pop %v1879
        %v1891 = vmul.f32 1.0, %v1890
        %v1892 = vrcp.pop %v1880
        %v1893 = vmul.f32 1.0, %v1892
        %v1894 = vrcp.pop %v1881
        %v1895 = vmul.f32 1.0, %v1894
        %vm1896 = vcmp.ge.f32.partialorder %v1808, 0.0
        %vm1897 = vcmp.ge.f32.partialorder %v1814, 0.0
        %vm1898 = vcmp.ge.f32.partialorder %v1820, 0.0
        %vm1899 = vcmp.ge.f32.partialorder %v1826, 0.0
        %vm1900 = vcmp.ge.f32.partialorder %v1832, 0.0
        %vm1901 = vcmp.ge.f32.partialorder %v1838, 0.0
        %vm1902 = vcmp.ge.f32.partialorder %v1844, 0.0
        %v1903 = vmul.f32 %v1862, %v1883
        %v1904 = vmul.f32 %v1864, %v1885
        %v1905 = vmul.f32 %v1866, %v1887
        %v1906 = vmul.f32 %v1868, %v1889
        %v1907 = vmul.f32 %v1870, %v1891
        %v1908 = vmul.f32 %v1872, %v1893
        %v1909 = vmul.f32 %v1874, %v1895
        %v1910 = vsel %vm1896, %v1883, %v1903
        %v1911 = vsel %vm1897, %v1885, %v1904
        %v1912 = vsel %vm1898, %v1887, %v1905
        %v1913 = vsel %vm1899, %v1889, %v1906
        %v1914 = vsel %vm1900, %v1891, %v1907
        %v1915 = vsel %vm1901, %v1893, %v1908
        %v1916 = vsel %vm1902, %v1895, %v1909
        %v1917 = vmul.f32 %v1808, %v1910
        %v1918 = vmul.f32 %v1814, %v1911
        %v1919 = vmul.f32 %v1820, %v1912
        %v1920 = vmul.f32 %v1826, %v1913
        %v1921 = vmul.f32 %v1832, %v1914
        %v1922 = vmul.f32 %v1838, %v1915
        %v1923 = vmul.f32 %v1844, %v1916
        loop: start=0, step=1, limit=4
        $region101: #{tpu_custom_call.1} parent=91 // loop_pre_header
          _
        $region102: #{tpu_custom_call.1} parent=91 // loop_header
          %s1925 = sphi 0, %s1929
          %p1926 = scmp.ge.s32.totalorder %s1925, 4
          %v1930 = vphi %v1106, %v6832
          %v1931 = vphi %v1917, %v7006
          %v1932 = vphi %v1918, %v7007
          %v1933 = vphi %v1919, %v7008
          %v1934 = vphi %v1920, %v7009
          %v1935 = vphi %v1921, %v7010
          %v1936 = vphi %v1922, %v7011
          %v1937 = vphi %v1923, %v7012
        $region103: #{tpu_custom_call.1} parent=91 // loop_header_branch
          %1928 = sbr.rel (%p1926) target = $region107
        $region104: #{tpu_custom_call.1} parent=91 // loop_body
          %s1938 = smul.u32 %s1925, 64
          %s1939 = smul.addr %s1938, 8
          %s1940 = scalar_lea.vmem [#allocation2], %s1939
          %v1941 = vld [vmem:[%s1940] sm:$0xff]
          %v1942 = vld [vmem:[%s1940 + $0x8] sm:$0xff]
          %v1943 = vld [vmem:[%s1940 + $0x10] sm:$0xff]
          %v1944 = vld [vmem:[%s1940 + $0x18] sm:$0xff]
          %v1945 = vld [vmem:[%s1940 + $0x20] sm:$0xff]
          %v1946 = vld [vmem:[%s1940 + $0x28] sm:$0xff]
          %v1947 = vld [vmem:[%s1940 + $0x30] sm:$0xff]
          %v1948 = vld [vmem:[%s1940 + $0x38] sm:$0xff]
          %v1949 = vld [vmem:[%s1940 + $0x40] sm:$0xff]
          %v1950 = vld [vmem:[%s1940 + $0x48] sm:$0xff]
          %v1951 = vld [vmem:[%s1940 + $0x50] sm:$0xff]
          %v1952 = vld [vmem:[%s1940 + $0x58] sm:$0xff]
          %v1953 = vld [vmem:[%s1940 + $0x60] sm:$0xff]
          %v1954 = vld [vmem:[%s1940 + $0x68] sm:$0xff]
          %v1955 = vld [vmem:[%s1940 + $0x70] sm:$0xff]
          %v1956 = vld [vmem:[%s1940 + $0x78] sm:$0xff]
          %v1957 = vld [vmem:[%s1940 + $0x80] sm:$0xff]
          %v1958 = vld [vmem:[%s1940 + $0x88] sm:$0xff]
          %v1959 = vld [vmem:[%s1940 + $0x90] sm:$0xff]
          %v1960 = vld [vmem:[%s1940 + $0x98] sm:$0xff]
          %v1961 = vld [vmem:[%s1940 + $0xa0] sm:$0xff]
          %v1962 = vld [vmem:[%s1940 + $0xa8] sm:$0xff]
          %v1963 = vld [vmem:[%s1940 + $0xb0] sm:$0xff]
          %v1964 = vld [vmem:[%s1940 + $0xb8] sm:$0xff]
          %v1965 = vld [vmem:[%s1940 + $0xc0] sm:$0xff]
          %v1966 = vld [vmem:[%s1940 + $0xc8] sm:$0xff]
          %v1967 = vld [vmem:[%s1940 + $0xd0] sm:$0xff]
          %v1968 = vld [vmem:[%s1940 + $0xd8] sm:$0xff]
          %v1969 = vld [vmem:[%s1940 + $0xe0] sm:$0xff]
          %v1970 = vld [vmem:[%s1940 + $0xe8] sm:$0xff]
          %v1971 = vld [vmem:[%s1940 + $0xf0] sm:$0xff]
          %v1972 = vld [vmem:[%s1940 + $0xf8] sm:$0xff]
          %v1973 = vld [vmem:[%s1940 + $0x100] sm:$0xff]
          %v1974 = vld [vmem:[%s1940 + $0x108] sm:$0xff]
          %v1975 = vld [vmem:[%s1940 + $0x110] sm:$0xff]
          %v1976 = vld [vmem:[%s1940 + $0x118] sm:$0xff]
          %v1977 = vld [vmem:[%s1940 + $0x120] sm:$0xff]
          %v1978 = vld [vmem:[%s1940 + $0x128] sm:$0xff]
          %v1979 = vld [vmem:[%s1940 + $0x130] sm:$0xff]
          %v1980 = vld [vmem:[%s1940 + $0x138] sm:$0xff]
          %v1981 = vld [vmem:[%s1940 + $0x140] sm:$0xff]
          %v1982 = vld [vmem:[%s1940 + $0x148] sm:$0xff]
          %v1983 = vld [vmem:[%s1940 + $0x150] sm:$0xff]
          %v1984 = vld [vmem:[%s1940 + $0x158] sm:$0xff]
          %v1985 = vld [vmem:[%s1940 + $0x160] sm:$0xff]
          %v1986 = vld [vmem:[%s1940 + $0x168] sm:$0xff]
          %v1987 = vld [vmem:[%s1940 + $0x170] sm:$0xff]
          %v1988 = vld [vmem:[%s1940 + $0x178] sm:$0xff]
          %v1989 = vld [vmem:[%s1940 + $0x180] sm:$0xff]
          %v1990 = vld [vmem:[%s1940 + $0x188] sm:$0xff]
          %v1991 = vld [vmem:[%s1940 + $0x190] sm:$0xff]
          %v1992 = vld [vmem:[%s1940 + $0x198] sm:$0xff]
          %v1993 = vld [vmem:[%s1940 + $0x1a0] sm:$0xff]
          %v1994 = vld [vmem:[%s1940 + $0x1a8] sm:$0xff]
          %v1995 = vld [vmem:[%s1940 + $0x1b0] sm:$0xff]
          %v1996 = vld [vmem:[%s1940 + $0x1b8] sm:$0xff]
          %v1997 = vld [vmem:[%s1940 + $0x1c0] sm:$0xff]
          %v1998 = vld [vmem:[%s1940 + $0x1c8] sm:$0xff]
          %v1999 = vld [vmem:[%s1940 + $0x1d0] sm:$0xff]
          %v2000 = vld [vmem:[%s1940 + $0x1d8] sm:$0xff]
          %v2001 = vld [vmem:[%s1940 + $0x1e0] sm:$0xff]
          %v2002 = vld [vmem:[%s1940 + $0x1e8] sm:$0xff]
          %v2003 = vld [vmem:[%s1940 + $0x1f0] sm:$0xff]
          %v2004 = vld [vmem:[%s1940 + $0x1f8] sm:$0xff]
          %s2005 = smul.u32 %s1925, 4
          %s2006 = scalar_lea.vmem %s11, %s2005
          %v2007 = vld [vmem:[%s2006] sm:$0xf]
          %v2009 = vlaneseq
          %v2010 = vshrl.u32 %v2009, 7
          %v2011 = vsub.s32 0, %v2010
          %v2012 = vrot.slane %v2007, %v2011
          %v2013 = vlaneseq
          %v2014 = vshrl.u32 %v2013, 7
          %v2015 = vsub.s32 1, %v2014
          %v2016 = vrot.slane %v2007, %v2015
          %v2017 = vlaneseq
          %v2018 = vshrl.u32 %v2017, 7
          %v2019 = vsub.s32 2, %v2018
          %v2020 = vrot.slane %v2007, %v2019
          %v2021 = vlaneseq
          %v2022 = vshrl.u32 %v2021, 7
          %v2023 = vsub.s32 3, %v2022
          %v2024 = vrot.slane %v2007, %v2023
          %v2029 = vand.u32 %v1942, 4294901760
          %2030 = vmatprep.subr.mxu0 %v2029
          %v2031 = vand.u32 %v1941, 4294901760
          %2032 = vmatpush1.msra.mxu0 %v2031
          %v2033 = vand.u32 %v1946, 4294901760
          %2034 = vmatprep.subr.mxu0 %v2033
          %v2035 = vand.u32 %v1945, 4294901760
          %2036 = vmatpush1.msra.mxu0 %v2035
          %v2037 = vand.u32 %v1950, 4294901760
          %2038 = vmatprep.subr.mxu0 %v2037
          %v2039 = vand.u32 %v1949, 4294901760
          %2040 = vmatpush1.msra.mxu0 %v2039
          %v2041 = vand.u32 %v1954, 4294901760
          %2042 = vmatprep.subr.mxu0 %v2041
          %v2043 = vand.u32 %v1953, 4294901760
          %2044 = vmatpush1.msra.mxu0 %v2043
          %v2045 = vand.u32 %v1958, 4294901760
          %2046 = vmatprep.subr.mxu0 %v2045
          %v2047 = vand.u32 %v1957, 4294901760
          %2048 = vmatpush1.msra.mxu0 %v2047
          %v2049 = vand.u32 %v1962, 4294901760
          %2050 = vmatprep.subr.mxu0 %v2049
          %v2051 = vand.u32 %v1961, 4294901760
          %2052 = vmatpush1.msra.mxu0 %v2051
          %v2053 = vand.u32 %v1966, 4294901760
          %2054 = vmatprep.subr.mxu0 %v2053
          %v2055 = vand.u32 %v1965, 4294901760
          %2056 = vmatpush1.msra.mxu0 %v2055
          %v2057 = vand.u32 %v1970, 4294901760
          %2058 = vmatprep.subr.mxu0 %v2057
          %v2059 = vand.u32 %v1969, 4294901760
          %2060 = vmatpush1.msra.mxu0 %v2059
          %v2061 = vand.u32 %v1974, 4294901760
          %2062 = vmatprep.subr.mxu0 %v2061
          %v2063 = vand.u32 %v1973, 4294901760
          %2064 = vmatpush1.msra.mxu0 %v2063
          %v2065 = vand.u32 %v1978, 4294901760
          %2066 = vmatprep.subr.mxu0 %v2065
          %v2067 = vand.u32 %v1977, 4294901760
          %2068 = vmatpush1.msra.mxu0 %v2067
          %v2069 = vand.u32 %v1982, 4294901760
          %2070 = vmatprep.subr.mxu0 %v2069
          %v2071 = vand.u32 %v1981, 4294901760
          %2072 = vmatpush1.msra.mxu0 %v2071
          %v2073 = vand.u32 %v1986, 4294901760
          %2074 = vmatprep.subr.mxu0 %v2073
          %v2075 = vand.u32 %v1985, 4294901760
          %2076 = vmatpush1.msra.mxu0 %v2075
          %v2077 = vand.u32 %v1990, 4294901760
          %2078 = vmatprep.subr.mxu0 %v2077
          %v2079 = vand.u32 %v1989, 4294901760
          %2080 = vmatpush1.msra.mxu0 %v2079
          %v2081 = vand.u32 %v1994, 4294901760
          %2082 = vmatprep.subr.mxu0 %v2081
          %v2083 = vand.u32 %v1993, 4294901760
          %2084 = vmatpush1.msra.mxu0 %v2083
          %v2085 = vand.u32 %v1998, 4294901760
          %2086 = vmatprep.subr.mxu0 %v2085
          %v2087 = vand.u32 %v1997, 4294901760
          %2088 = vmatpush1.msra.mxu0 %v2087
          %v2089 = vand.u32 %v2002, 4294901760
          %2090 = vmatprep.subr.mxu0 %v2089
          %v2091 = vand.u32 %v2001, 4294901760
          %2092 = vmatpush1.msra.mxu0 %v2091
          %2093 = vmatprep.subr.mxu0 0.0
          %2094 = vmatpush1.msra.mxu0 0.0
          %2095 = vmatprep.subr.mxu0 0.0
          %2096 = vmatpush1.msra.mxu0 0.0
          %2097 = vmatprep.subr.mxu0 0.0
          %2098 = vmatpush1.msra.mxu0 0.0
          %2099 = vmatprep.subr.mxu0 0.0
          %2100 = vmatpush1.msra.mxu0 0.0
          %2101 = vmatprep.subr.mxu0 0.0
          %2102 = vmatpush1.msra.mxu0 0.0
          %2103 = vmatprep.subr.mxu0 0.0
          %2104 = vmatpush1.msra.mxu0 0.0
          %2105 = vmatprep.subr.mxu0 0.0
          %2106 = vmatpush1.msra.mxu0 0.0
          %2107 = vmatprep.subr.mxu0 0.0
          %2108 = vmatpush1.msra.mxu0 0.0
          %2109 = vmatprep.subr.mxu0 0.0
          %2110 = vmatpush1.msra.mxu0 0.0
          %2111 = vmatprep.subr.mxu0 0.0
          %2112 = vmatpush1.msra.mxu0 0.0
          %2113 = vmatprep.subr.mxu0 0.0
          %2114 = vmatpush1.msra.mxu0 0.0
          %2115 = vmatprep.subr.mxu0 0.0
          %2116 = vmatpush1.msra.mxu0 0.0
          %2117 = vmatprep.subr.mxu0 0.0
          %2118 = vmatpush1.msra.mxu0 0.0
          %2119 = vmatprep.subr.mxu0 0.0
          %2120 = vmatpush1.msra.mxu0 0.0
          %2121 = vmatprep.subr.mxu0 0.0
          %2122 = vmatpush1.msra.mxu0 0.0
          %2123 = vmatprep.subr.mxu0 0.0
          %2124 = vmatpush1.msra.mxu0 0.0
          %2125 = vmatprep.mubr.f32.mxu0 0.0
          %v2126 = vand.u32 %v1930, 4294901760
          %v2127 = vsub.f32 %v1930, %v2126
          %v2128 = vand.u32 %v2127, 4294901760
          %v2129 = vsub.f32 %v2127, %v2128
          %v2130 = vand.u32 %v2129, 4294901760
          %2131 = vmatmul.mubr.f32.gmra.mrb[0].mxu0 %v2130
          %v2132 = vpop.f32.mrb[0].mxu0
          %v2133 = vadd.f32 %v2012, %v2132
          %v2134 = vpop.f32.mrb[0].mxu0
          %v2135 = vadd.f32 %v2016, %v2134
          %2136 = vdwg.mxu0
          %v2137 = vand.u32 %v1942, 4294901760
          %v2138 = vsub.f32 %v1942, %v2137
          %v2139 = vand.u32 %v2138, 4294901760
          %v2140 = vsub.f32 %v2138, %v2139
          %v2141 = vand.u32 %v2140, 4294901760
          %2142 = vmatprep.subr.mxu0 %v2141
          %v2143 = vand.u32 %v1941, 4294901760
          %v2144 = vsub.f32 %v1941, %v2143
          %v2145 = vand.u32 %v2144, 4294901760
          %v2146 = vsub.f32 %v2144, %v2145
          %v2147 = vand.u32 %v2146, 4294901760
          %2148 = vmatpush1.msra.mxu0 %v2147
          %v2149 = vand.u32 %v1946, 4294901760
          %v2150 = vsub.f32 %v1946, %v2149
          %v2151 = vand.u32 %v2150, 4294901760
          %v2152 = vsub.f32 %v2150, %v2151
          %v2153 = vand.u32 %v2152, 4294901760
          %2154 = vmatprep.subr.mxu0 %v2153
          %v2155 = vand.u32 %v1945, 4294901760
          %v2156 = vsub.f32 %v1945, %v2155
          %v2157 = vand.u32 %v2156, 4294901760
          %v2158 = vsub.f32 %v2156, %v2157
          %v2159 = vand.u32 %v2158, 4294901760
          %2160 = vmatpush1.msra.mxu0 %v2159
          %v2161 = vand.u32 %v1950, 4294901760
          %v2162 = vsub.f32 %v1950, %v2161
          %v2163 = vand.u32 %v2162, 4294901760
          %v2164 = vsub.f32 %v2162, %v2163
          %v2165 = vand.u32 %v2164, 4294901760
          %2166 = vmatprep.subr.mxu0 %v2165
          %v2167 = vand.u32 %v1949, 4294901760
          %v2168 = vsub.f32 %v1949, %v2167
          %v2169 = vand.u32 %v2168, 4294901760
          %v2170 = vsub.f32 %v2168, %v2169
          %v2171 = vand.u32 %v2170, 4294901760
          %2172 = vmatpush1.msra.mxu0 %v2171
          %v2173 = vand.u32 %v1954, 4294901760
          %v2174 = vsub.f32 %v1954, %v2173
          %v2175 = vand.u32 %v2174, 4294901760
          %v2176 = vsub.f32 %v2174, %v2175
          %v2177 = vand.u32 %v2176, 4294901760
          %2178 = vmatprep.subr.mxu0 %v2177
          %v2179 = vand.u32 %v1953, 4294901760
          %v2180 = vsub.f32 %v1953, %v2179
          %v2181 = vand.u32 %v2180, 4294901760
          %v2182 = vsub.f32 %v2180, %v2181
          %v2183 = vand.u32 %v2182, 4294901760
          %2184 = vmatpush1.msra.mxu0 %v2183
          %v2185 = vand.u32 %v1958, 4294901760
          %v2186 = vsub.f32 %v1958, %v2185
          %v2187 = vand.u32 %v2186, 4294901760
          %v2188 = vsub.f32 %v2186, %v2187
          %v2189 = vand.u32 %v2188, 4294901760
          %2190 = vmatprep.subr.mxu0 %v2189
          %v2191 = vand.u32 %v1957, 4294901760
          %v2192 = vsub.f32 %v1957, %v2191
          %v2193 = vand.u32 %v2192, 4294901760
          %v2194 = vsub.f32 %v2192, %v2193
          %v2195 = vand.u32 %v2194, 4294901760
          %2196 = vmatpush1.msra.mxu0 %v2195
          %v2197 = vand.u32 %v1962, 4294901760
          %v2198 = vsub.f32 %v1962, %v2197
          %v2199 = vand.u32 %v2198, 4294901760
          %v2200 = vsub.f32 %v2198, %v2199
          %v2201 = vand.u32 %v2200, 4294901760
          %2202 = vmatprep.subr.mxu0 %v2201
          %v2203 = vand.u32 %v1961, 4294901760
          %v2204 = vsub.f32 %v1961, %v2203
          %v2205 = vand.u32 %v2204, 4294901760
          %v2206 = vsub.f32 %v2204, %v2205
          %v2207 = vand.u32 %v2206, 4294901760
          %2208 = vmatpush1.msra.mxu0 %v2207
          %v2209 = vand.u32 %v1966, 4294901760
          %v2210 = vsub.f32 %v1966, %v2209
          %v2211 = vand.u32 %v2210, 4294901760
          %v2212 = vsub.f32 %v2210, %v2211
          %v2213 = vand.u32 %v2212, 4294901760
          %2214 = vmatprep.subr.mxu0 %v2213
          %v2215 = vand.u32 %v1965, 4294901760
          %v2216 = vsub.f32 %v1965, %v2215
          %v2217 = vand.u32 %v2216, 4294901760
          %v2218 = vsub.f32 %v2216, %v2217
          %v2219 = vand.u32 %v2218, 4294901760
          %2220 = vmatpush1.msra.mxu0 %v2219
          %v2221 = vand.u32 %v1970, 4294901760
          %v2222 = vsub.f32 %v1970, %v2221
          %v2223 = vand.u32 %v2222, 4294901760
          %v2224 = vsub.f32 %v2222, %v2223
          %v2225 = vand.u32 %v2224, 4294901760
          %2226 = vmatprep.subr.mxu0 %v2225
          %v2227 = vand.u32 %v1969, 4294901760
          %v2228 = vsub.f32 %v1969, %v2227
          %v2229 = vand.u32 %v2228, 4294901760
          %v2230 = vsub.f32 %v2228, %v2229
          %v2231 = vand.u32 %v2230, 4294901760
          %2232 = vmatpush1.msra.mxu0 %v2231
          %v2233 = vand.u32 %v1974, 4294901760
          %v2234 = vsub.f32 %v1974, %v2233
          %v2235 = vand.u32 %v2234, 4294901760
          %v2236 = vsub.f32 %v2234, %v2235
          %v2237 = vand.u32 %v2236, 4294901760
          %2238 = vmatprep.subr.mxu0 %v2237
          %v2239 = vand.u32 %v1973, 4294901760
          %v2240 = vsub.f32 %v1973, %v2239
          %v2241 = vand.u32 %v2240, 4294901760
          %v2242 = vsub.f32 %v2240, %v2241
          %v2243 = vand.u32 %v2242, 4294901760
          %2244 = vmatpush1.msra.mxu0 %v2243
          %v2245 = vand.u32 %v1978, 4294901760
          %v2246 = vsub.f32 %v1978, %v2245
          %v2247 = vand.u32 %v2246, 4294901760
          %v2248 = vsub.f32 %v2246, %v2247
          %v2249 = vand.u32 %v2248, 4294901760
          %2250 = vmatprep.subr.mxu0 %v2249
          %v2251 = vand.u32 %v1977, 4294901760
          %v2252 = vsub.f32 %v1977, %v2251
          %v2253 = vand.u32 %v2252, 4294901760
          %v2254 = vsub.f32 %v2252, %v2253
          %v2255 = vand.u32 %v2254, 4294901760
          %2256 = vmatpush1.msra.mxu0 %v2255
          %v2257 = vand.u32 %v1982, 4294901760
          %v2258 = vsub.f32 %v1982, %v2257
          %v2259 = vand.u32 %v2258, 4294901760
          %v2260 = vsub.f32 %v2258, %v2259
          %v2261 = vand.u32 %v2260, 4294901760
          %2262 = vmatprep.subr.mxu0 %v2261
          %v2263 = vand.u32 %v1981, 4294901760
          %v2264 = vsub.f32 %v1981, %v2263
          %v2265 = vand.u32 %v2264, 4294901760
          %v2266 = vsub.f32 %v2264, %v2265
          %v2267 = vand.u32 %v2266, 4294901760
          %2268 = vmatpush1.msra.mxu0 %v2267
          %v2269 = vand.u32 %v1986, 4294901760
          %v2270 = vsub.f32 %v1986, %v2269
          %v2271 = vand.u32 %v2270, 4294901760
          %v2272 = vsub.f32 %v2270, %v2271
          %v2273 = vand.u32 %v2272, 4294901760
          %2274 = vmatprep.subr.mxu0 %v2273
          %v2275 = vand.u32 %v1985, 4294901760
          %v2276 = vsub.f32 %v1985, %v2275
          %v2277 = vand.u32 %v2276, 4294901760
          %v2278 = vsub.f32 %v2276, %v2277
          %v2279 = vand.u32 %v2278, 4294901760
          %2280 = vmatpush1.msra.mxu0 %v2279
          %v2281 = vand.u32 %v1990, 4294901760
          %v2282 = vsub.f32 %v1990, %v2281
          %v2283 = vand.u32 %v2282, 4294901760
          %v2284 = vsub.f32 %v2282, %v2283
          %v2285 = vand.u32 %v2284, 4294901760
          %2286 = vmatprep.subr.mxu0 %v2285
          %v2287 = vand.u32 %v1989, 4294901760
          %v2288 = vsub.f32 %v1989, %v2287
          %v2289 = vand.u32 %v2288, 4294901760
          %v2290 = vsub.f32 %v2288, %v2289
          %v2291 = vand.u32 %v2290, 4294901760
          %2292 = vmatpush1.msra.mxu0 %v2291
          %v2293 = vand.u32 %v1994, 4294901760
          %v2294 = vsub.f32 %v1994, %v2293
          %v2295 = vand.u32 %v2294, 4294901760
          %v2296 = vsub.f32 %v2294, %v2295
          %v2297 = vand.u32 %v2296, 4294901760
          %2298 = vmatprep.subr.mxu0 %v2297
          %v2299 = vand.u32 %v1993, 4294901760
          %v2300 = vsub.f32 %v1993, %v2299
          %v2301 = vand.u32 %v2300, 4294901760
          %v2302 = vsub.f32 %v2300, %v2301
          %v2303 = vand.u32 %v2302, 4294901760
          %2304 = vmatpush1.msra.mxu0 %v2303
          %v2305 = vand.u32 %v1998, 4294901760
          %v2306 = vsub.f32 %v1998, %v2305
          %v2307 = vand.u32 %v2306, 4294901760
          %v2308 = vsub.f32 %v2306, %v2307
          %v2309 = vand.u32 %v2308, 4294901760
          %2310 = vmatprep.subr.mxu0 %v2309
          %v2311 = vand.u32 %v1997, 4294901760
          %v2312 = vsub.f32 %v1997, %v2311
          %v2313 = vand.u32 %v2312, 4294901760
          %v2314 = vsub.f32 %v2312, %v2313
          %v2315 = vand.u32 %v2314, 4294901760
          %2316 = vmatpush1.msra.mxu0 %v2315
          %v2317 = vand.u32 %v2002, 4294901760
          %v2318 = vsub.f32 %v2002, %v2317
          %v2319 = vand.u32 %v2318, 4294901760
          %v2320 = vsub.f32 %v2318, %v2319
          %v2321 = vand.u32 %v2320, 4294901760
          %2322 = vmatprep.subr.mxu0 %v2321
          %v2323 = vand.u32 %v2001, 4294901760
          %v2324 = vsub.f32 %v2001, %v2323
          %v2325 = vand.u32 %v2324, 4294901760
          %v2326 = vsub.f32 %v2324, %v2325
          %v2327 = vand.u32 %v2326, 4294901760
          %2328 = vmatpush1.msra.mxu0 %v2327
          %2329 = vmatprep.subr.mxu0 0.0
          %2330 = vmatpush1.msra.mxu0 0.0
          %2331 = vmatprep.subr.mxu0 0.0
          %2332 = vmatpush1.msra.mxu0 0.0
          %2333 = vmatprep.subr.mxu0 0.0
          %2334 = vmatpush1.msra.mxu0 0.0
          %2335 = vmatprep.subr.mxu0 0.0
          %2336 = vmatpush1.msra.mxu0 0.0
          %2337 = vmatprep.subr.mxu0 0.0
          %2338 = vmatpush1.msra.mxu0 0.0
          %2339 = vmatprep.subr.mxu0 0.0
          %2340 = vmatpush1.msra.mxu0 0.0
          %2341 = vmatprep.subr.mxu0 0.0
          %2342 = vmatpush1.msra.mxu0 0.0
          %2343 = vmatprep.subr.mxu0 0.0
          %2344 = vmatpush1.msra.mxu0 0.0
          %2345 = vmatprep.subr.mxu0 0.0
          %2346 = vmatpush1.msra.mxu0 0.0
          %2347 = vmatprep.subr.mxu0 0.0
          %2348 = vmatpush1.msra.mxu0 0.0
          %2349 = vmatprep.subr.mxu0 0.0
          %2350 = vmatpush1.msra.mxu0 0.0
          %2351 = vmatprep.subr.mxu0 0.0
          %2352 = vmatpush1.msra.mxu0 0.0
          %2353 = vmatprep.subr.mxu0 0.0
          %2354 = vmatpush1.msra.mxu0 0.0
          %2355 = vmatprep.subr.mxu0 0.0
          %2356 = vmatpush1.msra.mxu0 0.0
          %2357 = vmatprep.subr.mxu0 0.0
          %2358 = vmatpush1.msra.mxu0 0.0
          %2359 = vmatprep.subr.mxu0 0.0
          %2360 = vmatpush1.msra.mxu0 0.0
          %2361 = vmatprep.mubr.f32.mxu0 0.0
          %v2362 = vand.u32 %v1930, 4294901760
          %2363 = vmatmul.mubr.f32.gmra.mrb[0].mxu0 %v2362
          %v2364 = vpop.f32.mrb[0].mxu0
          %v2365 = vadd.f32 %v2133, %v2364
          %v2366 = vpop.f32.mrb[0].mxu0
          %v2367 = vadd.f32 %v2135, %v2366
          %2368 = vdwg.mxu0
          %v2369 = vand.u32 %v1942, 4294901760
          %v2370 = vsub.f32 %v1942, %v2369
          %2371 = vmatprep.subr.mxu0 %v2370
          %v2372 = vand.u32 %v1941, 4294901760
          %v2373 = vsub.f32 %v1941, %v2372
          %2374 = vmatpush1.msra.mxu0 %v2373
          %v2375 = vand.u32 %v1946, 4294901760
          %v2376 = vsub.f32 %v1946, %v2375
          %2377 = vmatprep.subr.mxu0 %v2376
          %v2378 = vand.u32 %v1945, 4294901760
          %v2379 = vsub.f32 %v1945, %v2378
          %2380 = vmatpush1.msra.mxu0 %v2379
          %v2381 = vand.u32 %v1950, 4294901760
          %v2382 = vsub.f32 %v1950, %v2381
          %2383 = vmatprep.subr.mxu0 %v2382
          %v2384 = vand.u32 %v1949, 4294901760
          %v2385 = vsub.f32 %v1949, %v2384
          %2386 = vmatpush1.msra.mxu0 %v2385
          %v2387 = vand.u32 %v1954, 4294901760
          %v2388 = vsub.f32 %v1954, %v2387
          %2389 = vmatprep.subr.mxu0 %v2388
          %v2390 = vand.u32 %v1953, 4294901760
          %v2391 = vsub.f32 %v1953, %v2390
          %2392 = vmatpush1.msra.mxu0 %v2391
          %v2393 = vand.u32 %v1958, 4294901760
          %v2394 = vsub.f32 %v1958, %v2393
          %2395 = vmatprep.subr.mxu0 %v2394
          %v2396 = vand.u32 %v1957, 4294901760
          %v2397 = vsub.f32 %v1957, %v2396
          %2398 = vmatpush1.msra.mxu0 %v2397
          %v2399 = vand.u32 %v1962, 4294901760
          %v2400 = vsub.f32 %v1962, %v2399
          %2401 = vmatprep.subr.mxu0 %v2400
          %v2402 = vand.u32 %v1961, 4294901760
          %v2403 = vsub.f32 %v1961, %v2402
          %2404 = vmatpush1.msra.mxu0 %v2403
          %v2405 = vand.u32 %v1966, 4294901760
          %v2406 = vsub.f32 %v1966, %v2405
          %2407 = vmatprep.subr.mxu0 %v2406
          %v2408 = vand.u32 %v1965, 4294901760
          %v2409 = vsub.f32 %v1965, %v2408
          %2410 = vmatpush1.msra.mxu0 %v2409
          %v2411 = vand.u32 %v1970, 4294901760
          %v2412 = vsub.f32 %v1970, %v2411
          %2413 = vmatprep.subr.mxu0 %v2412
          %v2414 = vand.u32 %v1969, 4294901760
          %v2415 = vsub.f32 %v1969, %v2414
          %2416 = vmatpush1.msra.mxu0 %v2415
          %v2417 = vand.u32 %v1974, 4294901760
          %v2418 = vsub.f32 %v1974, %v2417
          %2419 = vmatprep.subr.mxu0 %v2418
          %v2420 = vand.u32 %v1973, 4294901760
          %v2421 = vsub.f32 %v1973, %v2420
          %2422 = vmatpush1.msra.mxu0 %v2421
          %v2423 = vand.u32 %v1978, 4294901760
          %v2424 = vsub.f32 %v1978, %v2423
          %2425 = vmatprep.subr.mxu0 %v2424
          %v2426 = vand.u32 %v1977, 4294901760
          %v2427 = vsub.f32 %v1977, %v2426
          %2428 = vmatpush1.msra.mxu0 %v2427
          %v2429 = vand.u32 %v1982, 4294901760
          %v2430 = vsub.f32 %v1982, %v2429
          %2431 = vmatprep.subr.mxu0 %v2430
          %v2432 = vand.u32 %v1981, 4294901760
          %v2433 = vsub.f32 %v1981, %v2432
          %2434 = vmatpush1.msra.mxu0 %v2433
          %v2435 = vand.u32 %v1986, 4294901760
          %v2436 = vsub.f32 %v1986, %v2435
          %2437 = vmatprep.subr.mxu0 %v2436
          %v2438 = vand.u32 %v1985, 4294901760
          %v2439 = vsub.f32 %v1985, %v2438
          %2440 = vmatpush1.msra.mxu0 %v2439
          %v2441 = vand.u32 %v1990, 4294901760
          %v2442 = vsub.f32 %v1990, %v2441
          %2443 = vmatprep.subr.mxu0 %v2442
          %v2444 = vand.u32 %v1989, 4294901760
          %v2445 = vsub.f32 %v1989, %v2444
          %2446 = vmatpush1.msra.mxu0 %v2445
          %v2447 = vand.u32 %v1994, 4294901760
          %v2448 = vsub.f32 %v1994, %v2447
          %2449 = vmatprep.subr.mxu0 %v2448
          %v2450 = vand.u32 %v1993, 4294901760
          %v2451 = vsub.f32 %v1993, %v2450
          %2452 = vmatpush1.msra.mxu0 %v2451
          %v2453 = vand.u32 %v1998, 4294901760
          %v2454 = vsub.f32 %v1998, %v2453
          %2455 = vmatprep.subr.mxu0 %v2454
          %v2456 = vand.u32 %v1997, 4294901760
          %v2457 = vsub.f32 %v1997, %v2456
          %2458 = vmatpush1.msra.mxu0 %v2457
          %v2459 = vand.u32 %v2002, 4294901760
          %v2460 = vsub.f32 %v2002, %v2459
          %2461 = vmatprep.subr.mxu0 %v2460
          %v2462 = vand.u32 %v2001, 4294901760
          %v2463 = vsub.f32 %v2001, %v2462
          %2464 = vmatpush1.msra.mxu0 %v2463
          %2465 = vmatprep.subr.mxu0 0.0
          %2466 = vmatpush1.msra.mxu0 0.0
          %2467 = vmatprep.subr.mxu0 0.0
          %2468 = vmatpush1.msra.mxu0 0.0
          %2469 = vmatprep.subr.mxu0 0.0
          %2470 = vmatpush1.msra.mxu0 0.0
          %2471 = vmatprep.subr.mxu0 0.0
          %2472 = vmatpush1.msra.mxu0 0.0
          %2473 = vmatprep.subr.mxu0 0.0
          %2474 = vmatpush1.msra.mxu0 0.0
          %2475 = vmatprep.subr.mxu0 0.0
          %2476 = vmatpush1.msra.mxu0 0.0
          %2477 = vmatprep.subr.mxu0 0.0
          %2478 = vmatpush1.msra.mxu0 0.0
          %2479 = vmatprep.subr.mxu0 0.0
          %2480 = vmatpush1.msra.mxu0 0.0
          %2481 = vmatprep.subr.mxu0 0.0
          %2482 = vmatpush1.msra.mxu0 0.0
          %2483 = vmatprep.subr.mxu0 0.0
          %2484 = vmatpush1.msra.mxu0 0.0
          %2485 = vmatprep.subr.mxu0 0.0
          %2486 = vmatpush1.msra.mxu0 0.0
          %2487 = vmatprep.subr.mxu0 0.0
          %2488 = vmatpush1.msra.mxu0 0.0
          %2489 = vmatprep.subr.mxu0 0.0
          %2490 = vmatpush1.msra.mxu0 0.0
          %2491 = vmatprep.subr.mxu0 0.0
          %2492 = vmatpush1.msra.mxu0 0.0
          %2493 = vmatprep.subr.mxu0 0.0
          %2494 = vmatpush1.msra.mxu0 0.0
          %2495 = vmatprep.subr.mxu0 0.0
          %2496 = vmatpush1.msra.mxu0 0.0
          %2497 = vmatprep.mubr.f32.mxu0 0.0
          %v2498 = vand.u32 %v1930, 4294901760
          %v2499 = vsub.f32 %v1930, %v2498
          %2500 = vmatmul.mubr.f32.gmra.mrb[0].mxu0 %v2499
          %v2501 = vpop.f32.mrb[0].mxu0
          %v2502 = vadd.f32 %v2365, %v2501
          %v2503 = vpop.f32.mrb[0].mxu0
          %v2504 = vadd.f32 %v2367, %v2503
          %2505 = vdwg.mxu0
          %v2506 = vand.u32 %v1942, 4294901760
          %2507 = vmatprep.subr.mxu0 %v2506
          %v2508 = vand.u32 %v1941, 4294901760
          %2509 = vmatpush1.msra.mxu0 %v2508
          %v2510 = vand.u32 %v1946, 4294901760
          %2511 = vmatprep.subr.mxu0 %v2510
          %v2512 = vand.u32 %v1945, 4294901760
          %2513 = vmatpush1.msra.mxu0 %v2512
          %v2514 = vand.u32 %v1950, 4294901760
          %2515 = vmatprep.subr.mxu0 %v2514
          %v2516 = vand.u32 %v1949, 4294901760
          %2517 = vmatpush1.msra.mxu0 %v2516
          %v2518 = vand.u32 %v1954, 4294901760
          %2519 = vmatprep.subr.mxu0 %v2518
          %v2520 = vand.u32 %v1953, 4294901760
          %2521 = vmatpush1.msra.mxu0 %v2520
          %v2522 = vand.u32 %v1958, 4294901760
          %2523 = vmatprep.subr.mxu0 %v2522
          %v2524 = vand.u32 %v1957, 4294901760
          %2525 = vmatpush1.msra.mxu0 %v2524
          %v2526 = vand.u32 %v1962, 4294901760
          %2527 = vmatprep.subr.mxu0 %v2526
          %v2528 = vand.u32 %v1961, 4294901760
          %2529 = vmatpush1.msra.mxu0 %v2528
          %v2530 = vand.u32 %v1966, 4294901760
          %2531 = vmatprep.subr.mxu0 %v2530
          %v2532 = vand.u32 %v1965, 4294901760
          %2533 = vmatpush1.msra.mxu0 %v2532
          %v2534 = vand.u32 %v1970, 4294901760
          %2535 = vmatprep.subr.mxu0 %v2534
          %v2536 = vand.u32 %v1969, 4294901760
          %2537 = vmatpush1.msra.mxu0 %v2536
          %v2538 = vand.u32 %v1974, 4294901760
          %2539 = vmatprep.subr.mxu0 %v2538
          %v2540 = vand.u32 %v1973, 4294901760
          %2541 = vmatpush1.msra.mxu0 %v2540
          %v2542 = vand.u32 %v1978, 4294901760
          %2543 = vmatprep.subr.mxu0 %v2542
          %v2544 = vand.u32 %v1977, 4294901760
          %2545 = vmatpush1.msra.mxu0 %v2544
          %v2546 = vand.u32 %v1982, 4294901760
          %2547 = vmatprep.subr.mxu0 %v2546
          %v2548 = vand.u32 %v1981, 4294901760
          %2549 = vmatpush1.msra.mxu0 %v2548
          %v2550 = vand.u32 %v1986, 4294901760
          %2551 = vmatprep.subr.mxu0 %v2550
          %v2552 = vand.u32 %v1985, 4294901760
          %2553 = vmatpush1.msra.mxu0 %v2552
          %v2554 = vand.u32 %v1990, 4294901760
          %2555 = vmatprep.subr.mxu0 %v2554
          %v2556 = vand.u32 %v1989, 4294901760
          %2557 = vmatpush1.msra.mxu0 %v2556
          %v2558 = vand.u32 %v1994, 4294901760
          %2559 = vmatprep.subr.mxu0 %v2558
          %v2560 = vand.u32 %v1993, 4294901760
          %2561 = vmatpush1.msra.mxu0 %v2560
          %v2562 = vand.u32 %v1998, 4294901760
          %2563 = vmatprep.subr.mxu0 %v2562
          %v2564 = vand.u32 %v1997, 4294901760
          %2565 = vmatpush1.msra.mxu0 %v2564
          %v2566 = vand.u32 %v2002, 4294901760
          %2567 = vmatprep.subr.mxu0 %v2566
          %v2568 = vand.u32 %v2001, 4294901760
          %2569 = vmatpush1.msra.mxu0 %v2568
          %2570 = vmatprep.subr.mxu0 0.0
          %2571 = vmatpush1.msra.mxu0 0.0
          %2572 = vmatprep.subr.mxu0 0.0
          %2573 = vmatpush1.msra.mxu0 0.0
          %2574 = vmatprep.subr.mxu0 0.0
          %2575 = vmatpush1.msra.mxu0 0.0
          %2576 = vmatprep.subr.mxu0 0.0
          %2577 = vmatpush1.msra.mxu0 0.0
          %2578 = vmatprep.subr.mxu0 0.0
          %2579 = vmatpush1.msra.mxu0 0.0
          %2580 = vmatprep.subr.mxu0 0.0
          %2581 = vmatpush1.msra.mxu0 0.0
          %2582 = vmatprep.subr.mxu0 0.0
          %2583 = vmatpush1.msra.mxu0 0.0
          %2584 = vmatprep.subr.mxu0 0.0
          %2585 = vmatpush1.msra.mxu0 0.0
          %2586 = vmatprep.subr.mxu0 0.0
          %2587 = vmatpush1.msra.mxu0 0.0
          %2588 = vmatprep.subr.mxu0 0.0
          %2589 = vmatpush1.msra.mxu0 0.0
          %2590 = vmatprep.subr.mxu0 0.0
          %2591 = vmatpush1.msra.mxu0 0.0
          %2592 = vmatprep.subr.mxu0 0.0
          %2593 = vmatpush1.msra.mxu0 0.0
          %2594 = vmatprep.subr.mxu0 0.0
          %2595 = vmatpush1.msra.mxu0 0.0
          %2596 = vmatprep.subr.mxu0 0.0
          %2597 = vmatpush1.msra.mxu0 0.0
          %2598 = vmatprep.subr.mxu0 0.0
          %2599 = vmatpush1.msra.mxu0 0.0
          %2600 = vmatprep.subr.mxu0 0.0
          %2601 = vmatpush1.msra.mxu0 0.0
          %2602 = vmatprep.mubr.f32.mxu0 0.0
          %v2603 = vand.u32 %v1930, 4294901760
          %v2604 = vsub.f32 %v1930, %v2603
          %v2605 = vand.u32 %v2604, 4294901760
          %2606 = vmatmul.mubr.f32.gmra.mrb[0].mxu0 %v2605
          %v2607 = vpop.f32.mrb[0].mxu0
          %v2608 = vadd.f32 %v2502, %v2607
          %v2609 = vpop.f32.mrb[0].mxu0
          %v2610 = vadd.f32 %v2504, %v2609
          %2611 = vdwg.mxu0
          %v2612 = vand.u32 %v1942, 4294901760
          %v2613 = vsub.f32 %v1942, %v2612
          %v2614 = vand.u32 %v2613, 4294901760
          %2615 = vmatprep.subr.mxu0 %v2614
          %v2616 = vand.u32 %v1941, 4294901760
          %v2617 = vsub.f32 %v1941, %v2616
          %v2618 = vand.u32 %v2617, 4294901760
          %2619 = vmatpush1.msra.mxu0 %v2618
          %v2620 = vand.u32 %v1946, 4294901760
          %v2621 = vsub.f32 %v1946, %v2620
          %v2622 = vand.u32 %v2621, 4294901760
          %2623 = vmatprep.subr.mxu0 %v2622
          %v2624 = vand.u32 %v1945, 4294901760
          %v2625 = vsub.f32 %v1945, %v2624
          %v2626 = vand.u32 %v2625, 4294901760
          %2627 = vmatpush1.msra.mxu0 %v2626
          %v2628 = vand.u32 %v1950, 4294901760
          %v2629 = vsub.f32 %v1950, %v2628
          %v2630 = vand.u32 %v2629, 4294901760
          %2631 = vmatprep.subr.mxu0 %v2630
          %v2632 = vand.u32 %v1949, 4294901760
          %v2633 = vsub.f32 %v1949, %v2632
          %v2634 = vand.u32 %v2633, 4294901760
          %2635 = vmatpush1.msra.mxu0 %v2634
          %v2636 = vand.u32 %v1954, 4294901760
          %v2637 = vsub.f32 %v1954, %v2636
          %v2638 = vand.u32 %v2637, 4294901760
          %2639 = vmatprep.subr.mxu0 %v2638
          %v2640 = vand.u32 %v1953, 4294901760
          %v2641 = vsub.f32 %v1953, %v2640
          %v2642 = vand.u32 %v2641, 4294901760
          %2643 = vmatpush1.msra.mxu0 %v2642
          %v2644 = vand.u32 %v1958, 4294901760
          %v2645 = vsub.f32 %v1958, %v2644
          %v2646 = vand.u32 %v2645, 4294901760
          %2647 = vmatprep.subr.mxu0 %v2646
          %v2648 = vand.u32 %v1957, 4294901760
          %v2649 = vsub.f32 %v1957, %v2648
          %v2650 = vand.u32 %v2649, 4294901760
          %2651 = vmatpush1.msra.mxu0 %v2650
          %v2652 = vand.u32 %v1962, 4294901760
          %v2653 = vsub.f32 %v1962, %v2652
          %v2654 = vand.u32 %v2653, 4294901760
          %2655 = vmatprep.subr.mxu0 %v2654
          %v2656 = vand.u32 %v1961, 4294901760
          %v2657 = vsub.f32 %v1961, %v2656
          %v2658 = vand.u32 %v2657, 4294901760
          %2659 = vmatpush1.msra.mxu0 %v2658
          %v2660 = vand.u32 %v1966, 4294901760
          %v2661 = vsub.f32 %v1966, %v2660
          %v2662 = vand.u32 %v2661, 4294901760
          %2663 = vmatprep.subr.mxu0 %v2662
          %v2664 = vand.u32 %v1965, 4294901760
          %v2665 = vsub.f32 %v1965, %v2664
          %v2666 = vand.u32 %v2665, 4294901760
          %2667 = vmatpush1.msra.mxu0 %v2666
          %v2668 = vand.u32 %v1970, 4294901760
          %v2669 = vsub.f32 %v1970, %v2668
          %v2670 = vand.u32 %v2669, 4294901760
          %2671 = vmatprep.subr.mxu0 %v2670
          %v2672 = vand.u32 %v1969, 4294901760
          %v2673 = vsub.f32 %v1969, %v2672
          %v2674 = vand.u32 %v2673, 4294901760
          %2675 = vmatpush1.msra.mxu0 %v2674
          %v2676 = vand.u32 %v1974, 4294901760
          %v2677 = vsub.f32 %v1974, %v2676
          %v2678 = vand.u32 %v2677, 4294901760
          %2679 = vmatprep.subr.mxu0 %v2678
          %v2680 = vand.u32 %v1973, 4294901760
          %v2681 = vsub.f32 %v1973, %v2680
          %v2682 = vand.u32 %v2681, 4294901760
          %2683 = vmatpush1.msra.mxu0 %v2682
          %v2684 = vand.u32 %v1978, 4294901760
          %v2685 = vsub.f32 %v1978, %v2684
          %v2686 = vand.u32 %v2685, 4294901760
          %2687 = vmatprep.subr.mxu0 %v2686
          %v2688 = vand.u32 %v1977, 4294901760
          %v2689 = vsub.f32 %v1977, %v2688
          %v2690 = vand.u32 %v2689, 4294901760
          %2691 = vmatpush1.msra.mxu0 %v2690
          %v2692 = vand.u32 %v1982, 4294901760
          %v2693 = vsub.f32 %v1982, %v2692
          %v2694 = vand.u32 %v2693, 4294901760
          %2695 = vmatprep.subr.mxu0 %v2694
          %v2696 = vand.u32 %v1981, 4294901760
          %v2697 = vsub.f32 %v1981, %v2696
          %v2698 = vand.u32 %v2697, 4294901760
          %2699 = vmatpush1.msra.mxu0 %v2698
          %v2700 = vand.u32 %v1986, 4294901760
          %v2701 = vsub.f32 %v1986, %v2700
          %v2702 = vand.u32 %v2701, 4294901760
          %2703 = vmatprep.subr.mxu0 %v2702
          %v2704 = vand.u32 %v1985, 4294901760
          %v2705 = vsub.f32 %v1985, %v2704
          %v2706 = vand.u32 %v2705, 4294901760
          %2707 = vmatpush1.msra.mxu0 %v2706
          %v2708 = vand.u32 %v1990, 4294901760
          %v2709 = vsub.f32 %v1990, %v2708
          %v2710 = vand.u32 %v2709, 4294901760
          %2711 = vmatprep.subr.mxu0 %v2710
          %v2712 = vand.u32 %v1989, 4294901760
          %v2713 = vsub.f32 %v1989, %v2712
          %v2714 = vand.u32 %v2713, 4294901760
          %2715 = vmatpush1.msra.mxu0 %v2714
          %v2716 = vand.u32 %v1994, 4294901760
          %v2717 = vsub.f32 %v1994, %v2716
          %v2718 = vand.u32 %v2717, 4294901760
          %2719 = vmatprep.subr.mxu0 %v2718
          %v2720 = vand.u32 %v1993, 4294901760
          %v2721 = vsub.f32 %v1993, %v2720
          %v2722 = vand.u32 %v2721, 4294901760
          %2723 = vmatpush1.msra.mxu0 %v2722
          %v2724 = vand.u32 %v1998, 4294901760
          %v2725 = vsub.f32 %v1998, %v2724
          %v2726 = vand.u32 %v2725, 4294901760
          %2727 = vmatprep.subr.mxu0 %v2726
          %v2728 = vand.u32 %v1997, 4294901760
          %v2729 = vsub.f32 %v1997, %v2728
          %v2730 = vand.u32 %v2729, 4294901760
          %2731 = vmatpush1.msra.mxu0 %v2730
          %v2732 = vand.u32 %v2002, 4294901760
          %v2733 = vsub.f32 %v2002, %v2732
          %v2734 = vand.u32 %v2733, 4294901760
          %2735 = vmatprep.subr.mxu0 %v2734
          %v2736 = vand.u32 %v2001, 4294901760
          %v2737 = vsub.f32 %v2001, %v2736
          %v2738 = vand.u32 %v2737, 4294901760
          %2739 = vmatpush1.msra.mxu0 %v2738
          %2740 = vmatprep.subr.mxu0 0.0
          %2741 = vmatpush1.msra.mxu0 0.0
          %2742 = vmatprep.subr.mxu0 0.0
          %2743 = vmatpush1.msra.mxu0 0.0
          %2744 = vmatprep.subr.mxu0 0.0
          %2745 = vmatpush1.msra.mxu0 0.0
          %2746 = vmatprep.subr.mxu0 0.0
          %2747 = vmatpush1.msra.mxu0 0.0
          %2748 = vmatprep.subr.mxu0 0.0
          %2749 = vmatpush1.msra.mxu0 0.0
          %2750 = vmatprep.subr.mxu0 0.0
          %2751 = vmatpush1.msra.mxu0 0.0
          %2752 = vmatprep.subr.mxu0 0.0
          %2753 = vmatpush1.msra.mxu0 0.0
          %2754 = vmatprep.subr.mxu0 0.0
          %2755 = vmatpush1.msra.mxu0 0.0
          %2756 = vmatprep.subr.mxu0 0.0
          %2757 = vmatpush1.msra.mxu0 0.0
          %2758 = vmatprep.subr.mxu0 0.0
          %2759 = vmatpush1.msra.mxu0 0.0
          %2760 = vmatprep.subr.mxu0 0.0
          %2761 = vmatpush1.msra.mxu0 0.0
          %2762 = vmatprep.subr.mxu0 0.0
          %2763 = vmatpush1.msra.mxu0 0.0
          %2764 = vmatprep.subr.mxu0 0.0
          %2765 = vmatpush1.msra.mxu0 0.0
          %2766 = vmatprep.subr.mxu0 0.0
          %2767 = vmatpush1.msra.mxu0 0.0
          %2768 = vmatprep.subr.mxu0 0.0
          %2769 = vmatpush1.msra.mxu0 0.0
          %2770 = vmatprep.subr.mxu0 0.0
          %2771 = vmatpush1.msra.mxu0 0.0
          %2772 = vmatprep.mubr.f32.mxu0 0.0
          %v2773 = vand.u32 %v1930, 4294901760
          %2774 = vmatmul.mubr.f32.gmra.mrb[0].mxu0 %v2773
          %v2775 = vpop.f32.mrb[0].mxu0
          %v2776 = vadd.f32 %v2608, %v2775
          %v2777 = vpop.f32.mrb[0].mxu0
          %v2778 = vadd.f32 %v2610, %v2777
          %2779 = vdwg.mxu0
          %v2780 = vand.u32 %v1942, 4294901760
          %2781 = vmatprep.subr.mxu0 %v2780
          %v2782 = vand.u32 %v1941, 4294901760
          %2783 = vmatpush1.msra.mxu0 %v2782
          %v2784 = vand.u32 %v1946, 4294901760
          %2785 = vmatprep.subr.mxu0 %v2784
          %v2786 = vand.u32 %v1945, 4294901760
          %2787 = vmatpush1.msra.mxu0 %v2786
          %v2788 = vand.u32 %v1950, 4294901760
          %2789 = vmatprep.subr.mxu0 %v2788
          %v2790 = vand.u32 %v1949, 4294901760
          %2791 = vmatpush1.msra.mxu0 %v2790
          %v2792 = vand.u32 %v1954, 4294901760
          %2793 = vmatprep.subr.mxu0 %v2792
          %v2794 = vand.u32 %v1953, 4294901760
          %2795 = vmatpush1.msra.mxu0 %v2794
          %v2796 = vand.u32 %v1958, 4294901760
          %2797 = vmatprep.subr.mxu0 %v2796
          %v2798 = vand.u32 %v1957, 4294901760
          %2799 = vmatpush1.msra.mxu0 %v2798
          %v2800 = vand.u32 %v1962, 4294901760
          %2801 = vmatprep.subr.mxu0 %v2800
          %v2802 = vand.u32 %v1961, 4294901760
          %2803 = vmatpush1.msra.mxu0 %v2802
          %v2804 = vand.u32 %v1966, 4294901760
          %2805 = vmatprep.subr.mxu0 %v2804
          %v2806 = vand.u32 %v1965, 4294901760
          %2807 = vmatpush1.msra.mxu0 %v2806
          %v2808 = vand.u32 %v1970, 4294901760
          %2809 = vmatprep.subr.mxu0 %v2808
          %v2810 = vand.u32 %v1969, 4294901760
          %2811 = vmatpush1.msra.mxu0 %v2810
          %v2812 = vand.u32 %v1974, 4294901760
          %2813 = vmatprep.subr.mxu0 %v2812
          %v2814 = vand.u32 %v1973, 4294901760
          %2815 = vmatpush1.msra.mxu0 %v2814
          %v2816 = vand.u32 %v1978, 4294901760
          %2817 = vmatprep.subr.mxu0 %v2816
          %v2818 = vand.u32 %v1977, 4294901760
          %2819 = vmatpush1.msra.mxu0 %v2818
          %v2820 = vand.u32 %v1982, 4294901760
          %2821 = vmatprep.subr.mxu0 %v2820
          %v2822 = vand.u32 %v1981, 4294901760
          %2823 = vmatpush1.msra.mxu0 %v2822
          %v2824 = vand.u32 %v1986, 4294901760
          %2825 = vmatprep.subr.mxu0 %v2824
          %v2826 = vand.u32 %v1985, 4294901760
          %2827 = vmatpush1.msra.mxu0 %v2826
          %v2828 = vand.u32 %v1990, 4294901760
          %2829 = vmatprep.subr.mxu0 %v2828
          %v2830 = vand.u32 %v1989, 4294901760
          %2831 = vmatpush1.msra.mxu0 %v2830
          %v2832 = vand.u32 %v1994, 4294901760
          %2833 = vmatprep.subr.mxu0 %v2832
          %v2834 = vand.u32 %v1993, 4294901760
          %2835 = vmatpush1.msra.mxu0 %v2834
          %v2836 = vand.u32 %v1998, 4294901760
          %2837 = vmatprep.subr.mxu0 %v2836
          %v2838 = vand.u32 %v1997, 4294901760
          %2839 = vmatpush1.msra.mxu0 %v2838
          %v2840 = vand.u32 %v2002, 4294901760
          %2841 = vmatprep.subr.mxu0 %v2840
          %v2842 = vand.u32 %v2001, 4294901760
          %2843 = vmatpush1.msra.mxu0 %v2842
          %2844 = vmatprep.subr.mxu0 0.0
          %2845 = vmatpush1.msra.mxu0 0.0
          %2846 = vmatprep.subr.mxu0 0.0
          %2847 = vmatpush1.msra.mxu0 0.0
          %2848 = vmatprep.subr.mxu0 0.0
          %2849 = vmatpush1.msra.mxu0 0.0
          %2850 = vmatprep.subr.mxu0 0.0
          %2851 = vmatpush1.msra.mxu0 0.0
          %2852 = vmatprep.subr.mxu0 0.0
          %2853 = vmatpush1.msra.mxu0 0.0
          %2854 = vmatprep.subr.mxu0 0.0
          %2855 = vmatpush1.msra.mxu0 0.0
          %2856 = vmatprep.subr.mxu0 0.0
          %2857 = vmatpush1.msra.mxu0 0.0
          %2858 = vmatprep.subr.mxu0 0.0
          %2859 = vmatpush1.msra.mxu0 0.0
          %2860 = vmatprep.subr.mxu0 0.0
          %2861 = vmatpush1.msra.mxu0 0.0
          %2862 = vmatprep.subr.mxu0 0.0
          %2863 = vmatpush1.msra.mxu0 0.0
          %2864 = vmatprep.subr.mxu0 0.0
          %2865 = vmatpush1.msra.mxu0 0.0
          %2866 = vmatprep.subr.mxu0 0.0
          %2867 = vmatpush1.msra.mxu0 0.0
          %2868 = vmatprep.subr.mxu0 0.0
          %2869 = vmatpush1.msra.mxu0 0.0
          %2870 = vmatprep.subr.mxu0 0.0
          %2871 = vmatpush1.msra.mxu0 0.0
          %2872 = vmatprep.subr.mxu0 0.0
          %2873 = vmatpush1.msra.mxu0 0.0
          %2874 = vmatprep.subr.mxu0 0.0
          %2875 = vmatpush1.msra.mxu0 0.0
          %2876 = vmatprep.mubr.f32.mxu0 0.0
          %v2877 = vand.u32 %v1930, 4294901760
          %2878 = vmatmul.mubr.f32.gmra.mrb[0].mxu0 %v2877
          %v2879 = vpop.f32.mrb[0].mxu0
          %v2880 = vadd.f32 %v2776, %v2879
          %v2881 = vpop.f32.mrb[0].mxu0
          %v2882 = vadd.f32 %v2778, %v2881
          %2883 = vdwg.mxu0
          %v2884 = vand.u32 %v1944, 4294901760
          %2885 = vmatprep.subr.mxu0 %v2884
          %v2886 = vand.u32 %v1943, 4294901760
          %2887 = vmatpush1.msra.mxu0 %v2886
          %v2888 = vand.u32 %v1948, 4294901760
          %2889 = vmatprep.subr.mxu0 %v2888
          %v2890 = vand.u32 %v1947, 4294901760
          %2891 = vmatpush1.msra.mxu0 %v2890
          %v2892 = vand.u32 %v1952, 4294901760
          %2893 = vmatprep.subr.mxu0 %v2892
          %v2894 = vand.u32 %v1951, 4294901760
          %2895 = vmatpush1.msra.mxu0 %v2894
          %v2896 = vand.u32 %v1956, 4294901760
          %2897 = vmatprep.subr.mxu0 %v2896
          %v2898 = vand.u32 %v1955, 4294901760
          %2899 = vmatpush1.msra.mxu0 %v2898
          %v2900 = vand.u32 %v1960, 4294901760
          %2901 = vmatprep.subr.mxu0 %v2900
          %v2902 = vand.u32 %v1959, 4294901760
          %2903 = vmatpush1.msra.mxu0 %v2902
          %v2904 = vand.u32 %v1964, 4294901760
          %2905 = vmatprep.subr.mxu0 %v2904
          %v2906 = vand.u32 %v1963, 4294901760
          %2907 = vmatpush1.msra.mxu0 %v2906
          %v2908 = vand.u32 %v1968, 4294901760
          %2909 = vmatprep.subr.mxu0 %v2908
          %v2910 = vand.u32 %v1967, 4294901760
          %2911 = vmatpush1.msra.mxu0 %v2910
          %v2912 = vand.u32 %v1972, 4294901760
          %2913 = vmatprep.subr.mxu0 %v2912
          %v2914 = vand.u32 %v1971, 4294901760
          %2915 = vmatpush1.msra.mxu0 %v2914
          %v2916 = vand.u32 %v1976, 4294901760
          %2917 = vmatprep.subr.mxu0 %v2916
          %v2918 = vand.u32 %v1975, 4294901760
          %2919 = vmatpush1.msra.mxu0 %v2918
          %v2920 = vand.u32 %v1980, 4294901760
          %2921 = vmatprep.subr.mxu0 %v2920
          %v2922 = vand.u32 %v1979, 4294901760
          %2923 = vmatpush1.msra.mxu0 %v2922
          %v2924 = vand.u32 %v1984, 4294901760
          %2925 = vmatprep.subr.mxu0 %v2924
          %v2926 = vand.u32 %v1983, 4294901760
          %2927 = vmatpush1.msra.mxu0 %v2926
          %v2928 = vand.u32 %v1988, 4294901760
          %2929 = vmatprep.subr.mxu0 %v2928
          %v2930 = vand.u32 %v1987, 4294901760
          %2931 = vmatpush1.msra.mxu0 %v2930
          %v2932 = vand.u32 %v1992, 4294901760
          %2933 = vmatprep.subr.mxu0 %v2932
          %v2934 = vand.u32 %v1991, 4294901760
          %2935 = vmatpush1.msra.mxu0 %v2934
          %v2936 = vand.u32 %v1996, 4294901760
          %2937 = vmatprep.subr.mxu0 %v2936
          %v2938 = vand.u32 %v1995, 4294901760
          %2939 = vmatpush1.msra.mxu0 %v2938
          %v2940 = vand.u32 %v2000, 4294901760
          %2941 = vmatprep.subr.mxu0 %v2940
          %v2942 = vand.u32 %v1999, 4294901760
          %2943 = vmatpush1.msra.mxu0 %v2942
          %v2944 = vand.u32 %v2004, 4294901760
          %2945 = vmatprep.subr.mxu0 %v2944
          %v2946 = vand.u32 %v2003, 4294901760
          %2947 = vmatpush1.msra.mxu0 %v2946
          %2948 = vmatprep.subr.mxu0 0.0
          %2949 = vmatpush1.msra.mxu0 0.0
          %2950 = vmatprep.subr.mxu0 0.0
          %2951 = vmatpush1.msra.mxu0 0.0
          %2952 = vmatprep.subr.mxu0 0.0
          %2953 = vmatpush1.msra.mxu0 0.0
          %2954 = vmatprep.subr.mxu0 0.0
          %2955 = vmatpush1.msra.mxu0 0.0
          %2956 = vmatprep.subr.mxu0 0.0
          %2957 = vmatpush1.msra.mxu0 0.0
          %2958 = vmatprep.subr.mxu0 0.0
          %2959 = vmatpush1.msra.mxu0 0.0
          %2960 = vmatprep.subr.mxu0 0.0
          %2961 = vmatpush1.msra.mxu0 0.0
          %2962 = vmatprep.subr.mxu0 0.0
          %2963 = vmatpush1.msra.mxu0 0.0
          %2964 = vmatprep.subr.mxu0 0.0
          %2965 = vmatpush1.msra.mxu0 0.0
          %2966 = vmatprep.subr.mxu0 0.0
          %2967 = vmatpush1.msra.mxu0 0.0
          %2968 = vmatprep.subr.mxu0 0.0
          %2969 = vmatpush1.msra.mxu0 0.0
          %2970 = vmatprep.subr.mxu0 0.0
          %2971 = vmatpush1.msra.mxu0 0.0
          %2972 = vmatprep.subr.mxu0 0.0
          %2973 = vmatpush1.msra.mxu0 0.0
          %2974 = vmatprep.subr.mxu0 0.0
          %2975 = vmatpush1.msra.mxu0 0.0
          %2976 = vmatprep.subr.mxu0 0.0
          %2977 = vmatpush1.msra.mxu0 0.0
          %2978 = vmatprep.subr.mxu0 0.0
          %2979 = vmatpush1.msra.mxu0 0.0
          %2980 = vmatprep.mubr.f32.mxu0 0.0
          %v2981 = vand.u32 %v1930, 4294901760
          %v2982 = vsub.f32 %v1930, %v2981
          %v2983 = vand.u32 %v2982, 4294901760
          %v2984 = vsub.f32 %v2982, %v2983
          %v2985 = vand.u32 %v2984, 4294901760
          %2986 = vmatmul.mubr.f32.gmra.mrb[0].mxu0 %v2985
          %v2987 = vpop.f32.mrb[0].mxu0
          %v2988 = vadd.f32 %v2020, %v2987
          %v2989 = vpop.f32.mrb[0].mxu0
          %v2990 = vadd.f32 %v2024, %v2989
          %2991 = vdwg.mxu0
          %v2992 = vand.u32 %v1944, 4294901760
          %v2993 = vsub.f32 %v1944, %v2992
          %v2994 = vand.u32 %v2993, 4294901760
          %v2995 = vsub.f32 %v2993, %v2994
          %v2996 = vand.u32 %v2995, 4294901760
          %2997 = vmatprep.subr.mxu0 %v2996
          %v2998 = vand.u32 %v1943, 4294901760
          %v2999 = vsub.f32 %v1943, %v2998
          %v3000 = vand.u32 %v2999, 4294901760
          %v3001 = vsub.f32 %v2999, %v3000
          %v3002 = vand.u32 %v3001, 4294901760
          %3003 = vmatpush1.msra.mxu0 %v3002
          %v3004 = vand.u32 %v1948, 4294901760
          %v3005 = vsub.f32 %v1948, %v3004
          %v3006 = vand.u32 %v3005, 4294901760
          %v3007 = vsub.f32 %v3005, %v3006
          %v3008 = vand.u32 %v3007, 4294901760
          %3009 = vmatprep.subr.mxu0 %v3008
          %v3010 = vand.u32 %v1947, 4294901760
          %v3011 = vsub.f32 %v1947, %v3010
          %v3012 = vand.u32 %v3011, 4294901760
          %v3013 = vsub.f32 %v3011, %v3012
          %v3014 = vand.u32 %v3013, 4294901760
          %3015 = vmatpush1.msra.mxu0 %v3014
          %v3016 = vand.u32 %v1952, 4294901760
          %v3017 = vsub.f32 %v1952, %v3016
          %v3018 = vand.u32 %v3017, 4294901760
          %v3019 = vsub.f32 %v3017, %v3018
          %v3020 = vand.u32 %v3019, 4294901760
          %3021 = vmatprep.subr.mxu0 %v3020
          %v3022 = vand.u32 %v1951, 4294901760
          %v3023 = vsub.f32 %v1951, %v3022
          %v3024 = vand.u32 %v3023, 4294901760
          %v3025 = vsub.f32 %v3023, %v3024
          %v3026 = vand.u32 %v3025, 4294901760
          %3027 = vmatpush1.msra.mxu0 %v3026
          %v3028 = vand.u32 %v1956, 4294901760
          %v3029 = vsub.f32 %v1956, %v3028
          %v3030 = vand.u32 %v3029, 4294901760
          %v3031 = vsub.f32 %v3029, %v3030
          %v3032 = vand.u32 %v3031, 4294901760
          %3033 = vmatprep.subr.mxu0 %v3032
          %v3034 = vand.u32 %v1955, 4294901760
          %v3035 = vsub.f32 %v1955, %v3034
          %v3036 = vand.u32 %v3035, 4294901760
          %v3037 = vsub.f32 %v3035, %v3036
          %v3038 = vand.u32 %v3037, 4294901760
          %3039 = vmatpush1.msra.mxu0 %v3038
          %v3040 = vand.u32 %v1960, 4294901760
          %v3041 = vsub.f32 %v1960, %v3040
          %v3042 = vand.u32 %v3041, 4294901760
          %v3043 = vsub.f32 %v3041, %v3042
          %v3044 = vand.u32 %v3043, 4294901760
          %3045 = vmatprep.subr.mxu0 %v3044
          %v3046 = vand.u32 %v1959, 4294901760
          %v3047 = vsub.f32 %v1959, %v3046
          %v3048 = vand.u32 %v3047, 4294901760
          %v3049 = vsub.f32 %v3047, %v3048
          %v3050 = vand.u32 %v3049, 4294901760
          %3051 = vmatpush1.msra.mxu0 %v3050
          %v3052 = vand.u32 %v1964, 4294901760
          %v3053 = vsub.f32 %v1964, %v3052
          %v3054 = vand.u32 %v3053, 4294901760
          %v3055 = vsub.f32 %v3053, %v3054
          %v3056 = vand.u32 %v3055, 4294901760
          %3057 = vmatprep.subr.mxu0 %v3056
          %v3058 = vand.u32 %v1963, 4294901760
          %v3059 = vsub.f32 %v1963, %v3058
          %v3060 = vand.u32 %v3059, 4294901760
          %v3061 = vsub.f32 %v3059, %v3060
          %v3062 = vand.u32 %v3061, 4294901760
          %3063 = vmatpush1.msra.mxu0 %v3062
          %v3064 = vand.u32 %v1968, 4294901760
          %v3065 = vsub.f32 %v1968, %v3064
          %v3066 = vand.u32 %v3065, 4294901760
          %v3067 = vsub.f32 %v3065, %v3066
          %v3068 = vand.u32 %v3067, 4294901760
          %3069 = vmatprep.subr.mxu0 %v3068
          %v3070 = vand.u32 %v1967, 4294901760
          %v3071 = vsub.f32 %v1967, %v3070
          %v3072 = vand.u32 %v3071, 4294901760
          %v3073 = vsub.f32 %v3071, %v3072
          %v3074 = vand.u32 %v3073, 4294901760
          %3075 = vmatpush1.msra.mxu0 %v3074
          %v3076 = vand.u32 %v1972, 4294901760
          %v3077 = vsub.f32 %v1972, %v3076
          %v3078 = vand.u32 %v3077, 4294901760
          %v3079 = vsub.f32 %v3077, %v3078
          %v3080 = vand.u32 %v3079, 4294901760
          %3081 = vmatprep.subr.mxu0 %v3080
          %v3082 = vand.u32 %v1971, 4294901760
          %v3083 = vsub.f32 %v1971, %v3082
          %v3084 = vand.u32 %v3083, 4294901760
          %v3085 = vsub.f32 %v3083, %v3084
          %v3086 = vand.u32 %v3085, 4294901760
          %3087 = vmatpush1.msra.mxu0 %v3086
          %v3088 = vand.u32 %v1976, 4294901760
          %v3089 = vsub.f32 %v1976, %v3088
          %v3090 = vand.u32 %v3089, 4294901760
          %v3091 = vsub.f32 %v3089, %v3090
          %v3092 = vand.u32 %v3091, 4294901760
          %3093 = vmatprep.subr.mxu0 %v3092
          %v3094 = vand.u32 %v1975, 4294901760
          %v3095 = vsub.f32 %v1975, %v3094
          %v3096 = vand.u32 %v3095, 4294901760
          %v3097 = vsub.f32 %v3095, %v3096
          %v3098 = vand.u32 %v3097, 4294901760
          %3099 = vmatpush1.msra.mxu0 %v3098
          %v3100 = vand.u32 %v1980, 4294901760
          %v3101 = vsub.f32 %v1980, %v3100
          %v3102 = vand.u32 %v3101, 4294901760
          %v3103 = vsub.f32 %v3101, %v3102
          %v3104 = vand.u32 %v3103, 4294901760
          %3105 = vmatprep.subr.mxu0 %v3104
          %v3106 = vand.u32 %v1979, 4294901760
          %v3107 = vsub.f32 %v1979, %v3106
          %v3108 = vand.u32 %v3107, 4294901760
          %v3109 = vsub.f32 %v3107, %v3108
          %v3110 = vand.u32 %v3109, 4294901760
          %3111 = vmatpush1.msra.mxu0 %v3110
          %v3112 = vand.u32 %v1984, 4294901760
          %v3113 = vsub.f32 %v1984, %v3112
          %v3114 = vand.u32 %v3113, 4294901760
          %v3115 = vsub.f32 %v3113, %v3114
          %v3116 = vand.u32 %v3115, 4294901760
          %3117 = vmatprep.subr.mxu0 %v3116
          %v3118 = vand.u32 %v1983, 4294901760
          %v3119 = vsub.f32 %v1983, %v3118
          %v3120 = vand.u32 %v3119, 4294901760
          %v3121 = vsub.f32 %v3119, %v3120
          %v3122 = vand.u32 %v3121, 4294901760
          %3123 = vmatpush1.msra.mxu0 %v3122
          %v3124 = vand.u32 %v1988, 4294901760
          %v3125 = vsub.f32 %v1988, %v3124
          %v3126 = vand.u32 %v3125, 4294901760
          %v3127 = vsub.f32 %v3125, %v3126
          %v3128 = vand.u32 %v3127, 4294901760
          %3129 = vmatprep.subr.mxu0 %v3128
          %v3130 = vand.u32 %v1987, 4294901760
          %v3131 = vsub.f32 %v1987, %v3130
          %v3132 = vand.u32 %v3131, 4294901760
          %v3133 = vsub.f32 %v3131, %v3132
          %v3134 = vand.u32 %v3133, 4294901760
          %3135 = vmatpush1.msra.mxu0 %v3134
          %v3136 = vand.u32 %v1992, 4294901760
          %v3137 = vsub.f32 %v1992, %v3136
          %v3138 = vand.u32 %v3137, 4294901760
          %v3139 = vsub.f32 %v3137, %v3138
          %v3140 = vand.u32 %v3139, 4294901760
          %3141 = vmatprep.subr.mxu0 %v3140
          %v3142 = vand.u32 %v1991, 4294901760
          %v3143 = vsub.f32 %v1991, %v3142
          %v3144 = vand.u32 %v3143, 4294901760
          %v3145 = vsub.f32 %v3143, %v3144
          %v3146 = vand.u32 %v3145, 4294901760
          %3147 = vmatpush1.msra.mxu0 %v3146
          %v3148 = vand.u32 %v1996, 4294901760
          %v3149 = vsub.f32 %v1996, %v3148
          %v3150 = vand.u32 %v3149, 4294901760
          %v3151 = vsub.f32 %v3149, %v3150
          %v3152 = vand.u32 %v3151, 4294901760
          %3153 = vmatprep.subr.mxu0 %v3152
          %v3154 = vand.u32 %v1995, 4294901760
          %v3155 = vsub.f32 %v1995, %v3154
          %v3156 = vand.u32 %v3155, 4294901760
          %v3157 = vsub.f32 %v3155, %v3156
          %v3158 = vand.u32 %v3157, 4294901760
          %3159 = vmatpush1.msra.mxu0 %v3158
          %v3160 = vand.u32 %v2000, 4294901760
          %v3161 = vsub.f32 %v2000, %v3160
          %v3162 = vand.u32 %v3161, 4294901760
          %v3163 = vsub.f32 %v3161, %v3162
          %v3164 = vand.u32 %v3163, 4294901760
          %3165 = vmatprep.subr.mxu0 %v3164
          %v3166 = vand.u32 %v1999, 4294901760
          %v3167 = vsub.f32 %v1999, %v3166
          %v3168 = vand.u32 %v3167, 4294901760
          %v3169 = vsub.f32 %v3167, %v3168
          %v3170 = vand.u32 %v3169, 4294901760
          %3171 = vmatpush1.msra.mxu0 %v3170
          %v3172 = vand.u32 %v2004, 4294901760
          %v3173 = vsub.f32 %v2004, %v3172
          %v3174 = vand.u32 %v3173, 4294901760
          %v3175 = vsub.f32 %v3173, %v3174
          %v3176 = vand.u32 %v3175, 4294901760
          %3177 = vmatprep.subr.mxu0 %v3176
          %v3178 = vand.u32 %v2003, 4294901760
          %v3179 = vsub.f32 %v2003, %v3178
          %v3180 = vand.u32 %v3179, 4294901760
          %v3181 = vsub.f32 %v3179, %v3180
          %v3182 = vand.u32 %v3181, 4294901760
          %3183 = vmatpush1.msra.mxu0 %v3182
          %3184 = vmatprep.subr.mxu0 0.0
          %3185 = vmatpush1.msra.mxu0 0.0
          %3186 = vmatprep.subr.mxu0 0.0
          %3187 = vmatpush1.msra.mxu0 0.0
          %3188 = vmatprep.subr.mxu0 0.0
          %3189 = vmatpush1.msra.mxu0 0.0
          %3190 = vmatprep.subr.mxu0 0.0
          %3191 = vmatpush1.msra.mxu0 0.0
          %3192 = vmatprep.subr.mxu0 0.0
          %3193 = vmatpush1.msra.mxu0 0.0
          %3194 = vmatprep.subr.mxu0 0.0
          %3195 = vmatpush1.msra.mxu0 0.0
          %3196 = vmatprep.subr.mxu0 0.0
          %3197 = vmatpush1.msra.mxu0 0.0
          %3198 = vmatprep.subr.mxu0 0.0
          %3199 = vmatpush1.msra.mxu0 0.0
          %3200 = vmatprep.subr.mxu0 0.0
          %3201 = vmatpush1.msra.mxu0 0.0
          %3202 = vmatprep.subr.mxu0 0.0
          %3203 = vmatpush1.msra.mxu0 0.0
          %3204 = vmatprep.subr.mxu0 0.0
          %3205 = vmatpush1.msra.mxu0 0.0
          %3206 = vmatprep.subr.mxu0 0.0
          %3207 = vmatpush1.msra.mxu0 0.0
          %3208 = vmatprep.subr.mxu0 0.0
          %3209 = vmatpush1.msra.mxu0 0.0
          %3210 = vmatprep.subr.mxu0 0.0
          %3211 = vmatpush1.msra.mxu0 0.0
          %3212 = vmatprep.subr.mxu0 0.0
          %3213 = vmatpush1.msra.mxu0 0.0
          %3214 = vmatprep.subr.mxu0 0.0
          %3215 = vmatpush1.msra.mxu0 0.0
          %3216 = vmatprep.mubr.f32.mxu0 0.0
          %v3217 = vand.u32 %v1930, 4294901760
          %3218 = vmatmul.mubr.f32.gmra.mrb[0].mxu0 %v3217
          %v3219 = vpop.f32.mrb[0].mxu0
          %v3220 = vadd.f32 %v2988, %v3219
          %v3221 = vpop.f32.mrb[0].mxu0
          %v3222 = vadd.f32 %v2990, %v3221
          %3223 = vdwg.mxu0
          %v3224 = vand.u32 %v1944, 4294901760
          %v3225 = vsub.f32 %v1944, %v3224
          %3226 = vmatprep.subr.mxu0 %v3225
          %v3227 = vand.u32 %v1943, 4294901760
          %v3228 = vsub.f32 %v1943, %v3227
          %3229 = vmatpush1.msra.mxu0 %v3228
          %v3230 = vand.u32 %v1948, 4294901760
          %v3231 = vsub.f32 %v1948, %v3230
          %3232 = vmatprep.subr.mxu0 %v3231
          %v3233 = vand.u32 %v1947, 4294901760
          %v3234 = vsub.f32 %v1947, %v3233
          %3235 = vmatpush1.msra.mxu0 %v3234
          %v3236 = vand.u32 %v1952, 4294901760
          %v3237 = vsub.f32 %v1952, %v3236
          %3238 = vmatprep.subr.mxu0 %v3237
          %v3239 = vand.u32 %v1951, 4294901760
          %v3240 = vsub.f32 %v1951, %v3239
          %3241 = vmatpush1.msra.mxu0 %v3240
          %v3242 = vand.u32 %v1956, 4294901760
          %v3243 = vsub.f32 %v1956, %v3242
          %3244 = vmatprep.subr.mxu0 %v3243
          %v3245 = vand.u32 %v1955, 4294901760
          %v3246 = vsub.f32 %v1955, %v3245
          %3247 = vmatpush1.msra.mxu0 %v3246
          %v3248 = vand.u32 %v1960, 4294901760
          %v3249 = vsub.f32 %v1960, %v3248
          %3250 = vmatprep.subr.mxu0 %v3249
          %v3251 = vand.u32 %v1959, 4294901760
          %v3252 = vsub.f32 %v1959, %v3251
          %3253 = vmatpush1.msra.mxu0 %v3252
          %v3254 = vand.u32 %v1964, 4294901760
          %v3255 = vsub.f32 %v1964, %v3254
          %3256 = vmatprep.subr.mxu0 %v3255
          %v3257 = vand.u32 %v1963, 4294901760
          %v3258 = vsub.f32 %v1963, %v3257
          %3259 = vmatpush1.msra.mxu0 %v3258
          %v3260 = vand.u32 %v1968, 4294901760
          %v3261 = vsub.f32 %v1968, %v3260
          %3262 = vmatprep.subr.mxu0 %v3261
          %v3263 = vand.u32 %v1967, 4294901760
          %v3264 = vsub.f32 %v1967, %v3263
          %3265 = vmatpush1.msra.mxu0 %v3264
          %v3266 = vand.u32 %v1972, 4294901760
          %v3267 = vsub.f32 %v1972, %v3266
          %3268 = vmatprep.subr.mxu0 %v3267
          %v3269 = vand.u32 %v1971, 4294901760
          %v3270 = vsub.f32 %v1971, %v3269
          %3271 = vmatpush1.msra.mxu0 %v3270
          %v3272 = vand.u32 %v1976, 4294901760
          %v3273 = vsub.f32 %v1976, %v3272
          %3274 = vmatprep.subr.mxu0 %v3273
          %v3275 = vand.u32 %v1975, 4294901760
          %v3276 = vsub.f32 %v1975, %v3275
          %3277 = vmatpush1.msra.mxu0 %v3276
          %v3278 = vand.u32 %v1980, 4294901760
          %v3279 = vsub.f32 %v1980, %v3278
          %3280 = vmatprep.subr.mxu0 %v3279
          %v3281 = vand.u32 %v1979, 4294901760
          %v3282 = vsub.f32 %v1979, %v3281
          %3283 = vmatpush1.msra.mxu0 %v3282
          %v3284 = vand.u32 %v1984, 4294901760
          %v3285 = vsub.f32 %v1984, %v3284
          %3286 = vmatprep.subr.mxu0 %v3285
          %v3287 = vand.u32 %v1983, 4294901760
          %v3288 = vsub.f32 %v1983, %v3287
          %3289 = vmatpush1.msra.mxu0 %v3288
          %v3290 = vand.u32 %v1988, 4294901760
          %v3291 = vsub.f32 %v1988, %v3290
          %3292 = vmatprep.subr.mxu0 %v3291
          %v3293 = vand.u32 %v1987, 4294901760
          %v3294 = vsub.f32 %v1987, %v3293
          %3295 = vmatpush1.msra.mxu0 %v3294
          %v3296 = vand.u32 %v1992, 4294901760
          %v3297 = vsub.f32 %v1992, %v3296
          %3298 = vmatprep.subr.mxu0 %v3297
          %v3299 = vand.u32 %v1991, 4294901760
          %v3300 = vsub.f32 %v1991, %v3299
          %3301 = vmatpush1.msra.mxu0 %v3300
          %v3302 = vand.u32 %v1996, 4294901760
          %v3303 = vsub.f32 %v1996, %v3302
          %3304 = vmatprep.subr.mxu0 %v3303
          %v3305 = vand.u32 %v1995, 4294901760
          %v3306 = vsub.f32 %v1995, %v3305
          %3307 = vmatpush1.msra.mxu0 %v3306
          %v3308 = vand.u32 %v2000, 4294901760
          %v3309 = vsub.f32 %v2000, %v3308
          %3310 = vmatprep.subr.mxu0 %v3309
          %v3311 = vand.u32 %v1999, 4294901760
          %v3312 = vsub.f32 %v1999, %v3311
          %3313 = vmatpush1.msra.mxu0 %v3312
          %v3314 = vand.u32 %v2004, 4294901760
          %v3315 = vsub.f32 %v2004, %v3314
          %3316 = vmatprep.subr.mxu0 %v3315
          %v3317 = vand.u32 %v2003, 4294901760
          %v3318 = vsub.f32 %v2003, %v3317
          %3319 = vmatpush1.msra.mxu0 %v3318
          %3320 = vmatprep.subr.mxu0 0.0
          %3321 = vmatpush1.msra.mxu0 0.0
          %3322 = vmatprep.subr.mxu0 0.0
          %3323 = vmatpush1.msra.mxu0 0.0
          %3324 = vmatprep.subr.mxu0 0.0
          %3325 = vmatpush1.msra.mxu0 0.0
          %3326 = vmatprep.subr.mxu0 0.0
          %3327 = vmatpush1.msra.mxu0 0.0
          %3328 = vmatprep.subr.mxu0 0.0
          %3329 = vmatpush1.msra.mxu0 0.0
          %3330 = vmatprep.subr.mxu0 0.0
          %3331 = vmatpush1.msra.mxu0 0.0
          %3332 = vmatprep.subr.mxu0 0.0
          %3333 = vmatpush1.msra.mxu0 0.0
          %3334 = vmatprep.subr.mxu0 0.0
          %3335 = vmatpush1.msra.mxu0 0.0
          %3336 = vmatprep.subr.mxu0 0.0
          %3337 = vmatpush1.msra.mxu0 0.0
          %3338 = vmatprep.subr.mxu0 0.0
          %3339 = vmatpush1.msra.mxu0 0.0
          %3340 = vmatprep.subr.mxu0 0.0
          %3341 = vmatpush1.msra.mxu0 0.0
          %3342 = vmatprep.subr.mxu0 0.0
          %3343 = vmatpush1.msra.mxu0 0.0
          %3344 = vmatprep.subr.mxu0 0.0
          %3345 = vmatpush1.msra.mxu0 0.0
          %3346 = vmatprep.subr.mxu0 0.0
          %3347 = vmatpush1.msra.mxu0 0.0
          %3348 = vmatprep.subr.mxu0 0.0
          %3349 = vmatpush1.msra.mxu0 0.0
          %3350 = vmatprep.subr.mxu0 0.0
          %3351 = vmatpush1.msra.mxu0 0.0
          %3352 = vmatprep.mubr.f32.mxu0 0.0
          %v3353 = vand.u32 %v1930, 4294901760
          %v3354 = vsub.f32 %v1930, %v3353
          %3355 = vmatmul.mubr.f32.gmra.mrb[0].mxu0 %v3354
          %v3356 = vpop.f32.mrb[0].mxu0
          %v3357 = vadd.f32 %v3220, %v3356
          %v3358 = vpop.f32.mrb[0].mxu0
          %v3359 = vadd.f32 %v3222, %v3358
          %3360 = vdwg.mxu0
          %v3361 = vand.u32 %v1944, 4294901760
          %3362 = vmatprep.subr.mxu0 %v3361
          %v3363 = vand.u32 %v1943, 4294901760
          %3364 = vmatpush1.msra.mxu0 %v3363
          %v3365 = vand.u32 %v1948, 4294901760
          %3366 = vmatprep.subr.mxu0 %v3365
          %v3367 = vand.u32 %v1947, 4294901760
          %3368 = vmatpush1.msra.mxu0 %v3367
          %v3369 = vand.u32 %v1952, 4294901760
          %3370 = vmatprep.subr.mxu0 %v3369
          %v3371 = vand.u32 %v1951, 4294901760
          %3372 = vmatpush1.msra.mxu0 %v3371
          %v3373 = vand.u32 %v1956, 4294901760
          %3374 = vmatprep.subr.mxu0 %v3373
          %v3375 = vand.u32 %v1955, 4294901760
          %3376 = vmatpush1.msra.mxu0 %v3375
          %v3377 = vand.u32 %v1960, 4294901760
          %3378 = vmatprep.subr.mxu0 %v3377
          %v3379 = vand.u32 %v1959, 4294901760
          %3380 = vmatpush1.msra.mxu0 %v3379
          %v3381 = vand.u32 %v1964, 4294901760
          %3382 = vmatprep.subr.mxu0 %v3381
          %v3383 = vand.u32 %v1963, 4294901760
          %3384 = vmatpush1.msra.mxu0 %v3383
          %v3385 = vand.u32 %v1968, 4294901760
          %3386 = vmatprep.subr.mxu0 %v3385
          %v3387 = vand.u32 %v1967, 4294901760
          %3388 = vmatpush1.msra.mxu0 %v3387
          %v3389 = vand.u32 %v1972, 4294901760
          %3390 = vmatprep.subr.mxu0 %v3389
          %v3391 = vand.u32 %v1971, 4294901760
          %3392 = vmatpush1.msra.mxu0 %v3391
          %v3393 = vand.u32 %v1976, 4294901760
          %3394 = vmatprep.subr.mxu0 %v3393
          %v3395 = vand.u32 %v1975, 4294901760
          %3396 = vmatpush1.msra.mxu0 %v3395
          %v3397 = vand.u32 %v1980, 4294901760
          %3398 = vmatprep.subr.mxu0 %v3397
          %v3399 = vand.u32 %v1979, 4294901760
          %3400 = vmatpush1.msra.mxu0 %v3399
          %v3401 = vand.u32 %v1984, 4294901760
          %3402 = vmatprep.subr.mxu0 %v3401
          %v3403 = vand.u32 %v1983, 4294901760
          %3404 = vmatpush1.msra.mxu0 %v3403
          %v3405 = vand.u32 %v1988, 4294901760
          %3406 = vmatprep.subr.mxu0 %v3405
          %v3407 = vand.u32 %v1987, 4294901760
          %3408 = vmatpush1.msra.mxu0 %v3407
          %v3409 = vand.u32 %v1992, 4294901760
          %3410 = vmatprep.subr.mxu0 %v3409
          %v3411 = vand.u32 %v1991, 4294901760
          %3412 = vmatpush1.msra.mxu0 %v3411
          %v3413 = vand.u32 %v1996, 4294901760
          %3414 = vmatprep.subr.mxu0 %v3413
          %v3415 = vand.u32 %v1995, 4294901760
          %3416 = vmatpush1.msra.mxu0 %v3415
          %v3417 = vand.u32 %v2000, 4294901760
          %3418 = vmatprep.subr.mxu0 %v3417
          %v3419 = vand.u32 %v1999, 4294901760
          %3420 = vmatpush1.msra.mxu0 %v3419
          %v3421 = vand.u32 %v2004, 4294901760
          %3422 = vmatprep.subr.mxu0 %v3421
          %v3423 = vand.u32 %v2003, 4294901760
          %3424 = vmatpush1.msra.mxu0 %v3423
          %3425 = vmatprep.subr.mxu0 0.0
          %3426 = vmatpush1.msra.mxu0 0.0
          %3427 = vmatprep.subr.mxu0 0.0
          %3428 = vmatpush1.msra.mxu0 0.0
          %3429 = vmatprep.subr.mxu0 0.0
          %3430 = vmatpush1.msra.mxu0 0.0
          %3431 = vmatprep.subr.mxu0 0.0
          %3432 = vmatpush1.msra.mxu0 0.0
          %3433 = vmatprep.subr.mxu0 0.0
          %3434 = vmatpush1.msra.mxu0 0.0
          %3435 = vmatprep.subr.mxu0 0.0
          %3436 = vmatpush1.msra.mxu0 0.0
          %3437 = vmatprep.subr.mxu0 0.0
          %3438 = vmatpush1.msra.mxu0 0.0
          %3439 = vmatprep.subr.mxu0 0.0
          %3440 = vmatpush1.msra.mxu0 0.0
          %3441 = vmatprep.subr.mxu0 0.0
          %3442 = vmatpush1.msra.mxu0 0.0
          %3443 = vmatprep.subr.mxu0 0.0
          %3444 = vmatpush1.msra.mxu0 0.0
          %3445 = vmatprep.subr.mxu0 0.0
          %3446 = vmatpush1.msra.mxu0 0.0
          %3447 = vmatprep.subr.mxu0 0.0
          %3448 = vmatpush1.msra.mxu0 0.0
          %3449 = vmatprep.subr.mxu0 0.0
          %3450 = vmatpush1.msra.mxu0 0.0
          %3451 = vmatprep.subr.mxu0 0.0
          %3452 = vmatpush1.msra.mxu0 0.0
          %3453 = vmatprep.subr.mxu0 0.0
          %3454 = vmatpush1.msra.mxu0 0.0
          %3455 = vmatprep.subr.mxu0 0.0
          %3456 = vmatpush1.msra.mxu0 0.0
          %3457 = vmatprep.mubr.f32.mxu0 0.0
          %v3458 = vand.u32 %v1930, 4294901760
          %v3459 = vsub.f32 %v1930, %v3458
          %v3460 = vand.u32 %v3459, 4294901760
          %3461 = vmatmul.mubr.f32.gmra.mrb[0].mxu0 %v3460
          %v3462 = vpop.f32.mrb[0].mxu0
          %v3463 = vadd.f32 %v3357, %v3462
          %v3464 = vpop.f32.mrb[0].mxu0
          %v3465 = vadd.f32 %v3359, %v3464
          %3466 = vdwg.mxu0
          %v3467 = vand.u32 %v1944, 4294901760
          %v3468 = vsub.f32 %v1944, %v3467
          %v3469 = vand.u32 %v3468, 4294901760
          %3470 = vmatprep.subr.mxu0 %v3469
          %v3471 = vand.u32 %v1943, 4294901760
          %v3472 = vsub.f32 %v1943, %v3471
          %v3473 = vand.u32 %v3472, 4294901760
          %3474 = vmatpush1.msra.mxu0 %v3473
          %v3475 = vand.u32 %v1948, 4294901760
          %v3476 = vsub.f32 %v1948, %v3475
          %v3477 = vand.u32 %v3476, 4294901760
          %3478 = vmatprep.subr.mxu0 %v3477
          %v3479 = vand.u32 %v1947, 4294901760
          %v3480 = vsub.f32 %v1947, %v3479
          %v3481 = vand.u32 %v3480, 4294901760
          %3482 = vmatpush1.msra.mxu0 %v3481
          %v3483 = vand.u32 %v1952, 4294901760
          %v3484 = vsub.f32 %v1952, %v3483
          %v3485 = vand.u32 %v3484, 4294901760
          %3486 = vmatprep.subr.mxu0 %v3485
          %v3487 = vand.u32 %v1951, 4294901760
          %v3488 = vsub.f32 %v1951, %v3487
          %v3489 = vand.u32 %v3488, 4294901760
          %3490 = vmatpush1.msra.mxu0 %v3489
          %v3491 = vand.u32 %v1956, 4294901760
          %v3492 = vsub.f32 %v1956, %v3491
          %v3493 = vand.u32 %v3492, 4294901760
          %3494 = vmatprep.subr.mxu0 %v3493
          %v3495 = vand.u32 %v1955, 4294901760
          %v3496 = vsub.f32 %v1955, %v3495
          %v3497 = vand.u32 %v3496, 4294901760
          %3498 = vmatpush1.msra.mxu0 %v3497
          %v3499 = vand.u32 %v1960, 4294901760
          %v3500 = vsub.f32 %v1960, %v3499
          %v3501 = vand.u32 %v3500, 4294901760
          %3502 = vmatprep.subr.mxu0 %v3501
          %v3503 = vand.u32 %v1959, 4294901760
          %v3504 = vsub.f32 %v1959, %v3503
          %v3505 = vand.u32 %v3504, 4294901760
          %3506 = vmatpush1.msra.mxu0 %v3505
          %v3507 = vand.u32 %v1964, 4294901760
          %v3508 = vsub.f32 %v1964, %v3507
          %v3509 = vand.u32 %v3508, 4294901760
          %3510 = vmatprep.subr.mxu0 %v3509
          %v3511 = vand.u32 %v1963, 4294901760
          %v3512 = vsub.f32 %v1963, %v3511
          %v3513 = vand.u32 %v3512, 4294901760
          %3514 = vmatpush1.msra.mxu0 %v3513
          %v3515 = vand.u32 %v1968, 4294901760
          %v3516 = vsub.f32 %v1968, %v3515
          %v3517 = vand.u32 %v3516, 4294901760
          %3518 = vmatprep.subr.mxu0 %v3517
          %v3519 = vand.u32 %v1967, 4294901760
          %v3520 = vsub.f32 %v1967, %v3519
          %v3521 = vand.u32 %v3520, 4294901760
          %3522 = vmatpush1.msra.mxu0 %v3521
          %v3523 = vand.u32 %v1972, 4294901760
          %v3524 = vsub.f32 %v1972, %v3523
          %v3525 = vand.u32 %v3524, 4294901760
          %3526 = vmatprep.subr.mxu0 %v3525
          %v3527 = vand.u32 %v1971, 4294901760
          %v3528 = vsub.f32 %v1971, %v3527
          %v3529 = vand.u32 %v3528, 4294901760
          %3530 = vmatpush1.msra.mxu0 %v3529
          %v3531 = vand.u32 %v1976, 4294901760
          %v3532 = vsub.f32 %v1976, %v3531
          %v3533 = vand.u32 %v3532, 4294901760
          %3534 = vmatprep.subr.mxu0 %v3533
          %v3535 = vand.u32 %v1975, 4294901760
          %v3536 = vsub.f32 %v1975, %v3535
          %v3537 = vand.u32 %v3536, 4294901760
          %3538 = vmatpush1.msra.mxu0 %v3537
          %v3539 = vand.u32 %v1980, 4294901760
          %v3540 = vsub.f32 %v1980, %v3539
          %v3541 = vand.u32 %v3540, 4294901760
          %3542 = vmatprep.subr.mxu0 %v3541
          %v3543 = vand.u32 %v1979, 4294901760
          %v3544 = vsub.f32 %v1979, %v3543
          %v3545 = vand.u32 %v3544, 4294901760
          %3546 = vmatpush1.msra.mxu0 %v3545
          %v3547 = vand.u32 %v1984, 4294901760
          %v3548 = vsub.f32 %v1984, %v3547
          %v3549 = vand.u32 %v3548, 4294901760
          %3550 = vmatprep.subr.mxu0 %v3549
          %v3551 = vand.u32 %v1983, 4294901760
          %v3552 = vsub.f32 %v1983, %v3551
          %v3553 = vand.u32 %v3552, 4294901760
          %3554 = vmatpush1.msra.mxu0 %v3553
          %v3555 = vand.u32 %v1988, 4294901760
          %v3556 = vsub.f32 %v1988, %v3555
          %v3557 = vand.u32 %v3556, 4294901760
          %3558 = vmatprep.subr.mxu0 %v3557
          %v3559 = vand.u32 %v1987, 4294901760
          %v3560 = vsub.f32 %v1987, %v3559
          %v3561 = vand.u32 %v3560, 4294901760
          %3562 = vmatpush1.msra.mxu0 %v3561
          %v3563 = vand.u32 %v1992, 4294901760
          %v3564 = vsub.f32 %v1992, %v3563
          %v3565 = vand.u32 %v3564, 4294901760
          %3566 = vmatprep.subr.mxu0 %v3565
          %v3567 = vand.u32 %v1991, 4294901760
          %v3568 = vsub.f32 %v1991, %v3567
          %v3569 = vand.u32 %v3568, 4294901760
          %3570 = vmatpush1.msra.mxu0 %v3569
          %v3571 = vand.u32 %v1996, 4294901760
          %v3572 = vsub.f32 %v1996, %v3571
          %v3573 = vand.u32 %v3572, 4294901760
          %3574 = vmatprep.subr.mxu0 %v3573
          %v3575 = vand.u32 %v1995, 4294901760
          %v3576 = vsub.f32 %v1995, %v3575
          %v3577 = vand.u32 %v3576, 4294901760
          %3578 = vmatpush1.msra.mxu0 %v3577
          %v3579 = vand.u32 %v2000, 4294901760
          %v3580 = vsub.f32 %v2000, %v3579
          %v3581 = vand.u32 %v3580, 4294901760
          %3582 = vmatprep.subr.mxu0 %v3581
          %v3583 = vand.u32 %v1999, 4294901760
          %v3584 = vsub.f32 %v1999, %v3583
          %v3585 = vand.u32 %v3584, 4294901760
          %3586 = vmatpush1.msra.mxu0 %v3585
          %v3587 = vand.u32 %v2004, 4294901760
          %v3588 = vsub.f32 %v2004, %v3587
          %v3589 = vand.u32 %v3588, 4294901760
          %3590 = vmatprep.subr.mxu0 %v3589
          %v3591 = vand.u32 %v2003, 4294901760
          %v3592 = vsub.f32 %v2003, %v3591
          %v3593 = vand.u32 %v3592, 4294901760
          %3594 = vmatpush1.msra.mxu0 %v3593
          %3595 = vmatprep.subr.mxu0 0.0
          %3596 = vmatpush1.msra.mxu0 0.0
          %3597 = vmatprep.subr.mxu0 0.0
          %3598 = vmatpush1.msra.mxu0 0.0
          %3599 = vmatprep.subr.mxu0 0.0
          %3600 = vmatpush1.msra.mxu0 0.0
          %3601 = vmatprep.subr.mxu0 0.0
          %3602 = vmatpush1.msra.mxu0 0.0
          %3603 = vmatprep.subr.mxu0 0.0
          %3604 = vmatpush1.msra.mxu0 0.0
          %3605 = vmatprep.subr.mxu0 0.0
          %3606 = vmatpush1.msra.mxu0 0.0
          %3607 = vmatprep.subr.mxu0 0.0
          %3608 = vmatpush1.msra.mxu0 0.0
          %3609 = vmatprep.subr.mxu0 0.0
          %3610 = vmatpush1.msra.mxu0 0.0
          %3611 = vmatprep.subr.mxu0 0.0
          %3612 = vmatpush1.msra.mxu0 0.0
          %3613 = vmatprep.subr.mxu0 0.0
          %3614 = vmatpush1.msra.mxu0 0.0
          %3615 = vmatprep.subr.mxu0 0.0
          %3616 = vmatpush1.msra.mxu0 0.0
          %3617 = vmatprep.subr.mxu0 0.0
          %3618 = vmatpush1.msra.mxu0 0.0
          %3619 = vmatprep.subr.mxu0 0.0
          %3620 = vmatpush1.msra.mxu0 0.0
          %3621 = vmatprep.subr.mxu0 0.0
          %3622 = vmatpush1.msra.mxu0 0.0
          %3623 = vmatprep.subr.mxu0 0.0
          %3624 = vmatpush1.msra.mxu0 0.0
          %3625 = vmatprep.subr.mxu0 0.0
          %3626 = vmatpush1.msra.mxu0 0.0
          %3627 = vmatprep.mubr.f32.mxu0 0.0
          %v3628 = vand.u32 %v1930, 4294901760
          %3629 = vmatmul.mubr.f32.gmra.mrb[0].mxu0 %v3628
          %v3630 = vpop.f32.mrb[0].mxu0
          %v3631 = vadd.f32 %v3463, %v3630
          %v3632 = vpop.f32.mrb[0].mxu0
          %v3633 = vadd.f32 %v3465, %v3632
          %3634 = vdwg.mxu0
          %v3635 = vand.u32 %v1944, 4294901760
          %3636 = vmatprep.subr.mxu0 %v3635
          %v3637 = vand.u32 %v1943, 4294901760
          %3638 = vmatpush1.msra.mxu0 %v3637
          %v3639 = vand.u32 %v1948, 4294901760
          %3640 = vmatprep.subr.mxu0 %v3639
          %v3641 = vand.u32 %v1947, 4294901760
          %3642 = vmatpush1.msra.mxu0 %v3641
          %v3643 = vand.u32 %v1952, 4294901760
          %3644 = vmatprep.subr.mxu0 %v3643
          %v3645 = vand.u32 %v1951, 4294901760
          %3646 = vmatpush1.msra.mxu0 %v3645
          %v3647 = vand.u32 %v1956, 4294901760
          %3648 = vmatprep.subr.mxu0 %v3647
          %v3649 = vand.u32 %v1955, 4294901760
          %3650 = vmatpush1.msra.mxu0 %v3649
          %v3651 = vand.u32 %v1960, 4294901760
          %3652 = vmatprep.subr.mxu0 %v3651
          %v3653 = vand.u32 %v1959, 4294901760
          %3654 = vmatpush1.msra.mxu0 %v3653
          %v3655 = vand.u32 %v1964, 4294901760
          %3656 = vmatprep.subr.mxu0 %v3655
          %v3657 = vand.u32 %v1963, 4294901760
          %3658 = vmatpush1.msra.mxu0 %v3657
          %v3659 = vand.u32 %v1968, 4294901760
          %3660 = vmatprep.subr.mxu0 %v3659
          %v3661 = vand.u32 %v1967, 4294901760
          %3662 = vmatpush1.msra.mxu0 %v3661
          %v3663 = vand.u32 %v1972, 4294901760
          %3664 = vmatprep.subr.mxu0 %v3663
          %v3665 = vand.u32 %v1971, 4294901760
          %3666 = vmatpush1.msra.mxu0 %v3665
          %v3667 = vand.u32 %v1976, 4294901760
          %3668 = vmatprep.subr.mxu0 %v3667
          %v3669 = vand.u32 %v1975, 4294901760
          %3670 = vmatpush1.msra.mxu0 %v3669
          %v3671 = vand.u32 %v1980, 4294901760
          %3672 = vmatprep.subr.mxu0 %v3671
          %v3673 = vand.u32 %v1979, 4294901760
          %3674 = vmatpush1.msra.mxu0 %v3673
          %v3675 = vand.u32 %v1984, 4294901760
          %3676 = vmatprep.subr.mxu0 %v3675
          %v3677 = vand.u32 %v1983, 4294901760
          %3678 = vmatpush1.msra.mxu0 %v3677
          %v3679 = vand.u32 %v1988, 4294901760
          %3680 = vmatprep.subr.mxu0 %v3679
          %v3681 = vand.u32 %v1987, 4294901760
          %3682 = vmatpush1.msra.mxu0 %v3681
          %v3683 = vand.u32 %v1992, 4294901760
          %3684 = vmatprep.subr.mxu0 %v3683
          %v3685 = vand.u32 %v1991, 4294901760
          %3686 = vmatpush1.msra.mxu0 %v3685
          %v3687 = vand.u32 %v1996, 4294901760
          %3688 = vmatprep.subr.mxu0 %v3687
          %v3689 = vand.u32 %v1995, 4294901760
          %3690 = vmatpush1.msra.mxu0 %v3689
          %v3691 = vand.u32 %v2000, 4294901760
          %3692 = vmatprep.subr.mxu0 %v3691
          %v3693 = vand.u32 %v1999, 4294901760
          %3694 = vmatpush1.msra.mxu0 %v3693
          %v3695 = vand.u32 %v2004, 4294901760
          %3696 = vmatprep.subr.mxu0 %v3695
          %v3697 = vand.u32 %v2003, 4294901760
          %3698 = vmatpush1.msra.mxu0 %v3697
          %3699 = vmatprep.subr.mxu0 0.0
          %3700 = vmatpush1.msra.mxu0 0.0
          %3701 = vmatprep.subr.mxu0 0.0
          %3702 = vmatpush1.msra.mxu0 0.0
          %3703 = vmatprep.subr.mxu0 0.0
          %3704 = vmatpush1.msra.mxu0 0.0
          %3705 = vmatprep.subr.mxu0 0.0
          %3706 = vmatpush1.msra.mxu0 0.0
          %3707 = vmatprep.subr.mxu0 0.0
          %3708 = vmatpush1.msra.mxu0 0.0
          %3709 = vmatprep.subr.mxu0 0.0
          %3710 = vmatpush1.msra.mxu0 0.0
          %3711 = vmatprep.subr.mxu0 0.0
          %3712 = vmatpush1.msra.mxu0 0.0
          %3713 = vmatprep.subr.mxu0 0.0
          %3714 = vmatpush1.msra.mxu0 0.0
          %3715 = vmatprep.subr.mxu0 0.0
          %3716 = vmatpush1.msra.mxu0 0.0
          %3717 = vmatprep.subr.mxu0 0.0
          %3718 = vmatpush1.msra.mxu0 0.0
          %3719 = vmatprep.subr.mxu0 0.0
          %3720 = vmatpush1.msra.mxu0 0.0
          %3721 = vmatprep.subr.mxu0 0.0
          %3722 = vmatpush1.msra.mxu0 0.0
          %3723 = vmatprep.subr.mxu0 0.0
          %3724 = vmatpush1.msra.mxu0 0.0
          %3725 = vmatprep.subr.mxu0 0.0
          %3726 = vmatpush1.msra.mxu0 0.0
          %3727 = vmatprep.subr.mxu0 0.0
          %3728 = vmatpush1.msra.mxu0 0.0
          %3729 = vmatprep.subr.mxu0 0.0
          %3730 = vmatpush1.msra.mxu0 0.0
          %3731 = vmatprep.mubr.f32.mxu0 0.0
          %v3732 = vand.u32 %v1930, 4294901760
          %3733 = vmatmul.mubr.f32.gmra.mrb[0].mxu0 %v3732
          %v3734 = vpop.f32.mrb[0].mxu0
          %v3735 = vadd.f32 %v3631, %v3734
          %v3736 = vpop.f32.mrb[0].mxu0
          %v3737 = vadd.f32 %v3633, %v3736
          %3738 = vdwg.mxu0
          %s3739 = smul.u32 %s1925, 128
          %s3740 = scalar_lea.vmem [#allocation5], %s3739
          %v3741 = vld [vmem:[%s3740] sm:$0xff]
          %v3742 = vld [vmem:[%s3740 + $0x8] sm:$0xff]
          %v3743 = vld [vmem:[%s3740 + $0x10] sm:$0xff]
          %v3744 = vld [vmem:[%s3740 + $0x18] sm:$0xff]
          %v3745 = vld [vmem:[%s3740 + $0x20] sm:$0xff]
          %v3746 = vld [vmem:[%s3740 + $0x28] sm:$0xff]
          %v3747 = vld [vmem:[%s3740 + $0x30] sm:$0xff]
          %v3748 = vld [vmem:[%s3740 + $0x38] sm:$0xff]
          %v3749 = vld [vmem:[%s3740 + $0x40] sm:$0xff]
          %v3750 = vld [vmem:[%s3740 + $0x48] sm:$0xff]
          %v3751 = vld [vmem:[%s3740 + $0x50] sm:$0xff]
          %v3752 = vld [vmem:[%s3740 + $0x58] sm:$0xff]
          %v3753 = vld [vmem:[%s3740 + $0x60] sm:$0xff]
          %v3754 = vld [vmem:[%s3740 + $0x68] sm:$0xff]
          %v3755 = vld [vmem:[%s3740 + $0x70] sm:$0xff]
          %v3756 = vld [vmem:[%s3740 + $0x78] sm:$0xff]
          %s3757 = scalar_lea.vmem %s13, %s1925
          %v3758 = vld [vmem:[%s3757] sm:$0x1]
          %v3760 = vlaneseq
          %v3761 = vshrl.u32 %v3760, 7
          %v3762 = vsub.s32 0, %v3761
          %v3763 = vrot.slane %v3758, %v3762
          %3765 = vmatprep.subr.mxu0 0.0
          %v3766 = vand.u32 %v3741, 4294901760
          %3767 = vmatpush1.msra.mxu0 %v3766
          %3768 = vmatprep.subr.mxu0 0.0
          %v3769 = vand.u32 %v3742, 4294901760
          %3770 = vmatpush1.msra.mxu0 %v3769
          %3771 = vmatprep.subr.mxu0 0.0
          %v3772 = vand.u32 %v3743, 4294901760
          %3773 = vmatpush1.msra.mxu0 %v3772
          %3774 = vmatprep.subr.mxu0 0.0
          %v3775 = vand.u32 %v3744, 4294901760
          %3776 = vmatpush1.msra.mxu0 %v3775
          %3777 = vmatprep.subr.mxu0 0.0
          %v3778 = vand.u32 %v3745, 4294901760
          %3779 = vmatpush1.msra.mxu0 %v3778
          %3780 = vmatprep.subr.mxu0 0.0
          %v3781 = vand.u32 %v3746, 4294901760
          %3782 = vmatpush1.msra.mxu0 %v3781
          %3783 = vmatprep.subr.mxu0 0.0
          %v3784 = vand.u32 %v3747, 4294901760
          %3785 = vmatpush1.msra.mxu0 %v3784
          %3786 = vmatprep.subr.mxu0 0.0
          %v3787 = vand.u32 %v3748, 4294901760
          %3788 = vmatpush1.msra.mxu0 %v3787
          %3789 = vmatprep.subr.mxu0 0.0
          %v3790 = vand.u32 %v3749, 4294901760
          %3791 = vmatpush1.msra.mxu0 %v3790
          %3792 = vmatprep.subr.mxu0 0.0
          %v3793 = vand.u32 %v3750, 4294901760
          %3794 = vmatpush1.msra.mxu0 %v3793
          %3795 = vmatprep.subr.mxu0 0.0
          %v3796 = vand.u32 %v3751, 4294901760
          %3797 = vmatpush1.msra.mxu0 %v3796
          %3798 = vmatprep.subr.mxu0 0.0
          %v3799 = vand.u32 %v3752, 4294901760
          %3800 = vmatpush1.msra.mxu0 %v3799
          %3801 = vmatprep.subr.mxu0 0.0
          %v3802 = vand.u32 %v3753, 4294901760
          %3803 = vmatpush1.msra.mxu0 %v3802
          %3804 = vmatprep.subr.mxu0 0.0
          %v3805 = vand.u32 %v3754, 4294901760
          %3806 = vmatpush1.msra.mxu0 %v3805
          %3807 = vmatprep.subr.mxu0 0.0
          %v3808 = vand.u32 %v3755, 4294901760
          %3809 = vmatpush1.msra.mxu0 %v3808
          %3810 = vmatprep.subr.mxu0 0.0
          %v3811 = vand.u32 %v3756, 4294901760
          %3812 = vmatpush1.msra.mxu0 %v3811
          %3813 = vmatprep.subr.mxu0 0.0
          %3814 = vmatpush1.msra.mxu0 0.0
          %3815 = vmatprep.subr.mxu0 0.0
          %3816 = vmatpush1.msra.mxu0 0.0
          %3817 = vmatprep.subr.mxu0 0.0
          %3818 = vmatpush1.msra.mxu0 0.0
          %3819 = vmatprep.subr.mxu0 0.0
          %3820 = vmatpush1.msra.mxu0 0.0
          %3821 = vmatprep.subr.mxu0 0.0
          %3822 = vmatpush1.msra.mxu0 0.0
          %3823 = vmatprep.subr.mxu0 0.0
          %3824 = vmatpush1.msra.mxu0 0.0
          %3825 = vmatprep.subr.mxu0 0.0
          %3826 = vmatpush1.msra.mxu0 0.0
          %3827 = vmatprep.subr.mxu0 0.0
          %3828 = vmatpush1.msra.mxu0 0.0
          %3829 = vmatprep.subr.mxu0 0.0
          %3830 = vmatpush1.msra.mxu0 0.0
          %3831 = vmatprep.subr.mxu0 0.0
          %3832 = vmatpush1.msra.mxu0 0.0
          %3833 = vmatprep.subr.mxu0 0.0
          %3834 = vmatpush1.msra.mxu0 0.0
          %3835 = vmatprep.subr.mxu0 0.0
          %3836 = vmatpush1.msra.mxu0 0.0
          %3837 = vmatprep.subr.mxu0 0.0
          %3838 = vmatpush1.msra.mxu0 0.0
          %3839 = vmatprep.subr.mxu0 0.0
          %3840 = vmatpush1.msra.mxu0 0.0
          %3841 = vmatprep.subr.mxu0 0.0
          %3842 = vmatpush1.msra.mxu0 0.0
          %3843 = vmatprep.subr.mxu0 0.0
          %3844 = vmatpush1.msra.mxu0 0.0
          %3845 = vmatprep.mubr.f32.mxu0 0.0
          %v3846 = vand.u32 %v1931, 4294901760
          %v3847 = vsub.f32 %v1931, %v3846
          %v3848 = vand.u32 %v3847, 4294901760
          %v3849 = vsub.f32 %v3847, %v3848
          %v3850 = vand.u32 %v3849, 4294901760
          %3851 = vmatmul.mubr.f32.gmra.mrb[0].mxu0 %v3850
          %v3852 = vpop.f32.mrb[0].mxu0
          %v3853 = vadd.f32 %v3763, %v3852
          %v3854 = vpop.f32.mrb[0].mxu0
          %3855 = vmatprep.mubr.f32.mxu0 0.0
          %v3856 = vand.u32 %v1932, 4294901760
          %v3857 = vsub.f32 %v1932, %v3856
          %v3858 = vand.u32 %v3857, 4294901760
          %v3859 = vsub.f32 %v3857, %v3858
          %v3860 = vand.u32 %v3859, 4294901760
          %3861 = vmatmul.mubr.f32.gmra.mrb[0].mxu0 %v3860
          %v3862 = vpop.f32.mrb[0].mxu0
          %v3863 = vadd.f32 %v3763, %v3862
          %v3864 = vpop.f32.mrb[0].mxu0
          %3865 = vmatprep.mubr.f32.mxu0 0.0
          %v3866 = vand.u32 %v1933, 4294901760
          %v3867 = vsub.f32 %v1933, %v3866
          %v3868 = vand.u32 %v3867, 4294901760
          %v3869 = vsub.f32 %v3867, %v3868
          %v3870 = vand.u32 %v3869, 4294901760
          %3871 = vmatmul.mubr.f32.gmra.mrb[0].mxu0 %v3870
          %v3872 = vpop.f32.mrb[0].mxu0
          %v3873 = vadd.f32 %v3763, %v3872
          %v3874 = vpop.f32.mrb[0].mxu0
          %3875 = vmatprep.mubr.f32.mxu0 0.0
          %v3876 = vand.u32 %v1934, 4294901760
          %v3877 = vsub.f32 %v1934, %v3876
          %v3878 = vand.u32 %v3877, 4294901760
          %v3879 = vsub.f32 %v3877, %v3878
          %v3880 = vand.u32 %v3879, 4294901760
          %3881 = vmatmul.mubr.f32.gmra.mrb[0].mxu0 %v3880
          %v3882 = vpop.f32.mrb[0].mxu0
          %v3883 = vadd.f32 %v3763, %v3882
          %v3884 = vpop.f32.mrb[0].mxu0
          %3885 = vmatprep.mubr.f32.mxu0 0.0
          %v3886 = vand.u32 %v1935, 4294901760
          %v3887 = vsub.f32 %v1935, %v3886
          %v3888 = vand.u32 %v3887, 4294901760
          %v3889 = vsub.f32 %v3887, %v3888
          %v3890 = vand.u32 %v3889, 4294901760
          %3891 = vmatmul.mubr.f32.gmra.mrb[0].mxu0 %v3890
          %v3892 = vpop.f32.mrb[0].mxu0
          %v3893 = vadd.f32 %v3763, %v3892
          %v3894 = vpop.f32.mrb[0].mxu0
          %3895 = vmatprep.mubr.f32.mxu0 0.0
          %v3896 = vand.u32 %v1936, 4294901760
          %v3897 = vsub.f32 %v1936, %v3896
          %v3898 = vand.u32 %v3897, 4294901760
          %v3899 = vsub.f32 %v3897, %v3898
          %v3900 = vand.u32 %v3899, 4294901760
          %3901 = vmatmul.mubr.f32.gmra.mrb[0].mxu0 %v3900
          %v3902 = vpop.f32.mrb[0].mxu0
          %v3903 = vadd.f32 %v3763, %v3902
          %v3904 = vpop.f32.mrb[0].mxu0
          %3905 = vmatprep.mubr.f32.mxu0 0.0
          %v3906 = vand.u32 %v1937, 4294901760
          %v3907 = vsub.f32 %v1937, %v3906
          %v3908 = vand.u32 %v3907, 4294901760
          %v3909 = vsub.f32 %v3907, %v3908
          %v3910 = vand.u32 %v3909, 4294901760
          %3911 = vmatmul.mubr.f32.gmra.mrb[0].mxu0 %v3910
          %v3912 = vpop.f32.mrb[0].mxu0
          %v3913 = vadd.f32 %v3763, %v3912
          %v3914 = vpop.f32.mrb[0].mxu0
          %3915 = vdwg.mxu0
          %3916 = vmatprep.subr.mxu0 0.0
          %v3917 = vand.u32 %v3741, 4294901760
          %v3918 = vsub.f32 %v3741, %v3917
          %v3919 = vand.u32 %v3918, 4294901760
          %v3920 = vsub.f32 %v3918, %v3919
          %v3921 = vand.u32 %v3920, 4294901760
          %3922 = vmatpush1.msra.mxu0 %v3921
          %3923 = vmatprep.subr.mxu0 0.0
          %v3924 = vand.u32 %v3742, 4294901760
          %v3925 = vsub.f32 %v3742, %v3924
          %v3926 = vand.u32 %v3925, 4294901760
          %v3927 = vsub.f32 %v3925, %v3926
          %v3928 = vand.u32 %v3927, 4294901760
          %3929 = vmatpush1.msra.mxu0 %v3928
          %3930 = vmatprep.subr.mxu0 0.0
          %v3931 = vand.u32 %v3743, 4294901760
          %v3932 = vsub.f32 %v3743, %v3931
          %v3933 = vand.u32 %v3932, 4294901760
          %v3934 = vsub.f32 %v3932, %v3933
          %v3935 = vand.u32 %v3934, 4294901760
          %3936 = vmatpush1.msra.mxu0 %v3935
          %3937 = vmatprep.subr.mxu0 0.0
          %v3938 = vand.u32 %v3744, 4294901760
          %v3939 = vsub.f32 %v3744, %v3938
          %v3940 = vand.u32 %v3939, 4294901760
          %v3941 = vsub.f32 %v3939, %v3940
          %v3942 = vand.u32 %v3941, 4294901760
          %3943 = vmatpush1.msra.mxu0 %v3942
          %3944 = vmatprep.subr.mxu0 0.0
          %v3945 = vand.u32 %v3745, 4294901760
          %v3946 = vsub.f32 %v3745, %v3945
          %v3947 = vand.u32 %v3946, 4294901760
          %v3948 = vsub.f32 %v3946, %v3947
          %v3949 = vand.u32 %v3948, 4294901760
          %3950 = vmatpush1.msra.mxu0 %v3949
          %3951 = vmatprep.subr.mxu0 0.0
          %v3952 = vand.u32 %v3746, 4294901760
          %v3953 = vsub.f32 %v3746, %v3952
          %v3954 = vand.u32 %v3953, 4294901760
          %v3955 = vsub.f32 %v3953, %v3954
          %v3956 = vand.u32 %v3955, 4294901760
          %3957 = vmatpush1.msra.mxu0 %v3956
          %3958 = vmatprep.subr.mxu0 0.0
          %v3959 = vand.u32 %v3747, 4294901760
          %v3960 = vsub.f32 %v3747, %v3959
          %v3961 = vand.u32 %v3960, 4294901760
          %v3962 = vsub.f32 %v3960, %v3961
          %v3963 = vand.u32 %v3962, 4294901760
          %3964 = vmatpush1.msra.mxu0 %v3963
          %3965 = vmatprep.subr.mxu0 0.0
          %v3966 = vand.u32 %v3748, 4294901760
          %v3967 = vsub.f32 %v3748, %v3966
          %v3968 = vand.u32 %v3967, 4294901760
          %v3969 = vsub.f32 %v3967, %v3968
          %v3970 = vand.u32 %v3969, 4294901760
          %3971 = vmatpush1.msra.mxu0 %v3970
          %3972 = vmatprep.subr.mxu0 0.0
          %v3973 = vand.u32 %v3749, 4294901760
          %v3974 = vsub.f32 %v3749, %v3973
          %v3975 = vand.u32 %v3974, 4294901760
          %v3976 = vsub.f32 %v3974, %v3975
          %v3977 = vand.u32 %v3976, 4294901760
          %3978 = vmatpush1.msra.mxu0 %v3977
          %3979 = vmatprep.subr.mxu0 0.0
          %v3980 = vand.u32 %v3750, 4294901760
          %v3981 = vsub.f32 %v3750, %v3980
          %v3982 = vand.u32 %v3981, 4294901760
          %v3983 = vsub.f32 %v3981, %v3982
          %v3984 = vand.u32 %v3983, 4294901760
          %3985 = vmatpush1.msra.mxu0 %v3984
          %3986 = vmatprep.subr.mxu0 0.0
          %v3987 = vand.u32 %v3751, 4294901760
          %v3988 = vsub.f32 %v3751, %v3987
          %v3989 = vand.u32 %v3988, 4294901760
          %v3990 = vsub.f32 %v3988, %v3989
          %v3991 = vand.u32 %v3990, 4294901760
          %3992 = vmatpush1.msra.mxu0 %v3991
          %3993 = vmatprep.subr.mxu0 0.0
          %v3994 = vand.u32 %v3752, 4294901760
          %v3995 = vsub.f32 %v3752, %v3994
          %v3996 = vand.u32 %v3995, 4294901760
          %v3997 = vsub.f32 %v3995, %v3996
          %v3998 = vand.u32 %v3997, 4294901760
          %3999 = vmatpush1.msra.mxu0 %v3998
          %4000 = vmatprep.subr.mxu0 0.0
          %v4001 = vand.u32 %v3753, 4294901760
          %v4002 = vsub.f32 %v3753, %v4001
          %v4003 = vand.u32 %v4002, 4294901760
          %v4004 = vsub.f32 %v4002, %v4003
          %v4005 = vand.u32 %v4004, 4294901760
          %4006 = vmatpush1.msra.mxu0 %v4005
          %4007 = vmatprep.subr.mxu0 0.0
          %v4008 = vand.u32 %v3754, 4294901760
          %v4009 = vsub.f32 %v3754, %v4008
          %v4010 = vand.u32 %v4009, 4294901760
          %v4011 = vsub.f32 %v4009, %v4010
          %v4012 = vand.u32 %v4011, 4294901760
          %4013 = vmatpush1.msra.mxu0 %v4012
          %4014 = vmatprep.subr.mxu0 0.0
          %v4015 = vand.u32 %v3755, 4294901760
          %v4016 = vsub.f32 %v3755, %v4015
          %v4017 = vand.u32 %v4016, 4294901760
          %v4018 = vsub.f32 %v4016, %v4017
          %v4019 = vand.u32 %v4018, 4294901760
          %4020 = vmatpush1.msra.mxu0 %v4019
          %4021 = vmatprep.subr.mxu0 0.0
          %v4022 = vand.u32 %v3756, 4294901760
          %v4023 = vsub.f32 %v3756, %v4022
          %v4024 = vand.u32 %v4023, 4294901760
          %v4025 = vsub.f32 %v4023, %v4024
          %v4026 = vand.u32 %v4025, 4294901760
          %4027 = vmatpush1.msra.mxu0 %v4026
          %4028 = vmatprep.subr.mxu0 0.0
          %4029 = vmatpush1.msra.mxu0 0.0
          %4030 = vmatprep.subr.mxu0 0.0
          %4031 = vmatpush1.msra.mxu0 0.0
          %4032 = vmatprep.subr.mxu0 0.0
          %4033 = vmatpush1.msra.mxu0 0.0
          %4034 = vmatprep.subr.mxu0 0.0
          %4035 = vmatpush1.msra.mxu0 0.0
          %4036 = vmatprep.subr.mxu0 0.0
          %4037 = vmatpush1.msra.mxu0 0.0
          %4038 = vmatprep.subr.mxu0 0.0
          %4039 = vmatpush1.msra.mxu0 0.0
          %4040 = vmatprep.subr.mxu0 0.0
          %4041 = vmatpush1.msra.mxu0 0.0
          %4042 = vmatprep.subr.mxu0 0.0
          %4043 = vmatpush1.msra.mxu0 0.0
          %4044 = vmatprep.subr.mxu0 0.0
          %4045 = vmatpush1.msra.mxu0 0.0
          %4046 = vmatprep.subr.mxu0 0.0
          %4047 = vmatpush1.msra.mxu0 0.0
          %4048 = vmatprep.subr.mxu0 0.0
          %4049 = vmatpush1.msra.mxu0 0.0
          %4050 = vmatprep.subr.mxu0 0.0
          %4051 = vmatpush1.msra.mxu0 0.0
          %4052 = vmatprep.subr.mxu0 0.0
          %4053 = vmatpush1.msra.mxu0 0.0
          %4054 = vmatprep.subr.mxu0 0.0
          %4055 = vmatpush1.msra.mxu0 0.0
          %4056 = vmatprep.subr.mxu0 0.0
          %4057 = vmatpush1.msra.mxu0 0.0
          %4058 = vmatprep.subr.mxu0 0.0
          %4059 = vmatpush1.msra.mxu0 0.0
          %4060 = vmatprep.mubr.f32.mxu0 0.0
          %v4061 = vand.u32 %v1931, 4294901760
          %4062 = vmatmul.mubr.f32.gmra.mrb[0].mxu0 %v4061
          %v4063 = vpop.f32.mrb[0].mxu0
          %v4064 = vadd.f32 %v3853, %v4063
          %v4065 = vpop.f32.mrb[0].mxu0
          %4066 = vmatprep.mubr.f32.mxu0 0.0
          %v4067 = vand.u32 %v1932, 4294901760
          %4068 = vmatmul.mubr.f32.gmra.mrb[0].mxu0 %v4067
          %v4069 = vpop.f32.mrb[0].mxu0
          %v4070 = vadd.f32 %v3863, %v4069
          %v4071 = vpop.f32.mrb[0].mxu0
          %4072 = vmatprep.mubr.f32.mxu0 0.0
          %v4073 = vand.u32 %v1933, 4294901760
          %4074 = vmatmul.mubr.f32.gmra.mrb[0].mxu0 %v4073
          %v4075 = vpop.f32.mrb[0].mxu0
          %v4076 = vadd.f32 %v3873, %v4075
          %v4077 = vpop.f32.mrb[0].mxu0
          %4078 = vmatprep.mubr.f32.mxu0 0.0
          %v4079 = vand.u32 %v1934, 4294901760
          %4080 = vmatmul.mubr.f32.gmra.mrb[0].mxu0 %v4079
          %v4081 = vpop.f32.mrb[0].mxu0
          %v4082 = vadd.f32 %v3883, %v4081
          %v4083 = vpop.f32.mrb[0].mxu0
          %4084 = vmatprep.mubr.f32.mxu0 0.0
          %v4085 = vand.u32 %v1935, 4294901760
          %4086 = vmatmul.mubr.f32.gmra.mrb[0].mxu0 %v4085
          %v4087 = vpop.f32.mrb[0].mxu0
          %v4088 = vadd.f32 %v3893, %v4087
          %v4089 = vpop.f32.mrb[0].mxu0
          %4090 = vmatprep.mubr.f32.mxu0 0.0
          %v4091 = vand.u32 %v1936, 4294901760
          %4092 = vmatmul.mubr.f32.gmra.mrb[0].mxu0 %v4091
          %v4093 = vpop.f32.mrb[0].mxu0
          %v4094 = vadd.f32 %v3903, %v4093
          %v4095 = vpop.f32.mrb[0].mxu0
          %4096 = vmatprep.mubr.f32.mxu0 0.0
          %v4097 = vand.u32 %v1937, 4294901760
          %4098 = vmatmul.mubr.f32.gmra.mrb[0].mxu0 %v4097
          %v4099 = vpop.f32.mrb[0].mxu0
          %v4100 = vadd.f32 %v3913, %v4099
          %v4101 = vpop.f32.mrb[0].mxu0
          %4102 = vdwg.mxu0
          %4103 = vmatprep.subr.mxu0 0.0
          %v4104 = vand.u32 %v3741, 4294901760
          %v4105 = vsub.f32 %v3741, %v4104
          %4106 = vmatpush1.msra.mxu0 %v4105
          %4107 = vmatprep.subr.mxu0 0.0
          %v4108 = vand.u32 %v3742, 4294901760
          %v4109 = vsub.f32 %v3742, %v4108
          %4110 = vmatpush1.msra.mxu0 %v4109
          %4111 = vmatprep.subr.mxu0 0.0
          %v4112 = vand.u32 %v3743, 4294901760
          %v4113 = vsub.f32 %v3743, %v4112
          %4114 = vmatpush1.msra.mxu0 %v4113
          %4115 = vmatprep.subr.mxu0 0.0
          %v4116 = vand.u32 %v3744, 4294901760
          %v4117 = vsub.f32 %v3744, %v4116
          %4118 = vmatpush1.msra.mxu0 %v4117
          %4119 = vmatprep.subr.mxu0 0.0
          %v4120 = vand.u32 %v3745, 4294901760
          %v4121 = vsub.f32 %v3745, %v4120
          %4122 = vmatpush1.msra.mxu0 %v4121
          %4123 = vmatprep.subr.mxu0 0.0
          %v4124 = vand.u32 %v3746, 4294901760
          %v4125 = vsub.f32 %v3746, %v4124
          %4126 = vmatpush1.msra.mxu0 %v4125
          %4127 = vmatprep.subr.mxu0 0.0
          %v4128 = vand.u32 %v3747, 4294901760
          %v4129 = vsub.f32 %v3747, %v4128
          %4130 = vmatpush1.msra.mxu0 %v4129
          %4131 = vmatprep.subr.mxu0 0.0
          %v4132 = vand.u32 %v3748, 4294901760
          %v4133 = vsub.f32 %v3748, %v4132
          %4134 = vmatpush1.msra.mxu0 %v4133
          %4135 = vmatprep.subr.mxu0 0.0
          %v4136 = vand.u32 %v3749, 4294901760
          %v4137 = vsub.f32 %v3749, %v4136
          %4138 = vmatpush1.msra.mxu0 %v4137
          %4139 = vmatprep.subr.mxu0 0.0
          %v4140 = vand.u32 %v3750, 4294901760
          %v4141 = vsub.f32 %v3750, %v4140
          %4142 = vmatpush1.msra.mxu0 %v4141
          %4143 = vmatprep.subr.mxu0 0.0
          %v4144 = vand.u32 %v3751, 4294901760
          %v4145 = vsub.f32 %v3751, %v4144
          %4146 = vmatpush1.msra.mxu0 %v4145
          %4147 = vmatprep.subr.mxu0 0.0
          %v4148 = vand.u32 %v3752, 4294901760
          %v4149 = vsub.f32 %v3752, %v4148
          %4150 = vmatpush1.msra.mxu0 %v4149
          %4151 = vmatprep.subr.mxu0 0.0
          %v4152 = vand.u32 %v3753, 4294901760
          %v4153 = vsub.f32 %v3753, %v4152
          %4154 = vmatpush1.msra.mxu0 %v4153
          %4155 = vmatprep.subr.mxu0 0.0
          %v4156 = vand.u32 %v3754, 4294901760
          %v4157 = vsub.f32 %v3754, %v4156
          %4158 = vmatpush1.msra.mxu0 %v4157
          %4159 = vmatprep.subr.mxu0 0.0
          %v4160 = vand.u32 %v3755, 4294901760
          %v4161 = vsub.f32 %v3755, %v4160
          %4162 = vmatpush1.msra.mxu0 %v4161
          %4163 = vmatprep.subr.mxu0 0.0
          %v4164 = vand.u32 %v3756, 4294901760
          %v4165 = vsub.f32 %v3756, %v4164
          %4166 = vmatpush1.msra.mxu0 %v4165
          %4167 = vmatprep.subr.mxu0 0.0
          %4168 = vmatpush1.msra.mxu0 0.0
          %4169 = vmatprep.subr.mxu0 0.0
          %4170 = vmatpush1.msra.mxu0 0.0
          %4171 = vmatprep.subr.mxu0 0.0
          %4172 = vmatpush1.msra.mxu0 0.0
          %4173 = vmatprep.subr.mxu0 0.0
          %4174 = vmatpush1.msra.mxu0 0.0
          %4175 = vmatprep.subr.mxu0 0.0
          %4176 = vmatpush1.msra.mxu0 0.0
          %4177 = vmatprep.subr.mxu0 0.0
          %4178 = vmatpush1.msra.mxu0 0.0
          %4179 = vmatprep.subr.mxu0 0.0
          %4180 = vmatpush1.msra.mxu0 0.0
          %4181 = vmatprep.subr.mxu0 0.0
          %4182 = vmatpush1.msra.mxu0 0.0
          %4183 = vmatprep.subr.mxu0 0.0
          %4184 = vmatpush1.msra.mxu0 0.0
          %4185 = vmatprep.subr.mxu0 0.0
          %4186 = vmatpush1.msra.mxu0 0.0
          %4187 = vmatprep.subr.mxu0 0.0
          %4188 = vmatpush1.msra.mxu0 0.0
          %4189 = vmatprep.subr.mxu0 0.0
          %4190 = vmatpush1.msra.mxu0 0.0
          %4191 = vmatprep.subr.mxu0 0.0
          %4192 = vmatpush1.msra.mxu0 0.0
          %4193 = vmatprep.subr.mxu0 0.0
          %4194 = vmatpush1.msra.mxu0 0.0
          %4195 = vmatprep.subr.mxu0 0.0
          %4196 = vmatpush1.msra.mxu0 0.0
          %4197 = vmatprep.subr.mxu0 0.0
          %4198 = vmatpush1.msra.mxu0 0.0
          %4199 = vmatprep.mubr.f32.mxu0 0.0
          %v4200 = vand.u32 %v1931, 4294901760
          %v4201 = vsub.f32 %v1931, %v4200
          %4202 = vmatmul.mubr.f32.gmra.mrb[0].mxu0 %v4201
          %v4203 = vpop.f32.mrb[0].mxu0
          %v4204 = vadd.f32 %v4064, %v4203
          %v4205 = vpop.f32.mrb[0].mxu0
          %4206 = vmatprep.mubr.f32.mxu0 0.0
          %v4207 = vand.u32 %v1932, 4294901760
          %v4208 = vsub.f32 %v1932, %v4207
          %4209 = vmatmul.mubr.f32.gmra.mrb[0].mxu0 %v4208
          %v4210 = vpop.f32.mrb[0].mxu0
          %v4211 = vadd.f32 %v4070, %v4210
          %v4212 = vpop.f32.mrb[0].mxu0
          %4213 = vmatprep.mubr.f32.mxu0 0.0
          %v4214 = vand.u32 %v1933, 4294901760
          %v4215 = vsub.f32 %v1933, %v4214
          %4216 = vmatmul.mubr.f32.gmra.mrb[0].mxu0 %v4215
          %v4217 = vpop.f32.mrb[0].mxu0
          %v4218 = vadd.f32 %v4076, %v4217
          %v4219 = vpop.f32.mrb[0].mxu0
          %4220 = vmatprep.mubr.f32.mxu0 0.0
          %v4221 = vand.u32 %v1934, 4294901760
          %v4222 = vsub.f32 %v1934, %v4221
          %4223 = vmatmul.mubr.f32.gmra.mrb[0].mxu0 %v4222
          %v4224 = vpop.f32.mrb[0].mxu0
          %v4225 = vadd.f32 %v4082, %v4224
          %v4226 = vpop.f32.mrb[0].mxu0
          %4227 = vmatprep.mubr.f32.mxu0 0.0
          %v4228 = vand.u32 %v1935, 4294901760
          %v4229 = vsub.f32 %v1935, %v4228
          %4230 = vmatmul.mubr.f32.gmra.mrb[0].mxu0 %v4229
          %v4231 = vpop.f32.mrb[0].mxu0
          %v4232 = vadd.f32 %v4088, %v4231
          %v4233 = vpop.f32.mrb[0].mxu0
          %4234 = vmatprep.mubr.f32.mxu0 0.0
          %v4235 = vand.u32 %v1936, 4294901760
          %v4236 = vsub.f32 %v1936, %v4235
          %4237 = vmatmul.mubr.f32.gmra.mrb[0].mxu0 %v4236
          %v4238 = vpop.f32.mrb[0].mxu0
          %v4239 = vadd.f32 %v4094, %v4238
          %v4240 = vpop.f32.mrb[0].mxu0
          %4241 = vmatprep.mubr.f32.mxu0 0.0
          %v4242 = vand.u32 %v1937, 4294901760
          %v4243 = vsub.f32 %v1937, %v4242
          %4244 = vmatmul.mubr.f32.gmra.mrb[0].mxu0 %v4243
          %v4245 = vpop.f32.mrb[0].mxu0
          %v4246 = vadd.f32 %v4100, %v4245
          %v4247 = vpop.f32.mrb[0].mxu0
          %4248 = vdwg.mxu0
          %4249 = vmatprep.subr.mxu0 0.0
          %v4250 = vand.u32 %v3741, 4294901760
          %4251 = vmatpush1.msra.mxu0 %v4250
          %4252 = vmatprep.subr.mxu0 0.0
          %v4253 = vand.u32 %v3742, 4294901760
          %4254 = vmatpush1.msra.mxu0 %v4253
          %4255 = vmatprep.subr.mxu0 0.0
          %v4256 = vand.u32 %v3743, 4294901760
          %4257 = vmatpush1.msra.mxu0 %v4256
          %4258 = vmatprep.subr.mxu0 0.0
          %v4259 = vand.u32 %v3744, 4294901760
          %4260 = vmatpush1.msra.mxu0 %v4259
          %4261 = vmatprep.subr.mxu0 0.0
          %v4262 = vand.u32 %v3745, 4294901760
          %4263 = vmatpush1.msra.mxu0 %v4262
          %4264 = vmatprep.subr.mxu0 0.0
          %v4265 = vand.u32 %v3746, 4294901760
          %4266 = vmatpush1.msra.mxu0 %v4265
          %4267 = vmatprep.subr.mxu0 0.0
          %v4268 = vand.u32 %v3747, 4294901760
          %4269 = vmatpush1.msra.mxu0 %v4268
          %4270 = vmatprep.subr.mxu0 0.0
          %v4271 = vand.u32 %v3748, 4294901760
          %4272 = vmatpush1.msra.mxu0 %v4271
          %4273 = vmatprep.subr.mxu0 0.0
          %v4274 = vand.u32 %v3749, 4294901760
          %4275 = vmatpush1.msra.mxu0 %v4274
          %4276 = vmatprep.subr.mxu0 0.0
          %v4277 = vand.u32 %v3750, 4294901760
          %4278 = vmatpush1.msra.mxu0 %v4277
          %4279 = vmatprep.subr.mxu0 0.0
          %v4280 = vand.u32 %v3751, 4294901760
          %4281 = vmatpush1.msra.mxu0 %v4280
          %4282 = vmatprep.subr.mxu0 0.0
          %v4283 = vand.u32 %v3752, 4294901760
          %4284 = vmatpush1.msra.mxu0 %v4283
          %4285 = vmatprep.subr.mxu0 0.0
          %v4286 = vand.u32 %v3753, 4294901760
          %4287 = vmatpush1.msra.mxu0 %v4286
          %4288 = vmatprep.subr.mxu0 0.0
          %v4289 = vand.u32 %v3754, 4294901760
          %4290 = vmatpush1.msra.mxu0 %v4289
          %4291 = vmatprep.subr.mxu0 0.0
          %v4292 = vand.u32 %v3755, 4294901760
          %4293 = vmatpush1.msra.mxu0 %v4292
          %4294 = vmatprep.subr.mxu0 0.0
          %v4295 = vand.u32 %v3756, 4294901760
          %4296 = vmatpush1.msra.mxu0 %v4295
          %4297 = vmatprep.subr.mxu0 0.0
          %4298 = vmatpush1.msra.mxu0 0.0
          %4299 = vmatprep.subr.mxu0 0.0
          %4300 = vmatpush1.msra.mxu0 0.0
          %4301 = vmatprep.subr.mxu0 0.0
          %4302 = vmatpush1.msra.mxu0 0.0
          %4303 = vmatprep.subr.mxu0 0.0
          %4304 = vmatpush1.msra.mxu0 0.0
          %4305 = vmatprep.subr.mxu0 0.0
          %4306 = vmatpush1.msra.mxu0 0.0
          %4307 = vmatprep.subr.mxu0 0.0
          %4308 = vmatpush1.msra.mxu0 0.0
          %4309 = vmatprep.subr.mxu0 0.0
          %4310 = vmatpush1.msra.mxu0 0.0
          %4311 = vmatprep.subr.mxu0 0.0
          %4312 = vmatpush1.msra.mxu0 0.0
          %4313 = vmatprep.subr.mxu0 0.0
          %4314 = vmatpush1.msra.mxu0 0.0
          %4315 = vmatprep.subr.mxu0 0.0
          %4316 = vmatpush1.msra.mxu0 0.0
          %4317 = vmatprep.subr.mxu0 0.0
          %4318 = vmatpush1.msra.mxu0 0.0
          %4319 = vmatprep.subr.mxu0 0.0
          %4320 = vmatpush1.msra.mxu0 0.0
          %4321 = vmatprep.subr.mxu0 0.0
          %4322 = vmatpush1.msra.mxu0 0.0
          %4323 = vmatprep.subr.mxu0 0.0
          %4324 = vmatpush1.msra.mxu0 0.0
          %4325 = vmatprep.subr.mxu0 0.0
          %4326 = vmatpush1.msra.mxu0 0.0
          %4327 = vmatprep.subr.mxu0 0.0
          %4328 = vmatpush1.msra.mxu0 0.0
          %4329 = vmatprep.mubr.f32.mxu0 0.0
          %v4330 = vand.u32 %v1931, 4294901760
          %v4331 = vsub.f32 %v1931, %v4330
          %v4332 = vand.u32 %v4331, 4294901760
          %4333 = vmatmul.mubr.f32.gmra.mrb[0].mxu0 %v4332
          %v4334 = vpop.f32.mrb[0].mxu0
          %v4335 = vadd.f32 %v4204, %v4334
          %v4336 = vpop.f32.mrb[0].mxu0
          %4337 = vmatprep.mubr.f32.mxu0 0.0
          %v4338 = vand.u32 %v1932, 4294901760
          %v4339 = vsub.f32 %v1932, %v4338
          %v4340 = vand.u32 %v4339, 4294901760
          %4341 = vmatmul.mubr.f32.gmra.mrb[0].mxu0 %v4340
          %v4342 = vpop.f32.mrb[0].mxu0
          %v4343 = vadd.f32 %v4211, %v4342
          %v4344 = vpop.f32.mrb[0].mxu0
          %4345 = vmatprep.mubr.f32.mxu0 0.0
          %v4346 = vand.u32 %v1933, 4294901760
          %v4347 = vsub.f32 %v1933, %v4346
          %v4348 = vand.u32 %v4347, 4294901760
          %4349 = vmatmul.mubr.f32.gmra.mrb[0].mxu0 %v4348
          %v4350 = vpop.f32.mrb[0].mxu0
          %v4351 = vadd.f32 %v4218, %v4350
          %v4352 = vpop.f32.mrb[0].mxu0
          %4353 = vmatprep.mubr.f32.mxu0 0.0
          %v4354 = vand.u32 %v1934, 4294901760
          %v4355 = vsub.f32 %v1934, %v4354
          %v4356 = vand.u32 %v4355, 4294901760
          %4357 = vmatmul.mubr.f32.gmra.mrb[0].mxu0 %v4356
          %v4358 = vpop.f32.mrb[0].mxu0
          %v4359 = vadd.f32 %v4225, %v4358
          %v4360 = vpop.f32.mrb[0].mxu0
          %4361 = vmatprep.mubr.f32.mxu0 0.0
          %v4362 = vand.u32 %v1935, 4294901760
          %v4363 = vsub.f32 %v1935, %v4362
          %v4364 = vand.u32 %v4363, 4294901760
          %4365 = vmatmul.mubr.f32.gmra.mrb[0].mxu0 %v4364
          %v4366 = vpop.f32.mrb[0].mxu0
          %v4367 = vadd.f32 %v4232, %v4366
          %v4368 = vpop.f32.mrb[0].mxu0
          %4369 = vmatprep.mubr.f32.mxu0 0.0
          %v4370 = vand.u32 %v1936, 4294901760
          %v4371 = vsub.f32 %v1936, %v4370
          %v4372 = vand.u32 %v4371, 4294901760
          %4373 = vmatmul.mubr.f32.gmra.mrb[0].mxu0 %v4372
          %v4374 = vpop.f32.mrb[0].mxu0
          %v4375 = vadd.f32 %v4239, %v4374
          %v4376 = vpop.f32.mrb[0].mxu0
          %4377 = vmatprep.mubr.f32.mxu0 0.0
          %v4378 = vand.u32 %v1937, 4294901760
          %v4379 = vsub.f32 %v1937, %v4378
          %v4380 = vand.u32 %v4379, 4294901760
          %4381 = vmatmul.mubr.f32.gmra.mrb[0].mxu0 %v4380
          %v4382 = vpop.f32.mrb[0].mxu0
          %v4383 = vadd.f32 %v4246, %v4382
          %v4384 = vpop.f32.mrb[0].mxu0
          %4385 = vdwg.mxu0
          %4386 = vmatprep.subr.mxu0 0.0
          %v4387 = vand.u32 %v3741, 4294901760
          %v4388 = vsub.f32 %v3741, %v4387
          %v4389 = vand.u32 %v4388, 4294901760
          %4390 = vmatpush1.msra.mxu0 %v4389
          %4391 = vmatprep.subr.mxu0 0.0
          %v4392 = vand.u32 %v3742, 4294901760
          %v4393 = vsub.f32 %v3742, %v4392
          %v4394 = vand.u32 %v4393, 4294901760
          %4395 = vmatpush1.msra.mxu0 %v4394
          %4396 = vmatprep.subr.mxu0 0.0
          %v4397 = vand.u32 %v3743, 4294901760
          %v4398 = vsub.f32 %v3743, %v4397
          %v4399 = vand.u32 %v4398, 4294901760
          %4400 = vmatpush1.msra.mxu0 %v4399
          %4401 = vmatprep.subr.mxu0 0.0
          %v4402 = vand.u32 %v3744, 4294901760
          %v4403 = vsub.f32 %v3744, %v4402
          %v4404 = vand.u32 %v4403, 4294901760
          %4405 = vmatpush1.msra.mxu0 %v4404
          %4406 = vmatprep.subr.mxu0 0.0
          %v4407 = vand.u32 %v3745, 4294901760
          %v4408 = vsub.f32 %v3745, %v4407
          %v4409 = vand.u32 %v4408, 4294901760
          %4410 = vmatpush1.msra.mxu0 %v4409
          %4411 = vmatprep.subr.mxu0 0.0
          %v4412 = vand.u32 %v3746, 4294901760
          %v4413 = vsub.f32 %v3746, %v4412
          %v4414 = vand.u32 %v4413, 4294901760
          %4415 = vmatpush1.msra.mxu0 %v4414
          %4416 = vmatprep.subr.mxu0 0.0
          %v4417 = vand.u32 %v3747, 4294901760
          %v4418 = vsub.f32 %v3747, %v4417
          %v4419 = vand.u32 %v4418, 4294901760
          %4420 = vmatpush1.msra.mxu0 %v4419
          %4421 = vmatprep.subr.mxu0 0.0
          %v4422 = vand.u32 %v3748, 4294901760
          %v4423 = vsub.f32 %v3748, %v4422
          %v4424 = vand.u32 %v4423, 4294901760
          %4425 = vmatpush1.msra.mxu0 %v4424
          %4426 = vmatprep.subr.mxu0 0.0
          %v4427 = vand.u32 %v3749, 4294901760
          %v4428 = vsub.f32 %v3749, %v4427
          %v4429 = vand.u32 %v4428, 4294901760
          %4430 = vmatpush1.msra.mxu0 %v4429
          %4431 = vmatprep.subr.mxu0 0.0
          %v4432 = vand.u32 %v3750, 4294901760
          %v4433 = vsub.f32 %v3750, %v4432
          %v4434 = vand.u32 %v4433, 4294901760
          %4435 = vmatpush1.msra.mxu0 %v4434
          %4436 = vmatprep.subr.mxu0 0.0
          %v4437 = vand.u32 %v3751, 4294901760
          %v4438 = vsub.f32 %v3751, %v4437
          %v4439 = vand.u32 %v4438, 4294901760
          %4440 = vmatpush1.msra.mxu0 %v4439
          %4441 = vmatprep.subr.mxu0 0.0
          %v4442 = vand.u32 %v3752, 4294901760
          %v4443 = vsub.f32 %v3752, %v4442
          %v4444 = vand.u32 %v4443, 4294901760
          %4445 = vmatpush1.msra.mxu0 %v4444
          %4446 = vmatprep.subr.mxu0 0.0
          %v4447 = vand.u32 %v3753, 4294901760
          %v4448 = vsub.f32 %v3753, %v4447
          %v4449 = vand.u32 %v4448, 4294901760
          %4450 = vmatpush1.msra.mxu0 %v4449
          %4451 = vmatprep.subr.mxu0 0.0
          %v4452 = vand.u32 %v3754, 4294901760
          %v4453 = vsub.f32 %v3754, %v4452
          %v4454 = vand.u32 %v4453, 4294901760
          %4455 = vmatpush1.msra.mxu0 %v4454
          %4456 = vmatprep.subr.mxu0 0.0
          %v4457 = vand.u32 %v3755, 4294901760
          %v4458 = vsub.f32 %v3755, %v4457
          %v4459 = vand.u32 %v4458, 4294901760
          %4460 = vmatpush1.msra.mxu0 %v4459
          %4461 = vmatprep.subr.mxu0 0.0
          %v4462 = vand.u32 %v3756, 4294901760
          %v4463 = vsub.f32 %v3756, %v4462
          %v4464 = vand.u32 %v4463, 4294901760
          %4465 = vmatpush1.msra.mxu0 %v4464
          %4466 = vmatprep.subr.mxu0 0.0
          %4467 = vmatpush1.msra.mxu0 0.0
          %4468 = vmatprep.subr.mxu0 0.0
          %4469 = vmatpush1.msra.mxu0 0.0
          %4470 = vmatprep.subr.mxu0 0.0
          %4471 = vmatpush1.msra.mxu0 0.0
          %4472 = vmatprep.subr.mxu0 0.0
          %4473 = vmatpush1.msra.mxu0 0.0
          %4474 = vmatprep.subr.mxu0 0.0
          %4475 = vmatpush1.msra.mxu0 0.0
          %4476 = vmatprep.subr.mxu0 0.0
          %4477 = vmatpush1.msra.mxu0 0.0
          %4478 = vmatprep.subr.mxu0 0.0
          %4479 = vmatpush1.msra.mxu0 0.0
          %4480 = vmatprep.subr.mxu0 0.0
          %4481 = vmatpush1.msra.mxu0 0.0
          %4482 = vmatprep.subr.mxu0 0.0
          %4483 = vmatpush1.msra.mxu0 0.0
          %4484 = vmatprep.subr.mxu0 0.0
          %4485 = vmatpush1.msra.mxu0 0.0
          %4486 = vmatprep.subr.mxu0 0.0
          %4487 = vmatpush1.msra.mxu0 0.0
          %4488 = vmatprep.subr.mxu0 0.0
          %4489 = vmatpush1.msra.mxu0 0.0
          %4490 = vmatprep.subr.mxu0 0.0
          %4491 = vmatpush1.msra.mxu0 0.0
          %4492 = vmatprep.subr.mxu0 0.0
          %4493 = vmatpush1.msra.mxu0 0.0
          %4494 = vmatprep.subr.mxu0 0.0
          %4495 = vmatpush1.msra.mxu0 0.0
          %4496 = vmatprep.subr.mxu0 0.0
          %4497 = vmatpush1.msra.mxu0 0.0
          %4498 = vmatprep.mubr.f32.mxu0 0.0
          %v4499 = vand.u32 %v1931, 4294901760
          %4500 = vmatmul.mubr.f32.gmra.mrb[0].mxu0 %v4499
          %v4501 = vpop.f32.mrb[0].mxu0
          %v4502 = vadd.f32 %v4335, %v4501
          %v4503 = vpop.f32.mrb[0].mxu0
          %4504 = vmatprep.mubr.f32.mxu0 0.0
          %v4505 = vand.u32 %v1932, 4294901760
          %4506 = vmatmul.mubr.f32.gmra.mrb[0].mxu0 %v4505
          %v4507 = vpop.f32.mrb[0].mxu0
          %v4508 = vadd.f32 %v4343, %v4507
          %v4509 = vpop.f32.mrb[0].mxu0
          %4510 = vmatprep.mubr.f32.mxu0 0.0
          %v4511 = vand.u32 %v1933, 4294901760
          %4512 = vmatmul.mubr.f32.gmra.mrb[0].mxu0 %v4511
          %v4513 = vpop.f32.mrb[0].mxu0
          %v4514 = vadd.f32 %v4351, %v4513
          %v4515 = vpop.f32.mrb[0].mxu0
          %4516 = vmatprep.mubr.f32.mxu0 0.0
          %v4517 = vand.u32 %v1934, 4294901760
          %4518 = vmatmul.mubr.f32.gmra.mrb[0].mxu0 %v4517
          %v4519 = vpop.f32.mrb[0].mxu0
          %v4520 = vadd.f32 %v4359, %v4519
          %v4521 = vpop.f32.mrb[0].mxu0
          %4522 = vmatprep.mubr.f32.mxu0 0.0
          %v4523 = vand.u32 %v1935, 4294901760
          %4524 = vmatmul.mubr.f32.gmra.mrb[0].mxu0 %v4523
          %v4525 = vpop.f32.mrb[0].mxu0
          %v4526 = vadd.f32 %v4367, %v4525
          %v4527 = vpop.f32.mrb[0].mxu0
          %4528 = vmatprep.mubr.f32.mxu0 0.0
          %v4529 = vand.u32 %v1936, 4294901760
          %4530 = vmatmul.mubr.f32.gmra.mrb[0].mxu0 %v4529
          %v4531 = vpop.f32.mrb[0].mxu0
          %v4532 = vadd.f32 %v4375, %v4531
          %v4533 = vpop.f32.mrb[0].mxu0
          %4534 = vmatprep.mubr.f32.mxu0 0.0
          %v4535 = vand.u32 %v1937, 4294901760
          %4536 = vmatmul.mubr.f32.gmra.mrb[0].mxu0 %v4535
          %v4537 = vpop.f32.mrb[0].mxu0
          %v4538 = vadd.f32 %v4383, %v4537
          %v4539 = vpop.f32.mrb[0].mxu0
          %4540 = vdwg.mxu0
          %4541 = vmatprep.subr.mxu0 0.0
          %v4542 = vand.u32 %v3741, 4294901760
          %4543 = vmatpush1.msra.mxu0 %v4542
          %4544 = vmatprep.subr.mxu0 0.0
          %v4545 = vand.u32 %v3742, 4294901760
          %4546 = vmatpush1.msra.mxu0 %v4545
          %4547 = vmatprep.subr.mxu0 0.0
          %v4548 = vand.u32 %v3743, 4294901760
          %4549 = vmatpush1.msra.mxu0 %v4548
          %4550 = vmatprep.subr.mxu0 0.0
          %v4551 = vand.u32 %v3744, 4294901760
          %4552 = vmatpush1.msra.mxu0 %v4551
          %4553 = vmatprep.subr.mxu0 0.0
          %v4554 = vand.u32 %v3745, 4294901760
          %4555 = vmatpush1.msra.mxu0 %v4554
          %4556 = vmatprep.subr.mxu0 0.0
          %v4557 = vand.u32 %v3746, 4294901760
          %4558 = vmatpush1.msra.mxu0 %v4557
          %4559 = vmatprep.subr.mxu0 0.0
          %v4560 = vand.u32 %v3747, 4294901760
          %4561 = vmatpush1.msra.mxu0 %v4560
          %4562 = vmatprep.subr.mxu0 0.0
          %v4563 = vand.u32 %v3748, 4294901760
          %4564 = vmatpush1.msra.mxu0 %v4563
          %4565 = vmatprep.subr.mxu0 0.0
          %v4566 = vand.u32 %v3749, 4294901760
          %4567 = vmatpush1.msra.mxu0 %v4566
          %4568 = vmatprep.subr.mxu0 0.0
          %v4569 = vand.u32 %v3750, 4294901760
          %4570 = vmatpush1.msra.mxu0 %v4569
          %4571 = vmatprep.subr.mxu0 0.0
          %v4572 = vand.u32 %v3751, 4294901760
          %4573 = vmatpush1.msra.mxu0 %v4572
          %4574 = vmatprep.subr.mxu0 0.0
          %v4575 = vand.u32 %v3752, 4294901760
          %4576 = vmatpush1.msra.mxu0 %v4575
          %4577 = vmatprep.subr.mxu0 0.0
          %v4578 = vand.u32 %v3753, 4294901760
          %4579 = vmatpush1.msra.mxu0 %v4578
          %4580 = vmatprep.subr.mxu0 0.0
          %v4581 = vand.u32 %v3754, 4294901760
          %4582 = vmatpush1.msra.mxu0 %v4581
          %4583 = vmatprep.subr.mxu0 0.0
          %v4584 = vand.u32 %v3755, 4294901760
          %4585 = vmatpush1.msra.mxu0 %v4584
          %4586 = vmatprep.subr.mxu0 0.0
          %v4587 = vand.u32 %v3756, 4294901760
          %4588 = vmatpush1.msra.mxu0 %v4587
          %4589 = vmatprep.subr.mxu0 0.0
          %4590 = vmatpush1.msra.mxu0 0.0
          %4591 = vmatprep.subr.mxu0 0.0
          %4592 = vmatpush1.msra.mxu0 0.0
          %4593 = vmatprep.subr.mxu0 0.0
          %4594 = vmatpush1.msra.mxu0 0.0
          %4595 = vmatprep.subr.mxu0 0.0
          %4596 = vmatpush1.msra.mxu0 0.0
          %4597 = vmatprep.subr.mxu0 0.0
          %4598 = vmatpush1.msra.mxu0 0.0
          %4599 = vmatprep.subr.mxu0 0.0
          %4600 = vmatpush1.msra.mxu0 0.0
          %4601 = vmatprep.subr.mxu0 0.0
          %4602 = vmatpush1.msra.mxu0 0.0
          %4603 = vmatprep.subr.mxu0 0.0
          %4604 = vmatpush1.msra.mxu0 0.0
          %4605 = vmatprep.subr.mxu0 0.0
          %4606 = vmatpush1.msra.mxu0 0.0
          %4607 = vmatprep.subr.mxu0 0.0
          %4608 = vmatpush1.msra.mxu0 0.0
          %4609 = vmatprep.subr.mxu0 0.0
          %4610 = vmatpush1.msra.mxu0 0.0
          %4611 = vmatprep.subr.mxu0 0.0
          %4612 = vmatpush1.msra.mxu0 0.0
          %4613 = vmatprep.subr.mxu0 0.0
          %4614 = vmatpush1.msra.mxu0 0.0
          %4615 = vmatprep.subr.mxu0 0.0
          %4616 = vmatpush1.msra.mxu0 0.0
          %4617 = vmatprep.subr.mxu0 0.0
          %4618 = vmatpush1.msra.mxu0 0.0
          %4619 = vmatprep.subr.mxu0 0.0
          %4620 = vmatpush1.msra.mxu0 0.0
          %4621 = vmatprep.mubr.f32.mxu0 0.0
          %v4622 = vand.u32 %v1931, 4294901760
          %4623 = vmatmul.mubr.f32.gmra.mrb[0].mxu0 %v4622
          %v4624 = vpop.f32.mrb[0].mxu0
          %v4625 = vadd.f32 %v4502, %v4624
          %v4626 = vpop.f32.mrb[0].mxu0
          %4627 = vmatprep.mubr.f32.mxu0 0.0
          %v4628 = vand.u32 %v1932, 4294901760
          %4629 = vmatmul.mubr.f32.gmra.mrb[0].mxu0 %v4628
          %v4630 = vpop.f32.mrb[0].mxu0
          %v4631 = vadd.f32 %v4508, %v4630
          %v4632 = vpop.f32.mrb[0].mxu0
          %4633 = vmatprep.mubr.f32.mxu0 0.0
          %v4634 = vand.u32 %v1933, 4294901760
          %4635 = vmatmul.mubr.f32.gmra.mrb[0].mxu0 %v4634
          %v4636 = vpop.f32.mrb[0].mxu0
          %v4637 = vadd.f32 %v4514, %v4636
          %v4638 = vpop.f32.mrb[0].mxu0
          %4639 = vmatprep.mubr.f32.mxu0 0.0
          %v4640 = vand.u32 %v1934, 4294901760
          %4641 = vmatmul.mubr.f32.gmra.mrb[0].mxu0 %v4640
          %v4642 = vpop.f32.mrb[0].mxu0
          %v4643 = vadd.f32 %v4520, %v4642
          %v4644 = vpop.f32.mrb[0].mxu0
          %4645 = vmatprep.mubr.f32.mxu0 0.0
          %v4646 = vand.u32 %v1935, 4294901760
          %4647 = vmatmul.mubr.f32.gmra.mrb[0].mxu0 %v4646
          %v4648 = vpop.f32.mrb[0].mxu0
          %v4649 = vadd.f32 %v4526, %v4648
          %v4650 = vpop.f32.mrb[0].mxu0
          %4651 = vmatprep.mubr.f32.mxu0 0.0
          %v4652 = vand.u32 %v1936, 4294901760
          %4653 = vmatmul.mubr.f32.gmra.mrb[0].mxu0 %v4652
          %v4654 = vpop.f32.mrb[0].mxu0
          %v4655 = vadd.f32 %v4532, %v4654
          %v4656 = vpop.f32.mrb[0].mxu0
          %4657 = vmatprep.mubr.f32.mxu0 0.0
          %v4658 = vand.u32 %v1937, 4294901760
          %4659 = vmatmul.mubr.f32.gmra.mrb[0].mxu0 %v4658
          %v4660 = vpop.f32.mrb[0].mxu0
          %v4661 = vadd.f32 %v4538, %v4660
          %v4662 = vpop.f32.mrb[0].mxu0
          %4663 = vdwg.mxu0
          %v4664 = vand.u32 2147483647, %v1931
          %v4665 = vand.u32 2147483647, %v1932
          %v4666 = vand.u32 2147483647, %v1933
          %v4667 = vand.u32 2147483647, %v1934
          %v4668 = vand.u32 2147483647, %v1935
          %v4669 = vand.u32 2147483647, %v1936
          %v4670 = vand.u32 2147483647, %v1937
          %v4671 = vsub.f32 0.0, %v4664
          %v4672 = vsub.f32 0.0, %v4665
          %v4673 = vsub.f32 0.0, %v4666
          %v4674 = vsub.f32 0.0, %v4667
          %v4675 = vsub.f32 0.0, %v4668
          %v4676 = vsub.f32 0.0, %v4669
          %v4677 = vsub.f32 0.0, %v4670
          %v4678 = vmul.f32 %v4671, 1.442695
          %v4679 = vpow.pop %v4678
          %v4680 = vmul.f32 %v4672, 1.442695
          %v4681 = vpow.pop %v4680
          %v4682 = vmul.f32 %v4673, 1.442695
          %v4683 = vpow.pop %v4682
          %v4684 = vmul.f32 %v4674, 1.442695
          %v4685 = vpow.pop %v4684
          %v4686 = vmul.f32 %v4675, 1.442695
          %v4687 = vpow.pop %v4686
          %v4688 = vmul.f32 %v4676, 1.442695
          %v4689 = vpow.pop %v4688
          %v4690 = vmul.f32 %v4677, 1.442695
          %v4691 = vpow.pop %v4690
          %v4692 = vadd.f32 %v4679, 1.0
          %v4693 = vadd.f32 %v4681, 1.0
          %v4694 = vadd.f32 %v4683, 1.0
          %v4695 = vadd.f32 %v4685, 1.0
          %v4696 = vadd.f32 %v4687, 1.0
          %v4697 = vadd.f32 %v4689, 1.0
          %v4698 = vadd.f32 %v4691, 1.0
          %v4699 = vrcp.pop %v4692
          %v4700 = vmul.f32 1.0, %v4699
          %v4701 = vrcp.pop %v4693
          %v4702 = vmul.f32 1.0, %v4701
          %v4703 = vrcp.pop %v4694
          %v4704 = vmul.f32 1.0, %v4703
          %v4705 = vrcp.pop %v4695
          %v4706 = vmul.f32 1.0, %v4705
          %v4707 = vrcp.pop %v4696
          %v4708 = vmul.f32 1.0, %v4707
          %v4709 = vrcp.pop %v4697
          %v4710 = vmul.f32 1.0, %v4709
          %v4711 = vrcp.pop %v4698
          %v4712 = vmul.f32 1.0, %v4711
          %vm4713 = vcmp.ge.f32.partialorder %v1931, 0.0
          %vm4714 = vcmp.ge.f32.partialorder %v1932, 0.0
          %vm4715 = vcmp.ge.f32.partialorder %v1933, 0.0
          %vm4716 = vcmp.ge.f32.partialorder %v1934, 0.0
          %vm4717 = vcmp.ge.f32.partialorder %v1935, 0.0
          %vm4718 = vcmp.ge.f32.partialorder %v1936, 0.0
          %vm4719 = vcmp.ge.f32.partialorder %v1937, 0.0
          %v4720 = vmul.f32 %v4679, %v4700
          %v4721 = vmul.f32 %v4681, %v4702
          %v4722 = vmul.f32 %v4683, %v4704
          %v4723 = vmul.f32 %v4685, %v4706
          %v4724 = vmul.f32 %v4687, %v4708
          %v4725 = vmul.f32 %v4689, %v4710
          %v4726 = vmul.f32 %v4691, %v4712
          %v4727 = vsel %vm4713, %v4700, %v4720
          %v4728 = vsel %vm4714, %v4702, %v4721
          %v4729 = vsel %vm4715, %v4704, %v4722
          %v4730 = vsel %vm4716, %v4706, %v4723
          %v4731 = vsel %vm4717, %v4708, %v4724
          %v4732 = vsel %vm4718, %v4710, %v4725
          %v4733 = vsel %vm4719, %v4712, %v4726
          %v4735 = vsel %vm646, %v621, 0
          %v4738 = vsel %vm646, %v622, 0
          %v4741 = vsel %vm646, %v623, 0
          %v4744 = vsel %vm646, %v624, 0
          %v4747 = vsel %vm646, %v625, 0
          %v4750 = vsel %vm646, %v626, 0
          %v4753 = vsel %vm646, %v627, 0
          %v4755 = vand.u32 %v3737, 4294901760
          %4756 = vmatprep.subr.mxu0 %v4755
          %v4757 = vand.u32 %v3735, 4294901760
          %4758 = vmatpush1.msra.mxu0 %v4757
          %4759 = vmatprep.subr.mxu0 0.0
          %4760 = vmatpush1.msra.mxu0 0.0
          %4761 = vmatprep.subr.mxu0 0.0
          %4762 = vmatpush1.msra.mxu0 0.0
          %4763 = vmatprep.subr.mxu0 0.0
          %4764 = vmatpush1.msra.mxu0 0.0
          %4765 = vmatprep.subr.mxu0 0.0
          %4766 = vmatpush1.msra.mxu0 0.0
          %4767 = vmatprep.subr.mxu0 0.0
          %4768 = vmatpush1.msra.mxu0 0.0
          %4769 = vmatprep.subr.mxu0 0.0
          %4770 = vmatpush1.msra.mxu0 0.0
          %4771 = vmatprep.subr.mxu0 0.0
          %4772 = vmatpush1.msra.mxu0 0.0
          %4773 = vmatprep.subr.mxu0 0.0
          %4774 = vmatpush1.msra.mxu0 0.0
          %4775 = vmatprep.subr.mxu0 0.0
          %4776 = vmatpush1.msra.mxu0 0.0
          %4777 = vmatprep.subr.mxu0 0.0
          %4778 = vmatpush1.msra.mxu0 0.0
          %4779 = vmatprep.subr.mxu0 0.0
          %4780 = vmatpush1.msra.mxu0 0.0
          %4781 = vmatprep.subr.mxu0 0.0
          %4782 = vmatpush1.msra.mxu0 0.0
          %4783 = vmatprep.subr.mxu0 0.0
          %4784 = vmatpush1.msra.mxu0 0.0
          %4785 = vmatprep.subr.mxu0 0.0
          %4786 = vmatpush1.msra.mxu0 0.0
          %4787 = vmatprep.subr.mxu0 0.0
          %4788 = vmatpush1.msra.mxu0 0.0
          %4789 = vmatprep.subr.mxu0 0.0
          %4790 = vmatpush1.msra.mxu0 0.0
          %4791 = vmatprep.subr.mxu0 0.0
          %4792 = vmatpush1.msra.mxu0 0.0
          %4793 = vmatprep.subr.mxu0 0.0
          %4794 = vmatpush1.msra.mxu0 0.0
          %4795 = vmatprep.subr.mxu0 0.0
          %4796 = vmatpush1.msra.mxu0 0.0
          %4797 = vmatprep.subr.mxu0 0.0
          %4798 = vmatpush1.msra.mxu0 0.0
          %4799 = vmatprep.subr.mxu0 0.0
          %4800 = vmatpush1.msra.mxu0 0.0
          %4801 = vmatprep.subr.mxu0 0.0
          %4802 = vmatpush1.msra.mxu0 0.0
          %4803 = vmatprep.subr.mxu0 0.0
          %4804 = vmatpush1.msra.mxu0 0.0
          %4805 = vmatprep.subr.mxu0 0.0
          %4806 = vmatpush1.msra.mxu0 0.0
          %4807 = vmatprep.subr.mxu0 0.0
          %4808 = vmatpush1.msra.mxu0 0.0
          %4809 = vmatprep.subr.mxu0 0.0
          %4810 = vmatpush1.msra.mxu0 0.0
          %4811 = vmatprep.subr.mxu0 0.0
          %4812 = vmatpush1.msra.mxu0 0.0
          %4813 = vmatprep.subr.mxu0 0.0
          %4814 = vmatpush1.msra.mxu0 0.0
          %4815 = vmatprep.subr.mxu0 0.0
          %4816 = vmatpush1.msra.mxu0 0.0
          %4817 = vmatprep.subr.mxu0 0.0
          %4818 = vmatpush1.msra.mxu0 0.0
          %4819 = vmatprep.subr.mxu0 0.0
          %4820 = vmatpush1.msra.mxu0 0.0
          %4821 = vmatprep.mubr.f32.mxu0 0.0
          %v4822 = vand.u32 %v4735, 4294901760
          %v4823 = vsub.f32 %v4735, %v4822
          %v4824 = vand.u32 %v4823, 4294901760
          %v4825 = vsub.f32 %v4823, %v4824
          %v4826 = vand.u32 %v4825, 4294901760
          %4827 = vmatmul.mubr.f32.gmra.mrb[0].mxu0 %v4826
          %v4828 = vpop.f32.mrb[0].mxu0
          %v4829 = vadd.f32 0.0, %v4828
          %v4830 = vpop.f32.mrb[0].mxu0
          %v4831 = vadd.f32 0.0, %v4830
          %4832 = vmatprep.mubr.f32.mxu0 0.0
          %v4833 = vand.u32 %v4738, 4294901760
          %v4834 = vsub.f32 %v4738, %v4833
          %v4835 = vand.u32 %v4834, 4294901760
          %v4836 = vsub.f32 %v4834, %v4835
          %v4837 = vand.u32 %v4836, 4294901760
          %4838 = vmatmul.mubr.f32.gmra.mrb[0].mxu0 %v4837
          %v4839 = vpop.f32.mrb[0].mxu0
          %v4840 = vadd.f32 0.0, %v4839
          %v4841 = vpop.f32.mrb[0].mxu0
          %v4842 = vadd.f32 0.0, %v4841
          %4843 = vmatprep.mubr.f32.mxu0 0.0
          %v4844 = vand.u32 %v4741, 4294901760
          %v4845 = vsub.f32 %v4741, %v4844
          %v4846 = vand.u32 %v4845, 4294901760
          %v4847 = vsub.f32 %v4845, %v4846
          %v4848 = vand.u32 %v4847, 4294901760
          %4849 = vmatmul.mubr.f32.gmra.mrb[0].mxu0 %v4848
          %v4850 = vpop.f32.mrb[0].mxu0
          %v4851 = vadd.f32 0.0, %v4850
          %v4852 = vpop.f32.mrb[0].mxu0
          %v4853 = vadd.f32 0.0, %v4852
          %4854 = vmatprep.mubr.f32.mxu0 0.0
          %v4855 = vand.u32 %v4744, 4294901760
          %v4856 = vsub.f32 %v4744, %v4855
          %v4857 = vand.u32 %v4856, 4294901760
          %v4858 = vsub.f32 %v4856, %v4857
          %v4859 = vand.u32 %v4858, 4294901760
          %4860 = vmatmul.mubr.f32.gmra.mrb[0].mxu0 %v4859
          %v4861 = vpop.f32.mrb[0].mxu0
          %v4862 = vadd.f32 0.0, %v4861
          %v4863 = vpop.f32.mrb[0].mxu0
          %v4864 = vadd.f32 0.0, %v4863
          %4865 = vmatprep.mubr.f32.mxu0 0.0
          %v4866 = vand.u32 %v4747, 4294901760
          %v4867 = vsub.f32 %v4747, %v4866
          %v4868 = vand.u32 %v4867, 4294901760
          %v4869 = vsub.f32 %v4867, %v4868
          %v4870 = vand.u32 %v4869, 4294901760
          %4871 = vmatmul.mubr.f32.gmra.mrb[0].mxu0 %v4870
          %v4872 = vpop.f32.mrb[0].mxu0
          %v4873 = vadd.f32 0.0, %v4872
          %v4874 = vpop.f32.mrb[0].mxu0
          %v4875 = vadd.f32 0.0, %v4874
          %4876 = vmatprep.mubr.f32.mxu0 0.0
          %v4877 = vand.u32 %v4750, 4294901760
          %v4878 = vsub.f32 %v4750, %v4877
          %v4879 = vand.u32 %v4878, 4294901760
          %v4880 = vsub.f32 %v4878, %v4879
          %v4881 = vand.u32 %v4880, 4294901760
          %4882 = vmatmul.mubr.f32.gmra.mrb[0].mxu0 %v4881
          %v4883 = vpop.f32.mrb[0].mxu0
          %v4884 = vadd.f32 0.0, %v4883
          %v4885 = vpop.f32.mrb[0].mxu0
          %v4886 = vadd.f32 0.0, %v4885
          %4887 = vmatprep.mubr.f32.mxu0 0.0
          %v4888 = vand.u32 %v4753, 4294901760
          %v4889 = vsub.f32 %v4753, %v4888
          %v4890 = vand.u32 %v4889, 4294901760
          %v4891 = vsub.f32 %v4889, %v4890
          %v4892 = vand.u32 %v4891, 4294901760
          %4893 = vmatmul.mubr.f32.gmra.mrb[0].mxu0 %v4892
          %v4894 = vpop.f32.mrb[0].mxu0
          %v4895 = vadd.f32 0.0, %v4894
          %v4896 = vpop.f32.mrb[0].mxu0
          %v4897 = vadd.f32 0.0, %v4896
          %4898 = vdwg.mxu0
          %v4899 = vand.u32 %v3737, 4294901760
          %v4900 = vsub.f32 %v3737, %v4899
          %v4901 = vand.u32 %v4900, 4294901760
          %v4902 = vsub.f32 %v4900, %v4901
          %v4903 = vand.u32 %v4902, 4294901760
          %4904 = vmatprep.subr.mxu0 %v4903
          %v4905 = vand.u32 %v3735, 4294901760
          %v4906 = vsub.f32 %v3735, %v4905
          %v4907 = vand.u32 %v4906, 4294901760
          %v4908 = vsub.f32 %v4906, %v4907
          %v4909 = vand.u32 %v4908, 4294901760
          %4910 = vmatpush1.msra.mxu0 %v4909
          %4911 = vmatprep.subr.mxu0 0.0
          %4912 = vmatpush1.msra.mxu0 0.0
          %4913 = vmatprep.subr.mxu0 0.0
          %4914 = vmatpush1.msra.mxu0 0.0
          %4915 = vmatprep.subr.mxu0 0.0
          %4916 = vmatpush1.msra.mxu0 0.0
          %4917 = vmatprep.subr.mxu0 0.0
          %4918 = vmatpush1.msra.mxu0 0.0
          %4919 = vmatprep.subr.mxu0 0.0
          %4920 = vmatpush1.msra.mxu0 0.0
          %4921 = vmatprep.subr.mxu0 0.0
          %4922 = vmatpush1.msra.mxu0 0.0
          %4923 = vmatprep.subr.mxu0 0.0
          %4924 = vmatpush1.msra.mxu0 0.0
          %4925 = vmatprep.subr.mxu0 0.0
          %4926 = vmatpush1.msra.mxu0 0.0
          %4927 = vmatprep.subr.mxu0 0.0
          %4928 = vmatpush1.msra.mxu0 0.0
          %4929 = vmatprep.subr.mxu0 0.0
          %4930 = vmatpush1.msra.mxu0 0.0
          %4931 = vmatprep.subr.mxu0 0.0
          %4932 = vmatpush1.msra.mxu0 0.0
          %4933 = vmatprep.subr.mxu0 0.0
          %4934 = vmatpush1.msra.mxu0 0.0
          %4935 = vmatprep.subr.mxu0 0.0
          %4936 = vmatpush1.msra.mxu0 0.0
          %4937 = vmatprep.subr.mxu0 0.0
          %4938 = vmatpush1.msra.mxu0 0.0
          %4939 = vmatprep.subr.mxu0 0.0
          %4940 = vmatpush1.msra.mxu0 0.0
          %4941 = vmatprep.subr.mxu0 0.0
          %4942 = vmatpush1.msra.mxu0 0.0
          %4943 = vmatprep.subr.mxu0 0.0
          %4944 = vmatpush1.msra.mxu0 0.0
          %4945 = vmatprep.subr.mxu0 0.0
          %4946 = vmatpush1.msra.mxu0 0.0
          %4947 = vmatprep.subr.mxu0 0.0
          %4948 = vmatpush1.msra.mxu0 0.0
          %4949 = vmatprep.subr.mxu0 0.0
          %4950 = vmatpush1.msra.mxu0 0.0
          %4951 = vmatprep.subr.mxu0 0.0
          %4952 = vmatpush1.msra.mxu0 0.0
          %4953 = vmatprep.subr.mxu0 0.0
          %4954 = vmatpush1.msra.mxu0 0.0
          %4955 = vmatprep.subr.mxu0 0.0
          %4956 = vmatpush1.msra.mxu0 0.0
          %4957 = vmatprep.subr.mxu0 0.0
          %4958 = vmatpush1.msra.mxu0 0.0
          %4959 = vmatprep.subr.mxu0 0.0
          %4960 = vmatpush1.msra.mxu0 0.0
          %4961 = vmatprep.subr.mxu0 0.0
          %4962 = vmatpush1.msra.mxu0 0.0
          %4963 = vmatprep.subr.mxu0 0.0
          %4964 = vmatpush1.msra.mxu0 0.0
          %4965 = vmatprep.subr.mxu0 0.0
          %4966 = vmatpush1.msra.mxu0 0.0
          %4967 = vmatprep.subr.mxu0 0.0
          %4968 = vmatpush1.msra.mxu0 0.0
          %4969 = vmatprep.subr.mxu0 0.0
          %4970 = vmatpush1.msra.mxu0 0.0
          %4971 = vmatprep.subr.mxu0 0.0
          %4972 = vmatpush1.msra.mxu0 0.0
          %4973 = vmatprep.mubr.f32.mxu0 0.0
          %v4974 = vand.u32 %v4735, 4294901760
          %4975 = vmatmul.mubr.f32.gmra.mrb[0].mxu0 %v4974
          %v4976 = vpop.f32.mrb[0].mxu0
          %v4977 = vadd.f32 %v4829, %v4976
          %v4978 = vpop.f32.mrb[0].mxu0
          %v4979 = vadd.f32 %v4831, %v4978
          %4980 = vmatprep.mubr.f32.mxu0 0.0
          %v4981 = vand.u32 %v4738, 4294901760
          %4982 = vmatmul.mubr.f32.gmra.mrb[0].mxu0 %v4981
          %v4983 = vpop.f32.mrb[0].mxu0
          %v4984 = vadd.f32 %v4840, %v4983
          %v4985 = vpop.f32.mrb[0].mxu0
          %v4986 = vadd.f32 %v4842, %v4985
          %4987 = vmatprep.mubr.f32.mxu0 0.0
          %v4988 = vand.u32 %v4741, 4294901760
          %4989 = vmatmul.mubr.f32.gmra.mrb[0].mxu0 %v4988
          %v4990 = vpop.f32.mrb[0].mxu0
          %v4991 = vadd.f32 %v4851, %v4990
          %v4992 = vpop.f32.mrb[0].mxu0
          %v4993 = vadd.f32 %v4853, %v4992
          %4994 = vmatprep.mubr.f32.mxu0 0.0
          %v4995 = vand.u32 %v4744, 4294901760
          %4996 = vmatmul.mubr.f32.gmra.mrb[0].mxu0 %v4995
          %v4997 = vpop.f32.mrb[0].mxu0
          %v4998 = vadd.f32 %v4862, %v4997
          %v4999 = vpop.f32.mrb[0].mxu0
          %v5000 = vadd.f32 %v4864, %v4999
          %5001 = vmatprep.mubr.f32.mxu0 0.0
          %v5002 = vand.u32 %v4747, 4294901760
          %5003 = vmatmul.mubr.f32.gmra.mrb[0].mxu0 %v5002
          %v5004 = vpop.f32.mrb[0].mxu0
          %v5005 = vadd.f32 %v4873, %v5004
          %v5006 = vpop.f32.mrb[0].mxu0
          %v5007 = vadd.f32 %v4875, %v5006
          %5008 = vmatprep.mubr.f32.mxu0 0.0
          %v5009 = vand.u32 %v4750, 4294901760
          %5010 = vmatmul.mubr.f32.gmra.mrb[0].mxu0 %v5009
          %v5011 = vpop.f32.mrb[0].mxu0
          %v5012 = vadd.f32 %v4884, %v5011
          %v5013 = vpop.f32.mrb[0].mxu0
          %v5014 = vadd.f32 %v4886, %v5013
          %5015 = vmatprep.mubr.f32.mxu0 0.0
          %v5016 = vand.u32 %v4753, 4294901760
          %5017 = vmatmul.mubr.f32.gmra.mrb[0].mxu0 %v5016
          %v5018 = vpop.f32.mrb[0].mxu0
          %v5019 = vadd.f32 %v4895, %v5018
          %v5020 = vpop.f32.mrb[0].mxu0
          %v5021 = vadd.f32 %v4897, %v5020
          %5022 = vdwg.mxu0
          %v5023 = vand.u32 %v3737, 4294901760
          %v5024 = vsub.f32 %v3737, %v5023
          %5025 = vmatprep.subr.mxu0 %v5024
          %v5026 = vand.u32 %v3735, 4294901760
          %v5027 = vsub.f32 %v3735, %v5026
          %5028 = vmatpush1.msra.mxu0 %v5027
          %5029 = vmatprep.subr.mxu0 0.0
          %5030 = vmatpush1.msra.mxu0 0.0
          %5031 = vmatprep.subr.mxu0 0.0
          %5032 = vmatpush1.msra.mxu0 0.0
          %5033 = vmatprep.subr.mxu0 0.0
          %5034 = vmatpush1.msra.mxu0 0.0
          %5035 = vmatprep.subr.mxu0 0.0
          %5036 = vmatpush1.msra.mxu0 0.0
          %5037 = vmatprep.subr.mxu0 0.0
          %5038 = vmatpush1.msra.mxu0 0.0
          %5039 = vmatprep.subr.mxu0 0.0
          %5040 = vmatpush1.msra.mxu0 0.0
          %5041 = vmatprep.subr.mxu0 0.0
          %5042 = vmatpush1.msra.mxu0 0.0
          %5043 = vmatprep.subr.mxu0 0.0
          %5044 = vmatpush1.msra.mxu0 0.0
          %5045 = vmatprep.subr.mxu0 0.0
          %5046 = vmatpush1.msra.mxu0 0.0
          %5047 = vmatprep.subr.mxu0 0.0
          %5048 = vmatpush1.msra.mxu0 0.0
          %5049 = vmatprep.subr.mxu0 0.0
          %5050 = vmatpush1.msra.mxu0 0.0
          %5051 = vmatprep.subr.mxu0 0.0
          %5052 = vmatpush1.msra.mxu0 0.0
          %5053 = vmatprep.subr.mxu0 0.0
          %5054 = vmatpush1.msra.mxu0 0.0
          %5055 = vmatprep.subr.mxu0 0.0
          %5056 = vmatpush1.msra.mxu0 0.0
          %5057 = vmatprep.subr.mxu0 0.0
          %5058 = vmatpush1.msra.mxu0 0.0
          %5059 = vmatprep.subr.mxu0 0.0
          %5060 = vmatpush1.msra.mxu0 0.0
          %5061 = vmatprep.subr.mxu0 0.0
          %5062 = vmatpush1.msra.mxu0 0.0
          %5063 = vmatprep.subr.mxu0 0.0
          %5064 = vmatpush1.msra.mxu0 0.0
          %5065 = vmatprep.subr.mxu0 0.0
          %5066 = vmatpush1.msra.mxu0 0.0
          %5067 = vmatprep.subr.mxu0 0.0
          %5068 = vmatpush1.msra.mxu0 0.0
          %5069 = vmatprep.subr.mxu0 0.0
          %5070 = vmatpush1.msra.mxu0 0.0
          %5071 = vmatprep.subr.mxu0 0.0
          %5072 = vmatpush1.msra.mxu0 0.0
          %5073 = vmatprep.subr.mxu0 0.0
          %5074 = vmatpush1.msra.mxu0 0.0
          %5075 = vmatprep.subr.mxu0 0.0
          %5076 = vmatpush1.msra.mxu0 0.0
          %5077 = vmatprep.subr.mxu0 0.0
          %5078 = vmatpush1.msra.mxu0 0.0
          %5079 = vmatprep.subr.mxu0 0.0
          %5080 = vmatpush1.msra.mxu0 0.0
          %5081 = vmatprep.subr.mxu0 0.0
          %5082 = vmatpush1.msra.mxu0 0.0
          %5083 = vmatprep.subr.mxu0 0.0
          %5084 = vmatpush1.msra.mxu0 0.0
          %5085 = vmatprep.subr.mxu0 0.0
          %5086 = vmatpush1.msra.mxu0 0.0
          %5087 = vmatprep.subr.mxu0 0.0
          %5088 = vmatpush1.msra.mxu0 0.0
          %5089 = vmatprep.subr.mxu0 0.0
          %5090 = vmatpush1.msra.mxu0 0.0
          %5091 = vmatprep.mubr.f32.mxu0 0.0
          %v5092 = vand.u32 %v4735, 4294901760
          %v5093 = vsub.f32 %v4735, %v5092
          %5094 = vmatmul.mubr.f32.gmra.mrb[0].mxu0 %v5093
          %v5095 = vpop.f32.mrb[0].mxu0
          %v5096 = vadd.f32 %v4977, %v5095
          %v5097 = vpop.f32.mrb[0].mxu0
          %v5098 = vadd.f32 %v4979, %v5097
          %5099 = vmatprep.mubr.f32.mxu0 0.0
          %v5100 = vand.u32 %v4738, 4294901760
          %v5101 = vsub.f32 %v4738, %v5100
          %5102 = vmatmul.mubr.f32.gmra.mrb[0].mxu0 %v5101
          %v5103 = vpop.f32.mrb[0].mxu0
          %v5104 = vadd.f32 %v4984, %v5103
          %v5105 = vpop.f32.mrb[0].mxu0
          %v5106 = vadd.f32 %v4986, %v5105
          %5107 = vmatprep.mubr.f32.mxu0 0.0
          %v5108 = vand.u32 %v4741, 4294901760
          %v5109 = vsub.f32 %v4741, %v5108
          %5110 = vmatmul.mubr.f32.gmra.mrb[0].mxu0 %v5109
          %v5111 = vpop.f32.mrb[0].mxu0
          %v5112 = vadd.f32 %v4991, %v5111
          %v5113 = vpop.f32.mrb[0].mxu0
          %v5114 = vadd.f32 %v4993, %v5113
          %5115 = vmatprep.mubr.f32.mxu0 0.0
          %v5116 = vand.u32 %v4744, 4294901760
          %v5117 = vsub.f32 %v4744, %v5116
          %5118 = vmatmul.mubr.f32.gmra.mrb[0].mxu0 %v5117
          %v5119 = vpop.f32.mrb[0].mxu0
          %v5120 = vadd.f32 %v4998, %v5119
          %v5121 = vpop.f32.mrb[0].mxu0
          %v5122 = vadd.f32 %v5000, %v5121
          %5123 = vmatprep.mubr.f32.mxu0 0.0
          %v5124 = vand.u32 %v4747, 4294901760
          %v5125 = vsub.f32 %v4747, %v5124
          %5126 = vmatmul.mubr.f32.gmra.mrb[0].mxu0 %v5125
          %v5127 = vpop.f32.mrb[0].mxu0
          %v5128 = vadd.f32 %v5005, %v5127
          %v5129 = vpop.f32.mrb[0].mxu0
          %v5130 = vadd.f32 %v5007, %v5129
          %5131 = vmatprep.mubr.f32.mxu0 0.0
          %v5132 = vand.u32 %v4750, 4294901760
          %v5133 = vsub.f32 %v4750, %v5132
          %5134 = vmatmul.mubr.f32.gmra.mrb[0].mxu0 %v5133
          %v5135 = vpop.f32.mrb[0].mxu0
          %v5136 = vadd.f32 %v5012, %v5135
          %v5137 = vpop.f32.mrb[0].mxu0
          %v5138 = vadd.f32 %v5014, %v5137
          %5139 = vmatprep.mubr.f32.mxu0 0.0
          %v5140 = vand.u32 %v4753, 4294901760
          %v5141 = vsub.f32 %v4753, %v5140
          %5142 = vmatmul.mubr.f32.gmra.mrb[0].mxu0 %v5141
          %v5143 = vpop.f32.mrb[0].mxu0
          %v5144 = vadd.f32 %v5019, %v5143
          %v5145 = vpop.f32.mrb[0].mxu0
          %v5146 = vadd.f32 %v5021, %v5145
          %5147 = vdwg.mxu0
          %v5148 = vand.u32 %v3737, 4294901760
          %5149 = vmatprep.subr.mxu0 %v5148
          %v5150 = vand.u32 %v3735, 4294901760
          %5151 = vmatpush1.msra.mxu0 %v5150
          %5152 = vmatprep.subr.mxu0 0.0
          %5153 = vmatpush1.msra.mxu0 0.0
          %5154 = vmatprep.subr.mxu0 0.0
          %5155 = vmatpush1.msra.mxu0 0.0
          %5156 = vmatprep.subr.mxu0 0.0
          %5157 = vmatpush1.msra.mxu0 0.0
          %5158 = vmatprep.subr.mxu0 0.0
          %5159 = vmatpush1.msra.mxu0 0.0
          %5160 = vmatprep.subr.mxu0 0.0
          %5161 = vmatpush1.msra.mxu0 0.0
          %5162 = vmatprep.subr.mxu0 0.0
          %5163 = vmatpush1.msra.mxu0 0.0
          %5164 = vmatprep.subr.mxu0 0.0
          %5165 = vmatpush1.msra.mxu0 0.0
          %5166 = vmatprep.subr.mxu0 0.0
          %5167 = vmatpush1.msra.mxu0 0.0
          %5168 = vmatprep.subr.mxu0 0.0
          %5169 = vmatpush1.msra.mxu0 0.0
          %5170 = vmatprep.subr.mxu0 0.0
          %5171 = vmatpush1.msra.mxu0 0.0
          %5172 = vmatprep.subr.mxu0 0.0
          %5173 = vmatpush1.msra.mxu0 0.0
          %5174 = vmatprep.subr.mxu0 0.0
          %5175 = vmatpush1.msra.mxu0 0.0
          %5176 = vmatprep.subr.mxu0 0.0
          %5177 = vmatpush1.msra.mxu0 0.0
          %5178 = vmatprep.subr.mxu0 0.0
          %5179 = vmatpush1.msra.mxu0 0.0
          %5180 = vmatprep.subr.mxu0 0.0
          %5181 = vmatpush1.msra.mxu0 0.0
          %5182 = vmatprep.subr.mxu0 0.0
          %5183 = vmatpush1.msra.mxu0 0.0
          %5184 = vmatprep.subr.mxu0 0.0
          %5185 = vmatpush1.msra.mxu0 0.0
          %5186 = vmatprep.subr.mxu0 0.0
          %5187 = vmatpush1.msra.mxu0 0.0
          %5188 = vmatprep.subr.mxu0 0.0
          %5189 = vmatpush1.msra.mxu0 0.0
          %5190 = vmatprep.subr.mxu0 0.0
          %5191 = vmatpush1.msra.mxu0 0.0
          %5192 = vmatprep.subr.mxu0 0.0
          %5193 = vmatpush1.msra.mxu0 0.0
          %5194 = vmatprep.subr.mxu0 0.0
          %5195 = vmatpush1.msra.mxu0 0.0
          %5196 = vmatprep.subr.mxu0 0.0
          %5197 = vmatpush1.msra.mxu0 0.0
          %5198 = vmatprep.subr.mxu0 0.0
          %5199 = vmatpush1.msra.mxu0 0.0
          %5200 = vmatprep.subr.mxu0 0.0
          %5201 = vmatpush1.msra.mxu0 0.0
          %5202 = vmatprep.subr.mxu0 0.0
          %5203 = vmatpush1.msra.mxu0 0.0
          %5204 = vmatprep.subr.mxu0 0.0
          %5205 = vmatpush1.msra.mxu0 0.0
          %5206 = vmatprep.subr.mxu0 0.0
          %5207 = vmatpush1.msra.mxu0 0.0
          %5208 = vmatprep.subr.mxu0 0.0
          %5209 = vmatpush1.msra.mxu0 0.0
          %5210 = vmatprep.subr.mxu0 0.0
          %5211 = vmatpush1.msra.mxu0 0.0
          %5212 = vmatprep.subr.mxu0 0.0
          %5213 = vmatpush1.msra.mxu0 0.0
          %5214 = vmatprep.mubr.f32.mxu0 0.0
          %v5215 = vand.u32 %v4735, 4294901760
          %v5216 = vsub.f32 %v4735, %v5215
          %v5217 = vand.u32 %v5216, 4294901760
          %5218 = vmatmul.mubr.f32.gmra.mrb[0].mxu0 %v5217
          %v5219 = vpop.f32.mrb[0].mxu0
          %v5220 = vadd.f32 %v5096, %v5219
          %v5221 = vpop.f32.mrb[0].mxu0
          %v5222 = vadd.f32 %v5098, %v5221
          %5223 = vmatprep.mubr.f32.mxu0 0.0
          %v5224 = vand.u32 %v4738, 4294901760
          %v5225 = vsub.f32 %v4738, %v5224
          %v5226 = vand.u32 %v5225, 4294901760
          %5227 = vmatmul.mubr.f32.gmra.mrb[0].mxu0 %v5226
          %v5228 = vpop.f32.mrb[0].mxu0
          %v5229 = vadd.f32 %v5104, %v5228
          %v5230 = vpop.f32.mrb[0].mxu0
          %v5231 = vadd.f32 %v5106, %v5230
          %5232 = vmatprep.mubr.f32.mxu0 0.0
          %v5233 = vand.u32 %v4741, 4294901760
          %v5234 = vsub.f32 %v4741, %v5233
          %v5235 = vand.u32 %v5234, 4294901760
          %5236 = vmatmul.mubr.f32.gmra.mrb[0].mxu0 %v5235
          %v5237 = vpop.f32.mrb[0].mxu0
          %v5238 = vadd.f32 %v5112, %v5237
          %v5239 = vpop.f32.mrb[0].mxu0
          %v5240 = vadd.f32 %v5114, %v5239
          %5241 = vmatprep.mubr.f32.mxu0 0.0
          %v5242 = vand.u32 %v4744, 4294901760
          %v5243 = vsub.f32 %v4744, %v5242
          %v5244 = vand.u32 %v5243, 4294901760
          %5245 = vmatmul.mubr.f32.gmra.mrb[0].mxu0 %v5244
          %v5246 = vpop.f32.mrb[0].mxu0
          %v5247 = vadd.f32 %v5120, %v5246
          %v5248 = vpop.f32.mrb[0].mxu0
          %v5249 = vadd.f32 %v5122, %v5248
          %5250 = vmatprep.mubr.f32.mxu0 0.0
          %v5251 = vand.u32 %v4747, 4294901760
          %v5252 = vsub.f32 %v4747, %v5251
          %v5253 = vand.u32 %v5252, 4294901760
          %5254 = vmatmul.mubr.f32.gmra.mrb[0].mxu0 %v5253
          %v5255 = vpop.f32.mrb[0].mxu0
          %v5256 = vadd.f32 %v5128, %v5255
          %v5257 = vpop.f32.mrb[0].mxu0
          %v5258 = vadd.f32 %v5130, %v5257
          %5259 = vmatprep.mubr.f32.mxu0 0.0
          %v5260 = vand.u32 %v4750, 4294901760
          %v5261 = vsub.f32 %v4750, %v5260
          %v5262 = vand.u32 %v5261, 4294901760
          %5263 = vmatmul.mubr.f32.gmra.mrb[0].mxu0 %v5262
          %v5264 = vpop.f32.mrb[0].mxu0
          %v5265 = vadd.f32 %v5136, %v5264
          %v5266 = vpop.f32.mrb[0].mxu0
          %v5267 = vadd.f32 %v5138, %v5266
          %5268 = vmatprep.mubr.f32.mxu0 0.0
          %v5269 = vand.u32 %v4753, 4294901760
          %v5270 = vsub.f32 %v4753, %v5269
          %v5271 = vand.u32 %v5270, 4294901760
          %5272 = vmatmul.mubr.f32.gmra.mrb[0].mxu0 %v5271
          %v5273 = vpop.f32.mrb[0].mxu0
          %v5274 = vadd.f32 %v5144, %v5273
          %v5275 = vpop.f32.mrb[0].mxu0
          %v5276 = vadd.f32 %v5146, %v5275
          %5277 = vdwg.mxu0
          %v5278 = vand.u32 %v3737, 4294901760
          %v5279 = vsub.f32 %v3737, %v5278
          %v5280 = vand.u32 %v5279, 4294901760
          %5281 = vmatprep.subr.mxu0 %v5280
          %v5282 = vand.u32 %v3735, 4294901760
          %v5283 = vsub.f32 %v3735, %v5282
          %v5284 = vand.u32 %v5283, 4294901760
          %5285 = vmatpush1.msra.mxu0 %v5284
          %5286 = vmatprep.subr.mxu0 0.0
          %5287 = vmatpush1.msra.mxu0 0.0
          %5288 = vmatprep.subr.mxu0 0.0
          %5289 = vmatpush1.msra.mxu0 0.0
          %5290 = vmatprep.subr.mxu0 0.0
          %5291 = vmatpush1.msra.mxu0 0.0
          %5292 = vmatprep.subr.mxu0 0.0
          %5293 = vmatpush1.msra.mxu0 0.0
          %5294 = vmatprep.subr.mxu0 0.0
          %5295 = vmatpush1.msra.mxu0 0.0
          %5296 = vmatprep.subr.mxu0 0.0
          %5297 = vmatpush1.msra.mxu0 0.0
          %5298 = vmatprep.subr.mxu0 0.0
          %5299 = vmatpush1.msra.mxu0 0.0
          %5300 = vmatprep.subr.mxu0 0.0
          %5301 = vmatpush1.msra.mxu0 0.0
          %5302 = vmatprep.subr.mxu0 0.0
          %5303 = vmatpush1.msra.mxu0 0.0
          %5304 = vmatprep.subr.mxu0 0.0
          %5305 = vmatpush1.msra.mxu0 0.0
          %5306 = vmatprep.subr.mxu0 0.0
          %5307 = vmatpush1.msra.mxu0 0.0
          %5308 = vmatprep.subr.mxu0 0.0
          %5309 = vmatpush1.msra.mxu0 0.0
          %5310 = vmatprep.subr.mxu0 0.0
          %5311 = vmatpush1.msra.mxu0 0.0
          %5312 = vmatprep.subr.mxu0 0.0
          %5313 = vmatpush1.msra.mxu0 0.0
          %5314 = vmatprep.subr.mxu0 0.0
          %5315 = vmatpush1.msra.mxu0 0.0
          %5316 = vmatprep.subr.mxu0 0.0
          %5317 = vmatpush1.msra.mxu0 0.0
          %5318 = vmatprep.subr.mxu0 0.0
          %5319 = vmatpush1.msra.mxu0 0.0
          %5320 = vmatprep.subr.mxu0 0.0
          %5321 = vmatpush1.msra.mxu0 0.0
          %5322 = vmatprep.subr.mxu0 0.0
          %5323 = vmatpush1.msra.mxu0 0.0
          %5324 = vmatprep.subr.mxu0 0.0
          %5325 = vmatpush1.msra.mxu0 0.0
          %5326 = vmatprep.subr.mxu0 0.0
          %5327 = vmatpush1.msra.mxu0 0.0
          %5328 = vmatprep.subr.mxu0 0.0
          %5329 = vmatpush1.msra.mxu0 0.0
          %5330 = vmatprep.subr.mxu0 0.0
          %5331 = vmatpush1.msra.mxu0 0.0
          %5332 = vmatprep.subr.mxu0 0.0
          %5333 = vmatpush1.msra.mxu0 0.0
          %5334 = vmatprep.subr.mxu0 0.0
          %5335 = vmatpush1.msra.mxu0 0.0
          %5336 = vmatprep.subr.mxu0 0.0
          %5337 = vmatpush1.msra.mxu0 0.0
          %5338 = vmatprep.subr.mxu0 0.0
          %5339 = vmatpush1.msra.mxu0 0.0
          %5340 = vmatprep.subr.mxu0 0.0
          %5341 = vmatpush1.msra.mxu0 0.0
          %5342 = vmatprep.subr.mxu0 0.0
          %5343 = vmatpush1.msra.mxu0 0.0
          %5344 = vmatprep.subr.mxu0 0.0
          %5345 = vmatpush1.msra.mxu0 0.0
          %5346 = vmatprep.subr.mxu0 0.0
          %5347 = vmatpush1.msra.mxu0 0.0
          %5348 = vmatprep.mubr.f32.mxu0 0.0
          %v5349 = vand.u32 %v4735, 4294901760
          %5350 = vmatmul.mubr.f32.gmra.mrb[0].mxu0 %v5349
          %v5351 = vpop.f32.mrb[0].mxu0
          %v5352 = vadd.f32 %v5220, %v5351
          %v5353 = vpop.f32.mrb[0].mxu0
          %v5354 = vadd.f32 %v5222, %v5353
          %5355 = vmatprep.mubr.f32.mxu0 0.0
          %v5356 = vand.u32 %v4738, 4294901760
          %5357 = vmatmul.mubr.f32.gmra.mrb[0].mxu0 %v5356
          %v5358 = vpop.f32.mrb[0].mxu0
          %v5359 = vadd.f32 %v5229, %v5358
          %v5360 = vpop.f32.mrb[0].mxu0
          %v5361 = vadd.f32 %v5231, %v5360
          %5362 = vmatprep.mubr.f32.mxu0 0.0
          %v5363 = vand.u32 %v4741, 4294901760
          %5364 = vmatmul.mubr.f32.gmra.mrb[0].mxu0 %v5363
          %v5365 = vpop.f32.mrb[0].mxu0
          %v5366 = vadd.f32 %v5238, %v5365
          %v5367 = vpop.f32.mrb[0].mxu0
          %v5368 = vadd.f32 %v5240, %v5367
          %5369 = vmatprep.mubr.f32.mxu0 0.0
          %v5370 = vand.u32 %v4744, 4294901760
          %5371 = vmatmul.mubr.f32.gmra.mrb[0].mxu0 %v5370
          %v5372 = vpop.f32.mrb[0].mxu0
          %v5373 = vadd.f32 %v5247, %v5372
          %v5374 = vpop.f32.mrb[0].mxu0
          %v5375 = vadd.f32 %v5249, %v5374
          %5376 = vmatprep.mubr.f32.mxu0 0.0
          %v5377 = vand.u32 %v4747, 4294901760
          %5378 = vmatmul.mubr.f32.gmra.mrb[0].mxu0 %v5377
          %v5379 = vpop.f32.mrb[0].mxu0
          %v5380 = vadd.f32 %v5256, %v5379
          %v5381 = vpop.f32.mrb[0].mxu0
          %v5382 = vadd.f32 %v5258, %v5381
          %5383 = vmatprep.mubr.f32.mxu0 0.0
          %v5384 = vand.u32 %v4750, 4294901760
          %5385 = vmatmul.mubr.f32.gmra.mrb[0].mxu0 %v5384
          %v5386 = vpop.f32.mrb[0].mxu0
          %v5387 = vadd.f32 %v5265, %v5386
          %v5388 = vpop.f32.mrb[0].mxu0
          %v5389 = vadd.f32 %v5267, %v5388
          %5390 = vmatprep.mubr.f32.mxu0 0.0
          %v5391 = vand.u32 %v4753, 4294901760
          %5392 = vmatmul.mubr.f32.gmra.mrb[0].mxu0 %v5391
          %v5393 = vpop.f32.mrb[0].mxu0
          %v5394 = vadd.f32 %v5274, %v5393
          %v5395 = vpop.f32.mrb[0].mxu0
          %v5396 = vadd.f32 %v5276, %v5395
          %5397 = vdwg.mxu0
          %v5398 = vand.u32 %v3737, 4294901760
          %5399 = vmatprep.subr.mxu0 %v5398
          %v5400 = vand.u32 %v3735, 4294901760
          %5401 = vmatpush1.msra.mxu0 %v5400
          %5402 = vmatprep.subr.mxu0 0.0
          %5403 = vmatpush1.msra.mxu0 0.0
          %5404 = vmatprep.subr.mxu0 0.0
          %5405 = vmatpush1.msra.mxu0 0.0
          %5406 = vmatprep.subr.mxu0 0.0
          %5407 = vmatpush1.msra.mxu0 0.0
          %5408 = vmatprep.subr.mxu0 0.0
          %5409 = vmatpush1.msra.mxu0 0.0
          %5410 = vmatprep.subr.mxu0 0.0
          %5411 = vmatpush1.msra.mxu0 0.0
          %5412 = vmatprep.subr.mxu0 0.0
          %5413 = vmatpush1.msra.mxu0 0.0
          %5414 = vmatprep.subr.mxu0 0.0
          %5415 = vmatpush1.msra.mxu0 0.0
          %5416 = vmatprep.subr.mxu0 0.0
          %5417 = vmatpush1.msra.mxu0 0.0
          %5418 = vmatprep.subr.mxu0 0.0
          %5419 = vmatpush1.msra.mxu0 0.0
          %5420 = vmatprep.subr.mxu0 0.0
          %5421 = vmatpush1.msra.mxu0 0.0
          %5422 = vmatprep.subr.mxu0 0.0
          %5423 = vmatpush1.msra.mxu0 0.0
          %5424 = vmatprep.subr.mxu0 0.0
          %5425 = vmatpush1.msra.mxu0 0.0
          %5426 = vmatprep.subr.mxu0 0.0
          %5427 = vmatpush1.msra.mxu0 0.0
          %5428 = vmatprep.subr.mxu0 0.0
          %5429 = vmatpush1.msra.mxu0 0.0
          %5430 = vmatprep.subr.mxu0 0.0
          %5431 = vmatpush1.msra.mxu0 0.0
          %5432 = vmatprep.subr.mxu0 0.0
          %5433 = vmatpush1.msra.mxu0 0.0
          %5434 = vmatprep.subr.mxu0 0.0
          %5435 = vmatpush1.msra.mxu0 0.0
          %5436 = vmatprep.subr.mxu0 0.0
          %5437 = vmatpush1.msra.mxu0 0.0
          %5438 = vmatprep.subr.mxu0 0.0
          %5439 = vmatpush1.msra.mxu0 0.0
          %5440 = vmatprep.subr.mxu0 0.0
          %5441 = vmatpush1.msra.mxu0 0.0
          %5442 = vmatprep.subr.mxu0 0.0
          %5443 = vmatpush1.msra.mxu0 0.0
          %5444 = vmatprep.subr.mxu0 0.0
          %5445 = vmatpush1.msra.mxu0 0.0
          %5446 = vmatprep.subr.mxu0 0.0
          %5447 = vmatpush1.msra.mxu0 0.0
          %5448 = vmatprep.subr.mxu0 0.0
          %5449 = vmatpush1.msra.mxu0 0.0
          %5450 = vmatprep.subr.mxu0 0.0
          %5451 = vmatpush1.msra.mxu0 0.0
          %5452 = vmatprep.subr.mxu0 0.0
          %5453 = vmatpush1.msra.mxu0 0.0
          %5454 = vmatprep.subr.mxu0 0.0
          %5455 = vmatpush1.msra.mxu0 0.0
          %5456 = vmatprep.subr.mxu0 0.0
          %5457 = vmatpush1.msra.mxu0 0.0
          %5458 = vmatprep.subr.mxu0 0.0
          %5459 = vmatpush1.msra.mxu0 0.0
          %5460 = vmatprep.subr.mxu0 0.0
          %5461 = vmatpush1.msra.mxu0 0.0
          %5462 = vmatprep.subr.mxu0 0.0
          %5463 = vmatpush1.msra.mxu0 0.0
          %5464 = vmatprep.mubr.f32.mxu0 0.0
          %v5465 = vand.u32 %v4735, 4294901760
          %5466 = vmatmul.mubr.f32.gmra.mrb[0].mxu0 %v5465
          %v5467 = vpop.f32.mrb[0].mxu0
          %v5468 = vadd.f32 %v5352, %v5467
          %v5469 = vpop.f32.mrb[0].mxu0
          %v5470 = vadd.f32 %v5354, %v5469
          %5471 = vmatprep.mubr.f32.mxu0 0.0
          %v5472 = vand.u32 %v4738, 4294901760
          %5473 = vmatmul.mubr.f32.gmra.mrb[0].mxu0 %v5472
          %v5474 = vpop.f32.mrb[0].mxu0
          %v5475 = vadd.f32 %v5359, %v5474
          %v5476 = vpop.f32.mrb[0].mxu0
          %v5477 = vadd.f32 %v5361, %v5476
          %5478 = vmatprep.mubr.f32.mxu0 0.0
          %v5479 = vand.u32 %v4741, 4294901760
          %5480 = vmatmul.mubr.f32.gmra.mrb[0].mxu0 %v5479
          %v5481 = vpop.f32.mrb[0].mxu0
          %v5482 = vadd.f32 %v5366, %v5481
          %v5483 = vpop.f32.mrb[0].mxu0
          %v5484 = vadd.f32 %v5368, %v5483
          %5485 = vmatprep.mubr.f32.mxu0 0.0
          %v5486 = vand.u32 %v4744, 4294901760
          %5487 = vmatmul.mubr.f32.gmra.mrb[0].mxu0 %v5486
          %v5488 = vpop.f32.mrb[0].mxu0
          %v5489 = vadd.f32 %v5373, %v5488
          %v5490 = vpop.f32.mrb[0].mxu0
          %v5491 = vadd.f32 %v5375, %v5490
          %5492 = vmatprep.mubr.f32.mxu0 0.0
          %v5493 = vand.u32 %v4747, 4294901760
          %5494 = vmatmul.mubr.f32.gmra.mrb[0].mxu0 %v5493
          %v5495 = vpop.f32.mrb[0].mxu0
          %v5496 = vadd.f32 %v5380, %v5495
          %v5497 = vpop.f32.mrb[0].mxu0
          %v5498 = vadd.f32 %v5382, %v5497
          %5499 = vmatprep.mubr.f32.mxu0 0.0
          %v5500 = vand.u32 %v4750, 4294901760
          %5501 = vmatmul.mubr.f32.gmra.mrb[0].mxu0 %v5500
          %v5502 = vpop.f32.mrb[0].mxu0
          %v5503 = vadd.f32 %v5387, %v5502
          %v5504 = vpop.f32.mrb[0].mxu0
          %v5505 = vadd.f32 %v5389, %v5504
          %5506 = vmatprep.mubr.f32.mxu0 0.0
          %v5507 = vand.u32 %v4753, 4294901760
          %5508 = vmatmul.mubr.f32.gmra.mrb[0].mxu0 %v5507
          %v5509 = vpop.f32.mrb[0].mxu0
          %v5510 = vadd.f32 %v5394, %v5509
          %v5511 = vpop.f32.mrb[0].mxu0
          %v5512 = vadd.f32 %v5396, %v5511
          %5513 = vdwg.mxu0
          %v5515 = vsel %vm646, %v628, 0
          %v5518 = vsel %vm646, %v629, 0
          %v5521 = vsel %vm646, %v630, 0
          %v5524 = vsel %vm646, %v631, 0
          %v5527 = vsel %vm646, %v632, 0
          %v5530 = vsel %vm646, %v633, 0
          %v5533 = vsel %vm646, %v634, 0
          %5535 = vmatprep.subr.mxu0 0.0
          %v5536 = vand.u32 %v2882, 4294901760
          %5537 = vmatpush1.msra.mxu0 %v5536
          %5538 = vmatprep.subr.mxu0 0.0
          %5539 = vmatpush1.msra.mxu0 0.0
          %5540 = vmatprep.subr.mxu0 0.0
          %5541 = vmatpush1.msra.mxu0 0.0
          %5542 = vmatprep.subr.mxu0 0.0
          %5543 = vmatpush1.msra.mxu0 0.0
          %5544 = vmatprep.subr.mxu0 0.0
          %5545 = vmatpush1.msra.mxu0 0.0
          %5546 = vmatprep.subr.mxu0 0.0
          %5547 = vmatpush1.msra.mxu0 0.0
          %5548 = vmatprep.subr.mxu0 0.0
          %5549 = vmatpush1.msra.mxu0 0.0
          %5550 = vmatprep.subr.mxu0 0.0
          %5551 = vmatpush1.msra.mxu0 0.0
          %5552 = vmatprep.subr.mxu0 0.0
          %5553 = vmatpush1.msra.mxu0 0.0
          %5554 = vmatprep.subr.mxu0 0.0
          %5555 = vmatpush1.msra.mxu0 0.0
          %5556 = vmatprep.subr.mxu0 0.0
          %5557 = vmatpush1.msra.mxu0 0.0
          %5558 = vmatprep.subr.mxu0 0.0
          %5559 = vmatpush1.msra.mxu0 0.0
          %5560 = vmatprep.subr.mxu0 0.0
          %5561 = vmatpush1.msra.mxu0 0.0
          %5562 = vmatprep.subr.mxu0 0.0
          %5563 = vmatpush1.msra.mxu0 0.0
          %5564 = vmatprep.subr.mxu0 0.0
          %5565 = vmatpush1.msra.mxu0 0.0
          %5566 = vmatprep.subr.mxu0 0.0
          %5567 = vmatpush1.msra.mxu0 0.0
          %5568 = vmatprep.subr.mxu0 0.0
          %5569 = vmatpush1.msra.mxu0 0.0
          %5570 = vmatprep.subr.mxu0 0.0
          %5571 = vmatpush1.msra.mxu0 0.0
          %5572 = vmatprep.subr.mxu0 0.0
          %5573 = vmatpush1.msra.mxu0 0.0
          %5574 = vmatprep.subr.mxu0 0.0
          %5575 = vmatpush1.msra.mxu0 0.0
          %5576 = vmatprep.subr.mxu0 0.0
          %5577 = vmatpush1.msra.mxu0 0.0
          %5578 = vmatprep.subr.mxu0 0.0
          %5579 = vmatpush1.msra.mxu0 0.0
          %5580 = vmatprep.subr.mxu0 0.0
          %5581 = vmatpush1.msra.mxu0 0.0
          %5582 = vmatprep.subr.mxu0 0.0
          %5583 = vmatpush1.msra.mxu0 0.0
          %5584 = vmatprep.subr.mxu0 0.0
          %5585 = vmatpush1.msra.mxu0 0.0
          %5586 = vmatprep.subr.mxu0 0.0
          %5587 = vmatpush1.msra.mxu0 0.0
          %5588 = vmatprep.subr.mxu0 0.0
          %5589 = vmatpush1.msra.mxu0 0.0
          %5590 = vmatprep.subr.mxu0 0.0
          %5591 = vmatpush1.msra.mxu0 0.0
          %5592 = vmatprep.subr.mxu0 0.0
          %5593 = vmatpush1.msra.mxu0 0.0
          %5594 = vmatprep.subr.mxu0 0.0
          %5595 = vmatpush1.msra.mxu0 0.0
          %5596 = vmatprep.subr.mxu0 0.0
          %5597 = vmatpush1.msra.mxu0 0.0
          %5598 = vmatprep.subr.mxu0 0.0
          %5599 = vmatpush1.msra.mxu0 0.0
          %5600 = vmatprep.mubr.f32.mxu0 0.0
          %v5601 = vand.u32 %v5515, 4294901760
          %v5602 = vsub.f32 %v5515, %v5601
          %v5603 = vand.u32 %v5602, 4294901760
          %v5604 = vsub.f32 %v5602, %v5603
          %v5605 = vand.u32 %v5604, 4294901760
          %5606 = vmatmul.mubr.f32.gmra.mrb[0].mxu0 %v5605
          %v5607 = vpop.f32.mrb[0].mxu0
          %v5608 = vadd.f32 0.0, %v5607
          %v5609 = vpop.f32.mrb[0].mxu0
          %5610 = vmatprep.mubr.f32.mxu0 0.0
          %v5611 = vand.u32 %v5518, 4294901760
          %v5612 = vsub.f32 %v5518, %v5611
          %v5613 = vand.u32 %v5612, 4294901760
          %v5614 = vsub.f32 %v5612, %v5613
          %v5615 = vand.u32 %v5614, 4294901760
          %5616 = vmatmul.mubr.f32.gmra.mrb[0].mxu0 %v5615
          %v5617 = vpop.f32.mrb[0].mxu0
          %v5618 = vadd.f32 0.0, %v5617
          %v5619 = vpop.f32.mrb[0].mxu0
          %5620 = vmatprep.mubr.f32.mxu0 0.0
          %v5621 = vand.u32 %v5521, 4294901760
          %v5622 = vsub.f32 %v5521, %v5621
          %v5623 = vand.u32 %v5622, 4294901760
          %v5624 = vsub.f32 %v5622, %v5623
          %v5625 = vand.u32 %v5624, 4294901760
          %5626 = vmatmul.mubr.f32.gmra.mrb[0].mxu0 %v5625
          %v5627 = vpop.f32.mrb[0].mxu0
          %v5628 = vadd.f32 0.0, %v5627
          %v5629 = vpop.f32.mrb[0].mxu0
          %5630 = vmatprep.mubr.f32.mxu0 0.0
          %v5631 = vand.u32 %v5524, 4294901760
          %v5632 = vsub.f32 %v5524, %v5631
          %v5633 = vand.u32 %v5632, 4294901760
          %v5634 = vsub.f32 %v5632, %v5633
          %v5635 = vand.u32 %v5634, 4294901760
          %5636 = vmatmul.mubr.f32.gmra.mrb[0].mxu0 %v5635
          %v5637 = vpop.f32.mrb[0].mxu0
          %v5638 = vadd.f32 0.0, %v5637
          %v5639 = vpop.f32.mrb[0].mxu0
          %5640 = vmatprep.mubr.f32.mxu0 0.0
          %v5641 = vand.u32 %v5527, 4294901760
          %v5642 = vsub.f32 %v5527, %v5641
          %v5643 = vand.u32 %v5642, 4294901760
          %v5644 = vsub.f32 %v5642, %v5643
          %v5645 = vand.u32 %v5644, 4294901760
          %5646 = vmatmul.mubr.f32.gmra.mrb[0].mxu0 %v5645
          %v5647 = vpop.f32.mrb[0].mxu0
          %v5648 = vadd.f32 0.0, %v5647
          %v5649 = vpop.f32.mrb[0].mxu0
          %5650 = vmatprep.mubr.f32.mxu0 0.0
          %v5651 = vand.u32 %v5530, 4294901760
          %v5652 = vsub.f32 %v5530, %v5651
          %v5653 = vand.u32 %v5652, 4294901760
          %v5654 = vsub.f32 %v5652, %v5653
          %v5655 = vand.u32 %v5654, 4294901760
          %5656 = vmatmul.mubr.f32.gmra.mrb[0].mxu0 %v5655
          %v5657 = vpop.f32.mrb[0].mxu0
          %v5658 = vadd.f32 0.0, %v5657
          %v5659 = vpop.f32.mrb[0].mxu0
          %5660 = vmatprep.mubr.f32.mxu0 0.0
          %v5661 = vand.u32 %v5533, 4294901760
          %v5662 = vsub.f32 %v5533, %v5661
          %v5663 = vand.u32 %v5662, 4294901760
          %v5664 = vsub.f32 %v5662, %v5663
          %v5665 = vand.u32 %v5664, 4294901760
          %5666 = vmatmul.mubr.f32.gmra.mrb[0].mxu0 %v5665
          %v5667 = vpop.f32.mrb[0].mxu0
          %v5668 = vadd.f32 0.0, %v5667
          %v5669 = vpop.f32.mrb[0].mxu0
          %5670 = vdwg.mxu0
          %5671 = vmatprep.subr.mxu0 0.0
          %v5672 = vand.u32 %v2882, 4294901760
          %v5673 = vsub.f32 %v2882, %v5672
          %v5674 = vand.u32 %v5673, 4294901760
          %v5675 = vsub.f32 %v5673, %v5674
          %v5676 = vand.u32 %v5675, 4294901760
          %5677 = vmatpush1.msra.mxu0 %v5676
          %5678 = vmatprep.subr.mxu0 0.0
          %5679 = vmatpush1.msra.mxu0 0.0
          %5680 = vmatprep.subr.mxu0 0.0
          %5681 = vmatpush1.msra.mxu0 0.0
          %5682 = vmatprep.subr.mxu0 0.0
          %5683 = vmatpush1.msra.mxu0 0.0
          %5684 = vmatprep.subr.mxu0 0.0
          %5685 = vmatpush1.msra.mxu0 0.0
          %5686 = vmatprep.subr.mxu0 0.0
          %5687 = vmatpush1.msra.mxu0 0.0
          %5688 = vmatprep.subr.mxu0 0.0
          %5689 = vmatpush1.msra.mxu0 0.0
          %5690 = vmatprep.subr.mxu0 0.0
          %5691 = vmatpush1.msra.mxu0 0.0
          %5692 = vmatprep.subr.mxu0 0.0
          %5693 = vmatpush1.msra.mxu0 0.0
          %5694 = vmatprep.subr.mxu0 0.0
          %5695 = vmatpush1.msra.mxu0 0.0
          %5696 = vmatprep.subr.mxu0 0.0
          %5697 = vmatpush1.msra.mxu0 0.0
          %5698 = vmatprep.subr.mxu0 0.0
          %5699 = vmatpush1.msra.mxu0 0.0
          %5700 = vmatprep.subr.mxu0 0.0
          %5701 = vmatpush1.msra.mxu0 0.0
          %5702 = vmatprep.subr.mxu0 0.0
          %5703 = vmatpush1.msra.mxu0 0.0
          %5704 = vmatprep.subr.mxu0 0.0
          %5705 = vmatpush1.msra.mxu0 0.0
          %5706 = vmatprep.subr.mxu0 0.0
          %5707 = vmatpush1.msra.mxu0 0.0
          %5708 = vmatprep.subr.mxu0 0.0
          %5709 = vmatpush1.msra.mxu0 0.0
          %5710 = vmatprep.subr.mxu0 0.0
          %5711 = vmatpush1.msra.mxu0 0.0
          %5712 = vmatprep.subr.mxu0 0.0
          %5713 = vmatpush1.msra.mxu0 0.0
          %5714 = vmatprep.subr.mxu0 0.0
          %5715 = vmatpush1.msra.mxu0 0.0
          %5716 = vmatprep.subr.mxu0 0.0
          %5717 = vmatpush1.msra.mxu0 0.0
          %5718 = vmatprep.subr.mxu0 0.0
          %5719 = vmatpush1.msra.mxu0 0.0
          %5720 = vmatprep.subr.mxu0 0.0
          %5721 = vmatpush1.msra.mxu0 0.0
          %5722 = vmatprep.subr.mxu0 0.0
          %5723 = vmatpush1.msra.mxu0 0.0
          %5724 = vmatprep.subr.mxu0 0.0
          %5725 = vmatpush1.msra.mxu0 0.0
          %5726 = vmatprep.subr.mxu0 0.0
          %5727 = vmatpush1.msra.mxu0 0.0
          %5728 = vmatprep.subr.mxu0 0.0
          %5729 = vmatpush1.msra.mxu0 0.0
          %5730 = vmatprep.subr.mxu0 0.0
          %5731 = vmatpush1.msra.mxu0 0.0
          %5732 = vmatprep.subr.mxu0 0.0
          %5733 = vmatpush1.msra.mxu0 0.0
          %5734 = vmatprep.subr.mxu0 0.0
          %5735 = vmatpush1.msra.mxu0 0.0
          %5736 = vmatprep.subr.mxu0 0.0
          %5737 = vmatpush1.msra.mxu0 0.0
          %5738 = vmatprep.subr.mxu0 0.0
          %5739 = vmatpush1.msra.mxu0 0.0
          %5740 = vmatprep.mubr.f32.mxu0 0.0
          %v5741 = vand.u32 %v5515, 4294901760
          %5742 = vmatmul.mubr.f32.gmra.mrb[0].mxu0 %v5741
          %v5743 = vpop.f32.mrb[0].mxu0
          %v5744 = vadd.f32 %v5608, %v5743
          %v5745 = vpop.f32.mrb[0].mxu0
          %5746 = vmatprep.mubr.f32.mxu0 0.0
          %v5747 = vand.u32 %v5518, 4294901760
          %5748 = vmatmul.mubr.f32.gmra.mrb[0].mxu0 %v5747
          %v5749 = vpop.f32.mrb[0].mxu0
          %v5750 = vadd.f32 %v5618, %v5749
          %v5751 = vpop.f32.mrb[0].mxu0
          %5752 = vmatprep.mubr.f32.mxu0 0.0
          %v5753 = vand.u32 %v5521, 4294901760
          %5754 = vmatmul.mubr.f32.gmra.mrb[0].mxu0 %v5753
          %v5755 = vpop.f32.mrb[0].mxu0
          %v5756 = vadd.f32 %v5628, %v5755
          %v5757 = vpop.f32.mrb[0].mxu0
          %5758 = vmatprep.mubr.f32.mxu0 0.0
          %v5759 = vand.u32 %v5524, 4294901760
          %5760 = vmatmul.mubr.f32.gmra.mrb[0].mxu0 %v5759
          %v5761 = vpop.f32.mrb[0].mxu0
          %v5762 = vadd.f32 %v5638, %v5761
          %v5763 = vpop.f32.mrb[0].mxu0
          %5764 = vmatprep.mubr.f32.mxu0 0.0
          %v5765 = vand.u32 %v5527, 4294901760
          %5766 = vmatmul.mubr.f32.gmra.mrb[0].mxu0 %v5765
          %v5767 = vpop.f32.mrb[0].mxu0
          %v5768 = vadd.f32 %v5648, %v5767
          %v5769 = vpop.f32.mrb[0].mxu0
          %5770 = vmatprep.mubr.f32.mxu0 0.0
          %v5771 = vand.u32 %v5530, 4294901760
          %5772 = vmatmul.mubr.f32.gmra.mrb[0].mxu0 %v5771
          %v5773 = vpop.f32.mrb[0].mxu0
          %v5774 = vadd.f32 %v5658, %v5773
          %v5775 = vpop.f32.mrb[0].mxu0
          %5776 = vmatprep.mubr.f32.mxu0 0.0
          %v5777 = vand.u32 %v5533, 4294901760
          %5778 = vmatmul.mubr.f32.gmra.mrb[0].mxu0 %v5777
          %v5779 = vpop.f32.mrb[0].mxu0
          %v5780 = vadd.f32 %v5668, %v5779
          %v5781 = vpop.f32.mrb[0].mxu0
          %5782 = vdwg.mxu0
          %5783 = vmatprep.subr.mxu0 0.0
          %v5784 = vand.u32 %v2882, 4294901760
          %v5785 = vsub.f32 %v2882, %v5784
          %5786 = vmatpush1.msra.mxu0 %v5785
          %5787 = vmatprep.subr.mxu0 0.0
          %5788 = vmatpush1.msra.mxu0 0.0
          %5789 = vmatprep.subr.mxu0 0.0
          %5790 = vmatpush1.msra.mxu0 0.0
          %5791 = vmatprep.subr.mxu0 0.0
          %5792 = vmatpush1.msra.mxu0 0.0
          %5793 = vmatprep.subr.mxu0 0.0
          %5794 = vmatpush1.msra.mxu0 0.0
          %5795 = vmatprep.subr.mxu0 0.0
          %5796 = vmatpush1.msra.mxu0 0.0
          %5797 = vmatprep.subr.mxu0 0.0
          %5798 = vmatpush1.msra.mxu0 0.0
          %5799 = vmatprep.subr.mxu0 0.0
          %5800 = vmatpush1.msra.mxu0 0.0
          %5801 = vmatprep.subr.mxu0 0.0
          %5802 = vmatpush1.msra.mxu0 0.0
          %5803 = vmatprep.subr.mxu0 0.0
          %5804 = vmatpush1.msra.mxu0 0.0
          %5805 = vmatprep.subr.mxu0 0.0
          %5806 = vmatpush1.msra.mxu0 0.0
          %5807 = vmatprep.subr.mxu0 0.0
          %5808 = vmatpush1.msra.mxu0 0.0
          %5809 = vmatprep.subr.mxu0 0.0
          %5810 = vmatpush1.msra.mxu0 0.0
          %5811 = vmatprep.subr.mxu0 0.0
          %5812 = vmatpush1.msra.mxu0 0.0
          %5813 = vmatprep.subr.mxu0 0.0
          %5814 = vmatpush1.msra.mxu0 0.0
          %5815 = vmatprep.subr.mxu0 0.0
          %5816 = vmatpush1.msra.mxu0 0.0
          %5817 = vmatprep.subr.mxu0 0.0
          %5818 = vmatpush1.msra.mxu0 0.0
          %5819 = vmatprep.subr.mxu0 0.0
          %5820 = vmatpush1.msra.mxu0 0.0
          %5821 = vmatprep.subr.mxu0 0.0
          %5822 = vmatpush1.msra.mxu0 0.0
          %5823 = vmatprep.subr.mxu0 0.0
          %5824 = vmatpush1.msra.mxu0 0.0
          %5825 = vmatprep.subr.mxu0 0.0
          %5826 = vmatpush1.msra.mxu0 0.0
          %5827 = vmatprep.subr.mxu0 0.0
          %5828 = vmatpush1.msra.mxu0 0.0
          %5829 = vmatprep.subr.mxu0 0.0
          %5830 = vmatpush1.msra.mxu0 0.0
          %5831 = vmatprep.subr.mxu0 0.0
          %5832 = vmatpush1.msra.mxu0 0.0
          %5833 = vmatprep.subr.mxu0 0.0
          %5834 = vmatpush1.msra.mxu0 0.0
          %5835 = vmatprep.subr.mxu0 0.0
          %5836 = vmatpush1.msra.mxu0 0.0
          %5837 = vmatprep.subr.mxu0 0.0
          %5838 = vmatpush1.msra.mxu0 0.0
          %5839 = vmatprep.subr.mxu0 0.0
          %5840 = vmatpush1.msra.mxu0 0.0
          %5841 = vmatprep.subr.mxu0 0.0
          %5842 = vmatpush1.msra.mxu0 0.0
          %5843 = vmatprep.subr.mxu0 0.0
          %5844 = vmatpush1.msra.mxu0 0.0
          %5845 = vmatprep.subr.mxu0 0.0
          %5846 = vmatpush1.msra.mxu0 0.0
          %5847 = vmatprep.subr.mxu0 0.0
          %5848 = vmatpush1.msra.mxu0 0.0
          %5849 = vmatprep.mubr.f32.mxu0 0.0
          %v5850 = vand.u32 %v5515, 4294901760
          %v5851 = vsub.f32 %v5515, %v5850
          %5852 = vmatmul.mubr.f32.gmra.mrb[0].mxu0 %v5851
          %v5853 = vpop.f32.mrb[0].mxu0
          %v5854 = vadd.f32 %v5744, %v5853
          %v5855 = vpop.f32.mrb[0].mxu0
          %5856 = vmatprep.mubr.f32.mxu0 0.0
          %v5857 = vand.u32 %v5518, 4294901760
          %v5858 = vsub.f32 %v5518, %v5857
          %5859 = vmatmul.mubr.f32.gmra.mrb[0].mxu0 %v5858
          %v5860 = vpop.f32.mrb[0].mxu0
          %v5861 = vadd.f32 %v5750, %v5860
          %v5862 = vpop.f32.mrb[0].mxu0
          %5863 = vmatprep.mubr.f32.mxu0 0.0
          %v5864 = vand.u32 %v5521, 4294901760
          %v5865 = vsub.f32 %v5521, %v5864
          %5866 = vmatmul.mubr.f32.gmra.mrb[0].mxu0 %v5865
          %v5867 = vpop.f32.mrb[0].mxu0
          %v5868 = vadd.f32 %v5756, %v5867
          %v5869 = vpop.f32.mrb[0].mxu0
          %5870 = vmatprep.mubr.f32.mxu0 0.0
          %v5871 = vand.u32 %v5524, 4294901760
          %v5872 = vsub.f32 %v5524, %v5871
          %5873 = vmatmul.mubr.f32.gmra.mrb[0].mxu0 %v5872
          %v5874 = vpop.f32.mrb[0].mxu0
          %v5875 = vadd.f32 %v5762, %v5874
          %v5876 = vpop.f32.mrb[0].mxu0
          %5877 = vmatprep.mubr.f32.mxu0 0.0
          %v5878 = vand.u32 %v5527, 4294901760
          %v5879 = vsub.f32 %v5527, %v5878
          %5880 = vmatmul.mubr.f32.gmra.mrb[0].mxu0 %v5879
          %v5881 = vpop.f32.mrb[0].mxu0
          %v5882 = vadd.f32 %v5768, %v5881
          %v5883 = vpop.f32.mrb[0].mxu0
          %5884 = vmatprep.mubr.f32.mxu0 0.0
          %v5885 = vand.u32 %v5530, 4294901760
          %v5886 = vsub.f32 %v5530, %v5885
          %5887 = vmatmul.mubr.f32.gmra.mrb[0].mxu0 %v5886
          %v5888 = vpop.f32.mrb[0].mxu0
          %v5889 = vadd.f32 %v5774, %v5888
          %v5890 = vpop.f32.mrb[0].mxu0
          %5891 = vmatprep.mubr.f32.mxu0 0.0
          %v5892 = vand.u32 %v5533, 4294901760
          %v5893 = vsub.f32 %v5533, %v5892
          %5894 = vmatmul.mubr.f32.gmra.mrb[0].mxu0 %v5893
          %v5895 = vpop.f32.mrb[0].mxu0
          %v5896 = vadd.f32 %v5780, %v5895
          %v5897 = vpop.f32.mrb[0].mxu0
          %5898 = vdwg.mxu0
          %5899 = vmatprep.subr.mxu0 0.0
          %v5900 = vand.u32 %v2882, 4294901760
          %5901 = vmatpush1.msra.mxu0 %v5900
          %5902 = vmatprep.subr.mxu0 0.0
          %5903 = vmatpush1.msra.mxu0 0.0
          %5904 = vmatprep.subr.mxu0 0.0
          %5905 = vmatpush1.msra.mxu0 0.0
          %5906 = vmatprep.subr.mxu0 0.0
          %5907 = vmatpush1.msra.mxu0 0.0
          %5908 = vmatprep.subr.mxu0 0.0
          %5909 = vmatpush1.msra.mxu0 0.0
          %5910 = vmatprep.subr.mxu0 0.0
          %5911 = vmatpush1.msra.mxu0 0.0
          %5912 = vmatprep.subr.mxu0 0.0
          %5913 = vmatpush1.msra.mxu0 0.0
          %5914 = vmatprep.subr.mxu0 0.0
          %5915 = vmatpush1.msra.mxu0 0.0
          %5916 = vmatprep.subr.mxu0 0.0
          %5917 = vmatpush1.msra.mxu0 0.0
          %5918 = vmatprep.subr.mxu0 0.0
          %5919 = vmatpush1.msra.mxu0 0.0
          %5920 = vmatprep.subr.mxu0 0.0
          %5921 = vmatpush1.msra.mxu0 0.0
          %5922 = vmatprep.subr.mxu0 0.0
          %5923 = vmatpush1.msra.mxu0 0.0
          %5924 = vmatprep.subr.mxu0 0.0
          %5925 = vmatpush1.msra.mxu0 0.0
          %5926 = vmatprep.subr.mxu0 0.0
          %5927 = vmatpush1.msra.mxu0 0.0
          %5928 = vmatprep.subr.mxu0 0.0
          %5929 = vmatpush1.msra.mxu0 0.0
          %5930 = vmatprep.subr.mxu0 0.0
          %5931 = vmatpush1.msra.mxu0 0.0
          %5932 = vmatprep.subr.mxu0 0.0
          %5933 = vmatpush1.msra.mxu0 0.0
          %5934 = vmatprep.subr.mxu0 0.0
          %5935 = vmatpush1.msra.mxu0 0.0
          %5936 = vmatprep.subr.mxu0 0.0
          %5937 = vmatpush1.msra.mxu0 0.0
          %5938 = vmatprep.subr.mxu0 0.0
          %5939 = vmatpush1.msra.mxu0 0.0
          %5940 = vmatprep.subr.mxu0 0.0
          %5941 = vmatpush1.msra.mxu0 0.0
          %5942 = vmatprep.subr.mxu0 0.0
          %5943 = vmatpush1.msra.mxu0 0.0
          %5944 = vmatprep.subr.mxu0 0.0
          %5945 = vmatpush1.msra.mxu0 0.0
          %5946 = vmatprep.subr.mxu0 0.0
          %5947 = vmatpush1.msra.mxu0 0.0
          %5948 = vmatprep.subr.mxu0 0.0
          %5949 = vmatpush1.msra.mxu0 0.0
          %5950 = vmatprep.subr.mxu0 0.0
          %5951 = vmatpush1.msra.mxu0 0.0
          %5952 = vmatprep.subr.mxu0 0.0
          %5953 = vmatpush1.msra.mxu0 0.0
          %5954 = vmatprep.subr.mxu0 0.0
          %5955 = vmatpush1.msra.mxu0 0.0
          %5956 = vmatprep.subr.mxu0 0.0
          %5957 = vmatpush1.msra.mxu0 0.0
          %5958 = vmatprep.subr.mxu0 0.0
          %5959 = vmatpush1.msra.mxu0 0.0
          %5960 = vmatprep.subr.mxu0 0.0
          %5961 = vmatpush1.msra.mxu0 0.0
          %5962 = vmatprep.subr.mxu0 0.0
          %5963 = vmatpush1.msra.mxu0 0.0
          %5964 = vmatprep.mubr.f32.mxu0 0.0
          %v5965 = vand.u32 %v5515, 4294901760
          %v5966 = vsub.f32 %v5515, %v5965
          %v5967 = vand.u32 %v5966, 4294901760
          %5968 = vmatmul.mubr.f32.gmra.mrb[0].mxu0 %v5967
          %v5969 = vpop.f32.mrb[0].mxu0
          %v5970 = vadd.f32 %v5854, %v5969
          %v5971 = vpop.f32.mrb[0].mxu0
          %5972 = vmatprep.mubr.f32.mxu0 0.0
          %v5973 = vand.u32 %v5518, 4294901760
          %v5974 = vsub.f32 %v5518, %v5973
          %v5975 = vand.u32 %v5974, 4294901760
          %5976 = vmatmul.mubr.f32.gmra.mrb[0].mxu0 %v5975
          %v5977 = vpop.f32.mrb[0].mxu0
          %v5978 = vadd.f32 %v5861, %v5977
          %v5979 = vpop.f32.mrb[0].mxu0
          %5980 = vmatprep.mubr.f32.mxu0 0.0
          %v5981 = vand.u32 %v5521, 4294901760
          %v5982 = vsub.f32 %v5521, %v5981
          %v5983 = vand.u32 %v5982, 4294901760
          %5984 = vmatmul.mubr.f32.gmra.mrb[0].mxu0 %v5983
          %v5985 = vpop.f32.mrb[0].mxu0
          %v5986 = vadd.f32 %v5868, %v5985
          %v5987 = vpop.f32.mrb[0].mxu0
          %5988 = vmatprep.mubr.f32.mxu0 0.0
          %v5989 = vand.u32 %v5524, 4294901760
          %v5990 = vsub.f32 %v5524, %v5989
          %v5991 = vand.u32 %v5990, 4294901760
          %5992 = vmatmul.mubr.f32.gmra.mrb[0].mxu0 %v5991
          %v5993 = vpop.f32.mrb[0].mxu0
          %v5994 = vadd.f32 %v5875, %v5993
          %v5995 = vpop.f32.mrb[0].mxu0
          %5996 = vmatprep.mubr.f32.mxu0 0.0
          %v5997 = vand.u32 %v5527, 4294901760
          %v5998 = vsub.f32 %v5527, %v5997
          %v5999 = vand.u32 %v5998, 4294901760
          %6000 = vmatmul.mubr.f32.gmra.mrb[0].mxu0 %v5999
          %v6001 = vpop.f32.mrb[0].mxu0
          %v6002 = vadd.f32 %v5882, %v6001
          %v6003 = vpop.f32.mrb[0].mxu0
          %6004 = vmatprep.mubr.f32.mxu0 0.0
          %v6005 = vand.u32 %v5530, 4294901760
          %v6006 = vsub.f32 %v5530, %v6005
          %v6007 = vand.u32 %v6006, 4294901760
          %6008 = vmatmul.mubr.f32.gmra.mrb[0].mxu0 %v6007
          %v6009 = vpop.f32.mrb[0].mxu0
          %v6010 = vadd.f32 %v5889, %v6009
          %v6011 = vpop.f32.mrb[0].mxu0
          %6012 = vmatprep.mubr.f32.mxu0 0.0
          %v6013 = vand.u32 %v5533, 4294901760
          %v6014 = vsub.f32 %v5533, %v6013
          %v6015 = vand.u32 %v6014, 4294901760
          %6016 = vmatmul.mubr.f32.gmra.mrb[0].mxu0 %v6015
          %v6017 = vpop.f32.mrb[0].mxu0
          %v6018 = vadd.f32 %v5896, %v6017
          %v6019 = vpop.f32.mrb[0].mxu0
          %6020 = vdwg.mxu0
          %6021 = vmatprep.subr.mxu0 0.0
          %v6022 = vand.u32 %v2882, 4294901760
          %v6023 = vsub.f32 %v2882, %v6022
          %v6024 = vand.u32 %v6023, 4294901760
          %6025 = vmatpush1.msra.mxu0 %v6024
          %6026 = vmatprep.subr.mxu0 0.0
          %6027 = vmatpush1.msra.mxu0 0.0
          %6028 = vmatprep.subr.mxu0 0.0
          %6029 = vmatpush1.msra.mxu0 0.0
          %6030 = vmatprep.subr.mxu0 0.0
          %6031 = vmatpush1.msra.mxu0 0.0
          %6032 = vmatprep.subr.mxu0 0.0
          %6033 = vmatpush1.msra.mxu0 0.0
          %6034 = vmatprep.subr.mxu0 0.0
          %6035 = vmatpush1.msra.mxu0 0.0
          %6036 = vmatprep.subr.mxu0 0.0
          %6037 = vmatpush1.msra.mxu0 0.0
          %6038 = vmatprep.subr.mxu0 0.0
          %6039 = vmatpush1.msra.mxu0 0.0
          %6040 = vmatprep.subr.mxu0 0.0
          %6041 = vmatpush1.msra.mxu0 0.0
          %6042 = vmatprep.subr.mxu0 0.0
          %6043 = vmatpush1.msra.mxu0 0.0
          %6044 = vmatprep.subr.mxu0 0.0
          %6045 = vmatpush1.msra.mxu0 0.0
          %6046 = vmatprep.subr.mxu0 0.0
          %6047 = vmatpush1.msra.mxu0 0.0
          %6048 = vmatprep.subr.mxu0 0.0
          %6049 = vmatpush1.msra.mxu0 0.0
          %6050 = vmatprep.subr.mxu0 0.0
          %6051 = vmatpush1.msra.mxu0 0.0
          %6052 = vmatprep.subr.mxu0 0.0
          %6053 = vmatpush1.msra.mxu0 0.0
          %6054 = vmatprep.subr.mxu0 0.0
          %6055 = vmatpush1.msra.mxu0 0.0
          %6056 = vmatprep.subr.mxu0 0.0
          %6057 = vmatpush1.msra.mxu0 0.0
          %6058 = vmatprep.subr.mxu0 0.0
          %6059 = vmatpush1.msra.mxu0 0.0
          %6060 = vmatprep.subr.mxu0 0.0
          %6061 = vmatpush1.msra.mxu0 0.0
          %6062 = vmatprep.subr.mxu0 0.0
          %6063 = vmatpush1.msra.mxu0 0.0
          %6064 = vmatprep.subr.mxu0 0.0
          %6065 = vmatpush1.msra.mxu0 0.0
          %6066 = vmatprep.subr.mxu0 0.0
          %6067 = vmatpush1.msra.mxu0 0.0
          %6068 = vmatprep.subr.mxu0 0.0
          %6069 = vmatpush1.msra.mxu0 0.0
          %6070 = vmatprep.subr.mxu0 0.0
          %6071 = vmatpush1.msra.mxu0 0.0
          %6072 = vmatprep.subr.mxu0 0.0
          %6073 = vmatpush1.msra.mxu0 0.0
          %6074 = vmatprep.subr.mxu0 0.0
          %6075 = vmatpush1.msra.mxu0 0.0
          %6076 = vmatprep.subr.mxu0 0.0
          %6077 = vmatpush1.msra.mxu0 0.0
          %6078 = vmatprep.subr.mxu0 0.0
          %6079 = vmatpush1.msra.mxu0 0.0
          %6080 = vmatprep.subr.mxu0 0.0
          %6081 = vmatpush1.msra.mxu0 0.0
          %6082 = vmatprep.subr.mxu0 0.0
          %6083 = vmatpush1.msra.mxu0 0.0
          %6084 = vmatprep.subr.mxu0 0.0
          %6085 = vmatpush1.msra.mxu0 0.0
          %6086 = vmatprep.subr.mxu0 0.0
          %6087 = vmatpush1.msra.mxu0 0.0
          %6088 = vmatprep.mubr.f32.mxu0 0.0
          %v6089 = vand.u32 %v5515, 4294901760
          %6090 = vmatmul.mubr.f32.gmra.mrb[0].mxu0 %v6089
          %v6091 = vpop.f32.mrb[0].mxu0
          %v6092 = vadd.f32 %v5970, %v6091
          %v6093 = vpop.f32.mrb[0].mxu0
          %6094 = vmatprep.mubr.f32.mxu0 0.0
          %v6095 = vand.u32 %v5518, 4294901760
          %6096 = vmatmul.mubr.f32.gmra.mrb[0].mxu0 %v6095
          %v6097 = vpop.f32.mrb[0].mxu0
          %v6098 = vadd.f32 %v5978, %v6097
          %v6099 = vpop.f32.mrb[0].mxu0
          %6100 = vmatprep.mubr.f32.mxu0 0.0
          %v6101 = vand.u32 %v5521, 4294901760
          %6102 = vmatmul.mubr.f32.gmra.mrb[0].mxu0 %v6101
          %v6103 = vpop.f32.mrb[0].mxu0
          %v6104 = vadd.f32 %v5986, %v6103
          %v6105 = vpop.f32.mrb[0].mxu0
          %6106 = vmatprep.mubr.f32.mxu0 0.0
          %v6107 = vand.u32 %v5524, 4294901760
          %6108 = vmatmul.mubr.f32.gmra.mrb[0].mxu0 %v6107
          %v6109 = vpop.f32.mrb[0].mxu0
          %v6110 = vadd.f32 %v5994, %v6109
          %v6111 = vpop.f32.mrb[0].mxu0
          %6112 = vmatprep.mubr.f32.mxu0 0.0
          %v6113 = vand.u32 %v5527, 4294901760
          %6114 = vmatmul.mubr.f32.gmra.mrb[0].mxu0 %v6113
          %v6115 = vpop.f32.mrb[0].mxu0
          %v6116 = vadd.f32 %v6002, %v6115
          %v6117 = vpop.f32.mrb[0].mxu0
          %6118 = vmatprep.mubr.f32.mxu0 0.0
          %v6119 = vand.u32 %v5530, 4294901760
          %6120 = vmatmul.mubr.f32.gmra.mrb[0].mxu0 %v6119
          %v6121 = vpop.f32.mrb[0].mxu0
          %v6122 = vadd.f32 %v6010, %v6121
          %v6123 = vpop.f32.mrb[0].mxu0
          %6124 = vmatprep.mubr.f32.mxu0 0.0
          %v6125 = vand.u32 %v5533, 4294901760
          %6126 = vmatmul.mubr.f32.gmra.mrb[0].mxu0 %v6125
          %v6127 = vpop.f32.mrb[0].mxu0
          %v6128 = vadd.f32 %v6018, %v6127
          %v6129 = vpop.f32.mrb[0].mxu0
          %6130 = vdwg.mxu0
          %6131 = vmatprep.subr.mxu0 0.0
          %v6132 = vand.u32 %v2882, 4294901760
          %6133 = vmatpush1.msra.mxu0 %v6132
          %6134 = vmatprep.subr.mxu0 0.0
          %6135 = vmatpush1.msra.mxu0 0.0
          %6136 = vmatprep.subr.mxu0 0.0
          %6137 = vmatpush1.msra.mxu0 0.0
          %6138 = vmatprep.subr.mxu0 0.0
          %6139 = vmatpush1.msra.mxu0 0.0
          %6140 = vmatprep.subr.mxu0 0.0
          %6141 = vmatpush1.msra.mxu0 0.0
          %6142 = vmatprep.subr.mxu0 0.0
          %6143 = vmatpush1.msra.mxu0 0.0
          %6144 = vmatprep.subr.mxu0 0.0
          %6145 = vmatpush1.msra.mxu0 0.0
          %6146 = vmatprep.subr.mxu0 0.0
          %6147 = vmatpush1.msra.mxu0 0.0
          %6148 = vmatprep.subr.mxu0 0.0
          %6149 = vmatpush1.msra.mxu0 0.0
          %6150 = vmatprep.subr.mxu0 0.0
          %6151 = vmatpush1.msra.mxu0 0.0
          %6152 = vmatprep.subr.mxu0 0.0
          %6153 = vmatpush1.msra.mxu0 0.0
          %6154 = vmatprep.subr.mxu0 0.0
          %6155 = vmatpush1.msra.mxu0 0.0
          %6156 = vmatprep.subr.mxu0 0.0
          %6157 = vmatpush1.msra.mxu0 0.0
          %6158 = vmatprep.subr.mxu0 0.0
          %6159 = vmatpush1.msra.mxu0 0.0
          %6160 = vmatprep.subr.mxu0 0.0
          %6161 = vmatpush1.msra.mxu0 0.0
          %6162 = vmatprep.subr.mxu0 0.0
          %6163 = vmatpush1.msra.mxu0 0.0
          %6164 = vmatprep.subr.mxu0 0.0
          %6165 = vmatpush1.msra.mxu0 0.0
          %6166 = vmatprep.subr.mxu0 0.0
          %6167 = vmatpush1.msra.mxu0 0.0
          %6168 = vmatprep.subr.mxu0 0.0
          %6169 = vmatpush1.msra.mxu0 0.0
          %6170 = vmatprep.subr.mxu0 0.0
          %6171 = vmatpush1.msra.mxu0 0.0
          %6172 = vmatprep.subr.mxu0 0.0
          %6173 = vmatpush1.msra.mxu0 0.0
          %6174 = vmatprep.subr.mxu0 0.0
          %6175 = vmatpush1.msra.mxu0 0.0
          %6176 = vmatprep.subr.mxu0 0.0
          %6177 = vmatpush1.msra.mxu0 0.0
          %6178 = vmatprep.subr.mxu0 0.0
          %6179 = vmatpush1.msra.mxu0 0.0
          %6180 = vmatprep.subr.mxu0 0.0
          %6181 = vmatpush1.msra.mxu0 0.0
          %6182 = vmatprep.subr.mxu0 0.0
          %6183 = vmatpush1.msra.mxu0 0.0
          %6184 = vmatprep.subr.mxu0 0.0
          %6185 = vmatpush1.msra.mxu0 0.0
          %6186 = vmatprep.subr.mxu0 0.0
          %6187 = vmatpush1.msra.mxu0 0.0
          %6188 = vmatprep.subr.mxu0 0.0
          %6189 = vmatpush1.msra.mxu0 0.0
          %6190 = vmatprep.subr.mxu0 0.0
          %6191 = vmatpush1.msra.mxu0 0.0
          %6192 = vmatprep.subr.mxu0 0.0
          %6193 = vmatpush1.msra.mxu0 0.0
          %6194 = vmatprep.subr.mxu0 0.0
          %6195 = vmatpush1.msra.mxu0 0.0
          %6196 = vmatprep.mubr.f32.mxu0 0.0
          %v6197 = vand.u32 %v5515, 4294901760
          %6198 = vmatmul.mubr.f32.gmra.mrb[0].mxu0 %v6197
          %v6199 = vpop.f32.mrb[0].mxu0
          %v6200 = vadd.f32 %v6092, %v6199
          %v6201 = vpop.f32.mrb[0].mxu0
          %6202 = vmatprep.mubr.f32.mxu0 0.0
          %v6203 = vand.u32 %v5518, 4294901760
          %6204 = vmatmul.mubr.f32.gmra.mrb[0].mxu0 %v6203
          %v6205 = vpop.f32.mrb[0].mxu0
          %v6206 = vadd.f32 %v6098, %v6205
          %v6207 = vpop.f32.mrb[0].mxu0
          %6208 = vmatprep.mubr.f32.mxu0 0.0
          %v6209 = vand.u32 %v5521, 4294901760
          %6210 = vmatmul.mubr.f32.gmra.mrb[0].mxu0 %v6209
          %v6211 = vpop.f32.mrb[0].mxu0
          %v6212 = vadd.f32 %v6104, %v6211
          %v6213 = vpop.f32.mrb[0].mxu0
          %6214 = vmatprep.mubr.f32.mxu0 0.0
          %v6215 = vand.u32 %v5524, 4294901760
          %6216 = vmatmul.mubr.f32.gmra.mrb[0].mxu0 %v6215
          %v6217 = vpop.f32.mrb[0].mxu0
          %v6218 = vadd.f32 %v6110, %v6217
          %v6219 = vpop.f32.mrb[0].mxu0
          %6220 = vmatprep.mubr.f32.mxu0 0.0
          %v6221 = vand.u32 %v5527, 4294901760
          %6222 = vmatmul.mubr.f32.gmra.mrb[0].mxu0 %v6221
          %v6223 = vpop.f32.mrb[0].mxu0
          %v6224 = vadd.f32 %v6116, %v6223
          %v6225 = vpop.f32.mrb[0].mxu0
          %6226 = vmatprep.mubr.f32.mxu0 0.0
          %v6227 = vand.u32 %v5530, 4294901760
          %6228 = vmatmul.mubr.f32.gmra.mrb[0].mxu0 %v6227
          %v6229 = vpop.f32.mrb[0].mxu0
          %v6230 = vadd.f32 %v6122, %v6229
          %v6231 = vpop.f32.mrb[0].mxu0
          %6232 = vmatprep.mubr.f32.mxu0 0.0
          %v6233 = vand.u32 %v5533, 4294901760
          %6234 = vmatmul.mubr.f32.gmra.mrb[0].mxu0 %v6233
          %v6235 = vpop.f32.mrb[0].mxu0
          %v6236 = vadd.f32 %v6128, %v6235
          %v6237 = vpop.f32.mrb[0].mxu0
          %6238 = vdwg.mxu0
          %v6239 = vmul.f32 %v4727, %v5468
          %v6240 = vmul.f32 %v4728, %v5475
          %v6241 = vmul.f32 %v4729, %v5482
          %v6242 = vmul.f32 %v4730, %v5489
          %v6243 = vmul.f32 %v4731, %v5496
          %v6244 = vmul.f32 %v4732, %v5503
          %v6245 = vmul.f32 %v4733, %v5510
          %vm6246 = vcmask 457728
          %v6248 = vsel %vm6246, %v635, 0
          %6250 = vmatprep.subr.mxu0 0.0
          %v6251 = vand.u32 %v6239, 4294901760
          %6252 = vmatpush1.msra.mxu0 %v6251
          %6253 = vmatprep.subr.mxu0 0.0
          %v6254 = vand.u32 %v6240, 4294901760
          %6255 = vmatpush1.msra.mxu0 %v6254
          %6256 = vmatprep.subr.mxu0 0.0
          %v6257 = vand.u32 %v6241, 4294901760
          %6258 = vmatpush1.msra.mxu0 %v6257
          %6259 = vmatprep.subr.mxu0 0.0
          %v6260 = vand.u32 %v6242, 4294901760
          %6261 = vmatpush1.msra.mxu0 %v6260
          %6262 = vmatprep.subr.mxu0 0.0
          %v6263 = vand.u32 %v6243, 4294901760
          %6264 = vmatpush1.msra.mxu0 %v6263
          %6265 = vmatprep.subr.mxu0 0.0
          %v6266 = vand.u32 %v6244, 4294901760
          %6267 = vmatpush1.msra.mxu0 %v6266
          %6268 = vmatprep.subr.mxu0 0.0
          %v6269 = vand.u32 %v6245, 4294901760
          %6270 = vmatpush1.msra.mxu0 %v6269
          %6271 = vmatprep.subr.mxu0 0.0
          %6272 = vmatpush1.msra.mxu0 0.0
          %6273 = vmatprep.subr.mxu0 0.0
          %6274 = vmatpush1.msra.mxu0 0.0
          %6275 = vmatprep.subr.mxu0 0.0
          %6276 = vmatpush1.msra.mxu0 0.0
          %6277 = vmatprep.subr.mxu0 0.0
          %6278 = vmatpush1.msra.mxu0 0.0
          %6279 = vmatprep.subr.mxu0 0.0
          %6280 = vmatpush1.msra.mxu0 0.0
          %6281 = vmatprep.subr.mxu0 0.0
          %6282 = vmatpush1.msra.mxu0 0.0
          %6283 = vmatprep.subr.mxu0 0.0
          %6284 = vmatpush1.msra.mxu0 0.0
          %6285 = vmatprep.subr.mxu0 0.0
          %6286 = vmatpush1.msra.mxu0 0.0
          %6287 = vmatprep.subr.mxu0 0.0
          %6288 = vmatpush1.msra.mxu0 0.0
          %6289 = vmatprep.subr.mxu0 0.0
          %6290 = vmatpush1.msra.mxu0 0.0
          %6291 = vmatprep.subr.mxu0 0.0
          %6292 = vmatpush1.msra.mxu0 0.0
          %6293 = vmatprep.subr.mxu0 0.0
          %6294 = vmatpush1.msra.mxu0 0.0
          %6295 = vmatprep.subr.mxu0 0.0
          %6296 = vmatpush1.msra.mxu0 0.0
          %6297 = vmatprep.subr.mxu0 0.0
          %6298 = vmatpush1.msra.mxu0 0.0
          %6299 = vmatprep.subr.mxu0 0.0
          %6300 = vmatpush1.msra.mxu0 0.0
          %6301 = vmatprep.subr.mxu0 0.0
          %6302 = vmatpush1.msra.mxu0 0.0
          %6303 = vmatprep.subr.mxu0 0.0
          %6304 = vmatpush1.msra.mxu0 0.0
          %6305 = vmatprep.subr.mxu0 0.0
          %6306 = vmatpush1.msra.mxu0 0.0
          %6307 = vmatprep.subr.mxu0 0.0
          %6308 = vmatpush1.msra.mxu0 0.0
          %6309 = vmatprep.subr.mxu0 0.0
          %6310 = vmatpush1.msra.mxu0 0.0
          %6311 = vmatprep.subr.mxu0 0.0
          %6312 = vmatpush1.msra.mxu0 0.0
          %6313 = vmatprep.subr.mxu0 0.0
          %6314 = vmatpush1.msra.mxu0 0.0
          %6315 = vmatprep.subr.mxu0 0.0
          %6316 = vmatpush1.msra.mxu0 0.0
          %6317 = vmatprep.subr.mxu0 0.0
          %6318 = vmatpush1.msra.mxu0 0.0
          %6319 = vmatprep.subr.mxu0 0.0
          %6320 = vmatpush1.msra.mxu0 0.0
          %6321 = vmatprep.mubr.f32.mxu0 0.0
          %v6322 = vand.u32 %v6248, 4294901760
          %v6323 = vsub.f32 %v6248, %v6322
          %v6324 = vand.u32 %v6323, 4294901760
          %v6325 = vsub.f32 %v6323, %v6324
          %v6326 = vand.u32 %v6325, 4294901760
          %6327 = vmatmul.mubr.f32.gmra.mrb[0].mxu0 %v6326
          %v6328 = vpop.f32.mrb[0].mxu0
          %v6329 = vadd.f32 0.0, %v6328
          %v6330 = vpop.f32.mrb[0].mxu0
          %6331 = vdwg.mxu0
          %6332 = vmatprep.subr.mxu0 0.0
          %v6333 = vand.u32 %v6239, 4294901760
          %v6334 = vsub.f32 %v6239, %v6333
          %v6335 = vand.u32 %v6334, 4294901760
          %v6336 = vsub.f32 %v6334, %v6335
          %v6337 = vand.u32 %v6336, 4294901760
          %6338 = vmatpush1.msra.mxu0 %v6337
          %6339 = vmatprep.subr.mxu0 0.0
          %v6340 = vand.u32 %v6240, 4294901760
          %v6341 = vsub.f32 %v6240, %v6340
          %v6342 = vand.u32 %v6341, 4294901760
          %v6343 = vsub.f32 %v6341, %v6342
          %v6344 = vand.u32 %v6343, 4294901760
          %6345 = vmatpush1.msra.mxu0 %v6344
          %6346 = vmatprep.subr.mxu0 0.0
          %v6347 = vand.u32 %v6241, 4294901760
          %v6348 = vsub.f32 %v6241, %v6347
          %v6349 = vand.u32 %v6348, 4294901760
          %v6350 = vsub.f32 %v6348, %v6349
          %v6351 = vand.u32 %v6350, 4294901760
          %6352 = vmatpush1.msra.mxu0 %v6351
          %6353 = vmatprep.subr.mxu0 0.0
          %v6354 = vand.u32 %v6242, 4294901760
          %v6355 = vsub.f32 %v6242, %v6354
          %v6356 = vand.u32 %v6355, 4294901760
          %v6357 = vsub.f32 %v6355, %v6356
          %v6358 = vand.u32 %v6357, 4294901760
          %6359 = vmatpush1.msra.mxu0 %v6358
          %6360 = vmatprep.subr.mxu0 0.0
          %v6361 = vand.u32 %v6243, 4294901760
          %v6362 = vsub.f32 %v6243, %v6361
          %v6363 = vand.u32 %v6362, 4294901760
          %v6364 = vsub.f32 %v6362, %v6363
          %v6365 = vand.u32 %v6364, 4294901760
          %6366 = vmatpush1.msra.mxu0 %v6365
          %6367 = vmatprep.subr.mxu0 0.0
          %v6368 = vand.u32 %v6244, 4294901760
          %v6369 = vsub.f32 %v6244, %v6368
          %v6370 = vand.u32 %v6369, 4294901760
          %v6371 = vsub.f32 %v6369, %v6370
          %v6372 = vand.u32 %v6371, 4294901760
          %6373 = vmatpush1.msra.mxu0 %v6372
          %6374 = vmatprep.subr.mxu0 0.0
          %v6375 = vand.u32 %v6245, 4294901760
          %v6376 = vsub.f32 %v6245, %v6375
          %v6377 = vand.u32 %v6376, 4294901760
          %v6378 = vsub.f32 %v6376, %v6377
          %v6379 = vand.u32 %v6378, 4294901760
          %6380 = vmatpush1.msra.mxu0 %v6379
          %6381 = vmatprep.subr.mxu0 0.0
          %6382 = vmatpush1.msra.mxu0 0.0
          %6383 = vmatprep.subr.mxu0 0.0
          %6384 = vmatpush1.msra.mxu0 0.0
          %6385 = vmatprep.subr.mxu0 0.0
          %6386 = vmatpush1.msra.mxu0 0.0
          %6387 = vmatprep.subr.mxu0 0.0
          %6388 = vmatpush1.msra.mxu0 0.0
          %6389 = vmatprep.subr.mxu0 0.0
          %6390 = vmatpush1.msra.mxu0 0.0
          %6391 = vmatprep.subr.mxu0 0.0
          %6392 = vmatpush1.msra.mxu0 0.0
          %6393 = vmatprep.subr.mxu0 0.0
          %6394 = vmatpush1.msra.mxu0 0.0
          %6395 = vmatprep.subr.mxu0 0.0
          %6396 = vmatpush1.msra.mxu0 0.0
          %6397 = vmatprep.subr.mxu0 0.0
          %6398 = vmatpush1.msra.mxu0 0.0
          %6399 = vmatprep.subr.mxu0 0.0
          %6400 = vmatpush1.msra.mxu0 0.0
          %6401 = vmatprep.subr.mxu0 0.0
          %6402 = vmatpush1.msra.mxu0 0.0
          %6403 = vmatprep.subr.mxu0 0.0
          %6404 = vmatpush1.msra.mxu0 0.0
          %6405 = vmatprep.subr.mxu0 0.0
          %6406 = vmatpush1.msra.mxu0 0.0
          %6407 = vmatprep.subr.mxu0 0.0
          %6408 = vmatpush1.msra.mxu0 0.0
          %6409 = vmatprep.subr.mxu0 0.0
          %6410 = vmatpush1.msra.mxu0 0.0
          %6411 = vmatprep.subr.mxu0 0.0
          %6412 = vmatpush1.msra.mxu0 0.0
          %6413 = vmatprep.subr.mxu0 0.0
          %6414 = vmatpush1.msra.mxu0 0.0
          %6415 = vmatprep.subr.mxu0 0.0
          %6416 = vmatpush1.msra.mxu0 0.0
          %6417 = vmatprep.subr.mxu0 0.0
          %6418 = vmatpush1.msra.mxu0 0.0
          %6419 = vmatprep.subr.mxu0 0.0
          %6420 = vmatpush1.msra.mxu0 0.0
          %6421 = vmatprep.subr.mxu0 0.0
          %6422 = vmatpush1.msra.mxu0 0.0
          %6423 = vmatprep.subr.mxu0 0.0
          %6424 = vmatpush1.msra.mxu0 0.0
          %6425 = vmatprep.subr.mxu0 0.0
          %6426 = vmatpush1.msra.mxu0 0.0
          %6427 = vmatprep.subr.mxu0 0.0
          %6428 = vmatpush1.msra.mxu0 0.0
          %6429 = vmatprep.subr.mxu0 0.0
          %6430 = vmatpush1.msra.mxu0 0.0
          %6431 = vmatprep.mubr.f32.mxu0 0.0
          %v6432 = vand.u32 %v6248, 4294901760
          %6433 = vmatmul.mubr.f32.gmra.mrb[0].mxu0 %v6432
          %v6434 = vpop.f32.mrb[0].mxu0
          %v6435 = vadd.f32 %v6329, %v6434
          %v6436 = vpop.f32.mrb[0].mxu0
          %6437 = vdwg.mxu0
          %6438 = vmatprep.subr.mxu0 0.0
          %v6439 = vand.u32 %v6239, 4294901760
          %v6440 = vsub.f32 %v6239, %v6439
          %6441 = vmatpush1.msra.mxu0 %v6440
          %6442 = vmatprep.subr.mxu0 0.0
          %v6443 = vand.u32 %v6240, 4294901760
          %v6444 = vsub.f32 %v6240, %v6443
          %6445 = vmatpush1.msra.mxu0 %v6444
          %6446 = vmatprep.subr.mxu0 0.0
          %v6447 = vand.u32 %v6241, 4294901760
          %v6448 = vsub.f32 %v6241, %v6447
          %6449 = vmatpush1.msra.mxu0 %v6448
          %6450 = vmatprep.subr.mxu0 0.0
          %v6451 = vand.u32 %v6242, 4294901760
          %v6452 = vsub.f32 %v6242, %v6451
          %6453 = vmatpush1.msra.mxu0 %v6452
          %6454 = vmatprep.subr.mxu0 0.0
          %v6455 = vand.u32 %v6243, 4294901760
          %v6456 = vsub.f32 %v6243, %v6455
          %6457 = vmatpush1.msra.mxu0 %v6456
          %6458 = vmatprep.subr.mxu0 0.0
          %v6459 = vand.u32 %v6244, 4294901760
          %v6460 = vsub.f32 %v6244, %v6459
          %6461 = vmatpush1.msra.mxu0 %v6460
          %6462 = vmatprep.subr.mxu0 0.0
          %v6463 = vand.u32 %v6245, 4294901760
          %v6464 = vsub.f32 %v6245, %v6463
          %6465 = vmatpush1.msra.mxu0 %v6464
          %6466 = vmatprep.subr.mxu0 0.0
          %6467 = vmatpush1.msra.mxu0 0.0
          %6468 = vmatprep.subr.mxu0 0.0
          %6469 = vmatpush1.msra.mxu0 0.0
          %6470 = vmatprep.subr.mxu0 0.0
          %6471 = vmatpush1.msra.mxu0 0.0
          %6472 = vmatprep.subr.mxu0 0.0
          %6473 = vmatpush1.msra.mxu0 0.0
          %6474 = vmatprep.subr.mxu0 0.0
          %6475 = vmatpush1.msra.mxu0 0.0
          %6476 = vmatprep.subr.mxu0 0.0
          %6477 = vmatpush1.msra.mxu0 0.0
          %6478 = vmatprep.subr.mxu0 0.0
          %6479 = vmatpush1.msra.mxu0 0.0
          %6480 = vmatprep.subr.mxu0 0.0
          %6481 = vmatpush1.msra.mxu0 0.0
          %6482 = vmatprep.subr.mxu0 0.0
          %6483 = vmatpush1.msra.mxu0 0.0
          %6484 = vmatprep.subr.mxu0 0.0
          %6485 = vmatpush1.msra.mxu0 0.0
          %6486 = vmatprep.subr.mxu0 0.0
          %6487 = vmatpush1.msra.mxu0 0.0
          %6488 = vmatprep.subr.mxu0 0.0
          %6489 = vmatpush1.msra.mxu0 0.0
          %6490 = vmatprep.subr.mxu0 0.0
          %6491 = vmatpush1.msra.mxu0 0.0
          %6492 = vmatprep.subr.mxu0 0.0
          %6493 = vmatpush1.msra.mxu0 0.0
          %6494 = vmatprep.subr.mxu0 0.0
          %6495 = vmatpush1.msra.mxu0 0.0
          %6496 = vmatprep.subr.mxu0 0.0
          %6497 = vmatpush1.msra.mxu0 0.0
          %6498 = vmatprep.subr.mxu0 0.0
          %6499 = vmatpush1.msra.mxu0 0.0
          %6500 = vmatprep.subr.mxu0 0.0
          %6501 = vmatpush1.msra.mxu0 0.0
          %6502 = vmatprep.subr.mxu0 0.0
          %6503 = vmatpush1.msra.mxu0 0.0
          %6504 = vmatprep.subr.mxu0 0.0
          %6505 = vmatpush1.msra.mxu0 0.0
          %6506 = vmatprep.subr.mxu0 0.0
          %6507 = vmatpush1.msra.mxu0 0.0
          %6508 = vmatprep.subr.mxu0 0.0
          %6509 = vmatpush1.msra.mxu0 0.0
          %6510 = vmatprep.subr.mxu0 0.0
          %6511 = vmatpush1.msra.mxu0 0.0
          %6512 = vmatprep.subr.mxu0 0.0
          %6513 = vmatpush1.msra.mxu0 0.0
          %6514 = vmatprep.subr.mxu0 0.0
          %6515 = vmatpush1.msra.mxu0 0.0
          %6516 = vmatprep.mubr.f32.mxu0 0.0
          %v6517 = vand.u32 %v6248, 4294901760
          %v6518 = vsub.f32 %v6248, %v6517
          %6519 = vmatmul.mubr.f32.gmra.mrb[0].mxu0 %v6518
          %v6520 = vpop.f32.mrb[0].mxu0
          %v6521 = vadd.f32 %v6435, %v6520
          %v6522 = vpop.f32.mrb[0].mxu0
          %6523 = vdwg.mxu0
          %6524 = vmatprep.subr.mxu0 0.0
          %v6525 = vand.u32 %v6239, 4294901760
          %6526 = vmatpush1.msra.mxu0 %v6525
          %6527 = vmatprep.subr.mxu0 0.0
          %v6528 = vand.u32 %v6240, 4294901760
          %6529 = vmatpush1.msra.mxu0 %v6528
          %6530 = vmatprep.subr.mxu0 0.0
          %v6531 = vand.u32 %v6241, 4294901760
          %6532 = vmatpush1.msra.mxu0 %v6531
          %6533 = vmatprep.subr.mxu0 0.0
          %v6534 = vand.u32 %v6242, 4294901760
          %6535 = vmatpush1.msra.mxu0 %v6534
          %6536 = vmatprep.subr.mxu0 0.0
          %v6537 = vand.u32 %v6243, 4294901760
          %6538 = vmatpush1.msra.mxu0 %v6537
          %6539 = vmatprep.subr.mxu0 0.0
          %v6540 = vand.u32 %v6244, 4294901760
          %6541 = vmatpush1.msra.mxu0 %v6540
          %6542 = vmatprep.subr.mxu0 0.0
          %v6543 = vand.u32 %v6245, 4294901760
          %6544 = vmatpush1.msra.mxu0 %v6543
          %6545 = vmatprep.subr.mxu0 0.0
          %6546 = vmatpush1.msra.mxu0 0.0
          %6547 = vmatprep.subr.mxu0 0.0
          %6548 = vmatpush1.msra.mxu0 0.0
          %6549 = vmatprep.subr.mxu0 0.0
          %6550 = vmatpush1.msra.mxu0 0.0
          %6551 = vmatprep.subr.mxu0 0.0
          %6552 = vmatpush1.msra.mxu0 0.0
          %6553 = vmatprep.subr.mxu0 0.0
          %6554 = vmatpush1.msra.mxu0 0.0
          %6555 = vmatprep.subr.mxu0 0.0
          %6556 = vmatpush1.msra.mxu0 0.0
          %6557 = vmatprep.subr.mxu0 0.0
          %6558 = vmatpush1.msra.mxu0 0.0
          %6559 = vmatprep.subr.mxu0 0.0
          %6560 = vmatpush1.msra.mxu0 0.0
          %6561 = vmatprep.subr.mxu0 0.0
          %6562 = vmatpush1.msra.mxu0 0.0
          %6563 = vmatprep.subr.mxu0 0.0
          %6564 = vmatpush1.msra.mxu0 0.0
          %6565 = vmatprep.subr.mxu0 0.0
          %6566 = vmatpush1.msra.mxu0 0.0
          %6567 = vmatprep.subr.mxu0 0.0
          %6568 = vmatpush1.msra.mxu0 0.0
          %6569 = vmatprep.subr.mxu0 0.0
          %6570 = vmatpush1.msra.mxu0 0.0
          %6571 = vmatprep.subr.mxu0 0.0
          %6572 = vmatpush1.msra.mxu0 0.0
          %6573 = vmatprep.subr.mxu0 0.0
          %6574 = vmatpush1.msra.mxu0 0.0
          %6575 = vmatprep.subr.mxu0 0.0
          %6576 = vmatpush1.msra.mxu0 0.0
          %6577 = vmatprep.subr.mxu0 0.0
          %6578 = vmatpush1.msra.mxu0 0.0
          %6579 = vmatprep.subr.mxu0 0.0
          %6580 = vmatpush1.msra.mxu0 0.0
          %6581 = vmatprep.subr.mxu0 0.0
          %6582 = vmatpush1.msra.mxu0 0.0
          %6583 = vmatprep.subr.mxu0 0.0
          %6584 = vmatpush1.msra.mxu0 0.0
          %6585 = vmatprep.subr.mxu0 0.0
          %6586 = vmatpush1.msra.mxu0 0.0
          %6587 = vmatprep.subr.mxu0 0.0
          %6588 = vmatpush1.msra.mxu0 0.0
          %6589 = vmatprep.subr.mxu0 0.0
          %6590 = vmatpush1.msra.mxu0 0.0
          %6591 = vmatprep.subr.mxu0 0.0
          %6592 = vmatpush1.msra.mxu0 0.0
          %6593 = vmatprep.subr.mxu0 0.0
          %6594 = vmatpush1.msra.mxu0 0.0
          %6595 = vmatprep.mubr.f32.mxu0 0.0
          %v6596 = vand.u32 %v6248, 4294901760
          %v6597 = vsub.f32 %v6248, %v6596
          %v6598 = vand.u32 %v6597, 4294901760
          %6599 = vmatmul.mubr.f32.gmra.mrb[0].mxu0 %v6598
          %v6600 = vpop.f32.mrb[0].mxu0
          %v6601 = vadd.f32 %v6521, %v6600
          %v6602 = vpop.f32.mrb[0].mxu0
          %6603 = vdwg.mxu0
          %6604 = vmatprep.subr.mxu0 0.0
          %v6605 = vand.u32 %v6239, 4294901760
          %v6606 = vsub.f32 %v6239, %v6605
          %v6607 = vand.u32 %v6606, 4294901760
          %6608 = vmatpush1.msra.mxu0 %v6607
          %6609 = vmatprep.subr.mxu0 0.0
          %v6610 = vand.u32 %v6240, 4294901760
          %v6611 = vsub.f32 %v6240, %v6610
          %v6612 = vand.u32 %v6611, 4294901760
          %6613 = vmatpush1.msra.mxu0 %v6612
          %6614 = vmatprep.subr.mxu0 0.0
          %v6615 = vand.u32 %v6241, 4294901760
          %v6616 = vsub.f32 %v6241, %v6615
          %v6617 = vand.u32 %v6616, 4294901760
          %6618 = vmatpush1.msra.mxu0 %v6617
          %6619 = vmatprep.subr.mxu0 0.0
          %v6620 = vand.u32 %v6242, 4294901760
          %v6621 = vsub.f32 %v6242, %v6620
          %v6622 = vand.u32 %v6621, 4294901760
          %6623 = vmatpush1.msra.mxu0 %v6622
          %6624 = vmatprep.subr.mxu0 0.0
          %v6625 = vand.u32 %v6243, 4294901760
          %v6626 = vsub.f32 %v6243, %v6625
          %v6627 = vand.u32 %v6626, 4294901760
          %6628 = vmatpush1.msra.mxu0 %v6627
          %6629 = vmatprep.subr.mxu0 0.0
          %v6630 = vand.u32 %v6244, 4294901760
          %v6631 = vsub.f32 %v6244, %v6630
          %v6632 = vand.u32 %v6631, 4294901760
          %6633 = vmatpush1.msra.mxu0 %v6632
          %6634 = vmatprep.subr.mxu0 0.0
          %v6635 = vand.u32 %v6245, 4294901760
          %v6636 = vsub.f32 %v6245, %v6635
          %v6637 = vand.u32 %v6636, 4294901760
          %6638 = vmatpush1.msra.mxu0 %v6637
          %6639 = vmatprep.subr.mxu0 0.0
          %6640 = vmatpush1.msra.mxu0 0.0
          %6641 = vmatprep.subr.mxu0 0.0
          %6642 = vmatpush1.msra.mxu0 0.0
          %6643 = vmatprep.subr.mxu0 0.0
          %6644 = vmatpush1.msra.mxu0 0.0
          %6645 = vmatprep.subr.mxu0 0.0
          %6646 = vmatpush1.msra.mxu0 0.0
          %6647 = vmatprep.subr.mxu0 0.0
          %6648 = vmatpush1.msra.mxu0 0.0
          %6649 = vmatprep.subr.mxu0 0.0
          %6650 = vmatpush1.msra.mxu0 0.0
          %6651 = vmatprep.subr.mxu0 0.0
          %6652 = vmatpush1.msra.mxu0 0.0
          %6653 = vmatprep.subr.mxu0 0.0
          %6654 = vmatpush1.msra.mxu0 0.0
          %6655 = vmatprep.subr.mxu0 0.0
          %6656 = vmatpush1.msra.mxu0 0.0
          %6657 = vmatprep.subr.mxu0 0.0
          %6658 = vmatpush1.msra.mxu0 0.0
          %6659 = vmatprep.subr.mxu0 0.0
          %6660 = vmatpush1.msra.mxu0 0.0
          %6661 = vmatprep.subr.mxu0 0.0
          %6662 = vmatpush1.msra.mxu0 0.0
          %6663 = vmatprep.subr.mxu0 0.0
          %6664 = vmatpush1.msra.mxu0 0.0
          %6665 = vmatprep.subr.mxu0 0.0
          %6666 = vmatpush1.msra.mxu0 0.0
          %6667 = vmatprep.subr.mxu0 0.0
          %6668 = vmatpush1.msra.mxu0 0.0
          %6669 = vmatprep.subr.mxu0 0.0
          %6670 = vmatpush1.msra.mxu0 0.0
          %6671 = vmatprep.subr.mxu0 0.0
          %6672 = vmatpush1.msra.mxu0 0.0
          %6673 = vmatprep.subr.mxu0 0.0
          %6674 = vmatpush1.msra.mxu0 0.0
          %6675 = vmatprep.subr.mxu0 0.0
          %6676 = vmatpush1.msra.mxu0 0.0
          %6677 = vmatprep.subr.mxu0 0.0
          %6678 = vmatpush1.msra.mxu0 0.0
          %6679 = vmatprep.subr.mxu0 0.0
          %6680 = vmatpush1.msra.mxu0 0.0
          %6681 = vmatprep.subr.mxu0 0.0
          %6682 = vmatpush1.msra.mxu0 0.0
          %6683 = vmatprep.subr.mxu0 0.0
          %6684 = vmatpush1.msra.mxu0 0.0
          %6685 = vmatprep.subr.mxu0 0.0
          %6686 = vmatpush1.msra.mxu0 0.0
          %6687 = vmatprep.subr.mxu0 0.0
          %6688 = vmatpush1.msra.mxu0 0.0
          %6689 = vmatprep.mubr.f32.mxu0 0.0
          %v6690 = vand.u32 %v6248, 4294901760
          %6691 = vmatmul.mubr.f32.gmra.mrb[0].mxu0 %v6690
          %v6692 = vpop.f32.mrb[0].mxu0
          %v6693 = vadd.f32 %v6601, %v6692
          %v6694 = vpop.f32.mrb[0].mxu0
          %6695 = vdwg.mxu0
          %6696 = vmatprep.subr.mxu0 0.0
          %v6697 = vand.u32 %v6239, 4294901760
          %6698 = vmatpush1.msra.mxu0 %v6697
          %6699 = vmatprep.subr.mxu0 0.0
          %v6700 = vand.u32 %v6240, 4294901760
          %6701 = vmatpush1.msra.mxu0 %v6700
          %6702 = vmatprep.subr.mxu0 0.0
          %v6703 = vand.u32 %v6241, 4294901760
          %6704 = vmatpush1.msra.mxu0 %v6703
          %6705 = vmatprep.subr.mxu0 0.0
          %v6706 = vand.u32 %v6242, 4294901760
          %6707 = vmatpush1.msra.mxu0 %v6706
          %6708 = vmatprep.subr.mxu0 0.0
          %v6709 = vand.u32 %v6243, 4294901760
          %6710 = vmatpush1.msra.mxu0 %v6709
          %6711 = vmatprep.subr.mxu0 0.0
          %v6712 = vand.u32 %v6244, 4294901760
          %6713 = vmatpush1.msra.mxu0 %v6712
          %6714 = vmatprep.subr.mxu0 0.0
          %v6715 = vand.u32 %v6245, 4294901760
          %6716 = vmatpush1.msra.mxu0 %v6715
          %6717 = vmatprep.subr.mxu0 0.0
          %6718 = vmatpush1.msra.mxu0 0.0
          %6719 = vmatprep.subr.mxu0 0.0
          %6720 = vmatpush1.msra.mxu0 0.0
          %6721 = vmatprep.subr.mxu0 0.0
          %6722 = vmatpush1.msra.mxu0 0.0
          %6723 = vmatprep.subr.mxu0 0.0
          %6724 = vmatpush1.msra.mxu0 0.0
          %6725 = vmatprep.subr.mxu0 0.0
          %6726 = vmatpush1.msra.mxu0 0.0
          %6727 = vmatprep.subr.mxu0 0.0
          %6728 = vmatpush1.msra.mxu0 0.0
          %6729 = vmatprep.subr.mxu0 0.0
          %6730 = vmatpush1.msra.mxu0 0.0
          %6731 = vmatprep.subr.mxu0 0.0
          %6732 = vmatpush1.msra.mxu0 0.0
          %6733 = vmatprep.subr.mxu0 0.0
          %6734 = vmatpush1.msra.mxu0 0.0
          %6735 = vmatprep.subr.mxu0 0.0
          %6736 = vmatpush1.msra.mxu0 0.0
          %6737 = vmatprep.subr.mxu0 0.0
          %6738 = vmatpush1.msra.mxu0 0.0
          %6739 = vmatprep.subr.mxu0 0.0
          %6740 = vmatpush1.msra.mxu0 0.0
          %6741 = vmatprep.subr.mxu0 0.0
          %6742 = vmatpush1.msra.mxu0 0.0
          %6743 = vmatprep.subr.mxu0 0.0
          %6744 = vmatpush1.msra.mxu0 0.0
          %6745 = vmatprep.subr.mxu0 0.0
          %6746 = vmatpush1.msra.mxu0 0.0
          %6747 = vmatprep.subr.mxu0 0.0
          %6748 = vmatpush1.msra.mxu0 0.0
          %6749 = vmatprep.subr.mxu0 0.0
          %6750 = vmatpush1.msra.mxu0 0.0
          %6751 = vmatprep.subr.mxu0 0.0
          %6752 = vmatpush1.msra.mxu0 0.0
          %6753 = vmatprep.subr.mxu0 0.0
          %6754 = vmatpush1.msra.mxu0 0.0
          %6755 = vmatprep.subr.mxu0 0.0
          %6756 = vmatpush1.msra.mxu0 0.0
          %6757 = vmatprep.subr.mxu0 0.0
          %6758 = vmatpush1.msra.mxu0 0.0
          %6759 = vmatprep.subr.mxu0 0.0
          %6760 = vmatpush1.msra.mxu0 0.0
          %6761 = vmatprep.subr.mxu0 0.0
          %6762 = vmatpush1.msra.mxu0 0.0
          %6763 = vmatprep.subr.mxu0 0.0
          %6764 = vmatpush1.msra.mxu0 0.0
          %6765 = vmatprep.subr.mxu0 0.0
          %6766 = vmatpush1.msra.mxu0 0.0
          %6767 = vmatprep.mubr.f32.mxu0 0.0
          %v6768 = vand.u32 %v6248, 4294901760
          %6769 = vmatmul.mubr.f32.gmra.mrb[0].mxu0 %v6768
          %v6770 = vpop.f32.mrb[0].mxu0
          %v6771 = vadd.f32 %v6693, %v6770
          %v6772 = vpop.f32.mrb[0].mxu0
          %6773 = vdwg.mxu0
          %6775 = vset.pattern.permute.xlu0 0
          %6776 = vperm.xlu0 %6775, %v636
          %v6777 = vpop.permute.xlu0 %6776
          %v6779 = vmul.f32 %v6771, %v6777
          %v6780 = vadd.f32 %v2880, %v6779
          %s6781 = scalar_lea.vmem %s14, %s1925
          %v6782 = vld [vmem:[%s6781] sm:$0x1]
          %s6783 = scalar_lea.vmem %s15, %s1925
          %v6784 = vld [vmem:[%s6783] sm:$0x1]
          %v6785 = vmul.f32 %v6780, %v6780
          %v6786 = vrot.slane %v6780, 4
          %v6787 = vadd.f32 %v6780, %v6786
          %v6788 = vrot.slane %v6787, 2
          %v6789 = vadd.f32 %v6787, %v6788
          %v6790 = vrot.slane %v6789, 1
          %v6791 = vadd.f32 %v6789, %v6790
          %v6792 = vrot.slane %v6785, 4
          %v6793 = vadd.f32 %v6785, %v6792
          %v6794 = vrot.slane %v6793, 2
          %v6795 = vadd.f32 %v6793, %v6794
          %v6796 = vrot.slane %v6795, 1
          %v6797 = vadd.f32 %v6795, %v6796
          %v6798 = vmul.f32 %v6791, 0.125
          %v6799 = vmul.f32 %v6797, 0.125
          %v6800 = vmul.f32 %v6798, %v6798
          %v6801 = vsub.f32 %v6799, %v6800
          %v6802 = vmax.f32 %v6801, 0.0
          %v6803 = vsub.f32 %v6780, %v6798
          %v6804 = vadd.f32 %v6802, 1e-05
          %v6805 = vrsqrt.pop %v6804
          %v6806 = vmul.f32 %v6803, %v6805
          %v6808 = vlaneseq
          %v6809 = vshrl.u32 %v6808, 7
          %v6810 = vsub.s32 0, %v6809
          %v6811 = vrot.slane %v6782, %v6810
          %v6813 = vmul.f32 %v6806, %v6811
          %v6815 = vlaneseq
          %v6816 = vshrl.u32 %v6815, 7
          %v6817 = vsub.s32 0, %v6816
          %v6818 = vrot.slane %v6784, %v6817
          %v6820 = vadd.f32 %v6813, %v6818
          %v6821 = vand.u32 2147483647, %v6820
          %v6822 = vsub.f32 0.0, %v6821
          %v6823 = vmul.f32 %v6822, 1.442695
          %v6824 = vpow.pop %v6823
          %v6825 = vadd.f32 %v6824, 1.0
          %v6826 = vrcp.pop %v6825
          %v6827 = vmul.f32 1.0, %v6826
          %vm6828 = vcmp.ge.f32.partialorder %v6820, 0.0
          %v6829 = vmul.f32 %v6824, %v6827
          %v6830 = vsel %vm6828, %v6827, %v6829
          %v6831 = vmul.f32 %v6820, %v6830
          %v6832 = vadd.f32 %v1930, %v6831
          %v6833 = vadd.f32 %v4625, %v6200
          %v6834 = vadd.f32 %v4631, %v6206
          %v6835 = vadd.f32 %v4637, %v6212
          %v6836 = vadd.f32 %v4643, %v6218
          %v6837 = vadd.f32 %v4649, %v6224
          %v6838 = vadd.f32 %v4655, %v6230
          %v6839 = vadd.f32 %v4661, %v6236
          %v6840 = vadd.f32 %v6833, %v5470
          %v6841 = vadd.f32 %v6834, %v5477
          %v6842 = vadd.f32 %v6835, %v5484
          %v6843 = vadd.f32 %v6836, %v5491
          %v6844 = vadd.f32 %v6837, %v5498
          %v6845 = vadd.f32 %v6838, %v5505
          %v6846 = vadd.f32 %v6839, %v5512
          %s6847 = scalar_lea.vmem %s16, %s1925
          %v6848 = vld [vmem:[%s6847] sm:$0x1]
          %s6849 = scalar_lea.vmem %s17, %s1925
          %v6850 = vld [vmem:[%s6849] sm:$0x1]
          %v6851 = vmul.f32 %v6840, %v6840
          %v6852 = vmul.f32 %v6841, %v6841
          %v6853 = vmul.f32 %v6842, %v6842
          %v6854 = vmul.f32 %v6843, %v6843
          %v6855 = vmul.f32 %v6844, %v6844
          %v6856 = vmul.f32 %v6845, %v6845
          %v6857 = vmul.f32 %v6846, %v6846
          %v6858 = vadd.f32 %v6840, %v6841
          %v6859 = vadd.f32 %v6858, %v6842
          %v6860 = vadd.f32 %v6859, %v6843
          %v6861 = vadd.f32 %v6860, %v6844
          %v6862 = vadd.f32 %v6861, %v6845
          %v6863 = vadd.f32 %v6862, %v6846
          %v6864 = vrot.slane %v6863, 4
          %v6865 = vadd.f32 %v6863, %v6864
          %v6866 = vrot.slane %v6865, 2
          %v6867 = vadd.f32 %v6865, %v6866
          %v6868 = vrot.slane %v6867, 1
          %v6869 = vadd.f32 %v6867, %v6868
          %v6870 = vadd.f32 %v6851, %v6852
          %v6871 = vadd.f32 %v6870, %v6853
          %v6872 = vadd.f32 %v6871, %v6854
          %v6873 = vadd.f32 %v6872, %v6855
          %v6874 = vadd.f32 %v6873, %v6856
          %v6875 = vadd.f32 %v6874, %v6857
          %v6876 = vrot.slane %v6875, 4
          %v6877 = vadd.f32 %v6875, %v6876
          %v6878 = vrot.slane %v6877, 2
          %v6879 = vadd.f32 %v6877, %v6878
          %v6880 = vrot.slane %v6879, 1
          %v6881 = vadd.f32 %v6879, %v6880
          %v6882 = vmul.f32 %v6869, 0.017857144
          %v6883 = vmul.f32 %v6881, 0.017857144
          %v6884 = vmul.f32 %v6882, %v6882
          %v6885 = vsub.f32 %v6883, %v6884
          %v6886 = vmax.f32 %v6885, 0.0
          %v6887 = vsub.f32 %v6840, %v6882
          %v6888 = vsub.f32 %v6841, %v6882
          %v6889 = vsub.f32 %v6842, %v6882
          %v6890 = vsub.f32 %v6843, %v6882
          %v6891 = vsub.f32 %v6844, %v6882
          %v6892 = vsub.f32 %v6845, %v6882
          %v6893 = vsub.f32 %v6846, %v6882
          %v6894 = vadd.f32 %v6886, 1e-05
          %v6895 = vrsqrt.pop %v6894
          %v6896 = vmul.f32 %v6887, %v6895
          %v6897 = vmul.f32 %v6888, %v6895
          %v6898 = vmul.f32 %v6889, %v6895
          %v6899 = vmul.f32 %v6890, %v6895
          %v6900 = vmul.f32 %v6891, %v6895
          %v6901 = vmul.f32 %v6892, %v6895
          %v6902 = vmul.f32 %v6893, %v6895
          %v6904 = vlaneseq
          %v6905 = vshrl.u32 %v6904, 7
          %v6906 = vsub.s32 0, %v6905
          %v6907 = vrot.slane %v6848, %v6906
          %v6909 = vmul.f32 %v6896, %v6907
          %v6910 = vmul.f32 %v6897, %v6907
          %v6911 = vmul.f32 %v6898, %v6907
          %v6912 = vmul.f32 %v6899, %v6907
          %v6913 = vmul.f32 %v6900, %v6907
          %v6914 = vmul.f32 %v6901, %v6907
          %v6915 = vmul.f32 %v6902, %v6907
          %v6917 = vlaneseq
          %v6918 = vshrl.u32 %v6917, 7
          %v6919 = vsub.s32 0, %v6918
          %v6920 = vrot.slane %v6850, %v6919
          %v6922 = vadd.f32 %v6909, %v6920
          %v6923 = vadd.f32 %v6910, %v6920
          %v6924 = vadd.f32 %v6911, %v6920
          %v6925 = vadd.f32 %v6912, %v6920
          %v6926 = vadd.f32 %v6913, %v6920
          %v6927 = vadd.f32 %v6914, %v6920
          %v6928 = vadd.f32 %v6915, %v6920
          %v6929 = vand.u32 2147483647, %v6922
          %v6930 = vand.u32 2147483647, %v6923
          %v6931 = vand.u32 2147483647, %v6924
          %v6932 = vand.u32 2147483647, %v6925
          %v6933 = vand.u32 2147483647, %v6926
          %v6934 = vand.u32 2147483647, %v6927
          %v6935 = vand.u32 2147483647, %v6928
          %v6936 = vsub.f32 0.0, %v6929
          %v6937 = vsub.f32 0.0, %v6930
          %v6938 = vsub.f32 0.0, %v6931
          %v6939 = vsub.f32 0.0, %v6932
          %v6940 = vsub.f32 0.0, %v6933
          %v6941 = vsub.f32 0.0, %v6934
          %v6942 = vsub.f32 0.0, %v6935
          %v6943 = vmul.f32 %v6936, 1.442695
          %v6944 = vpow.pop %v6943
          %v6945 = vmul.f32 %v6937, 1.442695
          %v6946 = vpow.pop %v6945
          %v6947 = vmul.f32 %v6938, 1.442695
          %v6948 = vpow.pop %v6947
          %v6949 = vmul.f32 %v6939, 1.442695
          %v6950 = vpow.pop %v6949
          %v6951 = vmul.f32 %v6940, 1.442695
          %v6952 = vpow.pop %v6951
          %v6953 = vmul.f32 %v6941, 1.442695
          %v6954 = vpow.pop %v6953
          %v6955 = vmul.f32 %v6942, 1.442695
          %v6956 = vpow.pop %v6955
          %v6957 = vadd.f32 %v6944, 1.0
          %v6958 = vadd.f32 %v6946, 1.0
          %v6959 = vadd.f32 %v6948, 1.0
          %v6960 = vadd.f32 %v6950, 1.0
          %v6961 = vadd.f32 %v6952, 1.0
          %v6962 = vadd.f32 %v6954, 1.0
          %v6963 = vadd.f32 %v6956, 1.0
          %v6964 = vrcp.pop %v6957
          %v6965 = vmul.f32 1.0, %v6964
          %v6966 = vrcp.pop %v6958
          %v6967 = vmul.f32 1.0, %v6966
          %v6968 = vrcp.pop %v6959
          %v6969 = vmul.f32 1.0, %v6968
          %v6970 = vrcp.pop %v6960
          %v6971 = vmul.f32 1.0, %v6970
          %v6972 = vrcp.pop %v6961
          %v6973 = vmul.f32 1.0, %v6972
          %v6974 = vrcp.pop %v6962
          %v6975 = vmul.f32 1.0, %v6974
          %v6976 = vrcp.pop %v6963
          %v6977 = vmul.f32 1.0, %v6976
          %vm6978 = vcmp.ge.f32.partialorder %v6922, 0.0
          %vm6979 = vcmp.ge.f32.partialorder %v6923, 0.0
          %vm6980 = vcmp.ge.f32.partialorder %v6924, 0.0
          %vm6981 = vcmp.ge.f32.partialorder %v6925, 0.0
          %vm6982 = vcmp.ge.f32.partialorder %v6926, 0.0
          %vm6983 = vcmp.ge.f32.partialorder %v6927, 0.0
          %vm6984 = vcmp.ge.f32.partialorder %v6928, 0.0
          %v6985 = vmul.f32 %v6944, %v6965
          %v6986 = vmul.f32 %v6946, %v6967
          %v6987 = vmul.f32 %v6948, %v6969
          %v6988 = vmul.f32 %v6950, %v6971
          %v6989 = vmul.f32 %v6952, %v6973
          %v6990 = vmul.f32 %v6954, %v6975
          %v6991 = vmul.f32 %v6956, %v6977
          %v6992 = vsel %vm6978, %v6965, %v6985
          %v6993 = vsel %vm6979, %v6967, %v6986
          %v6994 = vsel %vm6980, %v6969, %v6987
          %v6995 = vsel %vm6981, %v6971, %v6988
          %v6996 = vsel %vm6982, %v6973, %v6989
          %v6997 = vsel %vm6983, %v6975, %v6990
          %v6998 = vsel %vm6984, %v6977, %v6991
          %v6999 = vmul.f32 %v6922, %v6992
          %v7000 = vmul.f32 %v6923, %v6993
          %v7001 = vmul.f32 %v6924, %v6994
          %v7002 = vmul.f32 %v6925, %v6995
          %v7003 = vmul.f32 %v6926, %v6996
          %v7004 = vmul.f32 %v6927, %v6997
          %v7005 = vmul.f32 %v6928, %v6998
          %v7006 = vadd.f32 %v1931, %v6999
          %v7007 = vadd.f32 %v1932, %v7000
          %v7008 = vadd.f32 %v1933, %v7001
          %v7009 = vadd.f32 %v1934, %v7002
          %v7010 = vadd.f32 %v1935, %v7003
          %v7011 = vadd.f32 %v1936, %v7004
          %v7012 = vadd.f32 %v1937, %v7005
        $region105: #{tpu_custom_call.1} parent=91 // loop_footer
          %s1929 = sadd.s32 1, %s1925
        $region106: #{tpu_custom_call.1} parent=91 // loop_footer_branch
          %1924 = sbr.rel target = $region102
        $region107: #{tpu_custom_call.1} parent=91 // loop_exit
          _
        %7013 = vst [vmem:[%s611] sm:$0xff] %v1931
        %7014 = vst [vmem:[%s611 + $0x8] sm:$0xff] %v1932
        %7015 = vst [vmem:[%s611 + $0x10] sm:$0xff] %v1933
        %7016 = vst [vmem:[%s611 + $0x18] sm:$0xff] %v1934
        %7017 = vst [vmem:[%s611 + $0x20] sm:$0xff] %v1935
        %7018 = vst [vmem:[%s611 + $0x28] sm:$0xff] %v1936
        %7019 = vst [vmem:[%s611 + $0x30] sm:$0xff] %v1937
        %s7020 = sand.u32 %s430, 1
        %s7021 = scalar_lea.sflag [#allocation4], %s7020
        %s7022 = sand.u32 %s430, 1
        %s7023 = smul.addr %s7022, 56
        %s7024 = scalar_lea.vmem [#allocation7], %s7023
        // Predicated region
        $region108: #{tpu_custom_call.1} parent=91 // pred_check
          %p7025 = pneg %p440
        $region109: #{tpu_custom_call.1} parent=91 // pred_check_branch
          %7027 = sbr.rel (%p7025) target = $region111
        $region110: #{tpu_custom_call.1} parent=91 // pred_region
          %s7029 = ssub.s32 896, 896
          %7030 = vsyncadd %s7021, %s7029
          %s7031 = smul.addr %s34, 7
          %s7032 = smul.addr %s7031, 128
          %s7033 = scalar_lea.hbm %s18, %s7032
          %s7034 = sshll.u32 %s7024, 4
          %s7035 = int_to_ptr.vmem [resolvable:$true] %s7034
          %7040 = dma.vmem_to_hbm [thread:$0]  %s7035, 896, %s7033, %s7021, 128, 128, 8
        $region111: #{tpu_custom_call.1} parent=91 // pred_fallthru
          _
      $region92: #{tpu_custom_call.1} parent=5 // pred_fallthru
        _
      %p7041 = scmp.le.s32.totalorder 2, %s29
      // Predicated region
      $region112: #{tpu_custom_call.1} parent=5 // pred_check
        %p7042 = pneg %p7041
      $region113: #{tpu_custom_call.1} parent=5 // pred_check_branch
        %7044 = sbr.rel (%p7042) target = $region115
      $region114: #{tpu_custom_call.1} parent=5 // pred_region
        %s7045 = ssub.s32 %s29, 2
        // Predicated region
        $region116: #{tpu_custom_call.1} parent=114 // pred_check
          %p7046 = pneg %p446
        $region117: #{tpu_custom_call.1} parent=114 // pred_check_branch
          %7048 = sbr.rel (%p7046) target = $region119
        $region118: #{tpu_custom_call.1} parent=114 // pred_region
          %s7049 = sand.u32 %s431, 1
          %s7050 = scalar_lea.sflag [#allocation4], %s7049
          %s7051 = sand.u32 %s431, 1
          %s7052 = smul.addr %s7051, 56
          %s7053 = scalar_lea.vmem [#allocation7], %s7052
          %7054 = dma.done %s7050, 896
        $region119: #{tpu_custom_call.1} parent=114 // pred_fallthru
          _
      $region115: #{tpu_custom_call.1} parent=5 // pred_fallthru
        _
    $region6: #{tpu_custom_call.1} parent=1 // loop_footer
      %s33 = sadd.s32 1, %s29
    $region7: #{tpu_custom_call.1} parent=1 // loop_footer_branch
      %28 = sbr.rel target = $region3
    $region8: #{tpu_custom_call.1} parent=1 // loop_exit
      _
    %7055 = vsyncpa [#allocation3], 1
    %s7056 = scalar_lea.sflag [#allocation3], 1
    %7057 = vsyncpa %s7056, 1
    %7058 = vsyncpa [#allocation6], 1
    %7059 = vsyncpa [#allocation4], 1
    %s7060 = scalar_lea.sflag [#allocation4], 1
    %7061 = vsyncpa %s7060, 1

</llo_original>
